<compile_context>
chip_gen: v6e
topology: v6e:2x2x1
jax: 0.10.0
libtpu: 0.0.40
codegen_flags: <defaults>
</compile_context>

<pallas_src>
import functools

import numpy as np
import jax
import jax.numpy as jnp
from jax.experimental import pallas as pl
from jax.experimental.pallas import tpu as pltpu


def get_intra_idx(kanchor: int, k_neighbors: int) -> np.ndarray:
    # Deterministic stand-in for L.get_intra_idx(kanchor): an [A, K] table of
    # anchor-neighbourhood indices.  The kernel is agnostic to its contents.
    # TODO(synk): the real vgtk/E2PN rotation-group neighbourhood table is not
    # reproduced here; plug in the library table to match the original module.
    return np.array([[(a + k) % kanchor for k in range(k_neighbors)]
                     for a in range(kanchor)], dtype=np.int32)


# ----------------------------------------------------------------------------
# Pallas kernel
# ----------------------------------------------------------------------------
def _kpconv_intra_kernel(x_ref, w_ref, out_ref, *, intra_idx):
    # x_ref:   (TP, A, C_in)    VMEM block
    # w_ref:   (K, C_in, C_out) VMEM, constant index_map -> resident across steps
    # out_ref: (TP, A, C_out)   VMEM block
    n_k = w_ref.shape[0]

    # Hoist weight slabs once per grid step.
    w = [w_ref[k] for k in range(n_k)]

    # Extract (and cache) each per-source-anchor activation slab at most once
    # per grid step: the sublane-gather relayout is paid once per distinct j.
    x_cache = {}

    def x_slab(j):
        if j not in x_cache:
            x_cache[j] = x_ref[:, j, :]
        return x_cache[j]

    # Dedupe identical (source anchor, kernel point) MXU products at trace time.
    prod_cache = {}

    def prod(j, k):
        key = (j, k)
        if key not in prod_cache:
            prod_cache[key] = jnp.dot(x_slab(j), w[k],
                                      preferred_element_type=jnp.float32)
        return prod_cache[key]

    for a, row in enumerate(intra_idx):          # static unroll over anchors
        acc = prod(int(row[0]), 0)
        for k in range(1, n_k):                  # static unroll over K
            acc = acc + prod(int(row[k]), k)
        out_ref[:, a, :] = acc.astype(out_ref.dtype)   # lane-dense store


# ----------------------------------------------------------------------------
# Wrapper
# ----------------------------------------------------------------------------
def _round_up(x, m):
    return ((x + m - 1) // m) * m


def _choose_tile_p(n_points, n_anchors, c_in, c_out,
                   dtype_bytes=4, vmem_budget_bytes=8 * 1024 * 1024):
    """Largest point tile whose double-buffered in+out slabs fit the budget.

    Uses the padded (sublane=8, lane=128) footprint of the trailing (A, C)
    dims.  The 8 MiB budget is conservative, so the kernel is safe under the
    scoped-VMEM defaults of v5e (16 MiB), v6e (32 MiB) and v7x (32 MiB) while
    still moving multi-MiB tiles per grid step.
    """
    a_pad = _round_up(n_anchors, 8)
    cin_pad = _round_up(c_in, 128)
    cout_pad = _round_up(c_out, 128)
    bytes_per_point = a_pad * (cin_pad + cout_pad) * dtype_bytes
    tile = vmem_budget_bytes // (2 * bytes_per_point)     # 2 = double buffer
    tile = min(tile, 1024, _round_up(n_points, 8))
    tile = max(8, (tile // 8) * 8)
    return int(tile)


def kpconv_intra_so3(x, weights, intra_idx, *, tile_p=None):
    """Forward of KPConvIntraSO3.

    x:         [P, A, C_in]  float32
    weights:   [K, C_in, C_out] float32
    intra_idx: [A, K] integer table (static anchor-neighbourhood indices)
    returns:   [P, A, C_out] float32
    """
    n_points, n_anchors, c_in = x.shape
    n_k, c_in_w, c_out = weights.shape
    intra_idx = np.asarray(intra_idx)
    assert c_in_w == c_in
    assert intra_idx.shape == (n_anchors, n_k)
    assert 0 <= int(intra_idx.min()) and int(intra_idx.max()) < n_anchors

    if tile_p is None:
        tile_p = _choose_tile_p(n_points, n_anchors, c_in, c_out,
                                dtype_bytes=x.dtype.itemsize)
    tile_p = int(tile_p)
    grid = (pl.cdiv(n_points, tile_p),)   # trailing block may be partial

    kernel = functools.partial(
        _kpconv_intra_kernel,
        intra_idx=tuple(map(tuple, intra_idx.tolist())))

    flops = 2 * n_points * n_anchors * n_k * c_in * c_out
    bytes_accessed = (x.size * x.dtype.itemsize
                      + weights.size * weights.dtype.itemsize
                      + n_points * n_anchors * c_out * x.dtype.itemsize)

    out = pl.pallas_call(
        kernel,
        out_shape=jax.ShapeDtypeStruct((n_points, n_anchors, c_out), x.dtype),
        grid=grid,
        in_specs=[
            pl.BlockSpec((tile_p, n_anchors, c_in), lambda i: (i, 0, 0)),
            pl.BlockSpec((n_k, c_in, c_out), lambda i: (0, 0, 0)),
        ],
        out_specs=pl.BlockSpec((tile_p, n_anchors, c_out), lambda i: (i, 0, 0)),
        compiler_params=pltpu.CompilerParams(
            dimension_semantics=("parallel",)),
        cost_estimate=pl.CostEstimate(
            flops=int(flops), transcendentals=0,
            bytes_accessed=int(bytes_accessed)),
    )(x, weights)

    return out


# ----------------------------------------------------------------------------
# Reference (float64 numpy, mirrors the PyTorch forward op-for-op)
# ----------------------------------------------------------------------------
def _reference(x, weights, intra_idx):
    x64 = np.asarray(x, dtype=np.float64)
    w64 = np.asarray(weights, dtype=np.float64)
    idx = np.asarray(intra_idx).reshape(-1)
    P, A, C = x64.shape
    K = w64.shape[0]
    xg = x64[:, idx, :].reshape(P, A, K, C)                 # index_select+view
    xg = np.transpose(xg, (2, 0, 1, 3)).reshape(K, P * A, C)
    out = np.einsum('kmc,kco->mo', xg, w64)                 # matmul + sum(0)
    return out.reshape(P, A, -1)


if __name__ == "__main__":
    # Small shapes consistent with the module: P points, A anchors (kanchor),
    # K intra-neighbourhood size, C_in/C_out feature channels.
    P, A, K = 200, 6, 3
    C_IN, C_OUT = 64, 128

    intra_idx = get_intra_idx(A, K)

    key = jax.random.PRNGKey(0)
    kx, kw = jax.random.split(key)
    x = jax.random.normal(kx, (P, A, C_IN), dtype=jnp.float32)
    bound = 1.0 / np.sqrt(K * C_IN)                 # kaiming-uniform-ish init
    weights = jax.random.uniform(kw, (K, C_IN, C_OUT), dtype=jnp.float32,
                                 minval=-bound, maxval=bound)

    ref = _reference(x, weights, intra_idx)

    # Explicit tile smaller than P: exercises the cdiv grid with a partial
    # trailing block (P=200, tile=128 -> 2 grid steps, second block ragged).
    out = kpconv_intra_so3(x, weights, intra_idx, tile_p=128)
    out = jax.block_until_ready(out)
    np.testing.assert_allclose(np.asarray(out), ref, rtol=2e-3, atol=2e-3)

    # Auto-derived (VMEM-budget) tile: whole problem in a single grid step.
    out_auto = kpconv_intra_so3(x, weights, intra_idx)
    out_auto = jax.block_until_ready(out_auto)
    np.testing.assert_allclose(np.asarray(out_auto), ref, rtol=2e-3, atol=2e-3)

    print("KERNEL_OK")
</pallas_src>

<mosaic_0001>
module attributes {stable_mosaic.version = 11 : i64} {
  func.func @_kpconv_intra_kernel(%arg0: i32, %arg1: memref<128x6x64xf32, #tpu.memory_space<vmem>>, %arg2: memref<3x64x128xf32, #tpu.memory_space<vmem>>, %arg3: memref<128x6x128xf32, #tpu.memory_space<vmem>>) attributes {dimension_semantics = [#tpu.dimension_semantics<parallel>], iteration_bounds = array<i64: 2>, scalar_prefetch = 0 : i64, scratch_operands = 0 : i64, tpu.core_type = #tpu.core_type<tc>, window_params = [{transform_indices = @transform_0, window_bounds = array<i64: 128, 6, 64>}, {pipeline_mode = #tpu.pipeline_mode<synchronous>, transform_indices = @transform_1, window_bounds = array<i64: 3, 64, 128>}, {transform_indices = @transform_2, window_bounds = array<i64: 128, 6, 128>}]} {
    %c0 = arith.constant 0 : index
    %c0_0 = arith.constant 0 : index
    %c0_1 = arith.constant 0 : index
    %0 = vector.load %arg2[%c0, %c0_0, %c0_1] : memref<3x64x128xf32, #tpu.memory_space<vmem>>, vector<1x64x128xf32>
    %1 = vector.shape_cast %0 : vector<1x64x128xf32> to vector<64x128xf32>
    %c1 = arith.constant 1 : index
    %c0_2 = arith.constant 0 : index
    %c0_3 = arith.constant 0 : index
    %2 = vector.load %arg2[%c1, %c0_2, %c0_3] : memref<3x64x128xf32, #tpu.memory_space<vmem>>, vector<1x64x128xf32>
    %3 = vector.shape_cast %2 : vector<1x64x128xf32> to vector<64x128xf32>
    %c2 = arith.constant 2 : index
    %c0_4 = arith.constant 0 : index
    %c0_5 = arith.constant 0 : index
    %4 = vector.load %arg2[%c2, %c0_4, %c0_5] : memref<3x64x128xf32, #tpu.memory_space<vmem>>, vector<1x64x128xf32>
    %5 = vector.shape_cast %4 : vector<1x64x128xf32> to vector<64x128xf32>
    %c0_6 = arith.constant 0 : index
    %c0_7 = arith.constant 0 : index
    %c0_8 = arith.constant 0 : index
    %6 = vector.load %arg1[%c0_6, %c0_7, %c0_8] : memref<128x6x64xf32, #tpu.memory_space<vmem>>, vector<128x1x64xf32>
    %7 = vector.shape_cast %6 : vector<128x1x64xf32> to vector<128x64xf32>
    %cst = arith.constant dense<0.000000e+00> : vector<128x128xf32>
    %8 = tpu.matmul %7, %1, %cst {dimension_numbers = #tpu.dot_dimension_numbers<[1], [0], [0], [1], [0, 0, 1, 1], [], []>} : vector<128x64xf32>, vector<64x128xf32>, vector<128x128xf32> -> vector<128x128xf32>
    %c0_9 = arith.constant 0 : index
    %c1_10 = arith.constant 1 : index
    %c0_11 = arith.constant 0 : index
    %9 = vector.load %arg1[%c0_9, %c1_10, %c0_11] : memref<128x6x64xf32, #tpu.memory_space<vmem>>, vector<128x1x64xf32>
    %10 = vector.shape_cast %9 : vector<128x1x64xf32> to vector<128x64xf32>
    %cst_12 = arith.constant dense<0.000000e+00> : vector<128x128xf32>
    %11 = tpu.matmul %10, %3, %cst_12 {dimension_numbers = #tpu.dot_dimension_numbers<[1], [0], [0], [1], [0, 0, 1, 1], [], []>} : vector<128x64xf32>, vector<64x128xf32>, vector<128x128xf32> -> vector<128x128xf32>
    %12 = arith.addf %8, %11 : vector<128x128xf32>
    %c0_13 = arith.constant 0 : index
    %c2_14 = arith.constant 2 : index
    %c0_15 = arith.constant 0 : index
    %13 = vector.load %arg1[%c0_13, %c2_14, %c0_15] : memref<128x6x64xf32, #tpu.memory_space<vmem>>, vector<128x1x64xf32>
    %14 = vector.shape_cast %13 : vector<128x1x64xf32> to vector<128x64xf32>
    %cst_16 = arith.constant dense<0.000000e+00> : vector<128x128xf32>
    %15 = tpu.matmul %14, %5, %cst_16 {dimension_numbers = #tpu.dot_dimension_numbers<[1], [0], [0], [1], [0, 0, 1, 1], [], []>} : vector<128x64xf32>, vector<64x128xf32>, vector<128x128xf32> -> vector<128x128xf32>
    %16 = arith.addf %12, %15 : vector<128x128xf32>
    %c0_17 = arith.constant 0 : index
    %c0_18 = arith.constant 0 : index
    %c0_19 = arith.constant 0 : index
    %17 = vector.load %arg3[%c0_17, %c0_18, %c0_19] : memref<128x6x128xf32, #tpu.memory_space<vmem>>, vector<128x1x128xf32>
    %18 = vector.shape_cast %17 : vector<128x1x128xf32> to vector<128x128xf32>
    %19 = vector.shape_cast %16 : vector<128x128xf32> to vector<128x1x128xf32>
    tpu.vector_store %arg3[%c0_17, %c0_18, %c0_19], %19 {strides = array<i32>} : memref<128x6x128xf32, #tpu.memory_space<vmem>>, vector<128x1x128xf32>,
    %cst_20 = arith.constant dense<0.000000e+00> : vector<128x128xf32>
    %20 = tpu.matmul %10, %1, %cst_20 {dimension_numbers = #tpu.dot_dimension_numbers<[1], [0], [0], [1], [0, 0, 1, 1], [], []>} : vector<128x64xf32>, vector<64x128xf32>, vector<128x128xf32> -> vector<128x128xf32>
    %cst_21 = arith.constant dense<0.000000e+00> : vector<128x128xf32>
    %21 = tpu.matmul %14, %3, %cst_21 {dimension_numbers = #tpu.dot_dimension_numbers<[1], [0], [0], [1], [0, 0, 1, 1], [], []>} : vector<128x64xf32>, vector<64x128xf32>, vector<128x128xf32> -> vector<128x128xf32>
    %22 = arith.addf %20, %21 : vector<128x128xf32>
    %c0_22 = arith.constant 0 : index
    %c3 = arith.constant 3 : index
    %c0_23 = arith.constant 0 : index
    %23 = vector.load %arg1[%c0_22, %c3, %c0_23] : memref<128x6x64xf32, #tpu.memory_space<vmem>>, vector<128x1x64xf32>
    %24 = vector.shape_cast %23 : vector<128x1x64xf32> to vector<128x64xf32>
    %cst_24 = arith.constant dense<0.000000e+00> : vector<128x128xf32>
    %25 = tpu.matmul %24, %5, %cst_24 {dimension_numbers = #tpu.dot_dimension_numbers<[1], [0], [0], [1], [0, 0, 1, 1], [], []>} : vector<128x64xf32>, vector<64x128xf32>, vector<128x128xf32> -> vector<128x128xf32>
    %26 = arith.addf %22, %25 : vector<128x128xf32>
    %c0_25 = arith.constant 0 : index
    %c1_26 = arith.constant 1 : index
    %c0_27 = arith.constant 0 : index
    %27 = vector.load %arg3[%c0_25, %c1_26, %c0_27] : memref<128x6x128xf32, #tpu.memory_space<vmem>>, vector<128x1x128xf32>
    %28 = vector.shape_cast %27 : vector<128x1x128xf32> to vector<128x128xf32>
    %29 = vector.shape_cast %26 : vector<128x128xf32> to vector<128x1x128xf32>
    tpu.vector_store %arg3[%c0_25, %c1_26, %c0_27], %29 {strides = array<i32>} : memref<128x6x128xf32, #tpu.memory_space<vmem>>, vector<128x1x128xf32>,
    %cst_28 = arith.constant dense<0.000000e+00> : vector<128x128xf32>
    %30 = tpu.matmul %14, %1, %cst_28 {dimension_numbers = #tpu.dot_dimension_numbers<[1], [0], [0], [1], [0, 0, 1, 1], [], []>} : vector<128x64xf32>, vector<64x128xf32>, vector<128x128xf32> -> vector<128x128xf32>
    %cst_29 = arith.constant dense<0.000000e+00> : vector<128x128xf32>
    %31 = tpu.matmul %24, %3, %cst_29 {dimension_numbers = #tpu.dot_dimension_numbers<[1], [0], [0], [1], [0, 0, 1, 1], [], []>} : vector<128x64xf32>, vector<64x128xf32>, vector<128x128xf32> -> vector<128x128xf32>
    %32 = arith.addf %30, %31 : vector<128x128xf32>
    %c0_30 = arith.constant 0 : index
    %c4 = arith.constant 4 : index
    %c0_31 = arith.constant 0 : index
    %33 = vector.load %arg1[%c0_30, %c4, %c0_31] : memref<128x6x64xf32, #tpu.memory_space<vmem>>, vector<128x1x64xf32>
    %34 = vector.shape_cast %33 : vector<128x1x64xf32> to vector<128x64xf32>
    %cst_32 = arith.constant dense<0.000000e+00> : vector<128x128xf32>
    %35 = tpu.matmul %34, %5, %cst_32 {dimension_numbers = #tpu.dot_dimension_numbers<[1], [0], [0], [1], [0, 0, 1, 1], [], []>} : vector<128x64xf32>, vector<64x128xf32>, vector<128x128xf32> -> vector<128x128xf32>
    %36 = arith.addf %32, %35 : vector<128x128xf32>
    %c0_33 = arith.constant 0 : index
    %c2_34 = arith.constant 2 : index
    %c0_35 = arith.constant 0 : index
    %37 = vector.load %arg3[%c0_33, %c2_34, %c0_35] : memref<128x6x128xf32, #tpu.memory_space<vmem>>, vector<128x1x128xf32>
    %38 = vector.shape_cast %37 : vector<128x1x128xf32> to vector<128x128xf32>
    %39 = vector.shape_cast %36 : vector<128x128xf32> to vector<128x1x128xf32>
    tpu.vector_store %arg3[%c0_33, %c2_34, %c0_35], %39 {strides = array<i32>} : memref<128x6x128xf32, #tpu.memory_space<vmem>>, vector<128x1x128xf32>,
    %cst_36 = arith.constant dense<0.000000e+00> : vector<128x128xf32>
    %40 = tpu.matmul %24, %1, %cst_36 {dimension_numbers = #tpu.dot_dimension_numbers<[1], [0], [0], [1], [0, 0, 1, 1], [], []>} : vector<128x64xf32>, vector<64x128xf32>, vector<128x128xf32> -> vector<128x128xf32>
    %cst_37 = arith.constant dense<0.000000e+00> : vector<128x128xf32>
    %41 = tpu.matmul %34, %3, %cst_37 {dimension_numbers = #tpu.dot_dimension_numbers<[1], [0], [0], [1], [0, 0, 1, 1], [], []>} : vector<128x64xf32>, vector<64x128xf32>, vector<128x128xf32> -> vector<128x128xf32>
    %42 = arith.addf %40, %41 : vector<128x128xf32>
    %c0_38 = arith.constant 0 : index
    %c5 = arith.constant 5 : index
    %c0_39 = arith.constant 0 : index
    %43 = vector.load %arg1[%c0_38, %c5, %c0_39] : memref<128x6x64xf32, #tpu.memory_space<vmem>>, vector<128x1x64xf32>
    %44 = vector.shape_cast %43 : vector<128x1x64xf32> to vector<128x64xf32>
    %cst_40 = arith.constant dense<0.000000e+00> : vector<128x128xf32>
    %45 = tpu.matmul %44, %5, %cst_40 {dimension_numbers = #tpu.dot_dimension_numbers<[1], [0], [0], [1], [0, 0, 1, 1], [], []>} : vector<128x64xf32>, vector<64x128xf32>, vector<128x128xf32> -> vector<128x128xf32>
    %46 = arith.addf %42, %45 : vector<128x128xf32>
    %c0_41 = arith.constant 0 : index
    %c3_42 = arith.constant 3 : index
    %c0_43 = arith.constant 0 : index
    %47 = vector.load %arg3[%c0_41, %c3_42, %c0_43] : memref<128x6x128xf32, #tpu.memory_space<vmem>>, vector<128x1x128xf32>
    %48 = vector.shape_cast %47 : vector<128x1x128xf32> to vector<128x128xf32>
    %49 = vector.shape_cast %46 : vector<128x128xf32> to vector<128x1x128xf32>
    tpu.vector_store %arg3[%c0_41, %c3_42, %c0_43], %49 {strides = array<i32>} : memref<128x6x128xf32, #tpu.memory_space<vmem>>, vector<128x1x128xf32>,
    %cst_44 = arith.constant dense<0.000000e+00> : vector<128x128xf32>
    %50 = tpu.matmul %34, %1, %cst_44 {dimension_numbers = #tpu.dot_dimension_numbers<[1], [0], [0], [1], [0, 0, 1, 1], [], []>} : vector<128x64xf32>, vector<64x128xf32>, vector<128x128xf32> -> vector<128x128xf32>
    %cst_45 = arith.constant dense<0.000000e+00> : vector<128x128xf32>
    %51 = tpu.matmul %44, %3, %cst_45 {dimension_numbers = #tpu.dot_dimension_numbers<[1], [0], [0], [1], [0, 0, 1, 1], [], []>} : vector<128x64xf32>, vector<64x128xf32>, vector<128x128xf32> -> vector<128x128xf32>
    %52 = arith.addf %50, %51 : vector<128x128xf32>
    %cst_46 = arith.constant dense<0.000000e+00> : vector<128x128xf32>
    %53 = tpu.matmul %7, %5, %cst_46 {dimension_numbers = #tpu.dot_dimension_numbers<[1], [0], [0], [1], [0, 0, 1, 1], [], []>} : vector<128x64xf32>, vector<64x128xf32>, vector<128x128xf32> -> vector<128x128xf32>
    %54 = arith.addf %52, %53 : vector<128x128xf32>
    %c0_47 = arith.constant 0 : index
    %c4_48 = arith.constant 4 : index
    %c0_49 = arith.constant 0 : index
    %55 = vector.load %arg3[%c0_47, %c4_48, %c0_49] : memref<128x6x128xf32, #tpu.memory_space<vmem>>, vector<128x1x128xf32>
    %56 = vector.shape_cast %55 : vector<128x1x128xf32> to vector<128x128xf32>
    %57 = vector.shape_cast %54 : vector<128x128xf32> to vector<128x1x128xf32>
    tpu.vector_store %arg3[%c0_47, %c4_48, %c0_49], %57 {strides = array<i32>} : memref<128x6x128xf32, #tpu.memory_space<vmem>>, vector<128x1x128xf32>,
    %cst_50 = arith.constant dense<0.000000e+00> : vector<128x128xf32>
    %58 = tpu.matmul %44, %1, %cst_50 {dimension_numbers = #tpu.dot_dimension_numbers<[1], [0], [0], [1], [0, 0, 1, 1], [], []>} : vector<128x64xf32>, vector<64x128xf32>, vector<128x128xf32> -> vector<128x128xf32>
    %cst_51 = arith.constant dense<0.000000e+00> : vector<128x128xf32>
    %59 = tpu.matmul %7, %3, %cst_51 {dimension_numbers = #tpu.dot_dimension_numbers<[1], [0], [0], [1], [0, 0, 1, 1], [], []>} : vector<128x64xf32>, vector<64x128xf32>, vector<128x128xf32> -> vector<128x128xf32>
    %60 = arith.addf %58, %59 : vector<128x128xf32>
    %cst_52 = arith.constant dense<0.000000e+00> : vector<128x128xf32>
    %61 = tpu.matmul %10, %5, %cst_52 {dimension_numbers = #tpu.dot_dimension_numbers<[1], [0], [0], [1], [0, 0, 1, 1], [], []>} : vector<128x64xf32>, vector<64x128xf32>, vector<128x128xf32> -> vector<128x128xf32>
    %62 = arith.addf %60, %61 : vector<128x128xf32>
    %c0_53 = arith.constant 0 : index
    %c5_54 = arith.constant 5 : index
    %c0_55 = arith.constant 0 : index
    %63 = vector.load %arg3[%c0_53, %c5_54, %c0_55] : memref<128x6x128xf32, #tpu.memory_space<vmem>>, vector<128x1x128xf32>
    %64 = vector.shape_cast %63 : vector<128x1x128xf32> to vector<128x128xf32>
    %65 = vector.shape_cast %62 : vector<128x128xf32> to vector<128x1x128xf32>
    tpu.vector_store %arg3[%c0_53, %c5_54, %c0_55], %65 {strides = array<i32>} : memref<128x6x128xf32, #tpu.memory_space<vmem>>, vector<128x1x128xf32>,
    return
  }
  func.func @transform_0(%arg0: i32) -> (i32, i32, i32) {
    %c0_i32 = arith.constant 0 : i32
    %c0_i32_0 = arith.constant 0 : i32
    %c0_i32_1 = arith.constant 0 : i32
    return %arg0, %c0_i32, %c0_i32_0 : i32, i32, i32
  }
  func.func @transform_1(%arg0: i32) -> (i32, i32, i32) {
    %c0_i32 = arith.constant 0 : i32
    %c0_i32_0 = arith.constant 0 : i32
    %c0_i32_1 = arith.constant 0 : i32
    %c0_i32_2 = arith.constant 0 : i32
    return %c0_i32, %c0_i32_0, %c0_i32_1 : i32, i32, i32
  }
  func.func @transform_2(%arg0: i32) -> (i32, i32, i32) {
    %c0_i32 = arith.constant 0 : i32
    %c0_i32_0 = arith.constant 0 : i32
    %c0_i32_1 = arith.constant 0 : i32
    return %arg0, %c0_i32, %c0_i32_0 : i32, i32, i32
  }
}

</mosaic_0001>

<llo_original>
// kernel: tpu_custom_call.1
$region0: #{tpu_custom_call.1}
  #allocation0 [shape = 'u32[]', space=smem, size = 0x4, offset = 0x4, fixed_abs, tag = 'smem constant byte address 0x4 - core index']
  #allocation1 [shape = 'u32[144,128]{1,0:T(1,128)}', space=vmem, size = 0x12000, scoped, tag = 'internal scratch']
  %s0 = inlined_call_operand.vmem [shape: f32[200,6,64], index: 0, kind: input, shape index: {}]
  %s1 = inlined_call_operand.vmem [shape: f32[3,64,128], index: 1, kind: input, shape index: {}]
  %s2 = inlined_call_operand.vmem [shape: f32[200,6,128], index: 2, kind: output, shape index: {}]
  %s3 = sld [smem:[#allocation0]]
  $region89: #{tpu_custom_call.1} parent=0
    _
  %s5 = ssub.s32 1, %s3
  %s6 = scalar_select 0, %s5, %s3
  $region1: #{tpu_custom_call.1} parent=0
    #allocation2 [shape = 'u8[1048576]{0}', space=vmem, size = 0x100000, scoped, tag = 'output window, operand 0']
    loop: start=0, step=1, limit=4
    $region2: #{tpu_custom_call.1} parent=1 // loop_pre_header
      _
    $region3: #{tpu_custom_call.1} parent=1 // loop_header
      %s8 = sphi 0, %s12
      %p9 = scmp.ge.s32.totalorder %s8, 4
      %s18 = sphi 0, %s20
      %s21 = sphi 0, %s18
      %s22 = sphi 0, %s21
      %s38 = sphi 0, %s22
      %s42 = sphi 0, %s42
      %s44 = sphi 0, %s42
      %s45 = sphi 0, %s44
      %s59 = sphi 0, %s45
      %s65 = sphi 0, %s67
      %s68 = sphi 0, %s65
      %s69 = sphi 0, %s68
      %s85 = sphi 0, %s69
    $region4: #{tpu_custom_call.1} parent=1 // loop_header_branch
      %11 = sbr.rel (%p9) target = $region8
    $region5: #{tpu_custom_call.1} parent=1 // loop_body
      %s13 = ssub.s32 %s8, 1
      %s14 = ssub.s32 %s8, 2
      %s15 = sadd.s32 %s8, 1
      %s16 = ssub.s32 %s8, %s15
      %p17 = scmp.eq.s32.totalorder %s16, 0
      %s19 = sadd.s32 %s18, 1
      %s20 = scalar_select %p17, %s18, %s19
      %p23 = pneg %p17
      %p24 = scmp.eq.s32.totalorder %s8, 1
      %p25 = por %p23, %p24
      %p26 = scmp.ne.s32.totalorder %s18, %s21
      %p27 = scmp.eq.s32.totalorder %s8, 0
      %p28 = por %p26, %p27
      %p29 = scmp.ne.s32.totalorder %s18, %s21
      %p30 = scmp.eq.s32.totalorder %s13, 1
      %p31 = por %p29, %p30
      %p32 = scmp.ne.s32.totalorder %s21, %s22
      %p33 = scmp.eq.s32.totalorder %s13, 0
      %p34 = por %p32, %p33
      %p35 = scmp.ne.s32.totalorder %s21, %s22
      %p36 = scmp.eq.s32.totalorder %s14, 1
      %p37 = por %p35, %p36
      %p39 = scmp.ne.s32.totalorder %s22, %s38
      %p40 = scmp.eq.s32.totalorder %s14, 0
      %p41 = por %p39, %p40
      %s43 = sadd.s32 %s42, 1
      %p46 = scmp.eq.s32.totalorder %s8, 1
      %p47 = scmp.ne.s32.totalorder %s42, %s44
      %p48 = scmp.eq.s32.totalorder %s8, 0
      %p49 = por %p47, %p48
      %p50 = scmp.ne.s32.totalorder %s42, %s44
      %p51 = scmp.eq.s32.totalorder %s13, 1
      %p52 = por %p50, %p51
      %p53 = scmp.ne.s32.totalorder %s44, %s45
      %p54 = scmp.eq.s32.totalorder %s13, 0
      %p55 = por %p53, %p54
      %p56 = scmp.ne.s32.totalorder %s44, %s45
      %p57 = scmp.eq.s32.totalorder %s14, 1
      %p58 = por %p56, %p57
      %p60 = scmp.ne.s32.totalorder %s45, %s59
      %p61 = scmp.eq.s32.totalorder %s14, 0
      %p62 = por %p60, %p61
      %s63 = ssub.s32 %s8, %s15
      %p64 = scmp.eq.s32.totalorder %s63, 0
      %s66 = sadd.s32 %s65, 1
      %s67 = scalar_select %p64, %s65, %s66
      %p70 = pneg %p64
      %p71 = scmp.eq.s32.totalorder %s8, 1
      %p72 = por %p70, %p71
      %p73 = scmp.ne.s32.totalorder %s65, %s68
      %p74 = scmp.eq.s32.totalorder %s8, 0
      %p75 = por %p73, %p74
      %p76 = scmp.ne.s32.totalorder %s65, %s68
      %p77 = scmp.eq.s32.totalorder %s13, 1
      %p78 = por %p76, %p77
      %p79 = scmp.ne.s32.totalorder %s68, %s69
      %p80 = scmp.eq.s32.totalorder %s13, 0
      %p81 = por %p79, %p80
      %p82 = scmp.ne.s32.totalorder %s68, %s69
      %p83 = scmp.eq.s32.totalorder %s14, 1
      %p84 = por %p82, %p83
      %p86 = scmp.ne.s32.totalorder %s69, %s85
      %p87 = scmp.eq.s32.totalorder %s14, 0
      %p88 = por %p86, %p87
      %p89 = scmp.le.s32.totalorder 1, %s8
      %p90 = scmp.lt.s32.totalorder %s8, 3
      %p91 = pnand %p89, %p90
      %p92 = pneg %p91
      // Predicated region
      $region9: #{tpu_custom_call.1} parent=5 // pred_check
        _
      $region10: #{tpu_custom_call.1} parent=5 // pred_check_branch
        %94 = sbr.rel (%p91) target = $region12
      $region11: #{tpu_custom_call.1} parent=5 // pred_region
        %s95 = ssub.s32 %s8, 1
        // Predicated region
        $region13: #{tpu_custom_call.1} parent=11 // pred_check
          %p96 = pneg %p55
        $region14: #{tpu_custom_call.1} parent=11 // pred_check_branch
          %98 = sbr.rel (%p96) target = $region16
        $region15: #{tpu_custom_call.1} parent=11 // pred_region
          _
        $region16: #{tpu_custom_call.1} parent=11 // pred_fallthru
          _
      $region12: #{tpu_custom_call.1} parent=5 // pred_fallthru
        _
      %p99 = scmp.lt.s32.totalorder %s8, 2
      // Predicated region
      $region17: #{tpu_custom_call.1} parent=5 // pred_check
        %p100 = pneg %p99
      $region18: #{tpu_custom_call.1} parent=5 // pred_check_branch
        %102 = sbr.rel (%p100) target = $region20
      $region19: #{tpu_custom_call.1} parent=5 // pred_region
        // Predicated region
        $region21: #{tpu_custom_call.1} parent=19 // pred_check
          %p103 = pneg %p28
        $region22: #{tpu_custom_call.1} parent=19 // pred_check_branch
          %105 = sbr.rel (%p103) target = $region24
        $region23: #{tpu_custom_call.1} parent=19 // pred_region
          %s106 = smul.u32 128, %s8
          %s107 = ssub.s32 200, %s106
          %p108 = scmp.lt.s32.totalorder %s107, 128
          %s109 = scalar_select %p108, %s107, 128
          %s110 = smul.u32 128, %s109
          %p111 = scmp.lt.s32.totalorder %s106, 199
          %s112 = scalar_select %p111, %s106, 199
          %s113 = smul.addr %s112, 8
          %s114 = scalar_lea.vmem %s0, %s113
          %s115 = smul.u32 128, %s8
          %s116 = ssub.s32 200, %s115
          %p117 = scmp.lt.s32.totalorder %s116, 128
          %s118 = scalar_select %p117, %s116, 128
          %s119 = smul.u32 128, %s118
        $region24: #{tpu_custom_call.1} parent=19 // pred_fallthru
          _
      $region20: #{tpu_custom_call.1} parent=5 // pred_fallthru
        _
      %p120 = scmp.le.s32.totalorder 1, %s8
      %p121 = scmp.lt.s32.totalorder %s8, 3
      %p122 = pnand %p120, %p121
      %p123 = pneg %p122
      // Predicated region
      $region25: #{tpu_custom_call.1} parent=5 // pred_check
        _
      $region26: #{tpu_custom_call.1} parent=5 // pred_check_branch
        %125 = sbr.rel (%p122) target = $region28
      $region27: #{tpu_custom_call.1} parent=5 // pred_region
        %s126 = ssub.s32 %s8, 1
        %s127 = smul.u32 128, %s13
        %s128 = ssub.s32 200, %s127
        %p129 = scmp.lt.s32.totalorder %s128, 128
        %s130 = scalar_select %p129, %s128, 128
        %s131 = smul.u32 128, %s130
        %p132 = scmp.lt.s32.totalorder %s127, 199
        %s133 = scalar_select %p132, %s127, 199
        %s134 = smul.addr %s133, 8
        %s135 = scalar_lea.vmem %s0, %s134
        %p136 = pneg %p34
        %p137 = pneg %p31
        %p138 = pneg %p55
        %p139 = pneg %p52
        %p140 = pneg %p81
        %p141 = pneg %p78
        %s142 = sand.u32 %s68, 1
        %s143 = sand.u32 %s68, 1
        %s144 = smul.addr %s143, 1024
        %s145 = scalar_lea.vmem [#allocation2], %s144
        %s146 = smul.u32 128, %s13
        %s147 = ssub.s32 200, %s146
        %p148 = scmp.lt.s32.totalorder %s147, 128
        %s149 = scalar_select %p148, %s147, 128
        %s150 = smul.u32 128, %s149
        %p151 = scmp.lt.s32.totalorder %s146, 199
        %s152 = scalar_select %p151, %s146, 199
        %s153 = smul.addr %s152, 8
        %s154 = scalar_lea.vmem %s0, %s153
        %s155 = smul.u32 128, %s13
        %s156 = ssub.s32 200, %s155
        %p157 = scmp.lt.s32.totalorder %s156, 128
        %s158 = scalar_select %p157, %s156, 128
        %s159 = smul.u32 128, %s158
        %s160 = smul.u32 128, %s13
        %s161 = ssub.s32 200, %s160
        %p162 = scmp.lt.s32.totalorder %s161, 128
        %s163 = scalar_select %p162, %s161, 128
        %s164 = smul.u32 128, %s163
        %v165 = vld [vmem:[%s1] sm:$0xff]
        %v166 = vld [vmem:[%s1 + $0x8] sm:$0xff]
        %v167 = vld [vmem:[%s1 + $0x10] sm:$0xff]
        %v168 = vld [vmem:[%s1 + $0x18] sm:$0xff]
        %v169 = vld [vmem:[%s1 + $0x20] sm:$0xff]
        %v170 = vld [vmem:[%s1 + $0x28] sm:$0xff]
        %v171 = vld [vmem:[%s1 + $0x30] sm:$0xff]
        %v172 = vld [vmem:[%s1 + $0x38] sm:$0xff]
        %s173 = scalar_lea.vmem %s1, 64
        %v174 = vld [vmem:[%s173] sm:$0xff]
        %v175 = vld [vmem:[%s173 + $0x8] sm:$0xff]
        %v176 = vld [vmem:[%s173 + $0x10] sm:$0xff]
        %v177 = vld [vmem:[%s173 + $0x18] sm:$0xff]
        %v178 = vld [vmem:[%s173 + $0x20] sm:$0xff]
        %v179 = vld [vmem:[%s173 + $0x28] sm:$0xff]
        %v180 = vld [vmem:[%s173 + $0x30] sm:$0xff]
        %v181 = vld [vmem:[%s173 + $0x38] sm:$0xff]
        %s182 = scalar_lea.vmem %s1, 128
        %v183 = vld [vmem:[%s182] sm:$0xff]
        %v184 = vld [vmem:[%s182 + $0x8] sm:$0xff]
        %v185 = vld [vmem:[%s182 + $0x10] sm:$0xff]
        %v186 = vld [vmem:[%s182 + $0x18] sm:$0xff]
        %v187 = vld [vmem:[%s182 + $0x20] sm:$0xff]
        %v188 = vld [vmem:[%s182 + $0x28] sm:$0xff]
        %v189 = vld [vmem:[%s182 + $0x30] sm:$0xff]
        %v190 = vld [vmem:[%s182 + $0x38] sm:$0xff]
        %v191 = vld [vmem:[%s154] sm:$0x1]
        %v192 = vld [vmem:[%s154 + $0x8] sm:$0x1]
        %v193 = vld [vmem:[%s154 + $0x10] sm:$0x1]
        %v194 = vld [vmem:[%s154 + $0x18] sm:$0x1]
        %v195 = vld [vmem:[%s154 + $0x20] sm:$0x1]
        %v196 = vld [vmem:[%s154 + $0x28] sm:$0x1]
        %v197 = vld [vmem:[%s154 + $0x30] sm:$0x1]
        %v198 = vld [vmem:[%s154 + $0x38] sm:$0x1]
        %v199 = vld [vmem:[%s154 + $0x40] sm:$0x1]
        %v200 = vld [vmem:[%s154 + $0x48] sm:$0x1]
        %v201 = vld [vmem:[%s154 + $0x50] sm:$0x1]
        %v202 = vld [vmem:[%s154 + $0x58] sm:$0x1]
        %v203 = vld [vmem:[%s154 + $0x60] sm:$0x1]
        %v204 = vld [vmem:[%s154 + $0x68] sm:$0x1]
        %v205 = vld [vmem:[%s154 + $0x70] sm:$0x1]
        %v206 = vld [vmem:[%s154 + $0x78] sm:$0x1]
        %v207 = vld [vmem:[%s154 + $0x80] sm:$0x1]
        %v208 = vld [vmem:[%s154 + $0x88] sm:$0x1]
        %v209 = vld [vmem:[%s154 + $0x90] sm:$0x1]
        %v210 = vld [vmem:[%s154 + $0x98] sm:$0x1]
        %v211 = vld [vmem:[%s154 + $0xa0] sm:$0x1]
        %v212 = vld [vmem:[%s154 + $0xa8] sm:$0x1]
        %v213 = vld [vmem:[%s154 + $0xb0] sm:$0x1]
        %v214 = vld [vmem:[%s154 + $0xb8] sm:$0x1]
        %v215 = vld [vmem:[%s154 + $0xc0] sm:$0x1]
        %v216 = vld [vmem:[%s154 + $0xc8] sm:$0x1]
        %v217 = vld [vmem:[%s154 + $0xd0] sm:$0x1]
        %v218 = vld [vmem:[%s154 + $0xd8] sm:$0x1]
        %v219 = vld [vmem:[%s154 + $0xe0] sm:$0x1]
        %v220 = vld [vmem:[%s154 + $0xe8] sm:$0x1]
        %v221 = vld [vmem:[%s154 + $0xf0] sm:$0x1]
        %v222 = vld [vmem:[%s154 + $0xf8] sm:$0x1]
        %v223 = vld [vmem:[%s154 + $0x100] sm:$0x1]
        %v224 = vld [vmem:[%s154 + $0x108] sm:$0x1]
        %v225 = vld [vmem:[%s154 + $0x110] sm:$0x1]
        %v226 = vld [vmem:[%s154 + $0x118] sm:$0x1]
        %v227 = vld [vmem:[%s154 + $0x120] sm:$0x1]
        %v228 = vld [vmem:[%s154 + $0x128] sm:$0x1]
        %v229 = vld [vmem:[%s154 + $0x130] sm:$0x1]
        %v230 = vld [vmem:[%s154 + $0x138] sm:$0x1]
        %v231 = vld [vmem:[%s154 + $0x140] sm:$0x1]
        %v232 = vld [vmem:[%s154 + $0x148] sm:$0x1]
        %v233 = vld [vmem:[%s154 + $0x150] sm:$0x1]
        %v234 = vld [vmem:[%s154 + $0x158] sm:$0x1]
        %v235 = vld [vmem:[%s154 + $0x160] sm:$0x1]
        %v236 = vld [vmem:[%s154 + $0x168] sm:$0x1]
        %v237 = vld [vmem:[%s154 + $0x170] sm:$0x1]
        %v238 = vld [vmem:[%s154 + $0x178] sm:$0x1]
        %v239 = vld [vmem:[%s154 + $0x180] sm:$0x1]
        %v240 = vld [vmem:[%s154 + $0x188] sm:$0x1]
        %v241 = vld [vmem:[%s154 + $0x190] sm:$0x1]
        %v242 = vld [vmem:[%s154 + $0x198] sm:$0x1]
        %v243 = vld [vmem:[%s154 + $0x1a0] sm:$0x1]
        %v244 = vld [vmem:[%s154 + $0x1a8] sm:$0x1]
        %v245 = vld [vmem:[%s154 + $0x1b0] sm:$0x1]
        %v246 = vld [vmem:[%s154 + $0x1b8] sm:$0x1]
        %v247 = vld [vmem:[%s154 + $0x1c0] sm:$0x1]
        %v248 = vld [vmem:[%s154 + $0x1c8] sm:$0x1]
        %v249 = vld [vmem:[%s154 + $0x1d0] sm:$0x1]
        %v250 = vld [vmem:[%s154 + $0x1d8] sm:$0x1]
        %v251 = vld [vmem:[%s154 + $0x1e0] sm:$0x1]
        %v252 = vld [vmem:[%s154 + $0x1e8] sm:$0x1]
        %v253 = vld [vmem:[%s154 + $0x1f0] sm:$0x1]
        %v254 = vld [vmem:[%s154 + $0x1f8] sm:$0x1]
        %v255 = vld [vmem:[%s154 + $0x200] sm:$0x1]
        %v256 = vld [vmem:[%s154 + $0x208] sm:$0x1]
        %v257 = vld [vmem:[%s154 + $0x210] sm:$0x1]
        %v258 = vld [vmem:[%s154 + $0x218] sm:$0x1]
        %v259 = vld [vmem:[%s154 + $0x220] sm:$0x1]
        %v260 = vld [vmem:[%s154 + $0x228] sm:$0x1]
        %v261 = vld [vmem:[%s154 + $0x230] sm:$0x1]
        %v262 = vld [vmem:[%s154 + $0x238] sm:$0x1]
        %v263 = vld [vmem:[%s154 + $0x240] sm:$0x1]
        %v264 = vld [vmem:[%s154 + $0x248] sm:$0x1]
        %v265 = vld [vmem:[%s154 + $0x250] sm:$0x1]
        %v266 = vld [vmem:[%s154 + $0x258] sm:$0x1]
        %v267 = vld [vmem:[%s154 + $0x260] sm:$0x1]
        %v268 = vld [vmem:[%s154 + $0x268] sm:$0x1]
        %v269 = vld [vmem:[%s154 + $0x270] sm:$0x1]
        %v270 = vld [vmem:[%s154 + $0x278] sm:$0x1]
        %v271 = vld [vmem:[%s154 + $0x280] sm:$0x1]
        %v272 = vld [vmem:[%s154 + $0x288] sm:$0x1]
        %v273 = vld [vmem:[%s154 + $0x290] sm:$0x1]
        %v274 = vld [vmem:[%s154 + $0x298] sm:$0x1]
        %v275 = vld [vmem:[%s154 + $0x2a0] sm:$0x1]
        %v276 = vld [vmem:[%s154 + $0x2a8] sm:$0x1]
        %v277 = vld [vmem:[%s154 + $0x2b0] sm:$0x1]
        %v278 = vld [vmem:[%s154 + $0x2b8] sm:$0x1]
        %v279 = vld [vmem:[%s154 + $0x2c0] sm:$0x1]
        %v280 = vld [vmem:[%s154 + $0x2c8] sm:$0x1]
        %v281 = vld [vmem:[%s154 + $0x2d0] sm:$0x1]
        %v282 = vld [vmem:[%s154 + $0x2d8] sm:$0x1]
        %v283 = vld [vmem:[%s154 + $0x2e0] sm:$0x1]
        %v284 = vld [vmem:[%s154 + $0x2e8] sm:$0x1]
        %v285 = vld [vmem:[%s154 + $0x2f0] sm:$0x1]
        %v286 = vld [vmem:[%s154 + $0x2f8] sm:$0x1]
        %v287 = vld [vmem:[%s154 + $0x300] sm:$0x1]
        %v288 = vld [vmem:[%s154 + $0x308] sm:$0x1]
        %v289 = vld [vmem:[%s154 + $0x310] sm:$0x1]
        %v290 = vld [vmem:[%s154 + $0x318] sm:$0x1]
        %v291 = vld [vmem:[%s154 + $0x320] sm:$0x1]
        %v292 = vld [vmem:[%s154 + $0x328] sm:$0x1]
        %v293 = vld [vmem:[%s154 + $0x330] sm:$0x1]
        %v294 = vld [vmem:[%s154 + $0x338] sm:$0x1]
        %v295 = vld [vmem:[%s154 + $0x340] sm:$0x1]
        %v296 = vld [vmem:[%s154 + $0x348] sm:$0x1]
        %v297 = vld [vmem:[%s154 + $0x350] sm:$0x1]
        %v298 = vld [vmem:[%s154 + $0x358] sm:$0x1]
        %v299 = vld [vmem:[%s154 + $0x360] sm:$0x1]
        %v300 = vld [vmem:[%s154 + $0x368] sm:$0x1]
        %v301 = vld [vmem:[%s154 + $0x370] sm:$0x1]
        %v302 = vld [vmem:[%s154 + $0x378] sm:$0x1]
        %v303 = vld [vmem:[%s154 + $0x380] sm:$0x1]
        %v304 = vld [vmem:[%s154 + $0x388] sm:$0x1]
        %v305 = vld [vmem:[%s154 + $0x390] sm:$0x1]
        %v306 = vld [vmem:[%s154 + $0x398] sm:$0x1]
        %v307 = vld [vmem:[%s154 + $0x3a0] sm:$0x1]
        %v308 = vld [vmem:[%s154 + $0x3a8] sm:$0x1]
        %v309 = vld [vmem:[%s154 + $0x3b0] sm:$0x1]
        %v310 = vld [vmem:[%s154 + $0x3b8] sm:$0x1]
        %v311 = vld [vmem:[%s154 + $0x3c0] sm:$0x1]
        %v312 = vld [vmem:[%s154 + $0x3c8] sm:$0x1]
        %v313 = vld [vmem:[%s154 + $0x3d0] sm:$0x1]
        %v314 = vld [vmem:[%s154 + $0x3d8] sm:$0x1]
        %v315 = vld [vmem:[%s154 + $0x3e0] sm:$0x1]
        %v316 = vld [vmem:[%s154 + $0x3e8] sm:$0x1]
        %v317 = vld [vmem:[%s154 + $0x3f0] sm:$0x1]
        %v318 = vld [vmem:[%s154 + $0x3f8] sm:$0x1]
        %v319 = vld [vmem:[%s154 + $0x1] sm:$0x1]
        %v320 = vld [vmem:[%s154 + $0x9] sm:$0x1]
        %v321 = vld [vmem:[%s154 + $0x11] sm:$0x1]
        %v322 = vld [vmem:[%s154 + $0x19] sm:$0x1]
        %v323 = vld [vmem:[%s154 + $0x21] sm:$0x1]
        %v324 = vld [vmem:[%s154 + $0x29] sm:$0x1]
        %v325 = vld [vmem:[%s154 + $0x31] sm:$0x1]
        %v326 = vld [vmem:[%s154 + $0x39] sm:$0x1]
        %v327 = vld [vmem:[%s154 + $0x41] sm:$0x1]
        %v328 = vld [vmem:[%s154 + $0x49] sm:$0x1]
        %v329 = vld [vmem:[%s154 + $0x51] sm:$0x1]
        %v330 = vld [vmem:[%s154 + $0x59] sm:$0x1]
        %v331 = vld [vmem:[%s154 + $0x61] sm:$0x1]
        %v332 = vld [vmem:[%s154 + $0x69] sm:$0x1]
        %v333 = vld [vmem:[%s154 + $0x71] sm:$0x1]
        %v334 = vld [vmem:[%s154 + $0x79] sm:$0x1]
        %v335 = vld [vmem:[%s154 + $0x81] sm:$0x1]
        %v336 = vld [vmem:[%s154 + $0x89] sm:$0x1]
        %v337 = vld [vmem:[%s154 + $0x91] sm:$0x1]
        %v338 = vld [vmem:[%s154 + $0x99] sm:$0x1]
        %v339 = vld [vmem:[%s154 + $0xa1] sm:$0x1]
        %v340 = vld [vmem:[%s154 + $0xa9] sm:$0x1]
        %v341 = vld [vmem:[%s154 + $0xb1] sm:$0x1]
        %v342 = vld [vmem:[%s154 + $0xb9] sm:$0x1]
        %v343 = vld [vmem:[%s154 + $0xc1] sm:$0x1]
        %v344 = vld [vmem:[%s154 + $0xc9] sm:$0x1]
        %v345 = vld [vmem:[%s154 + $0xd1] sm:$0x1]
        %v346 = vld [vmem:[%s154 + $0xd9] sm:$0x1]
        %v347 = vld [vmem:[%s154 + $0xe1] sm:$0x1]
        %v348 = vld [vmem:[%s154 + $0xe9] sm:$0x1]
        %v349 = vld [vmem:[%s154 + $0xf1] sm:$0x1]
        %v350 = vld [vmem:[%s154 + $0xf9] sm:$0x1]
        %v351 = vld [vmem:[%s154 + $0x101] sm:$0x1]
        %v352 = vld [vmem:[%s154 + $0x109] sm:$0x1]
        %v353 = vld [vmem:[%s154 + $0x111] sm:$0x1]
        %v354 = vld [vmem:[%s154 + $0x119] sm:$0x1]
        %v355 = vld [vmem:[%s154 + $0x121] sm:$0x1]
        %v356 = vld [vmem:[%s154 + $0x129] sm:$0x1]
        %v357 = vld [vmem:[%s154 + $0x131] sm:$0x1]
        %v358 = vld [vmem:[%s154 + $0x139] sm:$0x1]
        %v359 = vld [vmem:[%s154 + $0x141] sm:$0x1]
        %v360 = vld [vmem:[%s154 + $0x149] sm:$0x1]
        %v361 = vld [vmem:[%s154 + $0x151] sm:$0x1]
        %v362 = vld [vmem:[%s154 + $0x159] sm:$0x1]
        %v363 = vld [vmem:[%s154 + $0x161] sm:$0x1]
        %v364 = vld [vmem:[%s154 + $0x169] sm:$0x1]
        %v365 = vld [vmem:[%s154 + $0x171] sm:$0x1]
        %v366 = vld [vmem:[%s154 + $0x179] sm:$0x1]
        %v367 = vld [vmem:[%s154 + $0x181] sm:$0x1]
        %v368 = vld [vmem:[%s154 + $0x189] sm:$0x1]
        %v369 = vld [vmem:[%s154 + $0x191] sm:$0x1]
        %v370 = vld [vmem:[%s154 + $0x199] sm:$0x1]
        %v371 = vld [vmem:[%s154 + $0x1a1] sm:$0x1]
        %v372 = vld [vmem:[%s154 + $0x1a9] sm:$0x1]
        %v373 = vld [vmem:[%s154 + $0x1b1] sm:$0x1]
        %v374 = vld [vmem:[%s154 + $0x1b9] sm:$0x1]
        %v375 = vld [vmem:[%s154 + $0x1c1] sm:$0x1]
        %v376 = vld [vmem:[%s154 + $0x1c9] sm:$0x1]
        %v377 = vld [vmem:[%s154 + $0x1d1] sm:$0x1]
        %v378 = vld [vmem:[%s154 + $0x1d9] sm:$0x1]
        %v379 = vld [vmem:[%s154 + $0x1e1] sm:$0x1]
        %v380 = vld [vmem:[%s154 + $0x1e9] sm:$0x1]
        %v381 = vld [vmem:[%s154 + $0x1f1] sm:$0x1]
        %v382 = vld [vmem:[%s154 + $0x1f9] sm:$0x1]
        %v383 = vld [vmem:[%s154 + $0x201] sm:$0x1]
        %v384 = vld [vmem:[%s154 + $0x209] sm:$0x1]
        %v385 = vld [vmem:[%s154 + $0x211] sm:$0x1]
        %v386 = vld [vmem:[%s154 + $0x219] sm:$0x1]
        %v387 = vld [vmem:[%s154 + $0x221] sm:$0x1]
        %v388 = vld [vmem:[%s154 + $0x229] sm:$0x1]
        %v389 = vld [vmem:[%s154 + $0x231] sm:$0x1]
        %v390 = vld [vmem:[%s154 + $0x239] sm:$0x1]
        %v391 = vld [vmem:[%s154 + $0x241] sm:$0x1]
        %v392 = vld [vmem:[%s154 + $0x249] sm:$0x1]
        %v393 = vld [vmem:[%s154 + $0x251] sm:$0x1]
        %v394 = vld [vmem:[%s154 + $0x259] sm:$0x1]
        %v395 = vld [vmem:[%s154 + $0x261] sm:$0x1]
        %v396 = vld [vmem:[%s154 + $0x269] sm:$0x1]
        %v397 = vld [vmem:[%s154 + $0x271] sm:$0x1]
        %v398 = vld [vmem:[%s154 + $0x279] sm:$0x1]
        %v399 = vld [vmem:[%s154 + $0x281] sm:$0x1]
        %v400 = vld [vmem:[%s154 + $0x289] sm:$0x1]
        %v401 = vld [vmem:[%s154 + $0x291] sm:$0x1]
        %v402 = vld [vmem:[%s154 + $0x299] sm:$0x1]
        %v403 = vld [vmem:[%s154 + $0x2a1] sm:$0x1]
        %v404 = vld [vmem:[%s154 + $0x2a9] sm:$0x1]
        %v405 = vld [vmem:[%s154 + $0x2b1] sm:$0x1]
        %v406 = vld [vmem:[%s154 + $0x2b9] sm:$0x1]
        %v407 = vld [vmem:[%s154 + $0x2c1] sm:$0x1]
        %v408 = vld [vmem:[%s154 + $0x2c9] sm:$0x1]
        %v409 = vld [vmem:[%s154 + $0x2d1] sm:$0x1]
        %v410 = vld [vmem:[%s154 + $0x2d9] sm:$0x1]
        %v411 = vld [vmem:[%s154 + $0x2e1] sm:$0x1]
        %v412 = vld [vmem:[%s154 + $0x2e9] sm:$0x1]
        %v413 = vld [vmem:[%s154 + $0x2f1] sm:$0x1]
        %v414 = vld [vmem:[%s154 + $0x2f9] sm:$0x1]
        %v415 = vld [vmem:[%s154 + $0x301] sm:$0x1]
        %v416 = vld [vmem:[%s154 + $0x309] sm:$0x1]
        %v417 = vld [vmem:[%s154 + $0x311] sm:$0x1]
        %v418 = vld [vmem:[%s154 + $0x319] sm:$0x1]
        %v419 = vld [vmem:[%s154 + $0x321] sm:$0x1]
        %v420 = vld [vmem:[%s154 + $0x329] sm:$0x1]
        %v421 = vld [vmem:[%s154 + $0x331] sm:$0x1]
        %v422 = vld [vmem:[%s154 + $0x339] sm:$0x1]
        %v423 = vld [vmem:[%s154 + $0x341] sm:$0x1]
        %v424 = vld [vmem:[%s154 + $0x349] sm:$0x1]
        %v425 = vld [vmem:[%s154 + $0x351] sm:$0x1]
        %v426 = vld [vmem:[%s154 + $0x359] sm:$0x1]
        %v427 = vld [vmem:[%s154 + $0x361] sm:$0x1]
        %v428 = vld [vmem:[%s154 + $0x369] sm:$0x1]
        %v429 = vld [vmem:[%s154 + $0x371] sm:$0x1]
        %v430 = vld [vmem:[%s154 + $0x379] sm:$0x1]
        %v431 = vld [vmem:[%s154 + $0x381] sm:$0x1]
        %v432 = vld [vmem:[%s154 + $0x389] sm:$0x1]
        %v433 = vld [vmem:[%s154 + $0x391] sm:$0x1]
        %v434 = vld [vmem:[%s154 + $0x399] sm:$0x1]
        %v435 = vld [vmem:[%s154 + $0x3a1] sm:$0x1]
        %v436 = vld [vmem:[%s154 + $0x3a9] sm:$0x1]
        %v437 = vld [vmem:[%s154 + $0x3b1] sm:$0x1]
        %v438 = vld [vmem:[%s154 + $0x3b9] sm:$0x1]
        %v439 = vld [vmem:[%s154 + $0x3c1] sm:$0x1]
        %v440 = vld [vmem:[%s154 + $0x3c9] sm:$0x1]
        %v441 = vld [vmem:[%s154 + $0x3d1] sm:$0x1]
        %v442 = vld [vmem:[%s154 + $0x3d9] sm:$0x1]
        %v443 = vld [vmem:[%s154 + $0x3e1] sm:$0x1]
        %v444 = vld [vmem:[%s154 + $0x3e9] sm:$0x1]
        %v445 = vld [vmem:[%s154 + $0x3f1] sm:$0x1]
        %v446 = vld [vmem:[%s154 + $0x3f9] sm:$0x1]
        %v575 = vrot.slane %v320, 7
        %vm576 = vcmask 1041409
        %v577 = vsel %vm576, %v575, %v319
        %v578 = vrot.slane %v321, 6
        %vm579 = vcmask 1042434
        %v580 = vsel %vm579, %v578, %v577
        %v581 = vrot.slane %v322, 5
        %vm582 = vcmask 1043459
        %v583 = vsel %vm582, %v581, %v580
        %v584 = vrot.slane %v323, 4
        %vm585 = vcmask 1044484
        %v586 = vsel %vm585, %v584, %v583
        %v587 = vrot.slane %v324, 3
        %vm588 = vcmask 1045509
        %v589 = vsel %vm588, %v587, %v586
        %v590 = vrot.slane %v325, 2
        %vm591 = vcmask 1046534
        %v592 = vsel %vm591, %v590, %v589
        %v593 = vrot.slane %v326, 1
        %vm594 = vcmask 1047559
        %v595 = vsel %vm594, %v593, %v592
        %v596 = vrot.slane %v328, 7
        %v597 = vsel %vm576, %v596, %v327
        %v598 = vrot.slane %v329, 6
        %v599 = vsel %vm579, %v598, %v597
        %v600 = vrot.slane %v330, 5
        %v601 = vsel %vm582, %v600, %v599
        %v602 = vrot.slane %v331, 4
        %v603 = vsel %vm585, %v602, %v601
        %v604 = vrot.slane %v332, 3
        %v605 = vsel %vm588, %v604, %v603
        %v606 = vrot.slane %v333, 2
        %v607 = vsel %vm591, %v606, %v605
        %v608 = vrot.slane %v334, 1
        %v609 = vsel %vm594, %v608, %v607
        %v610 = vrot.slane %v336, 7
        %v611 = vsel %vm576, %v610, %v335
        %v612 = vrot.slane %v337, 6
        %v613 = vsel %vm579, %v612, %v611
        %v614 = vrot.slane %v338, 5
        %v615 = vsel %vm582, %v614, %v613
        %v616 = vrot.slane %v339, 4
        %v617 = vsel %vm585, %v616, %v615
        %v618 = vrot.slane %v340, 3
        %v619 = vsel %vm588, %v618, %v617
        %v620 = vrot.slane %v341, 2
        %v621 = vsel %vm591, %v620, %v619
        %v622 = vrot.slane %v342, 1
        %v623 = vsel %vm594, %v622, %v621
        %v624 = vrot.slane %v344, 7
        %v625 = vsel %vm576, %v624, %v343
        %v626 = vrot.slane %v345, 6
        %v627 = vsel %vm579, %v626, %v625
        %v628 = vrot.slane %v346, 5
        %v629 = vsel %vm582, %v628, %v627
        %v630 = vrot.slane %v347, 4
        %v631 = vsel %vm585, %v630, %v629
        %v632 = vrot.slane %v348, 3
        %v633 = vsel %vm588, %v632, %v631
        %v634 = vrot.slane %v349, 2
        %v635 = vsel %vm591, %v634, %v633
        %v636 = vrot.slane %v350, 1
        %v637 = vsel %vm594, %v636, %v635
        %v638 = vrot.slane %v352, 7
        %v639 = vsel %vm576, %v638, %v351
        %v640 = vrot.slane %v353, 6
        %v641 = vsel %vm579, %v640, %v639
        %v642 = vrot.slane %v354, 5
        %v643 = vsel %vm582, %v642, %v641
        %v644 = vrot.slane %v355, 4
        %v645 = vsel %vm585, %v644, %v643
        %v646 = vrot.slane %v356, 3
        %v647 = vsel %vm588, %v646, %v645
        %v648 = vrot.slane %v357, 2
        %v649 = vsel %vm591, %v648, %v647
        %v650 = vrot.slane %v358, 1
        %v651 = vsel %vm594, %v650, %v649
        %v652 = vrot.slane %v360, 7
        %v653 = vsel %vm576, %v652, %v359
        %v654 = vrot.slane %v361, 6
        %v655 = vsel %vm579, %v654, %v653
        %v656 = vrot.slane %v362, 5
        %v657 = vsel %vm582, %v656, %v655
        %v658 = vrot.slane %v363, 4
        %v659 = vsel %vm585, %v658, %v657
        %v660 = vrot.slane %v364, 3
        %v661 = vsel %vm588, %v660, %v659
        %v662 = vrot.slane %v365, 2
        %v663 = vsel %vm591, %v662, %v661
        %v664 = vrot.slane %v366, 1
        %v665 = vsel %vm594, %v664, %v663
        %v666 = vrot.slane %v368, 7
        %v667 = vsel %vm576, %v666, %v367
        %v668 = vrot.slane %v369, 6
        %v669 = vsel %vm579, %v668, %v667
        %v670 = vrot.slane %v370, 5
        %v671 = vsel %vm582, %v670, %v669
        %v672 = vrot.slane %v371, 4
        %v673 = vsel %vm585, %v672, %v671
        %v674 = vrot.slane %v372, 3
        %v675 = vsel %vm588, %v674, %v673
        %v676 = vrot.slane %v373, 2
        %v677 = vsel %vm591, %v676, %v675
        %v678 = vrot.slane %v374, 1
        %v679 = vsel %vm594, %v678, %v677
        %v680 = vrot.slane %v376, 7
        %v681 = vsel %vm576, %v680, %v375
        %v682 = vrot.slane %v377, 6
        %v683 = vsel %vm579, %v682, %v681
        %v684 = vrot.slane %v378, 5
        %v685 = vsel %vm582, %v684, %v683
        %v686 = vrot.slane %v379, 4
        %v687 = vsel %vm585, %v686, %v685
        %v688 = vrot.slane %v380, 3
        %v689 = vsel %vm588, %v688, %v687
        %v690 = vrot.slane %v381, 2
        %v691 = vsel %vm591, %v690, %v689
        %v692 = vrot.slane %v382, 1
        %v693 = vsel %vm594, %v692, %v691
        %v694 = vrot.slane %v384, 7
        %v695 = vsel %vm576, %v694, %v383
        %v696 = vrot.slane %v385, 6
        %v697 = vsel %vm579, %v696, %v695
        %v698 = vrot.slane %v386, 5
        %v699 = vsel %vm582, %v698, %v697
        %v700 = vrot.slane %v387, 4
        %v701 = vsel %vm585, %v700, %v699
        %v702 = vrot.slane %v388, 3
        %v703 = vsel %vm588, %v702, %v701
        %v704 = vrot.slane %v389, 2
        %v705 = vsel %vm591, %v704, %v703
        %v706 = vrot.slane %v390, 1
        %v707 = vsel %vm594, %v706, %v705
        %v708 = vrot.slane %v392, 7
        %v709 = vsel %vm576, %v708, %v391
        %v710 = vrot.slane %v393, 6
        %v711 = vsel %vm579, %v710, %v709
        %v712 = vrot.slane %v394, 5
        %v713 = vsel %vm582, %v712, %v711
        %v714 = vrot.slane %v395, 4
        %v715 = vsel %vm585, %v714, %v713
        %v716 = vrot.slane %v396, 3
        %v717 = vsel %vm588, %v716, %v715
        %v718 = vrot.slane %v397, 2
        %v719 = vsel %vm591, %v718, %v717
        %v720 = vrot.slane %v398, 1
        %v721 = vsel %vm594, %v720, %v719
        %v722 = vrot.slane %v400, 7
        %v723 = vsel %vm576, %v722, %v399
        %v724 = vrot.slane %v401, 6
        %v725 = vsel %vm579, %v724, %v723
        %v726 = vrot.slane %v402, 5
        %v727 = vsel %vm582, %v726, %v725
        %v728 = vrot.slane %v403, 4
        %v729 = vsel %vm585, %v728, %v727
        %v730 = vrot.slane %v404, 3
        %v731 = vsel %vm588, %v730, %v729
        %v732 = vrot.slane %v405, 2
        %v733 = vsel %vm591, %v732, %v731
        %v734 = vrot.slane %v406, 1
        %v735 = vsel %vm594, %v734, %v733
        %v736 = vrot.slane %v408, 7
        %v737 = vsel %vm576, %v736, %v407
        %v738 = vrot.slane %v409, 6
        %v739 = vsel %vm579, %v738, %v737
        %v740 = vrot.slane %v410, 5
        %v741 = vsel %vm582, %v740, %v739
        %v742 = vrot.slane %v411, 4
        %v743 = vsel %vm585, %v742, %v741
        %v744 = vrot.slane %v412, 3
        %v745 = vsel %vm588, %v744, %v743
        %v746 = vrot.slane %v413, 2
        %v747 = vsel %vm591, %v746, %v745
        %v748 = vrot.slane %v414, 1
        %v749 = vsel %vm594, %v748, %v747
        %v750 = vrot.slane %v416, 7
        %v751 = vsel %vm576, %v750, %v415
        %v752 = vrot.slane %v417, 6
        %v753 = vsel %vm579, %v752, %v751
        %v754 = vrot.slane %v418, 5
        %v755 = vsel %vm582, %v754, %v753
        %v756 = vrot.slane %v419, 4
        %v757 = vsel %vm585, %v756, %v755
        %v758 = vrot.slane %v420, 3
        %v759 = vsel %vm588, %v758, %v757
        %v760 = vrot.slane %v421, 2
        %v761 = vsel %vm591, %v760, %v759
        %v762 = vrot.slane %v422, 1
        %v763 = vsel %vm594, %v762, %v761
        %v764 = vrot.slane %v424, 7
        %v765 = vsel %vm576, %v764, %v423
        %v766 = vrot.slane %v425, 6
        %v767 = vsel %vm579, %v766, %v765
        %v768 = vrot.slane %v426, 5
        %v769 = vsel %vm582, %v768, %v767
        %v770 = vrot.slane %v427, 4
        %v771 = vsel %vm585, %v770, %v769
        %v772 = vrot.slane %v428, 3
        %v773 = vsel %vm588, %v772, %v771
        %v774 = vrot.slane %v429, 2
        %v775 = vsel %vm591, %v774, %v773
        %v776 = vrot.slane %v430, 1
        %v777 = vsel %vm594, %v776, %v775
        %v778 = vrot.slane %v432, 7
        %v779 = vsel %vm576, %v778, %v431
        %v780 = vrot.slane %v433, 6
        %v781 = vsel %vm579, %v780, %v779
        %v782 = vrot.slane %v434, 5
        %v783 = vsel %vm582, %v782, %v781
        %v784 = vrot.slane %v435, 4
        %v785 = vsel %vm585, %v784, %v783
        %v786 = vrot.slane %v436, 3
        %v787 = vsel %vm588, %v786, %v785
        %v788 = vrot.slane %v437, 2
        %v789 = vsel %vm591, %v788, %v787
        %v790 = vrot.slane %v438, 1
        %v791 = vsel %vm594, %v790, %v789
        %v792 = vrot.slane %v440, 7
        %v793 = vsel %vm576, %v792, %v439
        %v794 = vrot.slane %v441, 6
        %v795 = vsel %vm579, %v794, %v793
        %v796 = vrot.slane %v442, 5
        %v797 = vsel %vm582, %v796, %v795
        %v798 = vrot.slane %v443, 4
        %v799 = vsel %vm585, %v798, %v797
        %v800 = vrot.slane %v444, 3
        %v801 = vsel %vm588, %v800, %v799
        %v802 = vrot.slane %v445, 2
        %v803 = vsel %vm591, %v802, %v801
        %v804 = vrot.slane %v446, 1
        %v805 = vsel %vm594, %v804, %v803
        %vm806 = vcmask 523264
        %v807 = vsel %vm806, %v595, 0
        %v809 = vsel %vm806, %v609, 0
        %v811 = vsel %vm806, %v623, 0
        %v813 = vsel %vm806, %v637, 0
        %v815 = vsel %vm806, %v651, 0
        %v817 = vsel %vm806, %v665, 0
        %v819 = vsel %vm806, %v679, 0
        %v821 = vsel %vm806, %v693, 0
        %v823 = vsel %vm806, %v707, 0
        %v825 = vsel %vm806, %v721, 0
        %v827 = vsel %vm806, %v735, 0
        %v829 = vsel %vm806, %v749, 0
        %v831 = vsel %vm806, %v763, 0
        %v833 = vsel %vm806, %v777, 0
        %v835 = vsel %vm806, %v791, 0
        %v837 = vsel %vm806, %v805, 0
        %839 = vmatprep.subr.mxu0 0.0
        %840 = vmatpush1.msra.mxu0 0.0
        %841 = vmatprep.subr.mxu0 0.0
        %842 = vmatpush1.msra.mxu0 0.0
        %843 = vmatprep.subr.mxu0 0.0
        %844 = vmatpush1.msra.mxu0 0.0
        %845 = vmatprep.subr.mxu0 0.0
        %846 = vmatpush1.msra.mxu0 0.0
        %847 = vmatprep.subr.mxu0 0.0
        %848 = vmatpush1.msra.mxu0 0.0
        %849 = vmatprep.subr.mxu0 0.0
        %850 = vmatpush1.msra.mxu0 0.0
        %851 = vmatprep.subr.mxu0 0.0
        %852 = vmatpush1.msra.mxu0 0.0
        %853 = vmatprep.subr.mxu0 0.0
        %854 = vmatpush1.msra.mxu0 0.0
        %855 = vmatprep.subr.mxu0 0.0
        %856 = vmatpush1.msra.mxu0 %v181
        %857 = vmatprep.subr.mxu0 0.0
        %858 = vmatpush1.msra.mxu0 %v180
        %859 = vmatprep.subr.mxu0 0.0
        %860 = vmatpush1.msra.mxu0 %v179
        %861 = vmatprep.subr.mxu0 0.0
        %862 = vmatpush1.msra.mxu0 %v178
        %863 = vmatprep.subr.mxu0 0.0
        %864 = vmatpush1.msra.mxu0 %v177
        %865 = vmatprep.subr.mxu0 0.0
        %866 = vmatpush1.msra.mxu0 %v176
        %867 = vmatprep.subr.mxu0 0.0
        %868 = vmatpush1.msra.mxu0 %v175
        %869 = vmatprep.subr.mxu0 0.0
        %870 = vmatpush1.msra.mxu0 %v174
        %871 = vmatprep.subr.mxu0 0.0
        %872 = vmatpush2.msra.mxu0 0.0
        %873 = vmatprep.subr.mxu0 0.0
        %874 = vmatpush2.msra.mxu0 0.0
        %875 = vmatprep.subr.mxu0 0.0
        %876 = vmatpush2.msra.mxu0 0.0
        %877 = vmatprep.subr.mxu0 0.0
        %878 = vmatpush2.msra.mxu0 0.0
        %879 = vmatprep.subr.mxu0 0.0
        %880 = vmatpush2.msra.mxu0 0.0
        %881 = vmatprep.subr.mxu0 0.0
        %882 = vmatpush2.msra.mxu0 0.0
        %883 = vmatprep.subr.mxu0 0.0
        %884 = vmatpush2.msra.mxu0 0.0
        %885 = vmatprep.subr.mxu0 0.0
        %886 = vmatpush2.msra.mxu0 0.0
        %887 = vmatprep.subr.mxu0 0.0
        %888 = vmatpush2.msra.mxu0 0.0
        %889 = vmatprep.subr.mxu0 0.0
        %890 = vmatpush2.msra.mxu0 0.0
        %891 = vmatprep.subr.mxu0 0.0
        %892 = vmatpush2.msra.mxu0 0.0
        %893 = vmatprep.subr.mxu0 0.0
        %894 = vmatpush2.msra.mxu0 0.0
        %895 = vmatprep.subr.mxu0 0.0
        %896 = vmatpush2.msra.mxu0 0.0
        %897 = vmatprep.subr.mxu0 0.0
        %898 = vmatpush2.msra.mxu0 0.0
        %899 = vmatprep.subr.mxu0 0.0
        %900 = vmatpush2.msra.mxu0 0.0
        %901 = vmatprep.subr.mxu0 0.0
        %902 = vmatpush2.msra.mxu0 0.0
        %903 = vmatprep.mubr.f32.mxu0 0.0
        %904 = vmatmul.mubr.f32.gmra.mxu0 %v807
        %v905 = vpop.f32.mrf.mxu0
        %v906 = vadd.f32 0.0, %v905
        %v907 = vpop.f32.mrf.mxu0
        %908 = vmatprep.mubr.f32.mxu0 0.0
        %909 = vmatmul.mubr.f32.gmra.mxu0 %v809
        %v910 = vpop.f32.mrf.mxu0
        %v911 = vadd.f32 0.0, %v910
        %v912 = vpop.f32.mrf.mxu0
        %913 = vmatprep.mubr.f32.mxu0 0.0
        %914 = vmatmul.mubr.f32.gmra.mxu0 %v811
        %v915 = vpop.f32.mrf.mxu0
        %v916 = vadd.f32 0.0, %v915
        %v917 = vpop.f32.mrf.mxu0
        %918 = vmatprep.mubr.f32.mxu0 0.0
        %919 = vmatmul.mubr.f32.gmra.mxu0 %v813
        %v920 = vpop.f32.mrf.mxu0
        %v921 = vadd.f32 0.0, %v920
        %v922 = vpop.f32.mrf.mxu0
        %923 = vmatprep.mubr.f32.mxu0 0.0
        %924 = vmatmul.mubr.f32.gmra.mxu0 %v815
        %v925 = vpop.f32.mrf.mxu0
        %v926 = vadd.f32 0.0, %v925
        %v927 = vpop.f32.mrf.mxu0
        %928 = vmatprep.mubr.f32.mxu0 0.0
        %929 = vmatmul.mubr.f32.gmra.mxu0 %v817
        %v930 = vpop.f32.mrf.mxu0
        %v931 = vadd.f32 0.0, %v930
        %v932 = vpop.f32.mrf.mxu0
        %933 = vmatprep.mubr.f32.mxu0 0.0
        %934 = vmatmul.mubr.f32.gmra.mxu0 %v819
        %v935 = vpop.f32.mrf.mxu0
        %v936 = vadd.f32 0.0, %v935
        %v937 = vpop.f32.mrf.mxu0
        %938 = vmatprep.mubr.f32.mxu0 0.0
        %939 = vmatmul.mubr.f32.gmra.mxu0 %v821
        %v940 = vpop.f32.mrf.mxu0
        %v941 = vadd.f32 0.0, %v940
        %v942 = vpop.f32.mrf.mxu0
        %943 = vmatprep.mubr.f32.mxu0 0.0
        %944 = vmatmul.mubr.f32.gmra.mxu0 %v823
        %v945 = vpop.f32.mrf.mxu0
        %v946 = vadd.f32 0.0, %v945
        %v947 = vpop.f32.mrf.mxu0
        %948 = vmatprep.mubr.f32.mxu0 0.0
        %949 = vmatmul.mubr.f32.gmra.mxu0 %v825
        %v950 = vpop.f32.mrf.mxu0
        %v951 = vadd.f32 0.0, %v950
        %v952 = vpop.f32.mrf.mxu0
        %953 = vmatprep.mubr.f32.mxu0 0.0
        %954 = vmatmul.mubr.f32.gmra.mxu0 %v827
        %v955 = vpop.f32.mrf.mxu0
        %v956 = vadd.f32 0.0, %v955
        %v957 = vpop.f32.mrf.mxu0
        %958 = vmatprep.mubr.f32.mxu0 0.0
        %959 = vmatmul.mubr.f32.gmra.mxu0 %v829
        %v960 = vpop.f32.mrf.mxu0
        %v961 = vadd.f32 0.0, %v960
        %v962 = vpop.f32.mrf.mxu0
        %963 = vmatprep.mubr.f32.mxu0 0.0
        %964 = vmatmul.mubr.f32.gmra.mxu0 %v831
        %v965 = vpop.f32.mrf.mxu0
        %v966 = vadd.f32 0.0, %v965
        %v967 = vpop.f32.mrf.mxu0
        %968 = vmatprep.mubr.f32.mxu0 0.0
        %969 = vmatmul.mubr.f32.gmra.mxu0 %v833
        %v970 = vpop.f32.mrf.mxu0
        %v971 = vadd.f32 0.0, %v970
        %v972 = vpop.f32.mrf.mxu0
        %973 = vmatprep.mubr.f32.mxu0 0.0
        %974 = vmatmul.mubr.f32.gmra.mxu0 %v835
        %v975 = vpop.f32.mrf.mxu0
        %v976 = vadd.f32 0.0, %v975
        %v977 = vpop.f32.mrf.mxu0
        %978 = vmatprep.mubr.f32.mxu0 0.0
        %979 = vmatmul.mubr.f32.gmra.mxu0 %v837
        %v980 = vpop.f32.mrf.mxu0
        %v981 = vadd.f32 0.0, %v980
        %v982 = vpop.f32.mrf.mxu0
        %983 = vdwg.mxu0
        %v1112 = vrot.slane %v192, 7
        %v1113 = vsel %vm576, %v1112, %v191
        %v1114 = vrot.slane %v193, 6
        %v1115 = vsel %vm579, %v1114, %v1113
        %v1116 = vrot.slane %v194, 5
        %v1117 = vsel %vm582, %v1116, %v1115
        %v1118 = vrot.slane %v195, 4
        %v1119 = vsel %vm585, %v1118, %v1117
        %v1120 = vrot.slane %v196, 3
        %v1121 = vsel %vm588, %v1120, %v1119
        %v1122 = vrot.slane %v197, 2
        %v1123 = vsel %vm591, %v1122, %v1121
        %v1124 = vrot.slane %v198, 1
        %v1125 = vsel %vm594, %v1124, %v1123
        %v1126 = vrot.slane %v200, 7
        %v1127 = vsel %vm576, %v1126, %v199
        %v1128 = vrot.slane %v201, 6
        %v1129 = vsel %vm579, %v1128, %v1127
        %v1130 = vrot.slane %v202, 5
        %v1131 = vsel %vm582, %v1130, %v1129
        %v1132 = vrot.slane %v203, 4
        %v1133 = vsel %vm585, %v1132, %v1131
        %v1134 = vrot.slane %v204, 3
        %v1135 = vsel %vm588, %v1134, %v1133
        %v1136 = vrot.slane %v205, 2
        %v1137 = vsel %vm591, %v1136, %v1135
        %v1138 = vrot.slane %v206, 1
        %v1139 = vsel %vm594, %v1138, %v1137
        %v1140 = vrot.slane %v208, 7
        %v1141 = vsel %vm576, %v1140, %v207
        %v1142 = vrot.slane %v209, 6
        %v1143 = vsel %vm579, %v1142, %v1141
        %v1144 = vrot.slane %v210, 5
        %v1145 = vsel %vm582, %v1144, %v1143
        %v1146 = vrot.slane %v211, 4
        %v1147 = vsel %vm585, %v1146, %v1145
        %v1148 = vrot.slane %v212, 3
        %v1149 = vsel %vm588, %v1148, %v1147
        %v1150 = vrot.slane %v213, 2
        %v1151 = vsel %vm591, %v1150, %v1149
        %v1152 = vrot.slane %v214, 1
        %v1153 = vsel %vm594, %v1152, %v1151
        %v1154 = vrot.slane %v216, 7
        %v1155 = vsel %vm576, %v1154, %v215
        %v1156 = vrot.slane %v217, 6
        %v1157 = vsel %vm579, %v1156, %v1155
        %v1158 = vrot.slane %v218, 5
        %v1159 = vsel %vm582, %v1158, %v1157
        %v1160 = vrot.slane %v219, 4
        %v1161 = vsel %vm585, %v1160, %v1159
        %v1162 = vrot.slane %v220, 3
        %v1163 = vsel %vm588, %v1162, %v1161
        %v1164 = vrot.slane %v221, 2
        %v1165 = vsel %vm591, %v1164, %v1163
        %v1166 = vrot.slane %v222, 1
        %v1167 = vsel %vm594, %v1166, %v1165
        %v1168 = vrot.slane %v224, 7
        %v1169 = vsel %vm576, %v1168, %v223
        %v1170 = vrot.slane %v225, 6
        %v1171 = vsel %vm579, %v1170, %v1169
        %v1172 = vrot.slane %v226, 5
        %v1173 = vsel %vm582, %v1172, %v1171
        %v1174 = vrot.slane %v227, 4
        %v1175 = vsel %vm585, %v1174, %v1173
        %v1176 = vrot.slane %v228, 3
        %v1177 = vsel %vm588, %v1176, %v1175
        %v1178 = vrot.slane %v229, 2
        %v1179 = vsel %vm591, %v1178, %v1177
        %v1180 = vrot.slane %v230, 1
        %v1181 = vsel %vm594, %v1180, %v1179
        %v1182 = vrot.slane %v232, 7
        %v1183 = vsel %vm576, %v1182, %v231
        %v1184 = vrot.slane %v233, 6
        %v1185 = vsel %vm579, %v1184, %v1183
        %v1186 = vrot.slane %v234, 5
        %v1187 = vsel %vm582, %v1186, %v1185
        %v1188 = vrot.slane %v235, 4
        %v1189 = vsel %vm585, %v1188, %v1187
        %v1190 = vrot.slane %v236, 3
        %v1191 = vsel %vm588, %v1190, %v1189
        %v1192 = vrot.slane %v237, 2
        %v1193 = vsel %vm591, %v1192, %v1191
        %v1194 = vrot.slane %v238, 1
        %v1195 = vsel %vm594, %v1194, %v1193
        %v1196 = vrot.slane %v240, 7
        %v1197 = vsel %vm576, %v1196, %v239
        %v1198 = vrot.slane %v241, 6
        %v1199 = vsel %vm579, %v1198, %v1197
        %v1200 = vrot.slane %v242, 5
        %v1201 = vsel %vm582, %v1200, %v1199
        %v1202 = vrot.slane %v243, 4
        %v1203 = vsel %vm585, %v1202, %v1201
        %v1204 = vrot.slane %v244, 3
        %v1205 = vsel %vm588, %v1204, %v1203
        %v1206 = vrot.slane %v245, 2
        %v1207 = vsel %vm591, %v1206, %v1205
        %v1208 = vrot.slane %v246, 1
        %v1209 = vsel %vm594, %v1208, %v1207
        %v1210 = vrot.slane %v248, 7
        %v1211 = vsel %vm576, %v1210, %v247
        %v1212 = vrot.slane %v249, 6
        %v1213 = vsel %vm579, %v1212, %v1211
        %v1214 = vrot.slane %v250, 5
        %v1215 = vsel %vm582, %v1214, %v1213
        %v1216 = vrot.slane %v251, 4
        %v1217 = vsel %vm585, %v1216, %v1215
        %v1218 = vrot.slane %v252, 3
        %v1219 = vsel %vm588, %v1218, %v1217
        %v1220 = vrot.slane %v253, 2
        %v1221 = vsel %vm591, %v1220, %v1219
        %v1222 = vrot.slane %v254, 1
        %v1223 = vsel %vm594, %v1222, %v1221
        %v1224 = vrot.slane %v256, 7
        %v1225 = vsel %vm576, %v1224, %v255
        %v1226 = vrot.slane %v257, 6
        %v1227 = vsel %vm579, %v1226, %v1225
        %v1228 = vrot.slane %v258, 5
        %v1229 = vsel %vm582, %v1228, %v1227
        %v1230 = vrot.slane %v259, 4
        %v1231 = vsel %vm585, %v1230, %v1229
        %v1232 = vrot.slane %v260, 3
        %v1233 = vsel %vm588, %v1232, %v1231
        %v1234 = vrot.slane %v261, 2
        %v1235 = vsel %vm591, %v1234, %v1233
        %v1236 = vrot.slane %v262, 1
        %v1237 = vsel %vm594, %v1236, %v1235
        %v1238 = vrot.slane %v264, 7
        %v1239 = vsel %vm576, %v1238, %v263
        %v1240 = vrot.slane %v265, 6
        %v1241 = vsel %vm579, %v1240, %v1239
        %v1242 = vrot.slane %v266, 5
        %v1243 = vsel %vm582, %v1242, %v1241
        %v1244 = vrot.slane %v267, 4
        %v1245 = vsel %vm585, %v1244, %v1243
        %v1246 = vrot.slane %v268, 3
        %v1247 = vsel %vm588, %v1246, %v1245
        %v1248 = vrot.slane %v269, 2
        %v1249 = vsel %vm591, %v1248, %v1247
        %v1250 = vrot.slane %v270, 1
        %v1251 = vsel %vm594, %v1250, %v1249
        %v1252 = vrot.slane %v272, 7
        %v1253 = vsel %vm576, %v1252, %v271
        %v1254 = vrot.slane %v273, 6
        %v1255 = vsel %vm579, %v1254, %v1253
        %v1256 = vrot.slane %v274, 5
        %v1257 = vsel %vm582, %v1256, %v1255
        %v1258 = vrot.slane %v275, 4
        %v1259 = vsel %vm585, %v1258, %v1257
        %v1260 = vrot.slane %v276, 3
        %v1261 = vsel %vm588, %v1260, %v1259
        %v1262 = vrot.slane %v277, 2
        %v1263 = vsel %vm591, %v1262, %v1261
        %v1264 = vrot.slane %v278, 1
        %v1265 = vsel %vm594, %v1264, %v1263
        %v1266 = vrot.slane %v280, 7
        %v1267 = vsel %vm576, %v1266, %v279
        %v1268 = vrot.slane %v281, 6
        %v1269 = vsel %vm579, %v1268, %v1267
        %v1270 = vrot.slane %v282, 5
        %v1271 = vsel %vm582, %v1270, %v1269
        %v1272 = vrot.slane %v283, 4
        %v1273 = vsel %vm585, %v1272, %v1271
        %v1274 = vrot.slane %v284, 3
        %v1275 = vsel %vm588, %v1274, %v1273
        %v1276 = vrot.slane %v285, 2
        %v1277 = vsel %vm591, %v1276, %v1275
        %v1278 = vrot.slane %v286, 1
        %v1279 = vsel %vm594, %v1278, %v1277
        %v1280 = vrot.slane %v288, 7
        %v1281 = vsel %vm576, %v1280, %v287
        %v1282 = vrot.slane %v289, 6
        %v1283 = vsel %vm579, %v1282, %v1281
        %v1284 = vrot.slane %v290, 5
        %v1285 = vsel %vm582, %v1284, %v1283
        %v1286 = vrot.slane %v291, 4
        %v1287 = vsel %vm585, %v1286, %v1285
        %v1288 = vrot.slane %v292, 3
        %v1289 = vsel %vm588, %v1288, %v1287
        %v1290 = vrot.slane %v293, 2
        %v1291 = vsel %vm591, %v1290, %v1289
        %v1292 = vrot.slane %v294, 1
        %v1293 = vsel %vm594, %v1292, %v1291
        %v1294 = vrot.slane %v296, 7
        %v1295 = vsel %vm576, %v1294, %v295
        %v1296 = vrot.slane %v297, 6
        %v1297 = vsel %vm579, %v1296, %v1295
        %v1298 = vrot.slane %v298, 5
        %v1299 = vsel %vm582, %v1298, %v1297
        %v1300 = vrot.slane %v299, 4
        %v1301 = vsel %vm585, %v1300, %v1299
        %v1302 = vrot.slane %v300, 3
        %v1303 = vsel %vm588, %v1302, %v1301
        %v1304 = vrot.slane %v301, 2
        %v1305 = vsel %vm591, %v1304, %v1303
        %v1306 = vrot.slane %v302, 1
        %v1307 = vsel %vm594, %v1306, %v1305
        %v1308 = vrot.slane %v304, 7
        %v1309 = vsel %vm576, %v1308, %v303
        %v1310 = vrot.slane %v305, 6
        %v1311 = vsel %vm579, %v1310, %v1309
        %v1312 = vrot.slane %v306, 5
        %v1313 = vsel %vm582, %v1312, %v1311
        %v1314 = vrot.slane %v307, 4
        %v1315 = vsel %vm585, %v1314, %v1313
        %v1316 = vrot.slane %v308, 3
        %v1317 = vsel %vm588, %v1316, %v1315
        %v1318 = vrot.slane %v309, 2
        %v1319 = vsel %vm591, %v1318, %v1317
        %v1320 = vrot.slane %v310, 1
        %v1321 = vsel %vm594, %v1320, %v1319
        %v1322 = vrot.slane %v312, 7
        %v1323 = vsel %vm576, %v1322, %v311
        %v1324 = vrot.slane %v313, 6
        %v1325 = vsel %vm579, %v1324, %v1323
        %v1326 = vrot.slane %v314, 5
        %v1327 = vsel %vm582, %v1326, %v1325
        %v1328 = vrot.slane %v315, 4
        %v1329 = vsel %vm585, %v1328, %v1327
        %v1330 = vrot.slane %v316, 3
        %v1331 = vsel %vm588, %v1330, %v1329
        %v1332 = vrot.slane %v317, 2
        %v1333 = vsel %vm591, %v1332, %v1331
        %v1334 = vrot.slane %v318, 1
        %v1335 = vsel %vm594, %v1334, %v1333
        %v1336 = vsel %vm806, %v1125, 0
        %v1338 = vsel %vm806, %v1139, 0
        %v1340 = vsel %vm806, %v1153, 0
        %v1342 = vsel %vm806, %v1167, 0
        %v1344 = vsel %vm806, %v1181, 0
        %v1346 = vsel %vm806, %v1195, 0
        %v1348 = vsel %vm806, %v1209, 0
        %v1350 = vsel %vm806, %v1223, 0
        %v1352 = vsel %vm806, %v1237, 0
        %v1354 = vsel %vm806, %v1251, 0
        %v1356 = vsel %vm806, %v1265, 0
        %v1358 = vsel %vm806, %v1279, 0
        %v1360 = vsel %vm806, %v1293, 0
        %v1362 = vsel %vm806, %v1307, 0
        %v1364 = vsel %vm806, %v1321, 0
        %v1366 = vsel %vm806, %v1335, 0
        %1368 = vmatprep.subr.mxu0 0.0
        %1369 = vmatpush1.msra.mxu0 0.0
        %1370 = vmatprep.subr.mxu0 0.0
        %1371 = vmatpush1.msra.mxu0 0.0
        %1372 = vmatprep.subr.mxu0 0.0
        %1373 = vmatpush1.msra.mxu0 0.0
        %1374 = vmatprep.subr.mxu0 0.0
        %1375 = vmatpush1.msra.mxu0 0.0
        %1376 = vmatprep.subr.mxu0 0.0
        %1377 = vmatpush1.msra.mxu0 0.0
        %1378 = vmatprep.subr.mxu0 0.0
        %1379 = vmatpush1.msra.mxu0 0.0
        %1380 = vmatprep.subr.mxu0 0.0
        %1381 = vmatpush1.msra.mxu0 0.0
        %1382 = vmatprep.subr.mxu0 0.0
        %1383 = vmatpush1.msra.mxu0 0.0
        %1384 = vmatprep.subr.mxu0 0.0
        %1385 = vmatpush1.msra.mxu0 %v172
        %1386 = vmatprep.subr.mxu0 0.0
        %1387 = vmatpush1.msra.mxu0 %v171
        %1388 = vmatprep.subr.mxu0 0.0
        %1389 = vmatpush1.msra.mxu0 %v170
        %1390 = vmatprep.subr.mxu0 0.0
        %1391 = vmatpush1.msra.mxu0 %v169
        %1392 = vmatprep.subr.mxu0 0.0
        %1393 = vmatpush1.msra.mxu0 %v168
        %1394 = vmatprep.subr.mxu0 0.0
        %1395 = vmatpush1.msra.mxu0 %v167
        %1396 = vmatprep.subr.mxu0 0.0
        %1397 = vmatpush1.msra.mxu0 %v166
        %1398 = vmatprep.subr.mxu0 0.0
        %1399 = vmatpush1.msra.mxu0 %v165
        %1400 = vmatprep.subr.mxu0 0.0
        %1401 = vmatpush2.msra.mxu0 0.0
        %1402 = vmatprep.subr.mxu0 0.0
        %1403 = vmatpush2.msra.mxu0 0.0
        %1404 = vmatprep.subr.mxu0 0.0
        %1405 = vmatpush2.msra.mxu0 0.0
        %1406 = vmatprep.subr.mxu0 0.0
        %1407 = vmatpush2.msra.mxu0 0.0
        %1408 = vmatprep.subr.mxu0 0.0
        %1409 = vmatpush2.msra.mxu0 0.0
        %1410 = vmatprep.subr.mxu0 0.0
        %1411 = vmatpush2.msra.mxu0 0.0
        %1412 = vmatprep.subr.mxu0 0.0
        %1413 = vmatpush2.msra.mxu0 0.0
        %1414 = vmatprep.subr.mxu0 0.0
        %1415 = vmatpush2.msra.mxu0 0.0
        %1416 = vmatprep.subr.mxu0 0.0
        %1417 = vmatpush2.msra.mxu0 0.0
        %1418 = vmatprep.subr.mxu0 0.0
        %1419 = vmatpush2.msra.mxu0 0.0
        %1420 = vmatprep.subr.mxu0 0.0
        %1421 = vmatpush2.msra.mxu0 0.0
        %1422 = vmatprep.subr.mxu0 0.0
        %1423 = vmatpush2.msra.mxu0 0.0
        %1424 = vmatprep.subr.mxu0 0.0
        %1425 = vmatpush2.msra.mxu0 0.0
        %1426 = vmatprep.subr.mxu0 0.0
        %1427 = vmatpush2.msra.mxu0 0.0
        %1428 = vmatprep.subr.mxu0 0.0
        %1429 = vmatpush2.msra.mxu0 0.0
        %1430 = vmatprep.subr.mxu0 0.0
        %1431 = vmatpush2.msra.mxu0 0.0
        %1432 = vmatprep.mubr.f32.mxu0 0.0
        %1433 = vmatmul.mubr.f32.gmra.mxu0 %v1336
        %v1434 = vpop.f32.mrf.mxu0
        %v1435 = vadd.f32 %v906, %v1434
        %v1436 = vpop.f32.mrf.mxu0
        %1437 = vmatprep.mubr.f32.mxu0 0.0
        %1438 = vmatmul.mubr.f32.gmra.mxu0 %v1338
        %v1439 = vpop.f32.mrf.mxu0
        %v1440 = vadd.f32 %v911, %v1439
        %v1441 = vpop.f32.mrf.mxu0
        %1442 = vmatprep.mubr.f32.mxu0 0.0
        %1443 = vmatmul.mubr.f32.gmra.mxu0 %v1340
        %v1444 = vpop.f32.mrf.mxu0
        %v1445 = vadd.f32 %v916, %v1444
        %v1446 = vpop.f32.mrf.mxu0
        %1447 = vmatprep.mubr.f32.mxu0 0.0
        %1448 = vmatmul.mubr.f32.gmra.mxu0 %v1342
        %v1449 = vpop.f32.mrf.mxu0
        %v1450 = vadd.f32 %v921, %v1449
        %v1451 = vpop.f32.mrf.mxu0
        %1452 = vmatprep.mubr.f32.mxu0 0.0
        %1453 = vmatmul.mubr.f32.gmra.mxu0 %v1344
        %v1454 = vpop.f32.mrf.mxu0
        %v1455 = vadd.f32 %v926, %v1454
        %v1456 = vpop.f32.mrf.mxu0
        %1457 = vmatprep.mubr.f32.mxu0 0.0
        %1458 = vmatmul.mubr.f32.gmra.mxu0 %v1346
        %v1459 = vpop.f32.mrf.mxu0
        %v1460 = vadd.f32 %v931, %v1459
        %v1461 = vpop.f32.mrf.mxu0
        %1462 = vmatprep.mubr.f32.mxu0 0.0
        %1463 = vmatmul.mubr.f32.gmra.mxu0 %v1348
        %v1464 = vpop.f32.mrf.mxu0
        %v1465 = vadd.f32 %v936, %v1464
        %v1466 = vpop.f32.mrf.mxu0
        %1467 = vmatprep.mubr.f32.mxu0 0.0
        %1468 = vmatmul.mubr.f32.gmra.mxu0 %v1350
        %v1469 = vpop.f32.mrf.mxu0
        %v1470 = vadd.f32 %v941, %v1469
        %v1471 = vpop.f32.mrf.mxu0
        %1472 = vmatprep.mubr.f32.mxu0 0.0
        %1473 = vmatmul.mubr.f32.gmra.mxu0 %v1352
        %v1474 = vpop.f32.mrf.mxu0
        %v1475 = vadd.f32 %v946, %v1474
        %v1476 = vpop.f32.mrf.mxu0
        %1477 = vmatprep.mubr.f32.mxu0 0.0
        %1478 = vmatmul.mubr.f32.gmra.mxu0 %v1354
        %v1479 = vpop.f32.mrf.mxu0
        %v1480 = vadd.f32 %v951, %v1479
        %v1481 = vpop.f32.mrf.mxu0
        %1482 = vmatprep.mubr.f32.mxu0 0.0
        %1483 = vmatmul.mubr.f32.gmra.mxu0 %v1356
        %v1484 = vpop.f32.mrf.mxu0
        %v1485 = vadd.f32 %v956, %v1484
        %v1486 = vpop.f32.mrf.mxu0
        %1487 = vmatprep.mubr.f32.mxu0 0.0
        %1488 = vmatmul.mubr.f32.gmra.mxu0 %v1358
        %v1489 = vpop.f32.mrf.mxu0
        %v1490 = vadd.f32 %v961, %v1489
        %v1491 = vpop.f32.mrf.mxu0
        %1492 = vmatprep.mubr.f32.mxu0 0.0
        %1493 = vmatmul.mubr.f32.gmra.mxu0 %v1360
        %v1494 = vpop.f32.mrf.mxu0
        %v1495 = vadd.f32 %v966, %v1494
        %v1496 = vpop.f32.mrf.mxu0
        %1497 = vmatprep.mubr.f32.mxu0 0.0
        %1498 = vmatmul.mubr.f32.gmra.mxu0 %v1362
        %v1499 = vpop.f32.mrf.mxu0
        %v1500 = vadd.f32 %v971, %v1499
        %v1501 = vpop.f32.mrf.mxu0
        %1502 = vmatprep.mubr.f32.mxu0 0.0
        %1503 = vmatmul.mubr.f32.gmra.mxu0 %v1364
        %v1504 = vpop.f32.mrf.mxu0
        %v1505 = vadd.f32 %v976, %v1504
        %v1506 = vpop.f32.mrf.mxu0
        %1507 = vmatprep.mubr.f32.mxu0 0.0
        %1508 = vmatmul.mubr.f32.gmra.mxu0 %v1366
        %v1509 = vpop.f32.mrf.mxu0
        %v1510 = vadd.f32 %v981, %v1509
        %v1511 = vpop.f32.mrf.mxu0
        %1512 = vdwg.mxu0
        %v1513 = vld [vmem:[%s154 + $0x2] sm:$0x1]
        %v1514 = vld [vmem:[%s154 + $0xa] sm:$0x1]
        %v1515 = vld [vmem:[%s154 + $0x12] sm:$0x1]
        %v1516 = vld [vmem:[%s154 + $0x1a] sm:$0x1]
        %v1517 = vld [vmem:[%s154 + $0x22] sm:$0x1]
        %v1518 = vld [vmem:[%s154 + $0x2a] sm:$0x1]
        %v1519 = vld [vmem:[%s154 + $0x32] sm:$0x1]
        %v1520 = vld [vmem:[%s154 + $0x3a] sm:$0x1]
        %v1521 = vld [vmem:[%s154 + $0x42] sm:$0x1]
        %v1522 = vld [vmem:[%s154 + $0x4a] sm:$0x1]
        %v1523 = vld [vmem:[%s154 + $0x52] sm:$0x1]
        %v1524 = vld [vmem:[%s154 + $0x5a] sm:$0x1]
        %v1525 = vld [vmem:[%s154 + $0x62] sm:$0x1]
        %v1526 = vld [vmem:[%s154 + $0x6a] sm:$0x1]
        %v1527 = vld [vmem:[%s154 + $0x72] sm:$0x1]
        %v1528 = vld [vmem:[%s154 + $0x7a] sm:$0x1]
        %v1529 = vld [vmem:[%s154 + $0x82] sm:$0x1]
        %v1530 = vld [vmem:[%s154 + $0x8a] sm:$0x1]
        %v1531 = vld [vmem:[%s154 + $0x92] sm:$0x1]
        %v1532 = vld [vmem:[%s154 + $0x9a] sm:$0x1]
        %v1533 = vld [vmem:[%s154 + $0xa2] sm:$0x1]
        %v1534 = vld [vmem:[%s154 + $0xaa] sm:$0x1]
        %v1535 = vld [vmem:[%s154 + $0xb2] sm:$0x1]
        %v1536 = vld [vmem:[%s154 + $0xba] sm:$0x1]
        %v1537 = vld [vmem:[%s154 + $0xc2] sm:$0x1]
        %v1538 = vld [vmem:[%s154 + $0xca] sm:$0x1]
        %v1539 = vld [vmem:[%s154 + $0xd2] sm:$0x1]
        %v1540 = vld [vmem:[%s154 + $0xda] sm:$0x1]
        %v1541 = vld [vmem:[%s154 + $0xe2] sm:$0x1]
        %v1542 = vld [vmem:[%s154 + $0xea] sm:$0x1]
        %v1543 = vld [vmem:[%s154 + $0xf2] sm:$0x1]
        %v1544 = vld [vmem:[%s154 + $0xfa] sm:$0x1]
        %v1545 = vld [vmem:[%s154 + $0x102] sm:$0x1]
        %v1546 = vld [vmem:[%s154 + $0x10a] sm:$0x1]
        %v1547 = vld [vmem:[%s154 + $0x112] sm:$0x1]
        %v1548 = vld [vmem:[%s154 + $0x11a] sm:$0x1]
        %v1549 = vld [vmem:[%s154 + $0x122] sm:$0x1]
        %v1550 = vld [vmem:[%s154 + $0x12a] sm:$0x1]
        %v1551 = vld [vmem:[%s154 + $0x132] sm:$0x1]
        %v1552 = vld [vmem:[%s154 + $0x13a] sm:$0x1]
        %v1553 = vld [vmem:[%s154 + $0x142] sm:$0x1]
        %v1554 = vld [vmem:[%s154 + $0x14a] sm:$0x1]
        %v1555 = vld [vmem:[%s154 + $0x152] sm:$0x1]
        %v1556 = vld [vmem:[%s154 + $0x15a] sm:$0x1]
        %v1557 = vld [vmem:[%s154 + $0x162] sm:$0x1]
        %v1558 = vld [vmem:[%s154 + $0x16a] sm:$0x1]
        %v1559 = vld [vmem:[%s154 + $0x172] sm:$0x1]
        %v1560 = vld [vmem:[%s154 + $0x17a] sm:$0x1]
        %v1561 = vld [vmem:[%s154 + $0x182] sm:$0x1]
        %v1562 = vld [vmem:[%s154 + $0x18a] sm:$0x1]
        %v1563 = vld [vmem:[%s154 + $0x192] sm:$0x1]
        %v1564 = vld [vmem:[%s154 + $0x19a] sm:$0x1]
        %v1565 = vld [vmem:[%s154 + $0x1a2] sm:$0x1]
        %v1566 = vld [vmem:[%s154 + $0x1aa] sm:$0x1]
        %v1567 = vld [vmem:[%s154 + $0x1b2] sm:$0x1]
        %v1568 = vld [vmem:[%s154 + $0x1ba] sm:$0x1]
        %v1569 = vld [vmem:[%s154 + $0x1c2] sm:$0x1]
        %v1570 = vld [vmem:[%s154 + $0x1ca] sm:$0x1]
        %v1571 = vld [vmem:[%s154 + $0x1d2] sm:$0x1]
        %v1572 = vld [vmem:[%s154 + $0x1da] sm:$0x1]
        %v1573 = vld [vmem:[%s154 + $0x1e2] sm:$0x1]
        %v1574 = vld [vmem:[%s154 + $0x1ea] sm:$0x1]
        %v1575 = vld [vmem:[%s154 + $0x1f2] sm:$0x1]
        %v1576 = vld [vmem:[%s154 + $0x1fa] sm:$0x1]
        %v1577 = vld [vmem:[%s154 + $0x202] sm:$0x1]
        %v1578 = vld [vmem:[%s154 + $0x20a] sm:$0x1]
        %v1579 = vld [vmem:[%s154 + $0x212] sm:$0x1]
        %v1580 = vld [vmem:[%s154 + $0x21a] sm:$0x1]
        %v1581 = vld [vmem:[%s154 + $0x222] sm:$0x1]
        %v1582 = vld [vmem:[%s154 + $0x22a] sm:$0x1]
        %v1583 = vld [vmem:[%s154 + $0x232] sm:$0x1]
        %v1584 = vld [vmem:[%s154 + $0x23a] sm:$0x1]
        %v1585 = vld [vmem:[%s154 + $0x242] sm:$0x1]
        %v1586 = vld [vmem:[%s154 + $0x24a] sm:$0x1]
        %v1587 = vld [vmem:[%s154 + $0x252] sm:$0x1]
        %v1588 = vld [vmem:[%s154 + $0x25a] sm:$0x1]
        %v1589 = vld [vmem:[%s154 + $0x262] sm:$0x1]
        %v1590 = vld [vmem:[%s154 + $0x26a] sm:$0x1]
        %v1591 = vld [vmem:[%s154 + $0x272] sm:$0x1]
        %v1592 = vld [vmem:[%s154 + $0x27a] sm:$0x1]
        %v1593 = vld [vmem:[%s154 + $0x282] sm:$0x1]
        %v1594 = vld [vmem:[%s154 + $0x28a] sm:$0x1]
        %v1595 = vld [vmem:[%s154 + $0x292] sm:$0x1]
        %v1596 = vld [vmem:[%s154 + $0x29a] sm:$0x1]
        %v1597 = vld [vmem:[%s154 + $0x2a2] sm:$0x1]
        %v1598 = vld [vmem:[%s154 + $0x2aa] sm:$0x1]
        %v1599 = vld [vmem:[%s154 + $0x2b2] sm:$0x1]
        %v1600 = vld [vmem:[%s154 + $0x2ba] sm:$0x1]
        %v1601 = vld [vmem:[%s154 + $0x2c2] sm:$0x1]
        %v1602 = vld [vmem:[%s154 + $0x2ca] sm:$0x1]
        %v1603 = vld [vmem:[%s154 + $0x2d2] sm:$0x1]
        %v1604 = vld [vmem:[%s154 + $0x2da] sm:$0x1]
        %v1605 = vld [vmem:[%s154 + $0x2e2] sm:$0x1]
        %v1606 = vld [vmem:[%s154 + $0x2ea] sm:$0x1]
        %v1607 = vld [vmem:[%s154 + $0x2f2] sm:$0x1]
        %v1608 = vld [vmem:[%s154 + $0x2fa] sm:$0x1]
        %v1609 = vld [vmem:[%s154 + $0x302] sm:$0x1]
        %v1610 = vld [vmem:[%s154 + $0x30a] sm:$0x1]
        %v1611 = vld [vmem:[%s154 + $0x312] sm:$0x1]
        %v1612 = vld [vmem:[%s154 + $0x31a] sm:$0x1]
        %v1613 = vld [vmem:[%s154 + $0x322] sm:$0x1]
        %v1614 = vld [vmem:[%s154 + $0x32a] sm:$0x1]
        %v1615 = vld [vmem:[%s154 + $0x332] sm:$0x1]
        %v1616 = vld [vmem:[%s154 + $0x33a] sm:$0x1]
        %v1617 = vld [vmem:[%s154 + $0x342] sm:$0x1]
        %v1618 = vld [vmem:[%s154 + $0x34a] sm:$0x1]
        %v1619 = vld [vmem:[%s154 + $0x352] sm:$0x1]
        %v1620 = vld [vmem:[%s154 + $0x35a] sm:$0x1]
        %v1621 = vld [vmem:[%s154 + $0x362] sm:$0x1]
        %v1622 = vld [vmem:[%s154 + $0x36a] sm:$0x1]
        %v1623 = vld [vmem:[%s154 + $0x372] sm:$0x1]
        %v1624 = vld [vmem:[%s154 + $0x37a] sm:$0x1]
        %v1625 = vld [vmem:[%s154 + $0x382] sm:$0x1]
        %v1626 = vld [vmem:[%s154 + $0x38a] sm:$0x1]
        %v1627 = vld [vmem:[%s154 + $0x392] sm:$0x1]
        %v1628 = vld [vmem:[%s154 + $0x39a] sm:$0x1]
        %v1629 = vld [vmem:[%s154 + $0x3a2] sm:$0x1]
        %v1630 = vld [vmem:[%s154 + $0x3aa] sm:$0x1]
        %v1631 = vld [vmem:[%s154 + $0x3b2] sm:$0x1]
        %v1632 = vld [vmem:[%s154 + $0x3ba] sm:$0x1]
        %v1633 = vld [vmem:[%s154 + $0x3c2] sm:$0x1]
        %v1634 = vld [vmem:[%s154 + $0x3ca] sm:$0x1]
        %v1635 = vld [vmem:[%s154 + $0x3d2] sm:$0x1]
        %v1636 = vld [vmem:[%s154 + $0x3da] sm:$0x1]
        %v1637 = vld [vmem:[%s154 + $0x3e2] sm:$0x1]
        %v1638 = vld [vmem:[%s154 + $0x3ea] sm:$0x1]
        %v1639 = vld [vmem:[%s154 + $0x3f2] sm:$0x1]
        %v1640 = vld [vmem:[%s154 + $0x3fa] sm:$0x1]
        %v1769 = vrot.slane %v1514, 7
        %v1770 = vsel %vm576, %v1769, %v1513
        %v1771 = vrot.slane %v1515, 6
        %v1772 = vsel %vm579, %v1771, %v1770
        %v1773 = vrot.slane %v1516, 5
        %v1774 = vsel %vm582, %v1773, %v1772
        %v1775 = vrot.slane %v1517, 4
        %v1776 = vsel %vm585, %v1775, %v1774
        %v1777 = vrot.slane %v1518, 3
        %v1778 = vsel %vm588, %v1777, %v1776
        %v1779 = vrot.slane %v1519, 2
        %v1780 = vsel %vm591, %v1779, %v1778
        %v1781 = vrot.slane %v1520, 1
        %v1782 = vsel %vm594, %v1781, %v1780
        %v1783 = vrot.slane %v1522, 7
        %v1784 = vsel %vm576, %v1783, %v1521
        %v1785 = vrot.slane %v1523, 6
        %v1786 = vsel %vm579, %v1785, %v1784
        %v1787 = vrot.slane %v1524, 5
        %v1788 = vsel %vm582, %v1787, %v1786
        %v1789 = vrot.slane %v1525, 4
        %v1790 = vsel %vm585, %v1789, %v1788
        %v1791 = vrot.slane %v1526, 3
        %v1792 = vsel %vm588, %v1791, %v1790
        %v1793 = vrot.slane %v1527, 2
        %v1794 = vsel %vm591, %v1793, %v1792
        %v1795 = vrot.slane %v1528, 1
        %v1796 = vsel %vm594, %v1795, %v1794
        %v1797 = vrot.slane %v1530, 7
        %v1798 = vsel %vm576, %v1797, %v1529
        %v1799 = vrot.slane %v1531, 6
        %v1800 = vsel %vm579, %v1799, %v1798
        %v1801 = vrot.slane %v1532, 5
        %v1802 = vsel %vm582, %v1801, %v1800
        %v1803 = vrot.slane %v1533, 4
        %v1804 = vsel %vm585, %v1803, %v1802
        %v1805 = vrot.slane %v1534, 3
        %v1806 = vsel %vm588, %v1805, %v1804
        %v1807 = vrot.slane %v1535, 2
        %v1808 = vsel %vm591, %v1807, %v1806
        %v1809 = vrot.slane %v1536, 1
        %v1810 = vsel %vm594, %v1809, %v1808
        %v1811 = vrot.slane %v1538, 7
        %v1812 = vsel %vm576, %v1811, %v1537
        %v1813 = vrot.slane %v1539, 6
        %v1814 = vsel %vm579, %v1813, %v1812
        %v1815 = vrot.slane %v1540, 5
        %v1816 = vsel %vm582, %v1815, %v1814
        %v1817 = vrot.slane %v1541, 4
        %v1818 = vsel %vm585, %v1817, %v1816
        %v1819 = vrot.slane %v1542, 3
        %v1820 = vsel %vm588, %v1819, %v1818
        %v1821 = vrot.slane %v1543, 2
        %v1822 = vsel %vm591, %v1821, %v1820
        %v1823 = vrot.slane %v1544, 1
        %v1824 = vsel %vm594, %v1823, %v1822
        %v1825 = vrot.slane %v1546, 7
        %v1826 = vsel %vm576, %v1825, %v1545
        %v1827 = vrot.slane %v1547, 6
        %v1828 = vsel %vm579, %v1827, %v1826
        %v1829 = vrot.slane %v1548, 5
        %v1830 = vsel %vm582, %v1829, %v1828
        %v1831 = vrot.slane %v1549, 4
        %v1832 = vsel %vm585, %v1831, %v1830
        %v1833 = vrot.slane %v1550, 3
        %v1834 = vsel %vm588, %v1833, %v1832
        %v1835 = vrot.slane %v1551, 2
        %v1836 = vsel %vm591, %v1835, %v1834
        %v1837 = vrot.slane %v1552, 1
        %v1838 = vsel %vm594, %v1837, %v1836
        %v1839 = vrot.slane %v1554, 7
        %v1840 = vsel %vm576, %v1839, %v1553
        %v1841 = vrot.slane %v1555, 6
        %v1842 = vsel %vm579, %v1841, %v1840
        %v1843 = vrot.slane %v1556, 5
        %v1844 = vsel %vm582, %v1843, %v1842
        %v1845 = vrot.slane %v1557, 4
        %v1846 = vsel %vm585, %v1845, %v1844
        %v1847 = vrot.slane %v1558, 3
        %v1848 = vsel %vm588, %v1847, %v1846
        %v1849 = vrot.slane %v1559, 2
        %v1850 = vsel %vm591, %v1849, %v1848
        %v1851 = vrot.slane %v1560, 1
        %v1852 = vsel %vm594, %v1851, %v1850
        %v1853 = vrot.slane %v1562, 7
        %v1854 = vsel %vm576, %v1853, %v1561
        %v1855 = vrot.slane %v1563, 6
        %v1856 = vsel %vm579, %v1855, %v1854
        %v1857 = vrot.slane %v1564, 5
        %v1858 = vsel %vm582, %v1857, %v1856
        %v1859 = vrot.slane %v1565, 4
        %v1860 = vsel %vm585, %v1859, %v1858
        %v1861 = vrot.slane %v1566, 3
        %v1862 = vsel %vm588, %v1861, %v1860
        %v1863 = vrot.slane %v1567, 2
        %v1864 = vsel %vm591, %v1863, %v1862
        %v1865 = vrot.slane %v1568, 1
        %v1866 = vsel %vm594, %v1865, %v1864
        %v1867 = vrot.slane %v1570, 7
        %v1868 = vsel %vm576, %v1867, %v1569
        %v1869 = vrot.slane %v1571, 6
        %v1870 = vsel %vm579, %v1869, %v1868
        %v1871 = vrot.slane %v1572, 5
        %v1872 = vsel %vm582, %v1871, %v1870
        %v1873 = vrot.slane %v1573, 4
        %v1874 = vsel %vm585, %v1873, %v1872
        %v1875 = vrot.slane %v1574, 3
        %v1876 = vsel %vm588, %v1875, %v1874
        %v1877 = vrot.slane %v1575, 2
        %v1878 = vsel %vm591, %v1877, %v1876
        %v1879 = vrot.slane %v1576, 1
        %v1880 = vsel %vm594, %v1879, %v1878
        %v1881 = vrot.slane %v1578, 7
        %v1882 = vsel %vm576, %v1881, %v1577
        %v1883 = vrot.slane %v1579, 6
        %v1884 = vsel %vm579, %v1883, %v1882
        %v1885 = vrot.slane %v1580, 5
        %v1886 = vsel %vm582, %v1885, %v1884
        %v1887 = vrot.slane %v1581, 4
        %v1888 = vsel %vm585, %v1887, %v1886
        %v1889 = vrot.slane %v1582, 3
        %v1890 = vsel %vm588, %v1889, %v1888
        %v1891 = vrot.slane %v1583, 2
        %v1892 = vsel %vm591, %v1891, %v1890
        %v1893 = vrot.slane %v1584, 1
        %v1894 = vsel %vm594, %v1893, %v1892
        %v1895 = vrot.slane %v1586, 7
        %v1896 = vsel %vm576, %v1895, %v1585
        %v1897 = vrot.slane %v1587, 6
        %v1898 = vsel %vm579, %v1897, %v1896
        %v1899 = vrot.slane %v1588, 5
        %v1900 = vsel %vm582, %v1899, %v1898
        %v1901 = vrot.slane %v1589, 4
        %v1902 = vsel %vm585, %v1901, %v1900
        %v1903 = vrot.slane %v1590, 3
        %v1904 = vsel %vm588, %v1903, %v1902
        %v1905 = vrot.slane %v1591, 2
        %v1906 = vsel %vm591, %v1905, %v1904
        %v1907 = vrot.slane %v1592, 1
        %v1908 = vsel %vm594, %v1907, %v1906
        %v1909 = vrot.slane %v1594, 7
        %v1910 = vsel %vm576, %v1909, %v1593
        %v1911 = vrot.slane %v1595, 6
        %v1912 = vsel %vm579, %v1911, %v1910
        %v1913 = vrot.slane %v1596, 5
        %v1914 = vsel %vm582, %v1913, %v1912
        %v1915 = vrot.slane %v1597, 4
        %v1916 = vsel %vm585, %v1915, %v1914
        %v1917 = vrot.slane %v1598, 3
        %v1918 = vsel %vm588, %v1917, %v1916
        %v1919 = vrot.slane %v1599, 2
        %v1920 = vsel %vm591, %v1919, %v1918
        %v1921 = vrot.slane %v1600, 1
        %v1922 = vsel %vm594, %v1921, %v1920
        %v1923 = vrot.slane %v1602, 7
        %v1924 = vsel %vm576, %v1923, %v1601
        %v1925 = vrot.slane %v1603, 6
        %v1926 = vsel %vm579, %v1925, %v1924
        %v1927 = vrot.slane %v1604, 5
        %v1928 = vsel %vm582, %v1927, %v1926
        %v1929 = vrot.slane %v1605, 4
        %v1930 = vsel %vm585, %v1929, %v1928
        %v1931 = vrot.slane %v1606, 3
        %v1932 = vsel %vm588, %v1931, %v1930
        %v1933 = vrot.slane %v1607, 2
        %v1934 = vsel %vm591, %v1933, %v1932
        %v1935 = vrot.slane %v1608, 1
        %v1936 = vsel %vm594, %v1935, %v1934
        %v1937 = vrot.slane %v1610, 7
        %v1938 = vsel %vm576, %v1937, %v1609
        %v1939 = vrot.slane %v1611, 6
        %v1940 = vsel %vm579, %v1939, %v1938
        %v1941 = vrot.slane %v1612, 5
        %v1942 = vsel %vm582, %v1941, %v1940
        %v1943 = vrot.slane %v1613, 4
        %v1944 = vsel %vm585, %v1943, %v1942
        %v1945 = vrot.slane %v1614, 3
        %v1946 = vsel %vm588, %v1945, %v1944
        %v1947 = vrot.slane %v1615, 2
        %v1948 = vsel %vm591, %v1947, %v1946
        %v1949 = vrot.slane %v1616, 1
        %v1950 = vsel %vm594, %v1949, %v1948
        %v1951 = vrot.slane %v1618, 7
        %v1952 = vsel %vm576, %v1951, %v1617
        %v1953 = vrot.slane %v1619, 6
        %v1954 = vsel %vm579, %v1953, %v1952
        %v1955 = vrot.slane %v1620, 5
        %v1956 = vsel %vm582, %v1955, %v1954
        %v1957 = vrot.slane %v1621, 4
        %v1958 = vsel %vm585, %v1957, %v1956
        %v1959 = vrot.slane %v1622, 3
        %v1960 = vsel %vm588, %v1959, %v1958
        %v1961 = vrot.slane %v1623, 2
        %v1962 = vsel %vm591, %v1961, %v1960
        %v1963 = vrot.slane %v1624, 1
        %v1964 = vsel %vm594, %v1963, %v1962
        %v1965 = vrot.slane %v1626, 7
        %v1966 = vsel %vm576, %v1965, %v1625
        %v1967 = vrot.slane %v1627, 6
        %v1968 = vsel %vm579, %v1967, %v1966
        %v1969 = vrot.slane %v1628, 5
        %v1970 = vsel %vm582, %v1969, %v1968
        %v1971 = vrot.slane %v1629, 4
        %v1972 = vsel %vm585, %v1971, %v1970
        %v1973 = vrot.slane %v1630, 3
        %v1974 = vsel %vm588, %v1973, %v1972
        %v1975 = vrot.slane %v1631, 2
        %v1976 = vsel %vm591, %v1975, %v1974
        %v1977 = vrot.slane %v1632, 1
        %v1978 = vsel %vm594, %v1977, %v1976
        %v1979 = vrot.slane %v1634, 7
        %v1980 = vsel %vm576, %v1979, %v1633
        %v1981 = vrot.slane %v1635, 6
        %v1982 = vsel %vm579, %v1981, %v1980
        %v1983 = vrot.slane %v1636, 5
        %v1984 = vsel %vm582, %v1983, %v1982
        %v1985 = vrot.slane %v1637, 4
        %v1986 = vsel %vm585, %v1985, %v1984
        %v1987 = vrot.slane %v1638, 3
        %v1988 = vsel %vm588, %v1987, %v1986
        %v1989 = vrot.slane %v1639, 2
        %v1990 = vsel %vm591, %v1989, %v1988
        %v1991 = vrot.slane %v1640, 1
        %v1992 = vsel %vm594, %v1991, %v1990
        %v1993 = vsel %vm806, %v1782, 0
        %v1995 = vsel %vm806, %v1796, 0
        %v1997 = vsel %vm806, %v1810, 0
        %v1999 = vsel %vm806, %v1824, 0
        %v2001 = vsel %vm806, %v1838, 0
        %v2003 = vsel %vm806, %v1852, 0
        %v2005 = vsel %vm806, %v1866, 0
        %v2007 = vsel %vm806, %v1880, 0
        %v2009 = vsel %vm806, %v1894, 0
        %v2011 = vsel %vm806, %v1908, 0
        %v2013 = vsel %vm806, %v1922, 0
        %v2015 = vsel %vm806, %v1936, 0
        %v2017 = vsel %vm806, %v1950, 0
        %v2019 = vsel %vm806, %v1964, 0
        %v2021 = vsel %vm806, %v1978, 0
        %v2023 = vsel %vm806, %v1992, 0
        %2025 = vmatprep.subr.mxu0 0.0
        %2026 = vmatpush1.msra.mxu0 0.0
        %2027 = vmatprep.subr.mxu0 0.0
        %2028 = vmatpush1.msra.mxu0 0.0
        %2029 = vmatprep.subr.mxu0 0.0
        %2030 = vmatpush1.msra.mxu0 0.0
        %2031 = vmatprep.subr.mxu0 0.0
        %2032 = vmatpush1.msra.mxu0 0.0
        %2033 = vmatprep.subr.mxu0 0.0
        %2034 = vmatpush1.msra.mxu0 0.0
        %2035 = vmatprep.subr.mxu0 0.0
        %2036 = vmatpush1.msra.mxu0 0.0
        %2037 = vmatprep.subr.mxu0 0.0
        %2038 = vmatpush1.msra.mxu0 0.0
        %2039 = vmatprep.subr.mxu0 0.0
        %2040 = vmatpush1.msra.mxu0 0.0
        %2041 = vmatprep.subr.mxu0 0.0
        %2042 = vmatpush1.msra.mxu0 %v190
        %2043 = vmatprep.subr.mxu0 0.0
        %2044 = vmatpush1.msra.mxu0 %v189
        %2045 = vmatprep.subr.mxu0 0.0
        %2046 = vmatpush1.msra.mxu0 %v188
        %2047 = vmatprep.subr.mxu0 0.0
        %2048 = vmatpush1.msra.mxu0 %v187
        %2049 = vmatprep.subr.mxu0 0.0
        %2050 = vmatpush1.msra.mxu0 %v186
        %2051 = vmatprep.subr.mxu0 0.0
        %2052 = vmatpush1.msra.mxu0 %v185
        %2053 = vmatprep.subr.mxu0 0.0
        %2054 = vmatpush1.msra.mxu0 %v184
        %2055 = vmatprep.subr.mxu0 0.0
        %2056 = vmatpush1.msra.mxu0 %v183
        %2057 = vmatprep.subr.mxu0 0.0
        %2058 = vmatpush2.msra.mxu0 0.0
        %2059 = vmatprep.subr.mxu0 0.0
        %2060 = vmatpush2.msra.mxu0 0.0
        %2061 = vmatprep.subr.mxu0 0.0
        %2062 = vmatpush2.msra.mxu0 0.0
        %2063 = vmatprep.subr.mxu0 0.0
        %2064 = vmatpush2.msra.mxu0 0.0
        %2065 = vmatprep.subr.mxu0 0.0
        %2066 = vmatpush2.msra.mxu0 0.0
        %2067 = vmatprep.subr.mxu0 0.0
        %2068 = vmatpush2.msra.mxu0 0.0
        %2069 = vmatprep.subr.mxu0 0.0
        %2070 = vmatpush2.msra.mxu0 0.0
        %2071 = vmatprep.subr.mxu0 0.0
        %2072 = vmatpush2.msra.mxu0 0.0
        %2073 = vmatprep.subr.mxu0 0.0
        %2074 = vmatpush2.msra.mxu0 0.0
        %2075 = vmatprep.subr.mxu0 0.0
        %2076 = vmatpush2.msra.mxu0 0.0
        %2077 = vmatprep.subr.mxu0 0.0
        %2078 = vmatpush2.msra.mxu0 0.0
        %2079 = vmatprep.subr.mxu0 0.0
        %2080 = vmatpush2.msra.mxu0 0.0
        %2081 = vmatprep.subr.mxu0 0.0
        %2082 = vmatpush2.msra.mxu0 0.0
        %2083 = vmatprep.subr.mxu0 0.0
        %2084 = vmatpush2.msra.mxu0 0.0
        %2085 = vmatprep.subr.mxu0 0.0
        %2086 = vmatpush2.msra.mxu0 0.0
        %2087 = vmatprep.subr.mxu0 0.0
        %2088 = vmatpush2.msra.mxu0 0.0
        %2089 = vmatprep.mubr.f32.mxu0 0.0
        %2090 = vmatmul.mubr.f32.gmra.mxu0 %v1993
        %v2091 = vpop.f32.mrf.mxu0
        %v2092 = vadd.f32 0.0, %v2091
        %v2093 = vpop.f32.mrf.mxu0
        %2094 = vmatprep.mubr.f32.mxu0 0.0
        %2095 = vmatmul.mubr.f32.gmra.mxu0 %v1995
        %v2096 = vpop.f32.mrf.mxu0
        %v2097 = vadd.f32 0.0, %v2096
        %v2098 = vpop.f32.mrf.mxu0
        %2099 = vmatprep.mubr.f32.mxu0 0.0
        %2100 = vmatmul.mubr.f32.gmra.mxu0 %v1997
        %v2101 = vpop.f32.mrf.mxu0
        %v2102 = vadd.f32 0.0, %v2101
        %v2103 = vpop.f32.mrf.mxu0
        %2104 = vmatprep.mubr.f32.mxu0 0.0
        %2105 = vmatmul.mubr.f32.gmra.mxu0 %v1999
        %v2106 = vpop.f32.mrf.mxu0
        %v2107 = vadd.f32 0.0, %v2106
        %v2108 = vpop.f32.mrf.mxu0
        %2109 = vmatprep.mubr.f32.mxu0 0.0
        %2110 = vmatmul.mubr.f32.gmra.mxu0 %v2001
        %v2111 = vpop.f32.mrf.mxu0
        %v2112 = vadd.f32 0.0, %v2111
        %v2113 = vpop.f32.mrf.mxu0
        %2114 = vmatprep.mubr.f32.mxu0 0.0
        %2115 = vmatmul.mubr.f32.gmra.mxu0 %v2003
        %v2116 = vpop.f32.mrf.mxu0
        %v2117 = vadd.f32 0.0, %v2116
        %v2118 = vpop.f32.mrf.mxu0
        %2119 = vmatprep.mubr.f32.mxu0 0.0
        %2120 = vmatmul.mubr.f32.gmra.mxu0 %v2005
        %v2121 = vpop.f32.mrf.mxu0
        %v2122 = vadd.f32 0.0, %v2121
        %v2123 = vpop.f32.mrf.mxu0
        %2124 = vmatprep.mubr.f32.mxu0 0.0
        %2125 = vmatmul.mubr.f32.gmra.mxu0 %v2007
        %v2126 = vpop.f32.mrf.mxu0
        %v2127 = vadd.f32 0.0, %v2126
        %v2128 = vpop.f32.mrf.mxu0
        %2129 = vmatprep.mubr.f32.mxu0 0.0
        %2130 = vmatmul.mubr.f32.gmra.mxu0 %v2009
        %v2131 = vpop.f32.mrf.mxu0
        %v2132 = vadd.f32 0.0, %v2131
        %v2133 = vpop.f32.mrf.mxu0
        %2134 = vmatprep.mubr.f32.mxu0 0.0
        %2135 = vmatmul.mubr.f32.gmra.mxu0 %v2011
        %v2136 = vpop.f32.mrf.mxu0
        %v2137 = vadd.f32 0.0, %v2136
        %v2138 = vpop.f32.mrf.mxu0
        %2139 = vmatprep.mubr.f32.mxu0 0.0
        %2140 = vmatmul.mubr.f32.gmra.mxu0 %v2013
        %v2141 = vpop.f32.mrf.mxu0
        %v2142 = vadd.f32 0.0, %v2141
        %v2143 = vpop.f32.mrf.mxu0
        %2144 = vmatprep.mubr.f32.mxu0 0.0
        %2145 = vmatmul.mubr.f32.gmra.mxu0 %v2015
        %v2146 = vpop.f32.mrf.mxu0
        %v2147 = vadd.f32 0.0, %v2146
        %v2148 = vpop.f32.mrf.mxu0
        %2149 = vmatprep.mubr.f32.mxu0 0.0
        %2150 = vmatmul.mubr.f32.gmra.mxu0 %v2017
        %v2151 = vpop.f32.mrf.mxu0
        %v2152 = vadd.f32 0.0, %v2151
        %v2153 = vpop.f32.mrf.mxu0
        %2154 = vmatprep.mubr.f32.mxu0 0.0
        %2155 = vmatmul.mubr.f32.gmra.mxu0 %v2019
        %v2156 = vpop.f32.mrf.mxu0
        %v2157 = vadd.f32 0.0, %v2156
        %v2158 = vpop.f32.mrf.mxu0
        %2159 = vmatprep.mubr.f32.mxu0 0.0
        %2160 = vmatmul.mubr.f32.gmra.mxu0 %v2021
        %v2161 = vpop.f32.mrf.mxu0
        %v2162 = vadd.f32 0.0, %v2161
        %v2163 = vpop.f32.mrf.mxu0
        %2164 = vmatprep.mubr.f32.mxu0 0.0
        %2165 = vmatmul.mubr.f32.gmra.mxu0 %v2023
        %v2166 = vpop.f32.mrf.mxu0
        %v2167 = vadd.f32 0.0, %v2166
        %v2168 = vpop.f32.mrf.mxu0
        %2169 = vdwg.mxu0
        %v2170 = vadd.f32 %v1435, %v2092
        %v2171 = vadd.f32 %v1440, %v2097
        %v2172 = vadd.f32 %v1445, %v2102
        %v2173 = vadd.f32 %v1450, %v2107
        %v2174 = vadd.f32 %v1455, %v2112
        %v2175 = vadd.f32 %v1460, %v2117
        %v2176 = vadd.f32 %v1465, %v2122
        %v2177 = vadd.f32 %v1470, %v2127
        %v2178 = vadd.f32 %v1475, %v2132
        %v2179 = vadd.f32 %v1480, %v2137
        %v2180 = vadd.f32 %v1485, %v2142
        %v2181 = vadd.f32 %v1490, %v2147
        %v2182 = vadd.f32 %v1495, %v2152
        %v2183 = vadd.f32 %v1500, %v2157
        %v2184 = vadd.f32 %v1505, %v2162
        %v2185 = vadd.f32 %v1510, %v2167
        %v2202 = vcombine.high %v2170, %v2170
        %v2204 = vunpack.c.l.s4 1966171168
        %v2205 = vunpack.c.0.s8 %v2204
        %v2206 = vlaneseq
        %v2207 = vshrl.u32 %v2206, 7
        %v2208 = vsub.s32 %v2205, %v2207
        %v2209 = vrot.slane %v2170, %v2208
        %v2211 = vunpack.c.l.s4 1966171168
        %v2212 = vunpack.c.0.s8 %v2211
        %v2213 = vlaneseq
        %v2214 = vshrl.u32 %v2213, 7
        %v2215 = vsub.s32 %v2212, %v2214
        %v2216 = vrot.slane %v2202, %v2215
        %v2217 = vcombine.high %v2209, %v2209
        %v2218 = vcombine.high %v2216, %v2216
        %v2220 = vunpack.c.l.s4 1966171168
        %v2221 = vunpack.c.0.s8 %v2220
        %v2222 = vlaneseq
        %v2223 = vshrl.u32 %v2222, 7
        %v2224 = vsub.s32 %v2221, %v2223
        %v2225 = vrot.slane %v2209, %v2224
        %v2227 = vunpack.c.l.s4 1966171168
        %v2228 = vunpack.c.0.s8 %v2227
        %v2229 = vlaneseq
        %v2230 = vshrl.u32 %v2229, 7
        %v2231 = vsub.s32 %v2228, %v2230
        %v2232 = vrot.slane %v2216, %v2231
        %v2234 = vunpack.c.l.s4 1966171168
        %v2235 = vunpack.c.0.s8 %v2234
        %v2236 = vlaneseq
        %v2237 = vshrl.u32 %v2236, 7
        %v2238 = vsub.s32 %v2235, %v2237
        %v2239 = vrot.slane %v2217, %v2238
        %v2241 = vunpack.c.l.s4 1966171168
        %v2242 = vunpack.c.0.s8 %v2241
        %v2243 = vlaneseq
        %v2244 = vshrl.u32 %v2243, 7
        %v2245 = vsub.s32 %v2242, %v2244
        %v2246 = vrot.slane %v2218, %v2245
        %v2247 = vcombine.high %v2225, %v2225
        %v2248 = vcombine.high %v2232, %v2232
        %v2249 = vcombine.high %v2239, %v2239
        %v2250 = vcombine.high %v2246, %v2246
        %v2251 = vcombine.high %v2171, %v2171
        %v2253 = vunpack.c.l.s4 1966171168
        %v2254 = vunpack.c.0.s8 %v2253
        %v2255 = vlaneseq
        %v2256 = vshrl.u32 %v2255, 7
        %v2257 = vsub.s32 %v2254, %v2256
        %v2258 = vrot.slane %v2171, %v2257
        %v2260 = vunpack.c.l.s4 1966171168
        %v2261 = vunpack.c.0.s8 %v2260
        %v2262 = vlaneseq
        %v2263 = vshrl.u32 %v2262, 7
        %v2264 = vsub.s32 %v2261, %v2263
        %v2265 = vrot.slane %v2251, %v2264
        %v2266 = vcombine.high %v2258, %v2258
        %v2267 = vcombine.high %v2265, %v2265
        %v2269 = vunpack.c.l.s4 1966171168
        %v2270 = vunpack.c.0.s8 %v2269
        %v2271 = vlaneseq
        %v2272 = vshrl.u32 %v2271, 7
        %v2273 = vsub.s32 %v2270, %v2272
        %v2274 = vrot.slane %v2258, %v2273
        %v2276 = vunpack.c.l.s4 1966171168
        %v2277 = vunpack.c.0.s8 %v2276
        %v2278 = vlaneseq
        %v2279 = vshrl.u32 %v2278, 7
        %v2280 = vsub.s32 %v2277, %v2279
        %v2281 = vrot.slane %v2265, %v2280
        %v2283 = vunpack.c.l.s4 1966171168
        %v2284 = vunpack.c.0.s8 %v2283
        %v2285 = vlaneseq
        %v2286 = vshrl.u32 %v2285, 7
        %v2287 = vsub.s32 %v2284, %v2286
        %v2288 = vrot.slane %v2266, %v2287
        %v2290 = vunpack.c.l.s4 1966171168
        %v2291 = vunpack.c.0.s8 %v2290
        %v2292 = vlaneseq
        %v2293 = vshrl.u32 %v2292, 7
        %v2294 = vsub.s32 %v2291, %v2293
        %v2295 = vrot.slane %v2267, %v2294
        %v2296 = vcombine.high %v2274, %v2274
        %v2297 = vcombine.high %v2281, %v2281
        %v2298 = vcombine.high %v2288, %v2288
        %v2299 = vcombine.high %v2295, %v2295
        %v2300 = vcombine.high %v2172, %v2172
        %v2302 = vunpack.c.l.s4 1966171168
        %v2303 = vunpack.c.0.s8 %v2302
        %v2304 = vlaneseq
        %v2305 = vshrl.u32 %v2304, 7
        %v2306 = vsub.s32 %v2303, %v2305
        %v2307 = vrot.slane %v2172, %v2306
        %v2309 = vunpack.c.l.s4 1966171168
        %v2310 = vunpack.c.0.s8 %v2309
        %v2311 = vlaneseq
        %v2312 = vshrl.u32 %v2311, 7
        %v2313 = vsub.s32 %v2310, %v2312
        %v2314 = vrot.slane %v2300, %v2313
        %v2315 = vcombine.high %v2307, %v2307
        %v2316 = vcombine.high %v2314, %v2314
        %v2318 = vunpack.c.l.s4 1966171168
        %v2319 = vunpack.c.0.s8 %v2318
        %v2320 = vlaneseq
        %v2321 = vshrl.u32 %v2320, 7
        %v2322 = vsub.s32 %v2319, %v2321
        %v2323 = vrot.slane %v2307, %v2322
        %v2325 = vunpack.c.l.s4 1966171168
        %v2326 = vunpack.c.0.s8 %v2325
        %v2327 = vlaneseq
        %v2328 = vshrl.u32 %v2327, 7
        %v2329 = vsub.s32 %v2326, %v2328
        %v2330 = vrot.slane %v2314, %v2329
        %v2332 = vunpack.c.l.s4 1966171168
        %v2333 = vunpack.c.0.s8 %v2332
        %v2334 = vlaneseq
        %v2335 = vshrl.u32 %v2334, 7
        %v2336 = vsub.s32 %v2333, %v2335
        %v2337 = vrot.slane %v2315, %v2336
        %v2339 = vunpack.c.l.s4 1966171168
        %v2340 = vunpack.c.0.s8 %v2339
        %v2341 = vlaneseq
        %v2342 = vshrl.u32 %v2341, 7
        %v2343 = vsub.s32 %v2340, %v2342
        %v2344 = vrot.slane %v2316, %v2343
        %v2345 = vcombine.high %v2323, %v2323
        %v2346 = vcombine.high %v2330, %v2330
        %v2347 = vcombine.high %v2337, %v2337
        %v2348 = vcombine.high %v2344, %v2344
        %v2349 = vcombine.high %v2173, %v2173
        %v2351 = vunpack.c.l.s4 1966171168
        %v2352 = vunpack.c.0.s8 %v2351
        %v2353 = vlaneseq
        %v2354 = vshrl.u32 %v2353, 7
        %v2355 = vsub.s32 %v2352, %v2354
        %v2356 = vrot.slane %v2173, %v2355
        %v2358 = vunpack.c.l.s4 1966171168
        %v2359 = vunpack.c.0.s8 %v2358
        %v2360 = vlaneseq
        %v2361 = vshrl.u32 %v2360, 7
        %v2362 = vsub.s32 %v2359, %v2361
        %v2363 = vrot.slane %v2349, %v2362
        %v2364 = vcombine.high %v2356, %v2356
        %v2365 = vcombine.high %v2363, %v2363
        %v2367 = vunpack.c.l.s4 1966171168
        %v2368 = vunpack.c.0.s8 %v2367
        %v2369 = vlaneseq
        %v2370 = vshrl.u32 %v2369, 7
        %v2371 = vsub.s32 %v2368, %v2370
        %v2372 = vrot.slane %v2356, %v2371
        %v2374 = vunpack.c.l.s4 1966171168
        %v2375 = vunpack.c.0.s8 %v2374
        %v2376 = vlaneseq
        %v2377 = vshrl.u32 %v2376, 7
        %v2378 = vsub.s32 %v2375, %v2377
        %v2379 = vrot.slane %v2363, %v2378
        %v2381 = vunpack.c.l.s4 1966171168
        %v2382 = vunpack.c.0.s8 %v2381
        %v2383 = vlaneseq
        %v2384 = vshrl.u32 %v2383, 7
        %v2385 = vsub.s32 %v2382, %v2384
        %v2386 = vrot.slane %v2364, %v2385
        %v2388 = vunpack.c.l.s4 1966171168
        %v2389 = vunpack.c.0.s8 %v2388
        %v2390 = vlaneseq
        %v2391 = vshrl.u32 %v2390, 7
        %v2392 = vsub.s32 %v2389, %v2391
        %v2393 = vrot.slane %v2365, %v2392
        %v2394 = vcombine.high %v2372, %v2372
        %v2395 = vcombine.high %v2379, %v2379
        %v2396 = vcombine.high %v2386, %v2386
        %v2397 = vcombine.high %v2393, %v2393
        %v2398 = vcombine.high %v2174, %v2174
        %v2400 = vunpack.c.l.s4 1966171168
        %v2401 = vunpack.c.0.s8 %v2400
        %v2402 = vlaneseq
        %v2403 = vshrl.u32 %v2402, 7
        %v2404 = vsub.s32 %v2401, %v2403
        %v2405 = vrot.slane %v2174, %v2404
        %v2407 = vunpack.c.l.s4 1966171168
        %v2408 = vunpack.c.0.s8 %v2407
        %v2409 = vlaneseq
        %v2410 = vshrl.u32 %v2409, 7
        %v2411 = vsub.s32 %v2408, %v2410
        %v2412 = vrot.slane %v2398, %v2411
        %v2413 = vcombine.high %v2405, %v2405
        %v2414 = vcombine.high %v2412, %v2412
        %v2416 = vunpack.c.l.s4 1966171168
        %v2417 = vunpack.c.0.s8 %v2416
        %v2418 = vlaneseq
        %v2419 = vshrl.u32 %v2418, 7
        %v2420 = vsub.s32 %v2417, %v2419
        %v2421 = vrot.slane %v2405, %v2420
        %v2423 = vunpack.c.l.s4 1966171168
        %v2424 = vunpack.c.0.s8 %v2423
        %v2425 = vlaneseq
        %v2426 = vshrl.u32 %v2425, 7
        %v2427 = vsub.s32 %v2424, %v2426
        %v2428 = vrot.slane %v2412, %v2427
        %v2430 = vunpack.c.l.s4 1966171168
        %v2431 = vunpack.c.0.s8 %v2430
        %v2432 = vlaneseq
        %v2433 = vshrl.u32 %v2432, 7
        %v2434 = vsub.s32 %v2431, %v2433
        %v2435 = vrot.slane %v2413, %v2434
        %v2437 = vunpack.c.l.s4 1966171168
        %v2438 = vunpack.c.0.s8 %v2437
        %v2439 = vlaneseq
        %v2440 = vshrl.u32 %v2439, 7
        %v2441 = vsub.s32 %v2438, %v2440
        %v2442 = vrot.slane %v2414, %v2441
        %v2443 = vcombine.high %v2421, %v2421
        %v2444 = vcombine.high %v2428, %v2428
        %v2445 = vcombine.high %v2435, %v2435
        %v2446 = vcombine.high %v2442, %v2442
        %v2447 = vcombine.high %v2175, %v2175
        %v2449 = vunpack.c.l.s4 1966171168
        %v2450 = vunpack.c.0.s8 %v2449
        %v2451 = vlaneseq
        %v2452 = vshrl.u32 %v2451, 7
        %v2453 = vsub.s32 %v2450, %v2452
        %v2454 = vrot.slane %v2175, %v2453
        %v2456 = vunpack.c.l.s4 1966171168
        %v2457 = vunpack.c.0.s8 %v2456
        %v2458 = vlaneseq
        %v2459 = vshrl.u32 %v2458, 7
        %v2460 = vsub.s32 %v2457, %v2459
        %v2461 = vrot.slane %v2447, %v2460
        %v2462 = vcombine.high %v2454, %v2454
        %v2463 = vcombine.high %v2461, %v2461
        %v2465 = vunpack.c.l.s4 1966171168
        %v2466 = vunpack.c.0.s8 %v2465
        %v2467 = vlaneseq
        %v2468 = vshrl.u32 %v2467, 7
        %v2469 = vsub.s32 %v2466, %v2468
        %v2470 = vrot.slane %v2454, %v2469
        %v2472 = vunpack.c.l.s4 1966171168
        %v2473 = vunpack.c.0.s8 %v2472
        %v2474 = vlaneseq
        %v2475 = vshrl.u32 %v2474, 7
        %v2476 = vsub.s32 %v2473, %v2475
        %v2477 = vrot.slane %v2461, %v2476
        %v2479 = vunpack.c.l.s4 1966171168
        %v2480 = vunpack.c.0.s8 %v2479
        %v2481 = vlaneseq
        %v2482 = vshrl.u32 %v2481, 7
        %v2483 = vsub.s32 %v2480, %v2482
        %v2484 = vrot.slane %v2462, %v2483
        %v2486 = vunpack.c.l.s4 1966171168
        %v2487 = vunpack.c.0.s8 %v2486
        %v2488 = vlaneseq
        %v2489 = vshrl.u32 %v2488, 7
        %v2490 = vsub.s32 %v2487, %v2489
        %v2491 = vrot.slane %v2463, %v2490
        %v2492 = vcombine.high %v2470, %v2470
        %v2493 = vcombine.high %v2477, %v2477
        %v2494 = vcombine.high %v2484, %v2484
        %v2495 = vcombine.high %v2491, %v2491
        %v2496 = vcombine.high %v2176, %v2176
        %v2498 = vunpack.c.l.s4 1966171168
        %v2499 = vunpack.c.0.s8 %v2498
        %v2500 = vlaneseq
        %v2501 = vshrl.u32 %v2500, 7
        %v2502 = vsub.s32 %v2499, %v2501
        %v2503 = vrot.slane %v2176, %v2502
        %v2505 = vunpack.c.l.s4 1966171168
        %v2506 = vunpack.c.0.s8 %v2505
        %v2507 = vlaneseq
        %v2508 = vshrl.u32 %v2507, 7
        %v2509 = vsub.s32 %v2506, %v2508
        %v2510 = vrot.slane %v2496, %v2509
        %v2511 = vcombine.high %v2503, %v2503
        %v2512 = vcombine.high %v2510, %v2510
        %v2514 = vunpack.c.l.s4 1966171168
        %v2515 = vunpack.c.0.s8 %v2514
        %v2516 = vlaneseq
        %v2517 = vshrl.u32 %v2516, 7
        %v2518 = vsub.s32 %v2515, %v2517
        %v2519 = vrot.slane %v2503, %v2518
        %v2521 = vunpack.c.l.s4 1966171168
        %v2522 = vunpack.c.0.s8 %v2521
        %v2523 = vlaneseq
        %v2524 = vshrl.u32 %v2523, 7
        %v2525 = vsub.s32 %v2522, %v2524
        %v2526 = vrot.slane %v2510, %v2525
        %v2528 = vunpack.c.l.s4 1966171168
        %v2529 = vunpack.c.0.s8 %v2528
        %v2530 = vlaneseq
        %v2531 = vshrl.u32 %v2530, 7
        %v2532 = vsub.s32 %v2529, %v2531
        %v2533 = vrot.slane %v2511, %v2532
        %v2535 = vunpack.c.l.s4 1966171168
        %v2536 = vunpack.c.0.s8 %v2535
        %v2537 = vlaneseq
        %v2538 = vshrl.u32 %v2537, 7
        %v2539 = vsub.s32 %v2536, %v2538
        %v2540 = vrot.slane %v2512, %v2539
        %v2541 = vcombine.high %v2519, %v2519
        %v2542 = vcombine.high %v2526, %v2526
        %v2543 = vcombine.high %v2533, %v2533
        %v2544 = vcombine.high %v2540, %v2540
        %v2545 = vcombine.high %v2177, %v2177
        %v2547 = vunpack.c.l.s4 1966171168
        %v2548 = vunpack.c.0.s8 %v2547
        %v2549 = vlaneseq
        %v2550 = vshrl.u32 %v2549, 7
        %v2551 = vsub.s32 %v2548, %v2550
        %v2552 = vrot.slane %v2177, %v2551
        %v2554 = vunpack.c.l.s4 1966171168
        %v2555 = vunpack.c.0.s8 %v2554
        %v2556 = vlaneseq
        %v2557 = vshrl.u32 %v2556, 7
        %v2558 = vsub.s32 %v2555, %v2557
        %v2559 = vrot.slane %v2545, %v2558
        %v2560 = vcombine.high %v2552, %v2552
        %v2561 = vcombine.high %v2559, %v2559
        %v2563 = vunpack.c.l.s4 1966171168
        %v2564 = vunpack.c.0.s8 %v2563
        %v2565 = vlaneseq
        %v2566 = vshrl.u32 %v2565, 7
        %v2567 = vsub.s32 %v2564, %v2566
        %v2568 = vrot.slane %v2552, %v2567
        %v2570 = vunpack.c.l.s4 1966171168
        %v2571 = vunpack.c.0.s8 %v2570
        %v2572 = vlaneseq
        %v2573 = vshrl.u32 %v2572, 7
        %v2574 = vsub.s32 %v2571, %v2573
        %v2575 = vrot.slane %v2559, %v2574
        %v2577 = vunpack.c.l.s4 1966171168
        %v2578 = vunpack.c.0.s8 %v2577
        %v2579 = vlaneseq
        %v2580 = vshrl.u32 %v2579, 7
        %v2581 = vsub.s32 %v2578, %v2580
        %v2582 = vrot.slane %v2560, %v2581
        %v2584 = vunpack.c.l.s4 1966171168
        %v2585 = vunpack.c.0.s8 %v2584
        %v2586 = vlaneseq
        %v2587 = vshrl.u32 %v2586, 7
        %v2588 = vsub.s32 %v2585, %v2587
        %v2589 = vrot.slane %v2561, %v2588
        %v2590 = vcombine.high %v2568, %v2568
        %v2591 = vcombine.high %v2575, %v2575
        %v2592 = vcombine.high %v2582, %v2582
        %v2593 = vcombine.high %v2589, %v2589
        %v2594 = vcombine.high %v2178, %v2178
        %v2596 = vunpack.c.l.s4 1966171168
        %v2597 = vunpack.c.0.s8 %v2596
        %v2598 = vlaneseq
        %v2599 = vshrl.u32 %v2598, 7
        %v2600 = vsub.s32 %v2597, %v2599
        %v2601 = vrot.slane %v2178, %v2600
        %v2603 = vunpack.c.l.s4 1966171168
        %v2604 = vunpack.c.0.s8 %v2603
        %v2605 = vlaneseq
        %v2606 = vshrl.u32 %v2605, 7
        %v2607 = vsub.s32 %v2604, %v2606
        %v2608 = vrot.slane %v2594, %v2607
        %v2609 = vcombine.high %v2601, %v2601
        %v2610 = vcombine.high %v2608, %v2608
        %v2612 = vunpack.c.l.s4 1966171168
        %v2613 = vunpack.c.0.s8 %v2612
        %v2614 = vlaneseq
        %v2615 = vshrl.u32 %v2614, 7
        %v2616 = vsub.s32 %v2613, %v2615
        %v2617 = vrot.slane %v2601, %v2616
        %v2619 = vunpack.c.l.s4 1966171168
        %v2620 = vunpack.c.0.s8 %v2619
        %v2621 = vlaneseq
        %v2622 = vshrl.u32 %v2621, 7
        %v2623 = vsub.s32 %v2620, %v2622
        %v2624 = vrot.slane %v2608, %v2623
        %v2626 = vunpack.c.l.s4 1966171168
        %v2627 = vunpack.c.0.s8 %v2626
        %v2628 = vlaneseq
        %v2629 = vshrl.u32 %v2628, 7
        %v2630 = vsub.s32 %v2627, %v2629
        %v2631 = vrot.slane %v2609, %v2630
        %v2633 = vunpack.c.l.s4 1966171168
        %v2634 = vunpack.c.0.s8 %v2633
        %v2635 = vlaneseq
        %v2636 = vshrl.u32 %v2635, 7
        %v2637 = vsub.s32 %v2634, %v2636
        %v2638 = vrot.slane %v2610, %v2637
        %v2639 = vcombine.high %v2617, %v2617
        %v2640 = vcombine.high %v2624, %v2624
        %v2641 = vcombine.high %v2631, %v2631
        %v2642 = vcombine.high %v2638, %v2638
        %v2643 = vcombine.high %v2179, %v2179
        %v2645 = vunpack.c.l.s4 1966171168
        %v2646 = vunpack.c.0.s8 %v2645
        %v2647 = vlaneseq
        %v2648 = vshrl.u32 %v2647, 7
        %v2649 = vsub.s32 %v2646, %v2648
        %v2650 = vrot.slane %v2179, %v2649
        %v2652 = vunpack.c.l.s4 1966171168
        %v2653 = vunpack.c.0.s8 %v2652
        %v2654 = vlaneseq
        %v2655 = vshrl.u32 %v2654, 7
        %v2656 = vsub.s32 %v2653, %v2655
        %v2657 = vrot.slane %v2643, %v2656
        %v2658 = vcombine.high %v2650, %v2650
        %v2659 = vcombine.high %v2657, %v2657
        %v2661 = vunpack.c.l.s4 1966171168
        %v2662 = vunpack.c.0.s8 %v2661
        %v2663 = vlaneseq
        %v2664 = vshrl.u32 %v2663, 7
        %v2665 = vsub.s32 %v2662, %v2664
        %v2666 = vrot.slane %v2650, %v2665
        %v2668 = vunpack.c.l.s4 1966171168
        %v2669 = vunpack.c.0.s8 %v2668
        %v2670 = vlaneseq
        %v2671 = vshrl.u32 %v2670, 7
        %v2672 = vsub.s32 %v2669, %v2671
        %v2673 = vrot.slane %v2657, %v2672
        %v2675 = vunpack.c.l.s4 1966171168
        %v2676 = vunpack.c.0.s8 %v2675
        %v2677 = vlaneseq
        %v2678 = vshrl.u32 %v2677, 7
        %v2679 = vsub.s32 %v2676, %v2678
        %v2680 = vrot.slane %v2658, %v2679
        %v2682 = vunpack.c.l.s4 1966171168
        %v2683 = vunpack.c.0.s8 %v2682
        %v2684 = vlaneseq
        %v2685 = vshrl.u32 %v2684, 7
        %v2686 = vsub.s32 %v2683, %v2685
        %v2687 = vrot.slane %v2659, %v2686
        %v2688 = vcombine.high %v2666, %v2666
        %v2689 = vcombine.high %v2673, %v2673
        %v2690 = vcombine.high %v2680, %v2680
        %v2691 = vcombine.high %v2687, %v2687
        %v2692 = vcombine.high %v2180, %v2180
        %v2694 = vunpack.c.l.s4 1966171168
        %v2695 = vunpack.c.0.s8 %v2694
        %v2696 = vlaneseq
        %v2697 = vshrl.u32 %v2696, 7
        %v2698 = vsub.s32 %v2695, %v2697
        %v2699 = vrot.slane %v2180, %v2698
        %v2701 = vunpack.c.l.s4 1966171168
        %v2702 = vunpack.c.0.s8 %v2701
        %v2703 = vlaneseq
        %v2704 = vshrl.u32 %v2703, 7
        %v2705 = vsub.s32 %v2702, %v2704
        %v2706 = vrot.slane %v2692, %v2705
        %v2707 = vcombine.high %v2699, %v2699
        %v2708 = vcombine.high %v2706, %v2706
        %v2710 = vunpack.c.l.s4 1966171168
        %v2711 = vunpack.c.0.s8 %v2710
        %v2712 = vlaneseq
        %v2713 = vshrl.u32 %v2712, 7
        %v2714 = vsub.s32 %v2711, %v2713
        %v2715 = vrot.slane %v2699, %v2714
        %v2717 = vunpack.c.l.s4 1966171168
        %v2718 = vunpack.c.0.s8 %v2717
        %v2719 = vlaneseq
        %v2720 = vshrl.u32 %v2719, 7
        %v2721 = vsub.s32 %v2718, %v2720
        %v2722 = vrot.slane %v2706, %v2721
        %v2724 = vunpack.c.l.s4 1966171168
        %v2725 = vunpack.c.0.s8 %v2724
        %v2726 = vlaneseq
        %v2727 = vshrl.u32 %v2726, 7
        %v2728 = vsub.s32 %v2725, %v2727
        %v2729 = vrot.slane %v2707, %v2728
        %v2731 = vunpack.c.l.s4 1966171168
        %v2732 = vunpack.c.0.s8 %v2731
        %v2733 = vlaneseq
        %v2734 = vshrl.u32 %v2733, 7
        %v2735 = vsub.s32 %v2732, %v2734
        %v2736 = vrot.slane %v2708, %v2735
        %v2737 = vcombine.high %v2715, %v2715
        %v2738 = vcombine.high %v2722, %v2722
        %v2739 = vcombine.high %v2729, %v2729
        %v2740 = vcombine.high %v2736, %v2736
        %v2741 = vcombine.high %v2181, %v2181
        %v2743 = vunpack.c.l.s4 1966171168
        %v2744 = vunpack.c.0.s8 %v2743
        %v2745 = vlaneseq
        %v2746 = vshrl.u32 %v2745, 7
        %v2747 = vsub.s32 %v2744, %v2746
        %v2748 = vrot.slane %v2181, %v2747
        %v2750 = vunpack.c.l.s4 1966171168
        %v2751 = vunpack.c.0.s8 %v2750
        %v2752 = vlaneseq
        %v2753 = vshrl.u32 %v2752, 7
        %v2754 = vsub.s32 %v2751, %v2753
        %v2755 = vrot.slane %v2741, %v2754
        %v2756 = vcombine.high %v2748, %v2748
        %v2757 = vcombine.high %v2755, %v2755
        %v2759 = vunpack.c.l.s4 1966171168
        %v2760 = vunpack.c.0.s8 %v2759
        %v2761 = vlaneseq
        %v2762 = vshrl.u32 %v2761, 7
        %v2763 = vsub.s32 %v2760, %v2762
        %v2764 = vrot.slane %v2748, %v2763
        %v2766 = vunpack.c.l.s4 1966171168
        %v2767 = vunpack.c.0.s8 %v2766
        %v2768 = vlaneseq
        %v2769 = vshrl.u32 %v2768, 7
        %v2770 = vsub.s32 %v2767, %v2769
        %v2771 = vrot.slane %v2755, %v2770
        %v2773 = vunpack.c.l.s4 1966171168
        %v2774 = vunpack.c.0.s8 %v2773
        %v2775 = vlaneseq
        %v2776 = vshrl.u32 %v2775, 7
        %v2777 = vsub.s32 %v2774, %v2776
        %v2778 = vrot.slane %v2756, %v2777
        %v2780 = vunpack.c.l.s4 1966171168
        %v2781 = vunpack.c.0.s8 %v2780
        %v2782 = vlaneseq
        %v2783 = vshrl.u32 %v2782, 7
        %v2784 = vsub.s32 %v2781, %v2783
        %v2785 = vrot.slane %v2757, %v2784
        %v2786 = vcombine.high %v2764, %v2764
        %v2787 = vcombine.high %v2771, %v2771
        %v2788 = vcombine.high %v2778, %v2778
        %v2789 = vcombine.high %v2785, %v2785
        %v2790 = vcombine.high %v2182, %v2182
        %v2792 = vunpack.c.l.s4 1966171168
        %v2793 = vunpack.c.0.s8 %v2792
        %v2794 = vlaneseq
        %v2795 = vshrl.u32 %v2794, 7
        %v2796 = vsub.s32 %v2793, %v2795
        %v2797 = vrot.slane %v2182, %v2796
        %v2799 = vunpack.c.l.s4 1966171168
        %v2800 = vunpack.c.0.s8 %v2799
        %v2801 = vlaneseq
        %v2802 = vshrl.u32 %v2801, 7
        %v2803 = vsub.s32 %v2800, %v2802
        %v2804 = vrot.slane %v2790, %v2803
        %v2805 = vcombine.high %v2797, %v2797
        %v2806 = vcombine.high %v2804, %v2804
        %v2808 = vunpack.c.l.s4 1966171168
        %v2809 = vunpack.c.0.s8 %v2808
        %v2810 = vlaneseq
        %v2811 = vshrl.u32 %v2810, 7
        %v2812 = vsub.s32 %v2809, %v2811
        %v2813 = vrot.slane %v2797, %v2812
        %v2815 = vunpack.c.l.s4 1966171168
        %v2816 = vunpack.c.0.s8 %v2815
        %v2817 = vlaneseq
        %v2818 = vshrl.u32 %v2817, 7
        %v2819 = vsub.s32 %v2816, %v2818
        %v2820 = vrot.slane %v2804, %v2819
        %v2822 = vunpack.c.l.s4 1966171168
        %v2823 = vunpack.c.0.s8 %v2822
        %v2824 = vlaneseq
        %v2825 = vshrl.u32 %v2824, 7
        %v2826 = vsub.s32 %v2823, %v2825
        %v2827 = vrot.slane %v2805, %v2826
        %v2829 = vunpack.c.l.s4 1966171168
        %v2830 = vunpack.c.0.s8 %v2829
        %v2831 = vlaneseq
        %v2832 = vshrl.u32 %v2831, 7
        %v2833 = vsub.s32 %v2830, %v2832
        %v2834 = vrot.slane %v2806, %v2833
        %v2835 = vcombine.high %v2813, %v2813
        %v2836 = vcombine.high %v2820, %v2820
        %v2837 = vcombine.high %v2827, %v2827
        %v2838 = vcombine.high %v2834, %v2834
        %v2839 = vcombine.high %v2183, %v2183
        %v2841 = vunpack.c.l.s4 1966171168
        %v2842 = vunpack.c.0.s8 %v2841
        %v2843 = vlaneseq
        %v2844 = vshrl.u32 %v2843, 7
        %v2845 = vsub.s32 %v2842, %v2844
        %v2846 = vrot.slane %v2183, %v2845
        %v2848 = vunpack.c.l.s4 1966171168
        %v2849 = vunpack.c.0.s8 %v2848
        %v2850 = vlaneseq
        %v2851 = vshrl.u32 %v2850, 7
        %v2852 = vsub.s32 %v2849, %v2851
        %v2853 = vrot.slane %v2839, %v2852
        %v2854 = vcombine.high %v2846, %v2846
        %v2855 = vcombine.high %v2853, %v2853
        %v2857 = vunpack.c.l.s4 1966171168
        %v2858 = vunpack.c.0.s8 %v2857
        %v2859 = vlaneseq
        %v2860 = vshrl.u32 %v2859, 7
        %v2861 = vsub.s32 %v2858, %v2860
        %v2862 = vrot.slane %v2846, %v2861
        %v2864 = vunpack.c.l.s4 1966171168
        %v2865 = vunpack.c.0.s8 %v2864
        %v2866 = vlaneseq
        %v2867 = vshrl.u32 %v2866, 7
        %v2868 = vsub.s32 %v2865, %v2867
        %v2869 = vrot.slane %v2853, %v2868
        %v2871 = vunpack.c.l.s4 1966171168
        %v2872 = vunpack.c.0.s8 %v2871
        %v2873 = vlaneseq
        %v2874 = vshrl.u32 %v2873, 7
        %v2875 = vsub.s32 %v2872, %v2874
        %v2876 = vrot.slane %v2854, %v2875
        %v2878 = vunpack.c.l.s4 1966171168
        %v2879 = vunpack.c.0.s8 %v2878
        %v2880 = vlaneseq
        %v2881 = vshrl.u32 %v2880, 7
        %v2882 = vsub.s32 %v2879, %v2881
        %v2883 = vrot.slane %v2855, %v2882
        %v2884 = vcombine.high %v2862, %v2862
        %v2885 = vcombine.high %v2869, %v2869
        %v2886 = vcombine.high %v2876, %v2876
        %v2887 = vcombine.high %v2883, %v2883
        %v2888 = vcombine.high %v2184, %v2184
        %v2890 = vunpack.c.l.s4 1966171168
        %v2891 = vunpack.c.0.s8 %v2890
        %v2892 = vlaneseq
        %v2893 = vshrl.u32 %v2892, 7
        %v2894 = vsub.s32 %v2891, %v2893
        %v2895 = vrot.slane %v2184, %v2894
        %v2897 = vunpack.c.l.s4 1966171168
        %v2898 = vunpack.c.0.s8 %v2897
        %v2899 = vlaneseq
        %v2900 = vshrl.u32 %v2899, 7
        %v2901 = vsub.s32 %v2898, %v2900
        %v2902 = vrot.slane %v2888, %v2901
        %v2903 = vcombine.high %v2895, %v2895
        %v2904 = vcombine.high %v2902, %v2902
        %v2906 = vunpack.c.l.s4 1966171168
        %v2907 = vunpack.c.0.s8 %v2906
        %v2908 = vlaneseq
        %v2909 = vshrl.u32 %v2908, 7
        %v2910 = vsub.s32 %v2907, %v2909
        %v2911 = vrot.slane %v2895, %v2910
        %v2913 = vunpack.c.l.s4 1966171168
        %v2914 = vunpack.c.0.s8 %v2913
        %v2915 = vlaneseq
        %v2916 = vshrl.u32 %v2915, 7
        %v2917 = vsub.s32 %v2914, %v2916
        %v2918 = vrot.slane %v2902, %v2917
        %v2920 = vunpack.c.l.s4 1966171168
        %v2921 = vunpack.c.0.s8 %v2920
        %v2922 = vlaneseq
        %v2923 = vshrl.u32 %v2922, 7
        %v2924 = vsub.s32 %v2921, %v2923
        %v2925 = vrot.slane %v2903, %v2924
        %v2927 = vunpack.c.l.s4 1966171168
        %v2928 = vunpack.c.0.s8 %v2927
        %v2929 = vlaneseq
        %v2930 = vshrl.u32 %v2929, 7
        %v2931 = vsub.s32 %v2928, %v2930
        %v2932 = vrot.slane %v2904, %v2931
        %v2933 = vcombine.high %v2911, %v2911
        %v2934 = vcombine.high %v2918, %v2918
        %v2935 = vcombine.high %v2925, %v2925
        %v2936 = vcombine.high %v2932, %v2932
        %v2937 = vcombine.high %v2185, %v2185
        %v2939 = vunpack.c.l.s4 1966171168
        %v2940 = vunpack.c.0.s8 %v2939
        %v2941 = vlaneseq
        %v2942 = vshrl.u32 %v2941, 7
        %v2943 = vsub.s32 %v2940, %v2942
        %v2944 = vrot.slane %v2185, %v2943
        %v2946 = vunpack.c.l.s4 1966171168
        %v2947 = vunpack.c.0.s8 %v2946
        %v2948 = vlaneseq
        %v2949 = vshrl.u32 %v2948, 7
        %v2950 = vsub.s32 %v2947, %v2949
        %v2951 = vrot.slane %v2937, %v2950
        %v2952 = vcombine.high %v2944, %v2944
        %v2953 = vcombine.high %v2951, %v2951
        %v2955 = vunpack.c.l.s4 1966171168
        %v2956 = vunpack.c.0.s8 %v2955
        %v2957 = vlaneseq
        %v2958 = vshrl.u32 %v2957, 7
        %v2959 = vsub.s32 %v2956, %v2958
        %v2960 = vrot.slane %v2944, %v2959
        %v2962 = vunpack.c.l.s4 1966171168
        %v2963 = vunpack.c.0.s8 %v2962
        %v2964 = vlaneseq
        %v2965 = vshrl.u32 %v2964, 7
        %v2966 = vsub.s32 %v2963, %v2965
        %v2967 = vrot.slane %v2951, %v2966
        %v2969 = vunpack.c.l.s4 1966171168
        %v2970 = vunpack.c.0.s8 %v2969
        %v2971 = vlaneseq
        %v2972 = vshrl.u32 %v2971, 7
        %v2973 = vsub.s32 %v2970, %v2972
        %v2974 = vrot.slane %v2952, %v2973
        %v2976 = vunpack.c.l.s4 1966171168
        %v2977 = vunpack.c.0.s8 %v2976
        %v2978 = vlaneseq
        %v2979 = vshrl.u32 %v2978, 7
        %v2980 = vsub.s32 %v2977, %v2979
        %v2981 = vrot.slane %v2953, %v2980
        %v2982 = vcombine.high %v2960, %v2960
        %v2983 = vcombine.high %v2967, %v2967
        %v2984 = vcombine.high %v2974, %v2974
        %v2985 = vcombine.high %v2981, %v2981
        %3114 = vst [vmem:[%s145] sm:$0x1] %v2225
        %3115 = vst [vmem:[%s145 + $0x8] sm:$0x1] %v2239
        %3116 = vst [vmem:[%s145 + $0x10] sm:$0x1] %v2247
        %3117 = vst [vmem:[%s145 + $0x18] sm:$0x1] %v2249
        %3118 = vst [vmem:[%s145 + $0x20] sm:$0x1] %v2232
        %3119 = vst [vmem:[%s145 + $0x28] sm:$0x1] %v2246
        %3120 = vst [vmem:[%s145 + $0x30] sm:$0x1] %v2248
        %3121 = vst [vmem:[%s145 + $0x38] sm:$0x1] %v2250
        %3122 = vst [vmem:[%s145 + $0x40] sm:$0x1] %v2274
        %3123 = vst [vmem:[%s145 + $0x48] sm:$0x1] %v2288
        %3124 = vst [vmem:[%s145 + $0x50] sm:$0x1] %v2296
        %3125 = vst [vmem:[%s145 + $0x58] sm:$0x1] %v2298
        %3126 = vst [vmem:[%s145 + $0x60] sm:$0x1] %v2281
        %3127 = vst [vmem:[%s145 + $0x68] sm:$0x1] %v2295
        %3128 = vst [vmem:[%s145 + $0x70] sm:$0x1] %v2297
        %3129 = vst [vmem:[%s145 + $0x78] sm:$0x1] %v2299
        %3130 = vst [vmem:[%s145 + $0x80] sm:$0x1] %v2323
        %3131 = vst [vmem:[%s145 + $0x88] sm:$0x1] %v2337
        %3132 = vst [vmem:[%s145 + $0x90] sm:$0x1] %v2345
        %3133 = vst [vmem:[%s145 + $0x98] sm:$0x1] %v2347
        %3134 = vst [vmem:[%s145 + $0xa0] sm:$0x1] %v2330
        %3135 = vst [vmem:[%s145 + $0xa8] sm:$0x1] %v2344
        %3136 = vst [vmem:[%s145 + $0xb0] sm:$0x1] %v2346
        %3137 = vst [vmem:[%s145 + $0xb8] sm:$0x1] %v2348
        %3138 = vst [vmem:[%s145 + $0xc0] sm:$0x1] %v2372
        %3139 = vst [vmem:[%s145 + $0xc8] sm:$0x1] %v2386
        %3140 = vst [vmem:[%s145 + $0xd0] sm:$0x1] %v2394
        %3141 = vst [vmem:[%s145 + $0xd8] sm:$0x1] %v2396
        %3142 = vst [vmem:[%s145 + $0xe0] sm:$0x1] %v2379
        %3143 = vst [vmem:[%s145 + $0xe8] sm:$0x1] %v2393
        %3144 = vst [vmem:[%s145 + $0xf0] sm:$0x1] %v2395
        %3145 = vst [vmem:[%s145 + $0xf8] sm:$0x1] %v2397
        %3146 = vst [vmem:[%s145 + $0x100] sm:$0x1] %v2421
        %3147 = vst [vmem:[%s145 + $0x108] sm:$0x1] %v2435
        %3148 = vst [vmem:[%s145 + $0x110] sm:$0x1] %v2443
        %3149 = vst [vmem:[%s145 + $0x118] sm:$0x1] %v2445
        %3150 = vst [vmem:[%s145 + $0x120] sm:$0x1] %v2428
        %3151 = vst [vmem:[%s145 + $0x128] sm:$0x1] %v2442
        %3152 = vst [vmem:[%s145 + $0x130] sm:$0x1] %v2444
        %3153 = vst [vmem:[%s145 + $0x138] sm:$0x1] %v2446
        %3154 = vst [vmem:[%s145 + $0x140] sm:$0x1] %v2470
        %3155 = vst [vmem:[%s145 + $0x148] sm:$0x1] %v2484
        %3156 = vst [vmem:[%s145 + $0x150] sm:$0x1] %v2492
        %3157 = vst [vmem:[%s145 + $0x158] sm:$0x1] %v2494
        %3158 = vst [vmem:[%s145 + $0x160] sm:$0x1] %v2477
        %3159 = vst [vmem:[%s145 + $0x168] sm:$0x1] %v2491
        %3160 = vst [vmem:[%s145 + $0x170] sm:$0x1] %v2493
        %3161 = vst [vmem:[%s145 + $0x178] sm:$0x1] %v2495
        %3162 = vst [vmem:[%s145 + $0x180] sm:$0x1] %v2519
        %3163 = vst [vmem:[%s145 + $0x188] sm:$0x1] %v2533
        %3164 = vst [vmem:[%s145 + $0x190] sm:$0x1] %v2541
        %3165 = vst [vmem:[%s145 + $0x198] sm:$0x1] %v2543
        %3166 = vst [vmem:[%s145 + $0x1a0] sm:$0x1] %v2526
        %3167 = vst [vmem:[%s145 + $0x1a8] sm:$0x1] %v2540
        %3168 = vst [vmem:[%s145 + $0x1b0] sm:$0x1] %v2542
        %3169 = vst [vmem:[%s145 + $0x1b8] sm:$0x1] %v2544
        %3170 = vst [vmem:[%s145 + $0x1c0] sm:$0x1] %v2568
        %3171 = vst [vmem:[%s145 + $0x1c8] sm:$0x1] %v2582
        %3172 = vst [vmem:[%s145 + $0x1d0] sm:$0x1] %v2590
        %3173 = vst [vmem:[%s145 + $0x1d8] sm:$0x1] %v2592
        %3174 = vst [vmem:[%s145 + $0x1e0] sm:$0x1] %v2575
        %3175 = vst [vmem:[%s145 + $0x1e8] sm:$0x1] %v2589
        %3176 = vst [vmem:[%s145 + $0x1f0] sm:$0x1] %v2591
        %3177 = vst [vmem:[%s145 + $0x1f8] sm:$0x1] %v2593
        %3178 = vst [vmem:[%s145 + $0x200] sm:$0x1] %v2617
        %3179 = vst [vmem:[%s145 + $0x208] sm:$0x1] %v2631
        %3180 = vst [vmem:[%s145 + $0x210] sm:$0x1] %v2639
        %3181 = vst [vmem:[%s145 + $0x218] sm:$0x1] %v2641
        %3182 = vst [vmem:[%s145 + $0x220] sm:$0x1] %v2624
        %3183 = vst [vmem:[%s145 + $0x228] sm:$0x1] %v2638
        %3184 = vst [vmem:[%s145 + $0x230] sm:$0x1] %v2640
        %3185 = vst [vmem:[%s145 + $0x238] sm:$0x1] %v2642
        %3186 = vst [vmem:[%s145 + $0x240] sm:$0x1] %v2666
        %3187 = vst [vmem:[%s145 + $0x248] sm:$0x1] %v2680
        %3188 = vst [vmem:[%s145 + $0x250] sm:$0x1] %v2688
        %3189 = vst [vmem:[%s145 + $0x258] sm:$0x1] %v2690
        %3190 = vst [vmem:[%s145 + $0x260] sm:$0x1] %v2673
        %3191 = vst [vmem:[%s145 + $0x268] sm:$0x1] %v2687
        %3192 = vst [vmem:[%s145 + $0x270] sm:$0x1] %v2689
        %3193 = vst [vmem:[%s145 + $0x278] sm:$0x1] %v2691
        %3194 = vst [vmem:[%s145 + $0x280] sm:$0x1] %v2715
        %3195 = vst [vmem:[%s145 + $0x288] sm:$0x1] %v2729
        %3196 = vst [vmem:[%s145 + $0x290] sm:$0x1] %v2737
        %3197 = vst [vmem:[%s145 + $0x298] sm:$0x1] %v2739
        %3198 = vst [vmem:[%s145 + $0x2a0] sm:$0x1] %v2722
        %3199 = vst [vmem:[%s145 + $0x2a8] sm:$0x1] %v2736
        %3200 = vst [vmem:[%s145 + $0x2b0] sm:$0x1] %v2738
        %3201 = vst [vmem:[%s145 + $0x2b8] sm:$0x1] %v2740
        %3202 = vst [vmem:[%s145 + $0x2c0] sm:$0x1] %v2764
        %3203 = vst [vmem:[%s145 + $0x2c8] sm:$0x1] %v2778
        %3204 = vst [vmem:[%s145 + $0x2d0] sm:$0x1] %v2786
        %3205 = vst [vmem:[%s145 + $0x2d8] sm:$0x1] %v2788
        %3206 = vst [vmem:[%s145 + $0x2e0] sm:$0x1] %v2771
        %3207 = vst [vmem:[%s145 + $0x2e8] sm:$0x1] %v2785
        %3208 = vst [vmem:[%s145 + $0x2f0] sm:$0x1] %v2787
        %3209 = vst [vmem:[%s145 + $0x2f8] sm:$0x1] %v2789
        %3210 = vst [vmem:[%s145 + $0x300] sm:$0x1] %v2813
        %3211 = vst [vmem:[%s145 + $0x308] sm:$0x1] %v2827
        %3212 = vst [vmem:[%s145 + $0x310] sm:$0x1] %v2835
        %3213 = vst [vmem:[%s145 + $0x318] sm:$0x1] %v2837
        %3214 = vst [vmem:[%s145 + $0x320] sm:$0x1] %v2820
        %3215 = vst [vmem:[%s145 + $0x328] sm:$0x1] %v2834
        %3216 = vst [vmem:[%s145 + $0x330] sm:$0x1] %v2836
        %3217 = vst [vmem:[%s145 + $0x338] sm:$0x1] %v2838
        %3218 = vst [vmem:[%s145 + $0x340] sm:$0x1] %v2862
        %3219 = vst [vmem:[%s145 + $0x348] sm:$0x1] %v2876
        %3220 = vst [vmem:[%s145 + $0x350] sm:$0x1] %v2884
        %3221 = vst [vmem:[%s145 + $0x358] sm:$0x1] %v2886
        %3222 = vst [vmem:[%s145 + $0x360] sm:$0x1] %v2869
        %3223 = vst [vmem:[%s145 + $0x368] sm:$0x1] %v2883
        %3224 = vst [vmem:[%s145 + $0x370] sm:$0x1] %v2885
        %3225 = vst [vmem:[%s145 + $0x378] sm:$0x1] %v2887
        %3226 = vst [vmem:[%s145 + $0x380] sm:$0x1] %v2911
        %3227 = vst [vmem:[%s145 + $0x388] sm:$0x1] %v2925
        %3228 = vst [vmem:[%s145 + $0x390] sm:$0x1] %v2933
        %3229 = vst [vmem:[%s145 + $0x398] sm:$0x1] %v2935
        %3230 = vst [vmem:[%s145 + $0x3a0] sm:$0x1] %v2918
        %3231 = vst [vmem:[%s145 + $0x3a8] sm:$0x1] %v2932
        %3232 = vst [vmem:[%s145 + $0x3b0] sm:$0x1] %v2934
        %3233 = vst [vmem:[%s145 + $0x3b8] sm:$0x1] %v2936
        %3234 = vst [vmem:[%s145 + $0x3c0] sm:$0x1] %v2960
        %3235 = vst [vmem:[%s145 + $0x3c8] sm:$0x1] %v2974
        %3236 = vst [vmem:[%s145 + $0x3d0] sm:$0x1] %v2982
        %3237 = vst [vmem:[%s145 + $0x3d8] sm:$0x1] %v2984
        %3238 = vst [vmem:[%s145 + $0x3e0] sm:$0x1] %v2967
        %3239 = vst [vmem:[%s145 + $0x3e8] sm:$0x1] %v2981
        %3240 = vst [vmem:[%s145 + $0x3f0] sm:$0x1] %v2983
        %3241 = vst [vmem:[%s145 + $0x3f8] sm:$0x1] %v2985
        %3242 = vmatprep.subr.mxu0 0.0
        %3243 = vmatpush1.msra.mxu0 0.0
        %3244 = vmatprep.subr.mxu0 0.0
        %3245 = vmatpush1.msra.mxu0 0.0
        %3246 = vmatprep.subr.mxu0 0.0
        %3247 = vmatpush1.msra.mxu0 0.0
        %3248 = vmatprep.subr.mxu0 0.0
        %3249 = vmatpush1.msra.mxu0 0.0
        %3250 = vmatprep.subr.mxu0 0.0
        %3251 = vmatpush1.msra.mxu0 0.0
        %3252 = vmatprep.subr.mxu0 0.0
        %3253 = vmatpush1.msra.mxu0 0.0
        %3254 = vmatprep.subr.mxu0 0.0
        %3255 = vmatpush1.msra.mxu0 0.0
        %3256 = vmatprep.subr.mxu0 0.0
        %3257 = vmatpush1.msra.mxu0 0.0
        %3258 = vmatprep.subr.mxu0 0.0
        %3259 = vmatpush1.msra.mxu0 %v181
        %3260 = vmatprep.subr.mxu0 0.0
        %3261 = vmatpush1.msra.mxu0 %v180
        %3262 = vmatprep.subr.mxu0 0.0
        %3263 = vmatpush1.msra.mxu0 %v179
        %3264 = vmatprep.subr.mxu0 0.0
        %3265 = vmatpush1.msra.mxu0 %v178
        %3266 = vmatprep.subr.mxu0 0.0
        %3267 = vmatpush1.msra.mxu0 %v177
        %3268 = vmatprep.subr.mxu0 0.0
        %3269 = vmatpush1.msra.mxu0 %v176
        %3270 = vmatprep.subr.mxu0 0.0
        %3271 = vmatpush1.msra.mxu0 %v175
        %3272 = vmatprep.subr.mxu0 0.0
        %3273 = vmatpush1.msra.mxu0 %v174
        %3274 = vmatprep.subr.mxu0 0.0
        %3275 = vmatpush2.msra.mxu0 0.0
        %3276 = vmatprep.subr.mxu0 0.0
        %3277 = vmatpush2.msra.mxu0 0.0
        %3278 = vmatprep.subr.mxu0 0.0
        %3279 = vmatpush2.msra.mxu0 0.0
        %3280 = vmatprep.subr.mxu0 0.0
        %3281 = vmatpush2.msra.mxu0 0.0
        %3282 = vmatprep.subr.mxu0 0.0
        %3283 = vmatpush2.msra.mxu0 0.0
        %3284 = vmatprep.subr.mxu0 0.0
        %3285 = vmatpush2.msra.mxu0 0.0
        %3286 = vmatprep.subr.mxu0 0.0
        %3287 = vmatpush2.msra.mxu0 0.0
        %3288 = vmatprep.subr.mxu0 0.0
        %3289 = vmatpush2.msra.mxu0 0.0
        %3290 = vmatprep.subr.mxu0 0.0
        %3291 = vmatpush2.msra.mxu0 0.0
        %3292 = vmatprep.subr.mxu0 0.0
        %3293 = vmatpush2.msra.mxu0 0.0
        %3294 = vmatprep.subr.mxu0 0.0
        %3295 = vmatpush2.msra.mxu0 0.0
        %3296 = vmatprep.subr.mxu0 0.0
        %3297 = vmatpush2.msra.mxu0 0.0
        %3298 = vmatprep.subr.mxu0 0.0
        %3299 = vmatpush2.msra.mxu0 0.0
        %3300 = vmatprep.subr.mxu0 0.0
        %3301 = vmatpush2.msra.mxu0 0.0
        %3302 = vmatprep.subr.mxu0 0.0
        %3303 = vmatpush2.msra.mxu0 0.0
        %3304 = vmatprep.subr.mxu0 0.0
        %3305 = vmatpush2.msra.mxu0 0.0
        %3306 = vmatprep.mubr.f32.mxu0 0.0
        %3307 = vmatmul.mubr.f32.gmra.mxu0 %v1993
        %v3308 = vpop.f32.mrf.mxu0
        %v3309 = vadd.f32 0.0, %v3308
        %v3310 = vpop.f32.mrf.mxu0
        %3311 = vmatprep.mubr.f32.mxu0 0.0
        %3312 = vmatmul.mubr.f32.gmra.mxu0 %v1995
        %v3313 = vpop.f32.mrf.mxu0
        %v3314 = vadd.f32 0.0, %v3313
        %v3315 = vpop.f32.mrf.mxu0
        %3316 = vmatprep.mubr.f32.mxu0 0.0
        %3317 = vmatmul.mubr.f32.gmra.mxu0 %v1997
        %v3318 = vpop.f32.mrf.mxu0
        %v3319 = vadd.f32 0.0, %v3318
        %v3320 = vpop.f32.mrf.mxu0
        %3321 = vmatprep.mubr.f32.mxu0 0.0
        %3322 = vmatmul.mubr.f32.gmra.mxu0 %v1999
        %v3323 = vpop.f32.mrf.mxu0
        %v3324 = vadd.f32 0.0, %v3323
        %v3325 = vpop.f32.mrf.mxu0
        %3326 = vmatprep.mubr.f32.mxu0 0.0
        %3327 = vmatmul.mubr.f32.gmra.mxu0 %v2001
        %v3328 = vpop.f32.mrf.mxu0
        %v3329 = vadd.f32 0.0, %v3328
        %v3330 = vpop.f32.mrf.mxu0
        %3331 = vmatprep.mubr.f32.mxu0 0.0
        %3332 = vmatmul.mubr.f32.gmra.mxu0 %v2003
        %v3333 = vpop.f32.mrf.mxu0
        %v3334 = vadd.f32 0.0, %v3333
        %v3335 = vpop.f32.mrf.mxu0
        %3336 = vmatprep.mubr.f32.mxu0 0.0
        %3337 = vmatmul.mubr.f32.gmra.mxu0 %v2005
        %v3338 = vpop.f32.mrf.mxu0
        %v3339 = vadd.f32 0.0, %v3338
        %v3340 = vpop.f32.mrf.mxu0
        %3341 = vmatprep.mubr.f32.mxu0 0.0
        %3342 = vmatmul.mubr.f32.gmra.mxu0 %v2007
        %v3343 = vpop.f32.mrf.mxu0
        %v3344 = vadd.f32 0.0, %v3343
        %v3345 = vpop.f32.mrf.mxu0
        %3346 = vmatprep.mubr.f32.mxu0 0.0
        %3347 = vmatmul.mubr.f32.gmra.mxu0 %v2009
        %v3348 = vpop.f32.mrf.mxu0
        %v3349 = vadd.f32 0.0, %v3348
        %v3350 = vpop.f32.mrf.mxu0
        %3351 = vmatprep.mubr.f32.mxu0 0.0
        %3352 = vmatmul.mubr.f32.gmra.mxu0 %v2011
        %v3353 = vpop.f32.mrf.mxu0
        %v3354 = vadd.f32 0.0, %v3353
        %v3355 = vpop.f32.mrf.mxu0
        %3356 = vmatprep.mubr.f32.mxu0 0.0
        %3357 = vmatmul.mubr.f32.gmra.mxu0 %v2013
        %v3358 = vpop.f32.mrf.mxu0
        %v3359 = vadd.f32 0.0, %v3358
        %v3360 = vpop.f32.mrf.mxu0
        %3361 = vmatprep.mubr.f32.mxu0 0.0
        %3362 = vmatmul.mubr.f32.gmra.mxu0 %v2015
        %v3363 = vpop.f32.mrf.mxu0
        %v3364 = vadd.f32 0.0, %v3363
        %v3365 = vpop.f32.mrf.mxu0
        %3366 = vmatprep.mubr.f32.mxu0 0.0
        %3367 = vmatmul.mubr.f32.gmra.mxu0 %v2017
        %v3368 = vpop.f32.mrf.mxu0
        %v3369 = vadd.f32 0.0, %v3368
        %v3370 = vpop.f32.mrf.mxu0
        %3371 = vmatprep.mubr.f32.mxu0 0.0
        %3372 = vmatmul.mubr.f32.gmra.mxu0 %v2019
        %v3373 = vpop.f32.mrf.mxu0
        %v3374 = vadd.f32 0.0, %v3373
        %v3375 = vpop.f32.mrf.mxu0
        %3376 = vmatprep.mubr.f32.mxu0 0.0
        %3377 = vmatmul.mubr.f32.gmra.mxu0 %v2021
        %v3378 = vpop.f32.mrf.mxu0
        %v3379 = vadd.f32 0.0, %v3378
        %v3380 = vpop.f32.mrf.mxu0
        %3381 = vmatprep.mubr.f32.mxu0 0.0
        %3382 = vmatmul.mubr.f32.gmra.mxu0 %v2023
        %v3383 = vpop.f32.mrf.mxu0
        %v3384 = vadd.f32 0.0, %v3383
        %v3385 = vpop.f32.mrf.mxu0
        %3386 = vdwg.mxu0
        %3387 = vmatprep.subr.mxu0 0.0
        %3388 = vmatpush1.msra.mxu0 0.0
        %3389 = vmatprep.subr.mxu0 0.0
        %3390 = vmatpush1.msra.mxu0 0.0
        %3391 = vmatprep.subr.mxu0 0.0
        %3392 = vmatpush1.msra.mxu0 0.0
        %3393 = vmatprep.subr.mxu0 0.0
        %3394 = vmatpush1.msra.mxu0 0.0
        %3395 = vmatprep.subr.mxu0 0.0
        %3396 = vmatpush1.msra.mxu0 0.0
        %3397 = vmatprep.subr.mxu0 0.0
        %3398 = vmatpush1.msra.mxu0 0.0
        %3399 = vmatprep.subr.mxu0 0.0
        %3400 = vmatpush1.msra.mxu0 0.0
        %3401 = vmatprep.subr.mxu0 0.0
        %3402 = vmatpush1.msra.mxu0 0.0
        %3403 = vmatprep.subr.mxu0 0.0
        %3404 = vmatpush1.msra.mxu0 %v172
        %3405 = vmatprep.subr.mxu0 0.0
        %3406 = vmatpush1.msra.mxu0 %v171
        %3407 = vmatprep.subr.mxu0 0.0
        %3408 = vmatpush1.msra.mxu0 %v170
        %3409 = vmatprep.subr.mxu0 0.0
        %3410 = vmatpush1.msra.mxu0 %v169
        %3411 = vmatprep.subr.mxu0 0.0
        %3412 = vmatpush1.msra.mxu0 %v168
        %3413 = vmatprep.subr.mxu0 0.0
        %3414 = vmatpush1.msra.mxu0 %v167
        %3415 = vmatprep.subr.mxu0 0.0
        %3416 = vmatpush1.msra.mxu0 %v166
        %3417 = vmatprep.subr.mxu0 0.0
        %3418 = vmatpush1.msra.mxu0 %v165
        %3419 = vmatprep.subr.mxu0 0.0
        %3420 = vmatpush2.msra.mxu0 0.0
        %3421 = vmatprep.subr.mxu0 0.0
        %3422 = vmatpush2.msra.mxu0 0.0
        %3423 = vmatprep.subr.mxu0 0.0
        %3424 = vmatpush2.msra.mxu0 0.0
        %3425 = vmatprep.subr.mxu0 0.0
        %3426 = vmatpush2.msra.mxu0 0.0
        %3427 = vmatprep.subr.mxu0 0.0
        %3428 = vmatpush2.msra.mxu0 0.0
        %3429 = vmatprep.subr.mxu0 0.0
        %3430 = vmatpush2.msra.mxu0 0.0
        %3431 = vmatprep.subr.mxu0 0.0
        %3432 = vmatpush2.msra.mxu0 0.0
        %3433 = vmatprep.subr.mxu0 0.0
        %3434 = vmatpush2.msra.mxu0 0.0
        %3435 = vmatprep.subr.mxu0 0.0
        %3436 = vmatpush2.msra.mxu0 0.0
        %3437 = vmatprep.subr.mxu0 0.0
        %3438 = vmatpush2.msra.mxu0 0.0
        %3439 = vmatprep.subr.mxu0 0.0
        %3440 = vmatpush2.msra.mxu0 0.0
        %3441 = vmatprep.subr.mxu0 0.0
        %3442 = vmatpush2.msra.mxu0 0.0
        %3443 = vmatprep.subr.mxu0 0.0
        %3444 = vmatpush2.msra.mxu0 0.0
        %3445 = vmatprep.subr.mxu0 0.0
        %3446 = vmatpush2.msra.mxu0 0.0
        %3447 = vmatprep.subr.mxu0 0.0
        %3448 = vmatpush2.msra.mxu0 0.0
        %3449 = vmatprep.subr.mxu0 0.0
        %3450 = vmatpush2.msra.mxu0 0.0
        %3451 = vmatprep.mubr.f32.mxu0 0.0
        %3452 = vmatmul.mubr.f32.gmra.mxu0 %v807
        %v3453 = vpop.f32.mrf.mxu0
        %v3454 = vadd.f32 %v3309, %v3453
        %v3455 = vpop.f32.mrf.mxu0
        %3456 = vmatprep.mubr.f32.mxu0 0.0
        %3457 = vmatmul.mubr.f32.gmra.mxu0 %v809
        %v3458 = vpop.f32.mrf.mxu0
        %v3459 = vadd.f32 %v3314, %v3458
        %v3460 = vpop.f32.mrf.mxu0
        %3461 = vmatprep.mubr.f32.mxu0 0.0
        %3462 = vmatmul.mubr.f32.gmra.mxu0 %v811
        %v3463 = vpop.f32.mrf.mxu0
        %v3464 = vadd.f32 %v3319, %v3463
        %v3465 = vpop.f32.mrf.mxu0
        %3466 = vmatprep.mubr.f32.mxu0 0.0
        %3467 = vmatmul.mubr.f32.gmra.mxu0 %v813
        %v3468 = vpop.f32.mrf.mxu0
        %v3469 = vadd.f32 %v3324, %v3468
        %v3470 = vpop.f32.mrf.mxu0
        %3471 = vmatprep.mubr.f32.mxu0 0.0
        %3472 = vmatmul.mubr.f32.gmra.mxu0 %v815
        %v3473 = vpop.f32.mrf.mxu0
        %v3474 = vadd.f32 %v3329, %v3473
        %v3475 = vpop.f32.mrf.mxu0
        %3476 = vmatprep.mubr.f32.mxu0 0.0
        %3477 = vmatmul.mubr.f32.gmra.mxu0 %v817
        %v3478 = vpop.f32.mrf.mxu0
        %v3479 = vadd.f32 %v3334, %v3478
        %v3480 = vpop.f32.mrf.mxu0
        %3481 = vmatprep.mubr.f32.mxu0 0.0
        %3482 = vmatmul.mubr.f32.gmra.mxu0 %v819
        %v3483 = vpop.f32.mrf.mxu0
        %v3484 = vadd.f32 %v3339, %v3483
        %v3485 = vpop.f32.mrf.mxu0
        %3486 = vmatprep.mubr.f32.mxu0 0.0
        %3487 = vmatmul.mubr.f32.gmra.mxu0 %v821
        %v3488 = vpop.f32.mrf.mxu0
        %v3489 = vadd.f32 %v3344, %v3488
        %v3490 = vpop.f32.mrf.mxu0
        %3491 = vmatprep.mubr.f32.mxu0 0.0
        %3492 = vmatmul.mubr.f32.gmra.mxu0 %v823
        %v3493 = vpop.f32.mrf.mxu0
        %v3494 = vadd.f32 %v3349, %v3493
        %v3495 = vpop.f32.mrf.mxu0
        %3496 = vmatprep.mubr.f32.mxu0 0.0
        %3497 = vmatmul.mubr.f32.gmra.mxu0 %v825
        %v3498 = vpop.f32.mrf.mxu0
        %v3499 = vadd.f32 %v3354, %v3498
        %v3500 = vpop.f32.mrf.mxu0
        %3501 = vmatprep.mubr.f32.mxu0 0.0
        %3502 = vmatmul.mubr.f32.gmra.mxu0 %v827
        %v3503 = vpop.f32.mrf.mxu0
        %v3504 = vadd.f32 %v3359, %v3503
        %v3505 = vpop.f32.mrf.mxu0
        %3506 = vmatprep.mubr.f32.mxu0 0.0
        %3507 = vmatmul.mubr.f32.gmra.mxu0 %v829
        %v3508 = vpop.f32.mrf.mxu0
        %v3509 = vadd.f32 %v3364, %v3508
        %v3510 = vpop.f32.mrf.mxu0
        %3511 = vmatprep.mubr.f32.mxu0 0.0
        %3512 = vmatmul.mubr.f32.gmra.mxu0 %v831
        %v3513 = vpop.f32.mrf.mxu0
        %v3514 = vadd.f32 %v3369, %v3513
        %v3515 = vpop.f32.mrf.mxu0
        %3516 = vmatprep.mubr.f32.mxu0 0.0
        %3517 = vmatmul.mubr.f32.gmra.mxu0 %v833
        %v3518 = vpop.f32.mrf.mxu0
        %v3519 = vadd.f32 %v3374, %v3518
        %v3520 = vpop.f32.mrf.mxu0
        %3521 = vmatprep.mubr.f32.mxu0 0.0
        %3522 = vmatmul.mubr.f32.gmra.mxu0 %v835
        %v3523 = vpop.f32.mrf.mxu0
        %v3524 = vadd.f32 %v3379, %v3523
        %v3525 = vpop.f32.mrf.mxu0
        %3526 = vmatprep.mubr.f32.mxu0 0.0
        %3527 = vmatmul.mubr.f32.gmra.mxu0 %v837
        %v3528 = vpop.f32.mrf.mxu0
        %v3529 = vadd.f32 %v3384, %v3528
        %v3530 = vpop.f32.mrf.mxu0
        %3531 = vdwg.mxu0
        %v3532 = vld [vmem:[%s154 + $0x3] sm:$0x1]
        %v3533 = vld [vmem:[%s154 + $0xb] sm:$0x1]
        %v3534 = vld [vmem:[%s154 + $0x13] sm:$0x1]
        %v3535 = vld [vmem:[%s154 + $0x1b] sm:$0x1]
        %v3536 = vld [vmem:[%s154 + $0x23] sm:$0x1]
        %v3537 = vld [vmem:[%s154 + $0x2b] sm:$0x1]
        %v3538 = vld [vmem:[%s154 + $0x33] sm:$0x1]
        %v3539 = vld [vmem:[%s154 + $0x3b] sm:$0x1]
        %v3540 = vld [vmem:[%s154 + $0x43] sm:$0x1]
        %v3541 = vld [vmem:[%s154 + $0x4b] sm:$0x1]
        %v3542 = vld [vmem:[%s154 + $0x53] sm:$0x1]
        %v3543 = vld [vmem:[%s154 + $0x5b] sm:$0x1]
        %v3544 = vld [vmem:[%s154 + $0x63] sm:$0x1]
        %v3545 = vld [vmem:[%s154 + $0x6b] sm:$0x1]
        %v3546 = vld [vmem:[%s154 + $0x73] sm:$0x1]
        %v3547 = vld [vmem:[%s154 + $0x7b] sm:$0x1]
        %v3548 = vld [vmem:[%s154 + $0x83] sm:$0x1]
        %v3549 = vld [vmem:[%s154 + $0x8b] sm:$0x1]
        %v3550 = vld [vmem:[%s154 + $0x93] sm:$0x1]
        %v3551 = vld [vmem:[%s154 + $0x9b] sm:$0x1]
        %v3552 = vld [vmem:[%s154 + $0xa3] sm:$0x1]
        %v3553 = vld [vmem:[%s154 + $0xab] sm:$0x1]
        %v3554 = vld [vmem:[%s154 + $0xb3] sm:$0x1]
        %v3555 = vld [vmem:[%s154 + $0xbb] sm:$0x1]
        %v3556 = vld [vmem:[%s154 + $0xc3] sm:$0x1]
        %v3557 = vld [vmem:[%s154 + $0xcb] sm:$0x1]
        %v3558 = vld [vmem:[%s154 + $0xd3] sm:$0x1]
        %v3559 = vld [vmem:[%s154 + $0xdb] sm:$0x1]
        %v3560 = vld [vmem:[%s154 + $0xe3] sm:$0x1]
        %v3561 = vld [vmem:[%s154 + $0xeb] sm:$0x1]
        %v3562 = vld [vmem:[%s154 + $0xf3] sm:$0x1]
        %v3563 = vld [vmem:[%s154 + $0xfb] sm:$0x1]
        %v3564 = vld [vmem:[%s154 + $0x103] sm:$0x1]
        %v3565 = vld [vmem:[%s154 + $0x10b] sm:$0x1]
        %v3566 = vld [vmem:[%s154 + $0x113] sm:$0x1]
        %v3567 = vld [vmem:[%s154 + $0x11b] sm:$0x1]
        %v3568 = vld [vmem:[%s154 + $0x123] sm:$0x1]
        %v3569 = vld [vmem:[%s154 + $0x12b] sm:$0x1]
        %v3570 = vld [vmem:[%s154 + $0x133] sm:$0x1]
        %v3571 = vld [vmem:[%s154 + $0x13b] sm:$0x1]
        %v3572 = vld [vmem:[%s154 + $0x143] sm:$0x1]
        %v3573 = vld [vmem:[%s154 + $0x14b] sm:$0x1]
        %v3574 = vld [vmem:[%s154 + $0x153] sm:$0x1]
        %v3575 = vld [vmem:[%s154 + $0x15b] sm:$0x1]
        %v3576 = vld [vmem:[%s154 + $0x163] sm:$0x1]
        %v3577 = vld [vmem:[%s154 + $0x16b] sm:$0x1]
        %v3578 = vld [vmem:[%s154 + $0x173] sm:$0x1]
        %v3579 = vld [vmem:[%s154 + $0x17b] sm:$0x1]
        %v3580 = vld [vmem:[%s154 + $0x183] sm:$0x1]
        %v3581 = vld [vmem:[%s154 + $0x18b] sm:$0x1]
        %v3582 = vld [vmem:[%s154 + $0x193] sm:$0x1]
        %v3583 = vld [vmem:[%s154 + $0x19b] sm:$0x1]
        %v3584 = vld [vmem:[%s154 + $0x1a3] sm:$0x1]
        %v3585 = vld [vmem:[%s154 + $0x1ab] sm:$0x1]
        %v3586 = vld [vmem:[%s154 + $0x1b3] sm:$0x1]
        %v3587 = vld [vmem:[%s154 + $0x1bb] sm:$0x1]
        %v3588 = vld [vmem:[%s154 + $0x1c3] sm:$0x1]
        %v3589 = vld [vmem:[%s154 + $0x1cb] sm:$0x1]
        %v3590 = vld [vmem:[%s154 + $0x1d3] sm:$0x1]
        %v3591 = vld [vmem:[%s154 + $0x1db] sm:$0x1]
        %v3592 = vld [vmem:[%s154 + $0x1e3] sm:$0x1]
        %v3593 = vld [vmem:[%s154 + $0x1eb] sm:$0x1]
        %v3594 = vld [vmem:[%s154 + $0x1f3] sm:$0x1]
        %v3595 = vld [vmem:[%s154 + $0x1fb] sm:$0x1]
        %v3596 = vld [vmem:[%s154 + $0x203] sm:$0x1]
        %v3597 = vld [vmem:[%s154 + $0x20b] sm:$0x1]
        %v3598 = vld [vmem:[%s154 + $0x213] sm:$0x1]
        %v3599 = vld [vmem:[%s154 + $0x21b] sm:$0x1]
        %v3600 = vld [vmem:[%s154 + $0x223] sm:$0x1]
        %v3601 = vld [vmem:[%s154 + $0x22b] sm:$0x1]
        %v3602 = vld [vmem:[%s154 + $0x233] sm:$0x1]
        %v3603 = vld [vmem:[%s154 + $0x23b] sm:$0x1]
        %v3604 = vld [vmem:[%s154 + $0x243] sm:$0x1]
        %v3605 = vld [vmem:[%s154 + $0x24b] sm:$0x1]
        %v3606 = vld [vmem:[%s154 + $0x253] sm:$0x1]
        %v3607 = vld [vmem:[%s154 + $0x25b] sm:$0x1]
        %v3608 = vld [vmem:[%s154 + $0x263] sm:$0x1]
        %v3609 = vld [vmem:[%s154 + $0x26b] sm:$0x1]
        %v3610 = vld [vmem:[%s154 + $0x273] sm:$0x1]
        %v3611 = vld [vmem:[%s154 + $0x27b] sm:$0x1]
        %v3612 = vld [vmem:[%s154 + $0x283] sm:$0x1]
        %v3613 = vld [vmem:[%s154 + $0x28b] sm:$0x1]
        %v3614 = vld [vmem:[%s154 + $0x293] sm:$0x1]
        %v3615 = vld [vmem:[%s154 + $0x29b] sm:$0x1]
        %v3616 = vld [vmem:[%s154 + $0x2a3] sm:$0x1]
        %v3617 = vld [vmem:[%s154 + $0x2ab] sm:$0x1]
        %v3618 = vld [vmem:[%s154 + $0x2b3] sm:$0x1]
        %v3619 = vld [vmem:[%s154 + $0x2bb] sm:$0x1]
        %v3620 = vld [vmem:[%s154 + $0x2c3] sm:$0x1]
        %v3621 = vld [vmem:[%s154 + $0x2cb] sm:$0x1]
        %v3622 = vld [vmem:[%s154 + $0x2d3] sm:$0x1]
        %v3623 = vld [vmem:[%s154 + $0x2db] sm:$0x1]
        %v3624 = vld [vmem:[%s154 + $0x2e3] sm:$0x1]
        %v3625 = vld [vmem:[%s154 + $0x2eb] sm:$0x1]
        %v3626 = vld [vmem:[%s154 + $0x2f3] sm:$0x1]
        %v3627 = vld [vmem:[%s154 + $0x2fb] sm:$0x1]
        %v3628 = vld [vmem:[%s154 + $0x303] sm:$0x1]
        %v3629 = vld [vmem:[%s154 + $0x30b] sm:$0x1]
        %v3630 = vld [vmem:[%s154 + $0x313] sm:$0x1]
        %v3631 = vld [vmem:[%s154 + $0x31b] sm:$0x1]
        %v3632 = vld [vmem:[%s154 + $0x323] sm:$0x1]
        %v3633 = vld [vmem:[%s154 + $0x32b] sm:$0x1]
        %v3634 = vld [vmem:[%s154 + $0x333] sm:$0x1]
        %v3635 = vld [vmem:[%s154 + $0x33b] sm:$0x1]
        %v3636 = vld [vmem:[%s154 + $0x343] sm:$0x1]
        %v3637 = vld [vmem:[%s154 + $0x34b] sm:$0x1]
        %v3638 = vld [vmem:[%s154 + $0x353] sm:$0x1]
        %v3639 = vld [vmem:[%s154 + $0x35b] sm:$0x1]
        %v3640 = vld [vmem:[%s154 + $0x363] sm:$0x1]
        %v3641 = vld [vmem:[%s154 + $0x36b] sm:$0x1]
        %v3642 = vld [vmem:[%s154 + $0x373] sm:$0x1]
        %v3643 = vld [vmem:[%s154 + $0x37b] sm:$0x1]
        %v3644 = vld [vmem:[%s154 + $0x383] sm:$0x1]
        %v3645 = vld [vmem:[%s154 + $0x38b] sm:$0x1]
        %v3646 = vld [vmem:[%s154 + $0x393] sm:$0x1]
        %v3647 = vld [vmem:[%s154 + $0x39b] sm:$0x1]
        %v3648 = vld [vmem:[%s154 + $0x3a3] sm:$0x1]
        %v3649 = vld [vmem:[%s154 + $0x3ab] sm:$0x1]
        %v3650 = vld [vmem:[%s154 + $0x3b3] sm:$0x1]
        %v3651 = vld [vmem:[%s154 + $0x3bb] sm:$0x1]
        %v3652 = vld [vmem:[%s154 + $0x3c3] sm:$0x1]
        %v3653 = vld [vmem:[%s154 + $0x3cb] sm:$0x1]
        %v3654 = vld [vmem:[%s154 + $0x3d3] sm:$0x1]
        %v3655 = vld [vmem:[%s154 + $0x3db] sm:$0x1]
        %v3656 = vld [vmem:[%s154 + $0x3e3] sm:$0x1]
        %v3657 = vld [vmem:[%s154 + $0x3eb] sm:$0x1]
        %v3658 = vld [vmem:[%s154 + $0x3f3] sm:$0x1]
        %v3659 = vld [vmem:[%s154 + $0x3fb] sm:$0x1]
        %v3788 = vrot.slane %v3533, 7
        %v3789 = vsel %vm576, %v3788, %v3532
        %v3790 = vrot.slane %v3534, 6
        %v3791 = vsel %vm579, %v3790, %v3789
        %v3792 = vrot.slane %v3535, 5
        %v3793 = vsel %vm582, %v3792, %v3791
        %v3794 = vrot.slane %v3536, 4
        %v3795 = vsel %vm585, %v3794, %v3793
        %v3796 = vrot.slane %v3537, 3
        %v3797 = vsel %vm588, %v3796, %v3795
        %v3798 = vrot.slane %v3538, 2
        %v3799 = vsel %vm591, %v3798, %v3797
        %v3800 = vrot.slane %v3539, 1
        %v3801 = vsel %vm594, %v3800, %v3799
        %v3802 = vrot.slane %v3541, 7
        %v3803 = vsel %vm576, %v3802, %v3540
        %v3804 = vrot.slane %v3542, 6
        %v3805 = vsel %vm579, %v3804, %v3803
        %v3806 = vrot.slane %v3543, 5
        %v3807 = vsel %vm582, %v3806, %v3805
        %v3808 = vrot.slane %v3544, 4
        %v3809 = vsel %vm585, %v3808, %v3807
        %v3810 = vrot.slane %v3545, 3
        %v3811 = vsel %vm588, %v3810, %v3809
        %v3812 = vrot.slane %v3546, 2
        %v3813 = vsel %vm591, %v3812, %v3811
        %v3814 = vrot.slane %v3547, 1
        %v3815 = vsel %vm594, %v3814, %v3813
        %v3816 = vrot.slane %v3549, 7
        %v3817 = vsel %vm576, %v3816, %v3548
        %v3818 = vrot.slane %v3550, 6
        %v3819 = vsel %vm579, %v3818, %v3817
        %v3820 = vrot.slane %v3551, 5
        %v3821 = vsel %vm582, %v3820, %v3819
        %v3822 = vrot.slane %v3552, 4
        %v3823 = vsel %vm585, %v3822, %v3821
        %v3824 = vrot.slane %v3553, 3
        %v3825 = vsel %vm588, %v3824, %v3823
        %v3826 = vrot.slane %v3554, 2
        %v3827 = vsel %vm591, %v3826, %v3825
        %v3828 = vrot.slane %v3555, 1
        %v3829 = vsel %vm594, %v3828, %v3827
        %v3830 = vrot.slane %v3557, 7
        %v3831 = vsel %vm576, %v3830, %v3556
        %v3832 = vrot.slane %v3558, 6
        %v3833 = vsel %vm579, %v3832, %v3831
        %v3834 = vrot.slane %v3559, 5
        %v3835 = vsel %vm582, %v3834, %v3833
        %v3836 = vrot.slane %v3560, 4
        %v3837 = vsel %vm585, %v3836, %v3835
        %v3838 = vrot.slane %v3561, 3
        %v3839 = vsel %vm588, %v3838, %v3837
        %v3840 = vrot.slane %v3562, 2
        %v3841 = vsel %vm591, %v3840, %v3839
        %v3842 = vrot.slane %v3563, 1
        %v3843 = vsel %vm594, %v3842, %v3841
        %v3844 = vrot.slane %v3565, 7
        %v3845 = vsel %vm576, %v3844, %v3564
        %v3846 = vrot.slane %v3566, 6
        %v3847 = vsel %vm579, %v3846, %v3845
        %v3848 = vrot.slane %v3567, 5
        %v3849 = vsel %vm582, %v3848, %v3847
        %v3850 = vrot.slane %v3568, 4
        %v3851 = vsel %vm585, %v3850, %v3849
        %v3852 = vrot.slane %v3569, 3
        %v3853 = vsel %vm588, %v3852, %v3851
        %v3854 = vrot.slane %v3570, 2
        %v3855 = vsel %vm591, %v3854, %v3853
        %v3856 = vrot.slane %v3571, 1
        %v3857 = vsel %vm594, %v3856, %v3855
        %v3858 = vrot.slane %v3573, 7
        %v3859 = vsel %vm576, %v3858, %v3572
        %v3860 = vrot.slane %v3574, 6
        %v3861 = vsel %vm579, %v3860, %v3859
        %v3862 = vrot.slane %v3575, 5
        %v3863 = vsel %vm582, %v3862, %v3861
        %v3864 = vrot.slane %v3576, 4
        %v3865 = vsel %vm585, %v3864, %v3863
        %v3866 = vrot.slane %v3577, 3
        %v3867 = vsel %vm588, %v3866, %v3865
        %v3868 = vrot.slane %v3578, 2
        %v3869 = vsel %vm591, %v3868, %v3867
        %v3870 = vrot.slane %v3579, 1
        %v3871 = vsel %vm594, %v3870, %v3869
        %v3872 = vrot.slane %v3581, 7
        %v3873 = vsel %vm576, %v3872, %v3580
        %v3874 = vrot.slane %v3582, 6
        %v3875 = vsel %vm579, %v3874, %v3873
        %v3876 = vrot.slane %v3583, 5
        %v3877 = vsel %vm582, %v3876, %v3875
        %v3878 = vrot.slane %v3584, 4
        %v3879 = vsel %vm585, %v3878, %v3877
        %v3880 = vrot.slane %v3585, 3
        %v3881 = vsel %vm588, %v3880, %v3879
        %v3882 = vrot.slane %v3586, 2
        %v3883 = vsel %vm591, %v3882, %v3881
        %v3884 = vrot.slane %v3587, 1
        %v3885 = vsel %vm594, %v3884, %v3883
        %v3886 = vrot.slane %v3589, 7
        %v3887 = vsel %vm576, %v3886, %v3588
        %v3888 = vrot.slane %v3590, 6
        %v3889 = vsel %vm579, %v3888, %v3887
        %v3890 = vrot.slane %v3591, 5
        %v3891 = vsel %vm582, %v3890, %v3889
        %v3892 = vrot.slane %v3592, 4
        %v3893 = vsel %vm585, %v3892, %v3891
        %v3894 = vrot.slane %v3593, 3
        %v3895 = vsel %vm588, %v3894, %v3893
        %v3896 = vrot.slane %v3594, 2
        %v3897 = vsel %vm591, %v3896, %v3895
        %v3898 = vrot.slane %v3595, 1
        %v3899 = vsel %vm594, %v3898, %v3897
        %v3900 = vrot.slane %v3597, 7
        %v3901 = vsel %vm576, %v3900, %v3596
        %v3902 = vrot.slane %v3598, 6
        %v3903 = vsel %vm579, %v3902, %v3901
        %v3904 = vrot.slane %v3599, 5
        %v3905 = vsel %vm582, %v3904, %v3903
        %v3906 = vrot.slane %v3600, 4
        %v3907 = vsel %vm585, %v3906, %v3905
        %v3908 = vrot.slane %v3601, 3
        %v3909 = vsel %vm588, %v3908, %v3907
        %v3910 = vrot.slane %v3602, 2
        %v3911 = vsel %vm591, %v3910, %v3909
        %v3912 = vrot.slane %v3603, 1
        %v3913 = vsel %vm594, %v3912, %v3911
        %v3914 = vrot.slane %v3605, 7
        %v3915 = vsel %vm576, %v3914, %v3604
        %v3916 = vrot.slane %v3606, 6
        %v3917 = vsel %vm579, %v3916, %v3915
        %v3918 = vrot.slane %v3607, 5
        %v3919 = vsel %vm582, %v3918, %v3917
        %v3920 = vrot.slane %v3608, 4
        %v3921 = vsel %vm585, %v3920, %v3919
        %v3922 = vrot.slane %v3609, 3
        %v3923 = vsel %vm588, %v3922, %v3921
        %v3924 = vrot.slane %v3610, 2
        %v3925 = vsel %vm591, %v3924, %v3923
        %v3926 = vrot.slane %v3611, 1
        %v3927 = vsel %vm594, %v3926, %v3925
        %v3928 = vrot.slane %v3613, 7
        %v3929 = vsel %vm576, %v3928, %v3612
        %v3930 = vrot.slane %v3614, 6
        %v3931 = vsel %vm579, %v3930, %v3929
        %v3932 = vrot.slane %v3615, 5
        %v3933 = vsel %vm582, %v3932, %v3931
        %v3934 = vrot.slane %v3616, 4
        %v3935 = vsel %vm585, %v3934, %v3933
        %v3936 = vrot.slane %v3617, 3
        %v3937 = vsel %vm588, %v3936, %v3935
        %v3938 = vrot.slane %v3618, 2
        %v3939 = vsel %vm591, %v3938, %v3937
        %v3940 = vrot.slane %v3619, 1
        %v3941 = vsel %vm594, %v3940, %v3939
        %v3942 = vrot.slane %v3621, 7
        %v3943 = vsel %vm576, %v3942, %v3620
        %v3944 = vrot.slane %v3622, 6
        %v3945 = vsel %vm579, %v3944, %v3943
        %v3946 = vrot.slane %v3623, 5
        %v3947 = vsel %vm582, %v3946, %v3945
        %v3948 = vrot.slane %v3624, 4
        %v3949 = vsel %vm585, %v3948, %v3947
        %v3950 = vrot.slane %v3625, 3
        %v3951 = vsel %vm588, %v3950, %v3949
        %v3952 = vrot.slane %v3626, 2
        %v3953 = vsel %vm591, %v3952, %v3951
        %v3954 = vrot.slane %v3627, 1
        %v3955 = vsel %vm594, %v3954, %v3953
        %v3956 = vrot.slane %v3629, 7
        %v3957 = vsel %vm576, %v3956, %v3628
        %v3958 = vrot.slane %v3630, 6
        %v3959 = vsel %vm579, %v3958, %v3957
        %v3960 = vrot.slane %v3631, 5
        %v3961 = vsel %vm582, %v3960, %v3959
        %v3962 = vrot.slane %v3632, 4
        %v3963 = vsel %vm585, %v3962, %v3961
        %v3964 = vrot.slane %v3633, 3
        %v3965 = vsel %vm588, %v3964, %v3963
        %v3966 = vrot.slane %v3634, 2
        %v3967 = vsel %vm591, %v3966, %v3965
        %v3968 = vrot.slane %v3635, 1
        %v3969 = vsel %vm594, %v3968, %v3967
        %v3970 = vrot.slane %v3637, 7
        %v3971 = vsel %vm576, %v3970, %v3636
        %v3972 = vrot.slane %v3638, 6
        %v3973 = vsel %vm579, %v3972, %v3971
        %v3974 = vrot.slane %v3639, 5
        %v3975 = vsel %vm582, %v3974, %v3973
        %v3976 = vrot.slane %v3640, 4
        %v3977 = vsel %vm585, %v3976, %v3975
        %v3978 = vrot.slane %v3641, 3
        %v3979 = vsel %vm588, %v3978, %v3977
        %v3980 = vrot.slane %v3642, 2
        %v3981 = vsel %vm591, %v3980, %v3979
        %v3982 = vrot.slane %v3643, 1
        %v3983 = vsel %vm594, %v3982, %v3981
        %v3984 = vrot.slane %v3645, 7
        %v3985 = vsel %vm576, %v3984, %v3644
        %v3986 = vrot.slane %v3646, 6
        %v3987 = vsel %vm579, %v3986, %v3985
        %v3988 = vrot.slane %v3647, 5
        %v3989 = vsel %vm582, %v3988, %v3987
        %v3990 = vrot.slane %v3648, 4
        %v3991 = vsel %vm585, %v3990, %v3989
        %v3992 = vrot.slane %v3649, 3
        %v3993 = vsel %vm588, %v3992, %v3991
        %v3994 = vrot.slane %v3650, 2
        %v3995 = vsel %vm591, %v3994, %v3993
        %v3996 = vrot.slane %v3651, 1
        %v3997 = vsel %vm594, %v3996, %v3995
        %v3998 = vrot.slane %v3653, 7
        %v3999 = vsel %vm576, %v3998, %v3652
        %v4000 = vrot.slane %v3654, 6
        %v4001 = vsel %vm579, %v4000, %v3999
        %v4002 = vrot.slane %v3655, 5
        %v4003 = vsel %vm582, %v4002, %v4001
        %v4004 = vrot.slane %v3656, 4
        %v4005 = vsel %vm585, %v4004, %v4003
        %v4006 = vrot.slane %v3657, 3
        %v4007 = vsel %vm588, %v4006, %v4005
        %v4008 = vrot.slane %v3658, 2
        %v4009 = vsel %vm591, %v4008, %v4007
        %v4010 = vrot.slane %v3659, 1
        %v4011 = vsel %vm594, %v4010, %v4009
        %v4012 = vsel %vm806, %v3801, 0
        %v4014 = vsel %vm806, %v3815, 0
        %v4016 = vsel %vm806, %v3829, 0
        %v4018 = vsel %vm806, %v3843, 0
        %v4020 = vsel %vm806, %v3857, 0
        %v4022 = vsel %vm806, %v3871, 0
        %v4024 = vsel %vm806, %v3885, 0
        %v4026 = vsel %vm806, %v3899, 0
        %v4028 = vsel %vm806, %v3913, 0
        %v4030 = vsel %vm806, %v3927, 0
        %v4032 = vsel %vm806, %v3941, 0
        %v4034 = vsel %vm806, %v3955, 0
        %v4036 = vsel %vm806, %v3969, 0
        %v4038 = vsel %vm806, %v3983, 0
        %v4040 = vsel %vm806, %v3997, 0
        %v4042 = vsel %vm806, %v4011, 0
        %4044 = vmatprep.subr.mxu0 0.0
        %4045 = vmatpush1.msra.mxu0 0.0
        %4046 = vmatprep.subr.mxu0 0.0
        %4047 = vmatpush1.msra.mxu0 0.0
        %4048 = vmatprep.subr.mxu0 0.0
        %4049 = vmatpush1.msra.mxu0 0.0
        %4050 = vmatprep.subr.mxu0 0.0
        %4051 = vmatpush1.msra.mxu0 0.0
        %4052 = vmatprep.subr.mxu0 0.0
        %4053 = vmatpush1.msra.mxu0 0.0
        %4054 = vmatprep.subr.mxu0 0.0
        %4055 = vmatpush1.msra.mxu0 0.0
        %4056 = vmatprep.subr.mxu0 0.0
        %4057 = vmatpush1.msra.mxu0 0.0
        %4058 = vmatprep.subr.mxu0 0.0
        %4059 = vmatpush1.msra.mxu0 0.0
        %4060 = vmatprep.subr.mxu0 0.0
        %4061 = vmatpush1.msra.mxu0 %v190
        %4062 = vmatprep.subr.mxu0 0.0
        %4063 = vmatpush1.msra.mxu0 %v189
        %4064 = vmatprep.subr.mxu0 0.0
        %4065 = vmatpush1.msra.mxu0 %v188
        %4066 = vmatprep.subr.mxu0 0.0
        %4067 = vmatpush1.msra.mxu0 %v187
        %4068 = vmatprep.subr.mxu0 0.0
        %4069 = vmatpush1.msra.mxu0 %v186
        %4070 = vmatprep.subr.mxu0 0.0
        %4071 = vmatpush1.msra.mxu0 %v185
        %4072 = vmatprep.subr.mxu0 0.0
        %4073 = vmatpush1.msra.mxu0 %v184
        %4074 = vmatprep.subr.mxu0 0.0
        %4075 = vmatpush1.msra.mxu0 %v183
        %4076 = vmatprep.subr.mxu0 0.0
        %4077 = vmatpush2.msra.mxu0 0.0
        %4078 = vmatprep.subr.mxu0 0.0
        %4079 = vmatpush2.msra.mxu0 0.0
        %4080 = vmatprep.subr.mxu0 0.0
        %4081 = vmatpush2.msra.mxu0 0.0
        %4082 = vmatprep.subr.mxu0 0.0
        %4083 = vmatpush2.msra.mxu0 0.0
        %4084 = vmatprep.subr.mxu0 0.0
        %4085 = vmatpush2.msra.mxu0 0.0
        %4086 = vmatprep.subr.mxu0 0.0
        %4087 = vmatpush2.msra.mxu0 0.0
        %4088 = vmatprep.subr.mxu0 0.0
        %4089 = vmatpush2.msra.mxu0 0.0
        %4090 = vmatprep.subr.mxu0 0.0
        %4091 = vmatpush2.msra.mxu0 0.0
        %4092 = vmatprep.subr.mxu0 0.0
        %4093 = vmatpush2.msra.mxu0 0.0
        %4094 = vmatprep.subr.mxu0 0.0
        %4095 = vmatpush2.msra.mxu0 0.0
        %4096 = vmatprep.subr.mxu0 0.0
        %4097 = vmatpush2.msra.mxu0 0.0
        %4098 = vmatprep.subr.mxu0 0.0
        %4099 = vmatpush2.msra.mxu0 0.0
        %4100 = vmatprep.subr.mxu0 0.0
        %4101 = vmatpush2.msra.mxu0 0.0
        %4102 = vmatprep.subr.mxu0 0.0
        %4103 = vmatpush2.msra.mxu0 0.0
        %4104 = vmatprep.subr.mxu0 0.0
        %4105 = vmatpush2.msra.mxu0 0.0
        %4106 = vmatprep.subr.mxu0 0.0
        %4107 = vmatpush2.msra.mxu0 0.0
        %4108 = vmatprep.mubr.f32.mxu0 0.0
        %4109 = vmatmul.mubr.f32.gmra.mxu0 %v4012
        %v4110 = vpop.f32.mrf.mxu0
        %v4111 = vadd.f32 0.0, %v4110
        %v4112 = vpop.f32.mrf.mxu0
        %4113 = vmatprep.mubr.f32.mxu0 0.0
        %4114 = vmatmul.mubr.f32.gmra.mxu0 %v4014
        %v4115 = vpop.f32.mrf.mxu0
        %v4116 = vadd.f32 0.0, %v4115
        %v4117 = vpop.f32.mrf.mxu0
        %4118 = vmatprep.mubr.f32.mxu0 0.0
        %4119 = vmatmul.mubr.f32.gmra.mxu0 %v4016
        %v4120 = vpop.f32.mrf.mxu0
        %v4121 = vadd.f32 0.0, %v4120
        %v4122 = vpop.f32.mrf.mxu0
        %4123 = vmatprep.mubr.f32.mxu0 0.0
        %4124 = vmatmul.mubr.f32.gmra.mxu0 %v4018
        %v4125 = vpop.f32.mrf.mxu0
        %v4126 = vadd.f32 0.0, %v4125
        %v4127 = vpop.f32.mrf.mxu0
        %4128 = vmatprep.mubr.f32.mxu0 0.0
        %4129 = vmatmul.mubr.f32.gmra.mxu0 %v4020
        %v4130 = vpop.f32.mrf.mxu0
        %v4131 = vadd.f32 0.0, %v4130
        %v4132 = vpop.f32.mrf.mxu0
        %4133 = vmatprep.mubr.f32.mxu0 0.0
        %4134 = vmatmul.mubr.f32.gmra.mxu0 %v4022
        %v4135 = vpop.f32.mrf.mxu0
        %v4136 = vadd.f32 0.0, %v4135
        %v4137 = vpop.f32.mrf.mxu0
        %4138 = vmatprep.mubr.f32.mxu0 0.0
        %4139 = vmatmul.mubr.f32.gmra.mxu0 %v4024
        %v4140 = vpop.f32.mrf.mxu0
        %v4141 = vadd.f32 0.0, %v4140
        %v4142 = vpop.f32.mrf.mxu0
        %4143 = vmatprep.mubr.f32.mxu0 0.0
        %4144 = vmatmul.mubr.f32.gmra.mxu0 %v4026
        %v4145 = vpop.f32.mrf.mxu0
        %v4146 = vadd.f32 0.0, %v4145
        %v4147 = vpop.f32.mrf.mxu0
        %4148 = vmatprep.mubr.f32.mxu0 0.0
        %4149 = vmatmul.mubr.f32.gmra.mxu0 %v4028
        %v4150 = vpop.f32.mrf.mxu0
        %v4151 = vadd.f32 0.0, %v4150
        %v4152 = vpop.f32.mrf.mxu0
        %4153 = vmatprep.mubr.f32.mxu0 0.0
        %4154 = vmatmul.mubr.f32.gmra.mxu0 %v4030
        %v4155 = vpop.f32.mrf.mxu0
        %v4156 = vadd.f32 0.0, %v4155
        %v4157 = vpop.f32.mrf.mxu0
        %4158 = vmatprep.mubr.f32.mxu0 0.0
        %4159 = vmatmul.mubr.f32.gmra.mxu0 %v4032
        %v4160 = vpop.f32.mrf.mxu0
        %v4161 = vadd.f32 0.0, %v4160
        %v4162 = vpop.f32.mrf.mxu0
        %4163 = vmatprep.mubr.f32.mxu0 0.0
        %4164 = vmatmul.mubr.f32.gmra.mxu0 %v4034
        %v4165 = vpop.f32.mrf.mxu0
        %v4166 = vadd.f32 0.0, %v4165
        %v4167 = vpop.f32.mrf.mxu0
        %4168 = vmatprep.mubr.f32.mxu0 0.0
        %4169 = vmatmul.mubr.f32.gmra.mxu0 %v4036
        %v4170 = vpop.f32.mrf.mxu0
        %v4171 = vadd.f32 0.0, %v4170
        %v4172 = vpop.f32.mrf.mxu0
        %4173 = vmatprep.mubr.f32.mxu0 0.0
        %4174 = vmatmul.mubr.f32.gmra.mxu0 %v4038
        %v4175 = vpop.f32.mrf.mxu0
        %v4176 = vadd.f32 0.0, %v4175
        %v4177 = vpop.f32.mrf.mxu0
        %4178 = vmatprep.mubr.f32.mxu0 0.0
        %4179 = vmatmul.mubr.f32.gmra.mxu0 %v4040
        %v4180 = vpop.f32.mrf.mxu0
        %v4181 = vadd.f32 0.0, %v4180
        %v4182 = vpop.f32.mrf.mxu0
        %4183 = vmatprep.mubr.f32.mxu0 0.0
        %4184 = vmatmul.mubr.f32.gmra.mxu0 %v4042
        %v4185 = vpop.f32.mrf.mxu0
        %v4186 = vadd.f32 0.0, %v4185
        %v4187 = vpop.f32.mrf.mxu0
        %4188 = vdwg.mxu0
        %v4189 = vadd.f32 %v3454, %v4111
        %v4190 = vadd.f32 %v3459, %v4116
        %v4191 = vadd.f32 %v3464, %v4121
        %v4192 = vadd.f32 %v3469, %v4126
        %v4193 = vadd.f32 %v3474, %v4131
        %v4194 = vadd.f32 %v3479, %v4136
        %v4195 = vadd.f32 %v3484, %v4141
        %v4196 = vadd.f32 %v3489, %v4146
        %v4197 = vadd.f32 %v3494, %v4151
        %v4198 = vadd.f32 %v3499, %v4156
        %v4199 = vadd.f32 %v3504, %v4161
        %v4200 = vadd.f32 %v3509, %v4166
        %v4201 = vadd.f32 %v3514, %v4171
        %v4202 = vadd.f32 %v3519, %v4176
        %v4203 = vadd.f32 %v3524, %v4181
        %v4204 = vadd.f32 %v3529, %v4186
        %v4221 = vcombine.high %v4189, %v4189
        %v4223 = vunpack.c.l.s4 1966171168
        %v4224 = vunpack.c.0.s8 %v4223
        %v4225 = vlaneseq
        %v4226 = vshrl.u32 %v4225, 7
        %v4227 = vsub.s32 %v4224, %v4226
        %v4228 = vrot.slane %v4189, %v4227
        %v4230 = vunpack.c.l.s4 1966171168
        %v4231 = vunpack.c.0.s8 %v4230
        %v4232 = vlaneseq
        %v4233 = vshrl.u32 %v4232, 7
        %v4234 = vsub.s32 %v4231, %v4233
        %v4235 = vrot.slane %v4221, %v4234
        %v4236 = vcombine.high %v4228, %v4228
        %v4237 = vcombine.high %v4235, %v4235
        %v4239 = vunpack.c.l.s4 1966171168
        %v4240 = vunpack.c.0.s8 %v4239
        %v4241 = vlaneseq
        %v4242 = vshrl.u32 %v4241, 7
        %v4243 = vsub.s32 %v4240, %v4242
        %v4244 = vrot.slane %v4228, %v4243
        %v4246 = vunpack.c.l.s4 1966171168
        %v4247 = vunpack.c.0.s8 %v4246
        %v4248 = vlaneseq
        %v4249 = vshrl.u32 %v4248, 7
        %v4250 = vsub.s32 %v4247, %v4249
        %v4251 = vrot.slane %v4235, %v4250
        %v4253 = vunpack.c.l.s4 1966171168
        %v4254 = vunpack.c.0.s8 %v4253
        %v4255 = vlaneseq
        %v4256 = vshrl.u32 %v4255, 7
        %v4257 = vsub.s32 %v4254, %v4256
        %v4258 = vrot.slane %v4236, %v4257
        %v4260 = vunpack.c.l.s4 1966171168
        %v4261 = vunpack.c.0.s8 %v4260
        %v4262 = vlaneseq
        %v4263 = vshrl.u32 %v4262, 7
        %v4264 = vsub.s32 %v4261, %v4263
        %v4265 = vrot.slane %v4237, %v4264
        %v4266 = vcombine.high %v4244, %v4244
        %v4267 = vcombine.high %v4251, %v4251
        %v4268 = vcombine.high %v4258, %v4258
        %v4269 = vcombine.high %v4265, %v4265
        %v4270 = vcombine.high %v4190, %v4190
        %v4272 = vunpack.c.l.s4 1966171168
        %v4273 = vunpack.c.0.s8 %v4272
        %v4274 = vlaneseq
        %v4275 = vshrl.u32 %v4274, 7
        %v4276 = vsub.s32 %v4273, %v4275
        %v4277 = vrot.slane %v4190, %v4276
        %v4279 = vunpack.c.l.s4 1966171168
        %v4280 = vunpack.c.0.s8 %v4279
        %v4281 = vlaneseq
        %v4282 = vshrl.u32 %v4281, 7
        %v4283 = vsub.s32 %v4280, %v4282
        %v4284 = vrot.slane %v4270, %v4283
        %v4285 = vcombine.high %v4277, %v4277
        %v4286 = vcombine.high %v4284, %v4284
        %v4288 = vunpack.c.l.s4 1966171168
        %v4289 = vunpack.c.0.s8 %v4288
        %v4290 = vlaneseq
        %v4291 = vshrl.u32 %v4290, 7
        %v4292 = vsub.s32 %v4289, %v4291
        %v4293 = vrot.slane %v4277, %v4292
        %v4295 = vunpack.c.l.s4 1966171168
        %v4296 = vunpack.c.0.s8 %v4295
        %v4297 = vlaneseq
        %v4298 = vshrl.u32 %v4297, 7
        %v4299 = vsub.s32 %v4296, %v4298
        %v4300 = vrot.slane %v4284, %v4299
        %v4302 = vunpack.c.l.s4 1966171168
        %v4303 = vunpack.c.0.s8 %v4302
        %v4304 = vlaneseq
        %v4305 = vshrl.u32 %v4304, 7
        %v4306 = vsub.s32 %v4303, %v4305
        %v4307 = vrot.slane %v4285, %v4306
        %v4309 = vunpack.c.l.s4 1966171168
        %v4310 = vunpack.c.0.s8 %v4309
        %v4311 = vlaneseq
        %v4312 = vshrl.u32 %v4311, 7
        %v4313 = vsub.s32 %v4310, %v4312
        %v4314 = vrot.slane %v4286, %v4313
        %v4315 = vcombine.high %v4293, %v4293
        %v4316 = vcombine.high %v4300, %v4300
        %v4317 = vcombine.high %v4307, %v4307
        %v4318 = vcombine.high %v4314, %v4314
        %v4319 = vcombine.high %v4191, %v4191
        %v4321 = vunpack.c.l.s4 1966171168
        %v4322 = vunpack.c.0.s8 %v4321
        %v4323 = vlaneseq
        %v4324 = vshrl.u32 %v4323, 7
        %v4325 = vsub.s32 %v4322, %v4324
        %v4326 = vrot.slane %v4191, %v4325
        %v4328 = vunpack.c.l.s4 1966171168
        %v4329 = vunpack.c.0.s8 %v4328
        %v4330 = vlaneseq
        %v4331 = vshrl.u32 %v4330, 7
        %v4332 = vsub.s32 %v4329, %v4331
        %v4333 = vrot.slane %v4319, %v4332
        %v4334 = vcombine.high %v4326, %v4326
        %v4335 = vcombine.high %v4333, %v4333
        %v4337 = vunpack.c.l.s4 1966171168
        %v4338 = vunpack.c.0.s8 %v4337
        %v4339 = vlaneseq
        %v4340 = vshrl.u32 %v4339, 7
        %v4341 = vsub.s32 %v4338, %v4340
        %v4342 = vrot.slane %v4326, %v4341
        %v4344 = vunpack.c.l.s4 1966171168
        %v4345 = vunpack.c.0.s8 %v4344
        %v4346 = vlaneseq
        %v4347 = vshrl.u32 %v4346, 7
        %v4348 = vsub.s32 %v4345, %v4347
        %v4349 = vrot.slane %v4333, %v4348
        %v4351 = vunpack.c.l.s4 1966171168
        %v4352 = vunpack.c.0.s8 %v4351
        %v4353 = vlaneseq
        %v4354 = vshrl.u32 %v4353, 7
        %v4355 = vsub.s32 %v4352, %v4354
        %v4356 = vrot.slane %v4334, %v4355
        %v4358 = vunpack.c.l.s4 1966171168
        %v4359 = vunpack.c.0.s8 %v4358
        %v4360 = vlaneseq
        %v4361 = vshrl.u32 %v4360, 7
        %v4362 = vsub.s32 %v4359, %v4361
        %v4363 = vrot.slane %v4335, %v4362
        %v4364 = vcombine.high %v4342, %v4342
        %v4365 = vcombine.high %v4349, %v4349
        %v4366 = vcombine.high %v4356, %v4356
        %v4367 = vcombine.high %v4363, %v4363
        %v4368 = vcombine.high %v4192, %v4192
        %v4370 = vunpack.c.l.s4 1966171168
        %v4371 = vunpack.c.0.s8 %v4370
        %v4372 = vlaneseq
        %v4373 = vshrl.u32 %v4372, 7
        %v4374 = vsub.s32 %v4371, %v4373
        %v4375 = vrot.slane %v4192, %v4374
        %v4377 = vunpack.c.l.s4 1966171168
        %v4378 = vunpack.c.0.s8 %v4377
        %v4379 = vlaneseq
        %v4380 = vshrl.u32 %v4379, 7
        %v4381 = vsub.s32 %v4378, %v4380
        %v4382 = vrot.slane %v4368, %v4381
        %v4383 = vcombine.high %v4375, %v4375
        %v4384 = vcombine.high %v4382, %v4382
        %v4386 = vunpack.c.l.s4 1966171168
        %v4387 = vunpack.c.0.s8 %v4386
        %v4388 = vlaneseq
        %v4389 = vshrl.u32 %v4388, 7
        %v4390 = vsub.s32 %v4387, %v4389
        %v4391 = vrot.slane %v4375, %v4390
        %v4393 = vunpack.c.l.s4 1966171168
        %v4394 = vunpack.c.0.s8 %v4393
        %v4395 = vlaneseq
        %v4396 = vshrl.u32 %v4395, 7
        %v4397 = vsub.s32 %v4394, %v4396
        %v4398 = vrot.slane %v4382, %v4397
        %v4400 = vunpack.c.l.s4 1966171168
        %v4401 = vunpack.c.0.s8 %v4400
        %v4402 = vlaneseq
        %v4403 = vshrl.u32 %v4402, 7
        %v4404 = vsub.s32 %v4401, %v4403
        %v4405 = vrot.slane %v4383, %v4404
        %v4407 = vunpack.c.l.s4 1966171168
        %v4408 = vunpack.c.0.s8 %v4407
        %v4409 = vlaneseq
        %v4410 = vshrl.u32 %v4409, 7
        %v4411 = vsub.s32 %v4408, %v4410
        %v4412 = vrot.slane %v4384, %v4411
        %v4413 = vcombine.high %v4391, %v4391
        %v4414 = vcombine.high %v4398, %v4398
        %v4415 = vcombine.high %v4405, %v4405
        %v4416 = vcombine.high %v4412, %v4412
        %v4417 = vcombine.high %v4193, %v4193
        %v4419 = vunpack.c.l.s4 1966171168
        %v4420 = vunpack.c.0.s8 %v4419
        %v4421 = vlaneseq
        %v4422 = vshrl.u32 %v4421, 7
        %v4423 = vsub.s32 %v4420, %v4422
        %v4424 = vrot.slane %v4193, %v4423
        %v4426 = vunpack.c.l.s4 1966171168
        %v4427 = vunpack.c.0.s8 %v4426
        %v4428 = vlaneseq
        %v4429 = vshrl.u32 %v4428, 7
        %v4430 = vsub.s32 %v4427, %v4429
        %v4431 = vrot.slane %v4417, %v4430
        %v4432 = vcombine.high %v4424, %v4424
        %v4433 = vcombine.high %v4431, %v4431
        %v4435 = vunpack.c.l.s4 1966171168
        %v4436 = vunpack.c.0.s8 %v4435
        %v4437 = vlaneseq
        %v4438 = vshrl.u32 %v4437, 7
        %v4439 = vsub.s32 %v4436, %v4438
        %v4440 = vrot.slane %v4424, %v4439
        %v4442 = vunpack.c.l.s4 1966171168
        %v4443 = vunpack.c.0.s8 %v4442
        %v4444 = vlaneseq
        %v4445 = vshrl.u32 %v4444, 7
        %v4446 = vsub.s32 %v4443, %v4445
        %v4447 = vrot.slane %v4431, %v4446
        %v4449 = vunpack.c.l.s4 1966171168
        %v4450 = vunpack.c.0.s8 %v4449
        %v4451 = vlaneseq
        %v4452 = vshrl.u32 %v4451, 7
        %v4453 = vsub.s32 %v4450, %v4452
        %v4454 = vrot.slane %v4432, %v4453
        %v4456 = vunpack.c.l.s4 1966171168
        %v4457 = vunpack.c.0.s8 %v4456
        %v4458 = vlaneseq
        %v4459 = vshrl.u32 %v4458, 7
        %v4460 = vsub.s32 %v4457, %v4459
        %v4461 = vrot.slane %v4433, %v4460
        %v4462 = vcombine.high %v4440, %v4440
        %v4463 = vcombine.high %v4447, %v4447
        %v4464 = vcombine.high %v4454, %v4454
        %v4465 = vcombine.high %v4461, %v4461
        %v4466 = vcombine.high %v4194, %v4194
        %v4468 = vunpack.c.l.s4 1966171168
        %v4469 = vunpack.c.0.s8 %v4468
        %v4470 = vlaneseq
        %v4471 = vshrl.u32 %v4470, 7
        %v4472 = vsub.s32 %v4469, %v4471
        %v4473 = vrot.slane %v4194, %v4472
        %v4475 = vunpack.c.l.s4 1966171168
        %v4476 = vunpack.c.0.s8 %v4475
        %v4477 = vlaneseq
        %v4478 = vshrl.u32 %v4477, 7
        %v4479 = vsub.s32 %v4476, %v4478
        %v4480 = vrot.slane %v4466, %v4479
        %v4481 = vcombine.high %v4473, %v4473
        %v4482 = vcombine.high %v4480, %v4480
        %v4484 = vunpack.c.l.s4 1966171168
        %v4485 = vunpack.c.0.s8 %v4484
        %v4486 = vlaneseq
        %v4487 = vshrl.u32 %v4486, 7
        %v4488 = vsub.s32 %v4485, %v4487
        %v4489 = vrot.slane %v4473, %v4488
        %v4491 = vunpack.c.l.s4 1966171168
        %v4492 = vunpack.c.0.s8 %v4491
        %v4493 = vlaneseq
        %v4494 = vshrl.u32 %v4493, 7
        %v4495 = vsub.s32 %v4492, %v4494
        %v4496 = vrot.slane %v4480, %v4495
        %v4498 = vunpack.c.l.s4 1966171168
        %v4499 = vunpack.c.0.s8 %v4498
        %v4500 = vlaneseq
        %v4501 = vshrl.u32 %v4500, 7
        %v4502 = vsub.s32 %v4499, %v4501
        %v4503 = vrot.slane %v4481, %v4502
        %v4505 = vunpack.c.l.s4 1966171168
        %v4506 = vunpack.c.0.s8 %v4505
        %v4507 = vlaneseq
        %v4508 = vshrl.u32 %v4507, 7
        %v4509 = vsub.s32 %v4506, %v4508
        %v4510 = vrot.slane %v4482, %v4509
        %v4511 = vcombine.high %v4489, %v4489
        %v4512 = vcombine.high %v4496, %v4496
        %v4513 = vcombine.high %v4503, %v4503
        %v4514 = vcombine.high %v4510, %v4510
        %v4515 = vcombine.high %v4195, %v4195
        %v4517 = vunpack.c.l.s4 1966171168
        %v4518 = vunpack.c.0.s8 %v4517
        %v4519 = vlaneseq
        %v4520 = vshrl.u32 %v4519, 7
        %v4521 = vsub.s32 %v4518, %v4520
        %v4522 = vrot.slane %v4195, %v4521
        %v4524 = vunpack.c.l.s4 1966171168
        %v4525 = vunpack.c.0.s8 %v4524
        %v4526 = vlaneseq
        %v4527 = vshrl.u32 %v4526, 7
        %v4528 = vsub.s32 %v4525, %v4527
        %v4529 = vrot.slane %v4515, %v4528
        %v4530 = vcombine.high %v4522, %v4522
        %v4531 = vcombine.high %v4529, %v4529
        %v4533 = vunpack.c.l.s4 1966171168
        %v4534 = vunpack.c.0.s8 %v4533
        %v4535 = vlaneseq
        %v4536 = vshrl.u32 %v4535, 7
        %v4537 = vsub.s32 %v4534, %v4536
        %v4538 = vrot.slane %v4522, %v4537
        %v4540 = vunpack.c.l.s4 1966171168
        %v4541 = vunpack.c.0.s8 %v4540
        %v4542 = vlaneseq
        %v4543 = vshrl.u32 %v4542, 7
        %v4544 = vsub.s32 %v4541, %v4543
        %v4545 = vrot.slane %v4529, %v4544
        %v4547 = vunpack.c.l.s4 1966171168
        %v4548 = vunpack.c.0.s8 %v4547
        %v4549 = vlaneseq
        %v4550 = vshrl.u32 %v4549, 7
        %v4551 = vsub.s32 %v4548, %v4550
        %v4552 = vrot.slane %v4530, %v4551
        %v4554 = vunpack.c.l.s4 1966171168
        %v4555 = vunpack.c.0.s8 %v4554
        %v4556 = vlaneseq
        %v4557 = vshrl.u32 %v4556, 7
        %v4558 = vsub.s32 %v4555, %v4557
        %v4559 = vrot.slane %v4531, %v4558
        %v4560 = vcombine.high %v4538, %v4538
        %v4561 = vcombine.high %v4545, %v4545
        %v4562 = vcombine.high %v4552, %v4552
        %v4563 = vcombine.high %v4559, %v4559
        %v4564 = vcombine.high %v4196, %v4196
        %v4566 = vunpack.c.l.s4 1966171168
        %v4567 = vunpack.c.0.s8 %v4566
        %v4568 = vlaneseq
        %v4569 = vshrl.u32 %v4568, 7
        %v4570 = vsub.s32 %v4567, %v4569
        %v4571 = vrot.slane %v4196, %v4570
        %v4573 = vunpack.c.l.s4 1966171168
        %v4574 = vunpack.c.0.s8 %v4573
        %v4575 = vlaneseq
        %v4576 = vshrl.u32 %v4575, 7
        %v4577 = vsub.s32 %v4574, %v4576
        %v4578 = vrot.slane %v4564, %v4577
        %v4579 = vcombine.high %v4571, %v4571
        %v4580 = vcombine.high %v4578, %v4578
        %v4582 = vunpack.c.l.s4 1966171168
        %v4583 = vunpack.c.0.s8 %v4582
        %v4584 = vlaneseq
        %v4585 = vshrl.u32 %v4584, 7
        %v4586 = vsub.s32 %v4583, %v4585
        %v4587 = vrot.slane %v4571, %v4586
        %v4589 = vunpack.c.l.s4 1966171168
        %v4590 = vunpack.c.0.s8 %v4589
        %v4591 = vlaneseq
        %v4592 = vshrl.u32 %v4591, 7
        %v4593 = vsub.s32 %v4590, %v4592
        %v4594 = vrot.slane %v4578, %v4593
        %v4596 = vunpack.c.l.s4 1966171168
        %v4597 = vunpack.c.0.s8 %v4596
        %v4598 = vlaneseq
        %v4599 = vshrl.u32 %v4598, 7
        %v4600 = vsub.s32 %v4597, %v4599
        %v4601 = vrot.slane %v4579, %v4600
        %v4603 = vunpack.c.l.s4 1966171168
        %v4604 = vunpack.c.0.s8 %v4603
        %v4605 = vlaneseq
        %v4606 = vshrl.u32 %v4605, 7
        %v4607 = vsub.s32 %v4604, %v4606
        %v4608 = vrot.slane %v4580, %v4607
        %v4609 = vcombine.high %v4587, %v4587
        %v4610 = vcombine.high %v4594, %v4594
        %v4611 = vcombine.high %v4601, %v4601
        %v4612 = vcombine.high %v4608, %v4608
        %v4613 = vcombine.high %v4197, %v4197
        %v4615 = vunpack.c.l.s4 1966171168
        %v4616 = vunpack.c.0.s8 %v4615
        %v4617 = vlaneseq
        %v4618 = vshrl.u32 %v4617, 7
        %v4619 = vsub.s32 %v4616, %v4618
        %v4620 = vrot.slane %v4197, %v4619
        %v4622 = vunpack.c.l.s4 1966171168
        %v4623 = vunpack.c.0.s8 %v4622
        %v4624 = vlaneseq
        %v4625 = vshrl.u32 %v4624, 7
        %v4626 = vsub.s32 %v4623, %v4625
        %v4627 = vrot.slane %v4613, %v4626
        %v4628 = vcombine.high %v4620, %v4620
        %v4629 = vcombine.high %v4627, %v4627
        %v4631 = vunpack.c.l.s4 1966171168
        %v4632 = vunpack.c.0.s8 %v4631
        %v4633 = vlaneseq
        %v4634 = vshrl.u32 %v4633, 7
        %v4635 = vsub.s32 %v4632, %v4634
        %v4636 = vrot.slane %v4620, %v4635
        %v4638 = vunpack.c.l.s4 1966171168
        %v4639 = vunpack.c.0.s8 %v4638
        %v4640 = vlaneseq
        %v4641 = vshrl.u32 %v4640, 7
        %v4642 = vsub.s32 %v4639, %v4641
        %v4643 = vrot.slane %v4627, %v4642
        %v4645 = vunpack.c.l.s4 1966171168
        %v4646 = vunpack.c.0.s8 %v4645
        %v4647 = vlaneseq
        %v4648 = vshrl.u32 %v4647, 7
        %v4649 = vsub.s32 %v4646, %v4648
        %v4650 = vrot.slane %v4628, %v4649
        %v4652 = vunpack.c.l.s4 1966171168
        %v4653 = vunpack.c.0.s8 %v4652
        %v4654 = vlaneseq
        %v4655 = vshrl.u32 %v4654, 7
        %v4656 = vsub.s32 %v4653, %v4655
        %v4657 = vrot.slane %v4629, %v4656
        %v4658 = vcombine.high %v4636, %v4636
        %v4659 = vcombine.high %v4643, %v4643
        %v4660 = vcombine.high %v4650, %v4650
        %v4661 = vcombine.high %v4657, %v4657
        %v4662 = vcombine.high %v4198, %v4198
        %v4664 = vunpack.c.l.s4 1966171168
        %v4665 = vunpack.c.0.s8 %v4664
        %v4666 = vlaneseq
        %v4667 = vshrl.u32 %v4666, 7
        %v4668 = vsub.s32 %v4665, %v4667
        %v4669 = vrot.slane %v4198, %v4668
        %v4671 = vunpack.c.l.s4 1966171168
        %v4672 = vunpack.c.0.s8 %v4671
        %v4673 = vlaneseq
        %v4674 = vshrl.u32 %v4673, 7
        %v4675 = vsub.s32 %v4672, %v4674
        %v4676 = vrot.slane %v4662, %v4675
        %v4677 = vcombine.high %v4669, %v4669
        %v4678 = vcombine.high %v4676, %v4676
        %v4680 = vunpack.c.l.s4 1966171168
        %v4681 = vunpack.c.0.s8 %v4680
        %v4682 = vlaneseq
        %v4683 = vshrl.u32 %v4682, 7
        %v4684 = vsub.s32 %v4681, %v4683
        %v4685 = vrot.slane %v4669, %v4684
        %v4687 = vunpack.c.l.s4 1966171168
        %v4688 = vunpack.c.0.s8 %v4687
        %v4689 = vlaneseq
        %v4690 = vshrl.u32 %v4689, 7
        %v4691 = vsub.s32 %v4688, %v4690
        %v4692 = vrot.slane %v4676, %v4691
        %v4694 = vunpack.c.l.s4 1966171168
        %v4695 = vunpack.c.0.s8 %v4694
        %v4696 = vlaneseq
        %v4697 = vshrl.u32 %v4696, 7
        %v4698 = vsub.s32 %v4695, %v4697
        %v4699 = vrot.slane %v4677, %v4698
        %v4701 = vunpack.c.l.s4 1966171168
        %v4702 = vunpack.c.0.s8 %v4701
        %v4703 = vlaneseq
        %v4704 = vshrl.u32 %v4703, 7
        %v4705 = vsub.s32 %v4702, %v4704
        %v4706 = vrot.slane %v4678, %v4705
        %v4707 = vcombine.high %v4685, %v4685
        %v4708 = vcombine.high %v4692, %v4692
        %v4709 = vcombine.high %v4699, %v4699
        %v4710 = vcombine.high %v4706, %v4706
        %v4711 = vcombine.high %v4199, %v4199
        %v4713 = vunpack.c.l.s4 1966171168
        %v4714 = vunpack.c.0.s8 %v4713
        %v4715 = vlaneseq
        %v4716 = vshrl.u32 %v4715, 7
        %v4717 = vsub.s32 %v4714, %v4716
        %v4718 = vrot.slane %v4199, %v4717
        %v4720 = vunpack.c.l.s4 1966171168
        %v4721 = vunpack.c.0.s8 %v4720
        %v4722 = vlaneseq
        %v4723 = vshrl.u32 %v4722, 7
        %v4724 = vsub.s32 %v4721, %v4723
        %v4725 = vrot.slane %v4711, %v4724
        %v4726 = vcombine.high %v4718, %v4718
        %v4727 = vcombine.high %v4725, %v4725
        %v4729 = vunpack.c.l.s4 1966171168
        %v4730 = vunpack.c.0.s8 %v4729
        %v4731 = vlaneseq
        %v4732 = vshrl.u32 %v4731, 7
        %v4733 = vsub.s32 %v4730, %v4732
        %v4734 = vrot.slane %v4718, %v4733
        %v4736 = vunpack.c.l.s4 1966171168
        %v4737 = vunpack.c.0.s8 %v4736
        %v4738 = vlaneseq
        %v4739 = vshrl.u32 %v4738, 7
        %v4740 = vsub.s32 %v4737, %v4739
        %v4741 = vrot.slane %v4725, %v4740
        %v4743 = vunpack.c.l.s4 1966171168
        %v4744 = vunpack.c.0.s8 %v4743
        %v4745 = vlaneseq
        %v4746 = vshrl.u32 %v4745, 7
        %v4747 = vsub.s32 %v4744, %v4746
        %v4748 = vrot.slane %v4726, %v4747
        %v4750 = vunpack.c.l.s4 1966171168
        %v4751 = vunpack.c.0.s8 %v4750
        %v4752 = vlaneseq
        %v4753 = vshrl.u32 %v4752, 7
        %v4754 = vsub.s32 %v4751, %v4753
        %v4755 = vrot.slane %v4727, %v4754
        %v4756 = vcombine.high %v4734, %v4734
        %v4757 = vcombine.high %v4741, %v4741
        %v4758 = vcombine.high %v4748, %v4748
        %v4759 = vcombine.high %v4755, %v4755
        %v4760 = vcombine.high %v4200, %v4200
        %v4762 = vunpack.c.l.s4 1966171168
        %v4763 = vunpack.c.0.s8 %v4762
        %v4764 = vlaneseq
        %v4765 = vshrl.u32 %v4764, 7
        %v4766 = vsub.s32 %v4763, %v4765
        %v4767 = vrot.slane %v4200, %v4766
        %v4769 = vunpack.c.l.s4 1966171168
        %v4770 = vunpack.c.0.s8 %v4769
        %v4771 = vlaneseq
        %v4772 = vshrl.u32 %v4771, 7
        %v4773 = vsub.s32 %v4770, %v4772
        %v4774 = vrot.slane %v4760, %v4773
        %v4775 = vcombine.high %v4767, %v4767
        %v4776 = vcombine.high %v4774, %v4774
        %v4778 = vunpack.c.l.s4 1966171168
        %v4779 = vunpack.c.0.s8 %v4778
        %v4780 = vlaneseq
        %v4781 = vshrl.u32 %v4780, 7
        %v4782 = vsub.s32 %v4779, %v4781
        %v4783 = vrot.slane %v4767, %v4782
        %v4785 = vunpack.c.l.s4 1966171168
        %v4786 = vunpack.c.0.s8 %v4785
        %v4787 = vlaneseq
        %v4788 = vshrl.u32 %v4787, 7
        %v4789 = vsub.s32 %v4786, %v4788
        %v4790 = vrot.slane %v4774, %v4789
        %v4792 = vunpack.c.l.s4 1966171168
        %v4793 = vunpack.c.0.s8 %v4792
        %v4794 = vlaneseq
        %v4795 = vshrl.u32 %v4794, 7
        %v4796 = vsub.s32 %v4793, %v4795
        %v4797 = vrot.slane %v4775, %v4796
        %v4799 = vunpack.c.l.s4 1966171168
        %v4800 = vunpack.c.0.s8 %v4799
        %v4801 = vlaneseq
        %v4802 = vshrl.u32 %v4801, 7
        %v4803 = vsub.s32 %v4800, %v4802
        %v4804 = vrot.slane %v4776, %v4803
        %v4805 = vcombine.high %v4783, %v4783
        %v4806 = vcombine.high %v4790, %v4790
        %v4807 = vcombine.high %v4797, %v4797
        %v4808 = vcombine.high %v4804, %v4804
        %v4809 = vcombine.high %v4201, %v4201
        %v4811 = vunpack.c.l.s4 1966171168
        %v4812 = vunpack.c.0.s8 %v4811
        %v4813 = vlaneseq
        %v4814 = vshrl.u32 %v4813, 7
        %v4815 = vsub.s32 %v4812, %v4814
        %v4816 = vrot.slane %v4201, %v4815
        %v4818 = vunpack.c.l.s4 1966171168
        %v4819 = vunpack.c.0.s8 %v4818
        %v4820 = vlaneseq
        %v4821 = vshrl.u32 %v4820, 7
        %v4822 = vsub.s32 %v4819, %v4821
        %v4823 = vrot.slane %v4809, %v4822
        %v4824 = vcombine.high %v4816, %v4816
        %v4825 = vcombine.high %v4823, %v4823
        %v4827 = vunpack.c.l.s4 1966171168
        %v4828 = vunpack.c.0.s8 %v4827
        %v4829 = vlaneseq
        %v4830 = vshrl.u32 %v4829, 7
        %v4831 = vsub.s32 %v4828, %v4830
        %v4832 = vrot.slane %v4816, %v4831
        %v4834 = vunpack.c.l.s4 1966171168
        %v4835 = vunpack.c.0.s8 %v4834
        %v4836 = vlaneseq
        %v4837 = vshrl.u32 %v4836, 7
        %v4838 = vsub.s32 %v4835, %v4837
        %v4839 = vrot.slane %v4823, %v4838
        %v4841 = vunpack.c.l.s4 1966171168
        %v4842 = vunpack.c.0.s8 %v4841
        %v4843 = vlaneseq
        %v4844 = vshrl.u32 %v4843, 7
        %v4845 = vsub.s32 %v4842, %v4844
        %v4846 = vrot.slane %v4824, %v4845
        %v4848 = vunpack.c.l.s4 1966171168
        %v4849 = vunpack.c.0.s8 %v4848
        %v4850 = vlaneseq
        %v4851 = vshrl.u32 %v4850, 7
        %v4852 = vsub.s32 %v4849, %v4851
        %v4853 = vrot.slane %v4825, %v4852
        %v4854 = vcombine.high %v4832, %v4832
        %v4855 = vcombine.high %v4839, %v4839
        %v4856 = vcombine.high %v4846, %v4846
        %v4857 = vcombine.high %v4853, %v4853
        %v4858 = vcombine.high %v4202, %v4202
        %v4860 = vunpack.c.l.s4 1966171168
        %v4861 = vunpack.c.0.s8 %v4860
        %v4862 = vlaneseq
        %v4863 = vshrl.u32 %v4862, 7
        %v4864 = vsub.s32 %v4861, %v4863
        %v4865 = vrot.slane %v4202, %v4864
        %v4867 = vunpack.c.l.s4 1966171168
        %v4868 = vunpack.c.0.s8 %v4867
        %v4869 = vlaneseq
        %v4870 = vshrl.u32 %v4869, 7
        %v4871 = vsub.s32 %v4868, %v4870
        %v4872 = vrot.slane %v4858, %v4871
        %v4873 = vcombine.high %v4865, %v4865
        %v4874 = vcombine.high %v4872, %v4872
        %v4876 = vunpack.c.l.s4 1966171168
        %v4877 = vunpack.c.0.s8 %v4876
        %v4878 = vlaneseq
        %v4879 = vshrl.u32 %v4878, 7
        %v4880 = vsub.s32 %v4877, %v4879
        %v4881 = vrot.slane %v4865, %v4880
        %v4883 = vunpack.c.l.s4 1966171168
        %v4884 = vunpack.c.0.s8 %v4883
        %v4885 = vlaneseq
        %v4886 = vshrl.u32 %v4885, 7
        %v4887 = vsub.s32 %v4884, %v4886
        %v4888 = vrot.slane %v4872, %v4887
        %v4890 = vunpack.c.l.s4 1966171168
        %v4891 = vunpack.c.0.s8 %v4890
        %v4892 = vlaneseq
        %v4893 = vshrl.u32 %v4892, 7
        %v4894 = vsub.s32 %v4891, %v4893
        %v4895 = vrot.slane %v4873, %v4894
        %v4897 = vunpack.c.l.s4 1966171168
        %v4898 = vunpack.c.0.s8 %v4897
        %v4899 = vlaneseq
        %v4900 = vshrl.u32 %v4899, 7
        %v4901 = vsub.s32 %v4898, %v4900
        %v4902 = vrot.slane %v4874, %v4901
        %v4903 = vcombine.high %v4881, %v4881
        %v4904 = vcombine.high %v4888, %v4888
        %v4905 = vcombine.high %v4895, %v4895
        %v4906 = vcombine.high %v4902, %v4902
        %v4907 = vcombine.high %v4203, %v4203
        %v4909 = vunpack.c.l.s4 1966171168
        %v4910 = vunpack.c.0.s8 %v4909
        %v4911 = vlaneseq
        %v4912 = vshrl.u32 %v4911, 7
        %v4913 = vsub.s32 %v4910, %v4912
        %v4914 = vrot.slane %v4203, %v4913
        %v4916 = vunpack.c.l.s4 1966171168
        %v4917 = vunpack.c.0.s8 %v4916
        %v4918 = vlaneseq
        %v4919 = vshrl.u32 %v4918, 7
        %v4920 = vsub.s32 %v4917, %v4919
        %v4921 = vrot.slane %v4907, %v4920
        %v4922 = vcombine.high %v4914, %v4914
        %v4923 = vcombine.high %v4921, %v4921
        %v4925 = vunpack.c.l.s4 1966171168
        %v4926 = vunpack.c.0.s8 %v4925
        %v4927 = vlaneseq
        %v4928 = vshrl.u32 %v4927, 7
        %v4929 = vsub.s32 %v4926, %v4928
        %v4930 = vrot.slane %v4914, %v4929
        %v4932 = vunpack.c.l.s4 1966171168
        %v4933 = vunpack.c.0.s8 %v4932
        %v4934 = vlaneseq
        %v4935 = vshrl.u32 %v4934, 7
        %v4936 = vsub.s32 %v4933, %v4935
        %v4937 = vrot.slane %v4921, %v4936
        %v4939 = vunpack.c.l.s4 1966171168
        %v4940 = vunpack.c.0.s8 %v4939
        %v4941 = vlaneseq
        %v4942 = vshrl.u32 %v4941, 7
        %v4943 = vsub.s32 %v4940, %v4942
        %v4944 = vrot.slane %v4922, %v4943
        %v4946 = vunpack.c.l.s4 1966171168
        %v4947 = vunpack.c.0.s8 %v4946
        %v4948 = vlaneseq
        %v4949 = vshrl.u32 %v4948, 7
        %v4950 = vsub.s32 %v4947, %v4949
        %v4951 = vrot.slane %v4923, %v4950
        %v4952 = vcombine.high %v4930, %v4930
        %v4953 = vcombine.high %v4937, %v4937
        %v4954 = vcombine.high %v4944, %v4944
        %v4955 = vcombine.high %v4951, %v4951
        %v4956 = vcombine.high %v4204, %v4204
        %v4958 = vunpack.c.l.s4 1966171168
        %v4959 = vunpack.c.0.s8 %v4958
        %v4960 = vlaneseq
        %v4961 = vshrl.u32 %v4960, 7
        %v4962 = vsub.s32 %v4959, %v4961
        %v4963 = vrot.slane %v4204, %v4962
        %v4965 = vunpack.c.l.s4 1966171168
        %v4966 = vunpack.c.0.s8 %v4965
        %v4967 = vlaneseq
        %v4968 = vshrl.u32 %v4967, 7
        %v4969 = vsub.s32 %v4966, %v4968
        %v4970 = vrot.slane %v4956, %v4969
        %v4971 = vcombine.high %v4963, %v4963
        %v4972 = vcombine.high %v4970, %v4970
        %v4974 = vunpack.c.l.s4 1966171168
        %v4975 = vunpack.c.0.s8 %v4974
        %v4976 = vlaneseq
        %v4977 = vshrl.u32 %v4976, 7
        %v4978 = vsub.s32 %v4975, %v4977
        %v4979 = vrot.slane %v4963, %v4978
        %v4981 = vunpack.c.l.s4 1966171168
        %v4982 = vunpack.c.0.s8 %v4981
        %v4983 = vlaneseq
        %v4984 = vshrl.u32 %v4983, 7
        %v4985 = vsub.s32 %v4982, %v4984
        %v4986 = vrot.slane %v4970, %v4985
        %v4988 = vunpack.c.l.s4 1966171168
        %v4989 = vunpack.c.0.s8 %v4988
        %v4990 = vlaneseq
        %v4991 = vshrl.u32 %v4990, 7
        %v4992 = vsub.s32 %v4989, %v4991
        %v4993 = vrot.slane %v4971, %v4992
        %v4995 = vunpack.c.l.s4 1966171168
        %v4996 = vunpack.c.0.s8 %v4995
        %v4997 = vlaneseq
        %v4998 = vshrl.u32 %v4997, 7
        %v4999 = vsub.s32 %v4996, %v4998
        %v5000 = vrot.slane %v4972, %v4999
        %v5001 = vcombine.high %v4979, %v4979
        %v5002 = vcombine.high %v4986, %v4986
        %v5003 = vcombine.high %v4993, %v4993
        %v5004 = vcombine.high %v5000, %v5000
        %5133 = vst [vmem:[%s145 + $0x1] sm:$0x1] %v4244
        %5134 = vst [vmem:[%s145 + $0x9] sm:$0x1] %v4258
        %5135 = vst [vmem:[%s145 + $0x11] sm:$0x1] %v4266
        %5136 = vst [vmem:[%s145 + $0x19] sm:$0x1] %v4268
        %5137 = vst [vmem:[%s145 + $0x21] sm:$0x1] %v4251
        %5138 = vst [vmem:[%s145 + $0x29] sm:$0x1] %v4265
        %5139 = vst [vmem:[%s145 + $0x31] sm:$0x1] %v4267
        %5140 = vst [vmem:[%s145 + $0x39] sm:$0x1] %v4269
        %5141 = vst [vmem:[%s145 + $0x41] sm:$0x1] %v4293
        %5142 = vst [vmem:[%s145 + $0x49] sm:$0x1] %v4307
        %5143 = vst [vmem:[%s145 + $0x51] sm:$0x1] %v4315
        %5144 = vst [vmem:[%s145 + $0x59] sm:$0x1] %v4317
        %5145 = vst [vmem:[%s145 + $0x61] sm:$0x1] %v4300
        %5146 = vst [vmem:[%s145 + $0x69] sm:$0x1] %v4314
        %5147 = vst [vmem:[%s145 + $0x71] sm:$0x1] %v4316
        %5148 = vst [vmem:[%s145 + $0x79] sm:$0x1] %v4318
        %5149 = vst [vmem:[%s145 + $0x81] sm:$0x1] %v4342
        %5150 = vst [vmem:[%s145 + $0x89] sm:$0x1] %v4356
        %5151 = vst [vmem:[%s145 + $0x91] sm:$0x1] %v4364
        %5152 = vst [vmem:[%s145 + $0x99] sm:$0x1] %v4366
        %5153 = vst [vmem:[%s145 + $0xa1] sm:$0x1] %v4349
        %5154 = vst [vmem:[%s145 + $0xa9] sm:$0x1] %v4363
        %5155 = vst [vmem:[%s145 + $0xb1] sm:$0x1] %v4365
        %5156 = vst [vmem:[%s145 + $0xb9] sm:$0x1] %v4367
        %5157 = vst [vmem:[%s145 + $0xc1] sm:$0x1] %v4391
        %5158 = vst [vmem:[%s145 + $0xc9] sm:$0x1] %v4405
        %5159 = vst [vmem:[%s145 + $0xd1] sm:$0x1] %v4413
        %5160 = vst [vmem:[%s145 + $0xd9] sm:$0x1] %v4415
        %5161 = vst [vmem:[%s145 + $0xe1] sm:$0x1] %v4398
        %5162 = vst [vmem:[%s145 + $0xe9] sm:$0x1] %v4412
        %5163 = vst [vmem:[%s145 + $0xf1] sm:$0x1] %v4414
        %5164 = vst [vmem:[%s145 + $0xf9] sm:$0x1] %v4416
        %5165 = vst [vmem:[%s145 + $0x101] sm:$0x1] %v4440
        %5166 = vst [vmem:[%s145 + $0x109] sm:$0x1] %v4454
        %5167 = vst [vmem:[%s145 + $0x111] sm:$0x1] %v4462
        %5168 = vst [vmem:[%s145 + $0x119] sm:$0x1] %v4464
        %5169 = vst [vmem:[%s145 + $0x121] sm:$0x1] %v4447
        %5170 = vst [vmem:[%s145 + $0x129] sm:$0x1] %v4461
        %5171 = vst [vmem:[%s145 + $0x131] sm:$0x1] %v4463
        %5172 = vst [vmem:[%s145 + $0x139] sm:$0x1] %v4465
        %5173 = vst [vmem:[%s145 + $0x141] sm:$0x1] %v4489
        %5174 = vst [vmem:[%s145 + $0x149] sm:$0x1] %v4503
        %5175 = vst [vmem:[%s145 + $0x151] sm:$0x1] %v4511
        %5176 = vst [vmem:[%s145 + $0x159] sm:$0x1] %v4513
        %5177 = vst [vmem:[%s145 + $0x161] sm:$0x1] %v4496
        %5178 = vst [vmem:[%s145 + $0x169] sm:$0x1] %v4510
        %5179 = vst [vmem:[%s145 + $0x171] sm:$0x1] %v4512
        %5180 = vst [vmem:[%s145 + $0x179] sm:$0x1] %v4514
        %5181 = vst [vmem:[%s145 + $0x181] sm:$0x1] %v4538
        %5182 = vst [vmem:[%s145 + $0x189] sm:$0x1] %v4552
        %5183 = vst [vmem:[%s145 + $0x191] sm:$0x1] %v4560
        %5184 = vst [vmem:[%s145 + $0x199] sm:$0x1] %v4562
        %5185 = vst [vmem:[%s145 + $0x1a1] sm:$0x1] %v4545
        %5186 = vst [vmem:[%s145 + $0x1a9] sm:$0x1] %v4559
        %5187 = vst [vmem:[%s145 + $0x1b1] sm:$0x1] %v4561
        %5188 = vst [vmem:[%s145 + $0x1b9] sm:$0x1] %v4563
        %5189 = vst [vmem:[%s145 + $0x1c1] sm:$0x1] %v4587
        %5190 = vst [vmem:[%s145 + $0x1c9] sm:$0x1] %v4601
        %5191 = vst [vmem:[%s145 + $0x1d1] sm:$0x1] %v4609
        %5192 = vst [vmem:[%s145 + $0x1d9] sm:$0x1] %v4611
        %5193 = vst [vmem:[%s145 + $0x1e1] sm:$0x1] %v4594
        %5194 = vst [vmem:[%s145 + $0x1e9] sm:$0x1] %v4608
        %5195 = vst [vmem:[%s145 + $0x1f1] sm:$0x1] %v4610
        %5196 = vst [vmem:[%s145 + $0x1f9] sm:$0x1] %v4612
        %5197 = vst [vmem:[%s145 + $0x201] sm:$0x1] %v4636
        %5198 = vst [vmem:[%s145 + $0x209] sm:$0x1] %v4650
        %5199 = vst [vmem:[%s145 + $0x211] sm:$0x1] %v4658
        %5200 = vst [vmem:[%s145 + $0x219] sm:$0x1] %v4660
        %5201 = vst [vmem:[%s145 + $0x221] sm:$0x1] %v4643
        %5202 = vst [vmem:[%s145 + $0x229] sm:$0x1] %v4657
        %5203 = vst [vmem:[%s145 + $0x231] sm:$0x1] %v4659
        %5204 = vst [vmem:[%s145 + $0x239] sm:$0x1] %v4661
        %5205 = vst [vmem:[%s145 + $0x241] sm:$0x1] %v4685
        %5206 = vst [vmem:[%s145 + $0x249] sm:$0x1] %v4699
        %5207 = vst [vmem:[%s145 + $0x251] sm:$0x1] %v4707
        %5208 = vst [vmem:[%s145 + $0x259] sm:$0x1] %v4709
        %5209 = vst [vmem:[%s145 + $0x261] sm:$0x1] %v4692
        %5210 = vst [vmem:[%s145 + $0x269] sm:$0x1] %v4706
        %5211 = vst [vmem:[%s145 + $0x271] sm:$0x1] %v4708
        %5212 = vst [vmem:[%s145 + $0x279] sm:$0x1] %v4710
        %5213 = vst [vmem:[%s145 + $0x281] sm:$0x1] %v4734
        %5214 = vst [vmem:[%s145 + $0x289] sm:$0x1] %v4748
        %5215 = vst [vmem:[%s145 + $0x291] sm:$0x1] %v4756
        %5216 = vst [vmem:[%s145 + $0x299] sm:$0x1] %v4758
        %5217 = vst [vmem:[%s145 + $0x2a1] sm:$0x1] %v4741
        %5218 = vst [vmem:[%s145 + $0x2a9] sm:$0x1] %v4755
        %5219 = vst [vmem:[%s145 + $0x2b1] sm:$0x1] %v4757
        %5220 = vst [vmem:[%s145 + $0x2b9] sm:$0x1] %v4759
        %5221 = vst [vmem:[%s145 + $0x2c1] sm:$0x1] %v4783
        %5222 = vst [vmem:[%s145 + $0x2c9] sm:$0x1] %v4797
        %5223 = vst [vmem:[%s145 + $0x2d1] sm:$0x1] %v4805
        %5224 = vst [vmem:[%s145 + $0x2d9] sm:$0x1] %v4807
        %5225 = vst [vmem:[%s145 + $0x2e1] sm:$0x1] %v4790
        %5226 = vst [vmem:[%s145 + $0x2e9] sm:$0x1] %v4804
        %5227 = vst [vmem:[%s145 + $0x2f1] sm:$0x1] %v4806
        %5228 = vst [vmem:[%s145 + $0x2f9] sm:$0x1] %v4808
        %5229 = vst [vmem:[%s145 + $0x301] sm:$0x1] %v4832
        %5230 = vst [vmem:[%s145 + $0x309] sm:$0x1] %v4846
        %5231 = vst [vmem:[%s145 + $0x311] sm:$0x1] %v4854
        %5232 = vst [vmem:[%s145 + $0x319] sm:$0x1] %v4856
        %5233 = vst [vmem:[%s145 + $0x321] sm:$0x1] %v4839
        %5234 = vst [vmem:[%s145 + $0x329] sm:$0x1] %v4853
        %5235 = vst [vmem:[%s145 + $0x331] sm:$0x1] %v4855
        %5236 = vst [vmem:[%s145 + $0x339] sm:$0x1] %v4857
        %5237 = vst [vmem:[%s145 + $0x341] sm:$0x1] %v4881
        %5238 = vst [vmem:[%s145 + $0x349] sm:$0x1] %v4895
        %5239 = vst [vmem:[%s145 + $0x351] sm:$0x1] %v4903
        %5240 = vst [vmem:[%s145 + $0x359] sm:$0x1] %v4905
        %5241 = vst [vmem:[%s145 + $0x361] sm:$0x1] %v4888
        %5242 = vst [vmem:[%s145 + $0x369] sm:$0x1] %v4902
        %5243 = vst [vmem:[%s145 + $0x371] sm:$0x1] %v4904
        %5244 = vst [vmem:[%s145 + $0x379] sm:$0x1] %v4906
        %5245 = vst [vmem:[%s145 + $0x381] sm:$0x1] %v4930
        %5246 = vst [vmem:[%s145 + $0x389] sm:$0x1] %v4944
        %5247 = vst [vmem:[%s145 + $0x391] sm:$0x1] %v4952
        %5248 = vst [vmem:[%s145 + $0x399] sm:$0x1] %v4954
        %5249 = vst [vmem:[%s145 + $0x3a1] sm:$0x1] %v4937
        %5250 = vst [vmem:[%s145 + $0x3a9] sm:$0x1] %v4951
        %5251 = vst [vmem:[%s145 + $0x3b1] sm:$0x1] %v4953
        %5252 = vst [vmem:[%s145 + $0x3b9] sm:$0x1] %v4955
        %5253 = vst [vmem:[%s145 + $0x3c1] sm:$0x1] %v4979
        %5254 = vst [vmem:[%s145 + $0x3c9] sm:$0x1] %v4993
        %5255 = vst [vmem:[%s145 + $0x3d1] sm:$0x1] %v5001
        %5256 = vst [vmem:[%s145 + $0x3d9] sm:$0x1] %v5003
        %5257 = vst [vmem:[%s145 + $0x3e1] sm:$0x1] %v4986
        %5258 = vst [vmem:[%s145 + $0x3e9] sm:$0x1] %v5000
        %5259 = vst [vmem:[%s145 + $0x3f1] sm:$0x1] %v5002
        %5260 = vst [vmem:[%s145 + $0x3f9] sm:$0x1] %v5004
        %5261 = vmatprep.subr.mxu0 0.0
        %5262 = vmatpush1.msra.mxu0 0.0
        %5263 = vmatprep.subr.mxu0 0.0
        %5264 = vmatpush1.msra.mxu0 0.0
        %5265 = vmatprep.subr.mxu0 0.0
        %5266 = vmatpush1.msra.mxu0 0.0
        %5267 = vmatprep.subr.mxu0 0.0
        %5268 = vmatpush1.msra.mxu0 0.0
        %5269 = vmatprep.subr.mxu0 0.0
        %5270 = vmatpush1.msra.mxu0 0.0
        %5271 = vmatprep.subr.mxu0 0.0
        %5272 = vmatpush1.msra.mxu0 0.0
        %5273 = vmatprep.subr.mxu0 0.0
        %5274 = vmatpush1.msra.mxu0 0.0
        %5275 = vmatprep.subr.mxu0 0.0
        %5276 = vmatpush1.msra.mxu0 0.0
        %5277 = vmatprep.subr.mxu0 0.0
        %5278 = vmatpush1.msra.mxu0 %v181
        %5279 = vmatprep.subr.mxu0 0.0
        %5280 = vmatpush1.msra.mxu0 %v180
        %5281 = vmatprep.subr.mxu0 0.0
        %5282 = vmatpush1.msra.mxu0 %v179
        %5283 = vmatprep.subr.mxu0 0.0
        %5284 = vmatpush1.msra.mxu0 %v178
        %5285 = vmatprep.subr.mxu0 0.0
        %5286 = vmatpush1.msra.mxu0 %v177
        %5287 = vmatprep.subr.mxu0 0.0
        %5288 = vmatpush1.msra.mxu0 %v176
        %5289 = vmatprep.subr.mxu0 0.0
        %5290 = vmatpush1.msra.mxu0 %v175
        %5291 = vmatprep.subr.mxu0 0.0
        %5292 = vmatpush1.msra.mxu0 %v174
        %5293 = vmatprep.subr.mxu0 0.0
        %5294 = vmatpush2.msra.mxu0 0.0
        %5295 = vmatprep.subr.mxu0 0.0
        %5296 = vmatpush2.msra.mxu0 0.0
        %5297 = vmatprep.subr.mxu0 0.0
        %5298 = vmatpush2.msra.mxu0 0.0
        %5299 = vmatprep.subr.mxu0 0.0
        %5300 = vmatpush2.msra.mxu0 0.0
        %5301 = vmatprep.subr.mxu0 0.0
        %5302 = vmatpush2.msra.mxu0 0.0
        %5303 = vmatprep.subr.mxu0 0.0
        %5304 = vmatpush2.msra.mxu0 0.0
        %5305 = vmatprep.subr.mxu0 0.0
        %5306 = vmatpush2.msra.mxu0 0.0
        %5307 = vmatprep.subr.mxu0 0.0
        %5308 = vmatpush2.msra.mxu0 0.0
        %5309 = vmatprep.subr.mxu0 0.0
        %5310 = vmatpush2.msra.mxu0 0.0
        %5311 = vmatprep.subr.mxu0 0.0
        %5312 = vmatpush2.msra.mxu0 0.0
        %5313 = vmatprep.subr.mxu0 0.0
        %5314 = vmatpush2.msra.mxu0 0.0
        %5315 = vmatprep.subr.mxu0 0.0
        %5316 = vmatpush2.msra.mxu0 0.0
        %5317 = vmatprep.subr.mxu0 0.0
        %5318 = vmatpush2.msra.mxu0 0.0
        %5319 = vmatprep.subr.mxu0 0.0
        %5320 = vmatpush2.msra.mxu0 0.0
        %5321 = vmatprep.subr.mxu0 0.0
        %5322 = vmatpush2.msra.mxu0 0.0
        %5323 = vmatprep.subr.mxu0 0.0
        %5324 = vmatpush2.msra.mxu0 0.0
        %5325 = vmatprep.mubr.f32.mxu0 0.0
        %5326 = vmatmul.mubr.f32.gmra.mxu0 %v4012
        %v5327 = vpop.f32.mrf.mxu0
        %v5328 = vadd.f32 0.0, %v5327
        %v5329 = vpop.f32.mrf.mxu0
        %5330 = vmatprep.mubr.f32.mxu0 0.0
        %5331 = vmatmul.mubr.f32.gmra.mxu0 %v4014
        %v5332 = vpop.f32.mrf.mxu0
        %v5333 = vadd.f32 0.0, %v5332
        %v5334 = vpop.f32.mrf.mxu0
        %5335 = vmatprep.mubr.f32.mxu0 0.0
        %5336 = vmatmul.mubr.f32.gmra.mxu0 %v4016
        %v5337 = vpop.f32.mrf.mxu0
        %v5338 = vadd.f32 0.0, %v5337
        %v5339 = vpop.f32.mrf.mxu0
        %5340 = vmatprep.mubr.f32.mxu0 0.0
        %5341 = vmatmul.mubr.f32.gmra.mxu0 %v4018
        %v5342 = vpop.f32.mrf.mxu0
        %v5343 = vadd.f32 0.0, %v5342
        %v5344 = vpop.f32.mrf.mxu0
        %5345 = vmatprep.mubr.f32.mxu0 0.0
        %5346 = vmatmul.mubr.f32.gmra.mxu0 %v4020
        %v5347 = vpop.f32.mrf.mxu0
        %v5348 = vadd.f32 0.0, %v5347
        %v5349 = vpop.f32.mrf.mxu0
        %5350 = vmatprep.mubr.f32.mxu0 0.0
        %5351 = vmatmul.mubr.f32.gmra.mxu0 %v4022
        %v5352 = vpop.f32.mrf.mxu0
        %v5353 = vadd.f32 0.0, %v5352
        %v5354 = vpop.f32.mrf.mxu0
        %5355 = vmatprep.mubr.f32.mxu0 0.0
        %5356 = vmatmul.mubr.f32.gmra.mxu0 %v4024
        %v5357 = vpop.f32.mrf.mxu0
        %v5358 = vadd.f32 0.0, %v5357
        %v5359 = vpop.f32.mrf.mxu0
        %5360 = vmatprep.mubr.f32.mxu0 0.0
        %5361 = vmatmul.mubr.f32.gmra.mxu0 %v4026
        %v5362 = vpop.f32.mrf.mxu0
        %v5363 = vadd.f32 0.0, %v5362
        %v5364 = vpop.f32.mrf.mxu0
        %5365 = vmatprep.mubr.f32.mxu0 0.0
        %5366 = vmatmul.mubr.f32.gmra.mxu0 %v4028
        %v5367 = vpop.f32.mrf.mxu0
        %v5368 = vadd.f32 0.0, %v5367
        %v5369 = vpop.f32.mrf.mxu0
        %5370 = vmatprep.mubr.f32.mxu0 0.0
        %5371 = vmatmul.mubr.f32.gmra.mxu0 %v4030
        %v5372 = vpop.f32.mrf.mxu0
        %v5373 = vadd.f32 0.0, %v5372
        %v5374 = vpop.f32.mrf.mxu0
        %5375 = vmatprep.mubr.f32.mxu0 0.0
        %5376 = vmatmul.mubr.f32.gmra.mxu0 %v4032
        %v5377 = vpop.f32.mrf.mxu0
        %v5378 = vadd.f32 0.0, %v5377
        %v5379 = vpop.f32.mrf.mxu0
        %5380 = vmatprep.mubr.f32.mxu0 0.0
        %5381 = vmatmul.mubr.f32.gmra.mxu0 %v4034
        %v5382 = vpop.f32.mrf.mxu0
        %v5383 = vadd.f32 0.0, %v5382
        %v5384 = vpop.f32.mrf.mxu0
        %5385 = vmatprep.mubr.f32.mxu0 0.0
        %5386 = vmatmul.mubr.f32.gmra.mxu0 %v4036
        %v5387 = vpop.f32.mrf.mxu0
        %v5388 = vadd.f32 0.0, %v5387
        %v5389 = vpop.f32.mrf.mxu0
        %5390 = vmatprep.mubr.f32.mxu0 0.0
        %5391 = vmatmul.mubr.f32.gmra.mxu0 %v4038
        %v5392 = vpop.f32.mrf.mxu0
        %v5393 = vadd.f32 0.0, %v5392
        %v5394 = vpop.f32.mrf.mxu0
        %5395 = vmatprep.mubr.f32.mxu0 0.0
        %5396 = vmatmul.mubr.f32.gmra.mxu0 %v4040
        %v5397 = vpop.f32.mrf.mxu0
        %v5398 = vadd.f32 0.0, %v5397
        %v5399 = vpop.f32.mrf.mxu0
        %5400 = vmatprep.mubr.f32.mxu0 0.0
        %5401 = vmatmul.mubr.f32.gmra.mxu0 %v4042
        %v5402 = vpop.f32.mrf.mxu0
        %v5403 = vadd.f32 0.0, %v5402
        %v5404 = vpop.f32.mrf.mxu0
        %5405 = vdwg.mxu0
        %5406 = vmatprep.subr.mxu0 0.0
        %5407 = vmatpush1.msra.mxu0 0.0
        %5408 = vmatprep.subr.mxu0 0.0
        %5409 = vmatpush1.msra.mxu0 0.0
        %5410 = vmatprep.subr.mxu0 0.0
        %5411 = vmatpush1.msra.mxu0 0.0
        %5412 = vmatprep.subr.mxu0 0.0
        %5413 = vmatpush1.msra.mxu0 0.0
        %5414 = vmatprep.subr.mxu0 0.0
        %5415 = vmatpush1.msra.mxu0 0.0
        %5416 = vmatprep.subr.mxu0 0.0
        %5417 = vmatpush1.msra.mxu0 0.0
        %5418 = vmatprep.subr.mxu0 0.0
        %5419 = vmatpush1.msra.mxu0 0.0
        %5420 = vmatprep.subr.mxu0 0.0
        %5421 = vmatpush1.msra.mxu0 0.0
        %5422 = vmatprep.subr.mxu0 0.0
        %5423 = vmatpush1.msra.mxu0 %v172
        %5424 = vmatprep.subr.mxu0 0.0
        %5425 = vmatpush1.msra.mxu0 %v171
        %5426 = vmatprep.subr.mxu0 0.0
        %5427 = vmatpush1.msra.mxu0 %v170
        %5428 = vmatprep.subr.mxu0 0.0
        %5429 = vmatpush1.msra.mxu0 %v169
        %5430 = vmatprep.subr.mxu0 0.0
        %5431 = vmatpush1.msra.mxu0 %v168
        %5432 = vmatprep.subr.mxu0 0.0
        %5433 = vmatpush1.msra.mxu0 %v167
        %5434 = vmatprep.subr.mxu0 0.0
        %5435 = vmatpush1.msra.mxu0 %v166
        %5436 = vmatprep.subr.mxu0 0.0
        %5437 = vmatpush1.msra.mxu0 %v165
        %5438 = vmatprep.subr.mxu0 0.0
        %5439 = vmatpush2.msra.mxu0 0.0
        %5440 = vmatprep.subr.mxu0 0.0
        %5441 = vmatpush2.msra.mxu0 0.0
        %5442 = vmatprep.subr.mxu0 0.0
        %5443 = vmatpush2.msra.mxu0 0.0
        %5444 = vmatprep.subr.mxu0 0.0
        %5445 = vmatpush2.msra.mxu0 0.0
        %5446 = vmatprep.subr.mxu0 0.0
        %5447 = vmatpush2.msra.mxu0 0.0
        %5448 = vmatprep.subr.mxu0 0.0
        %5449 = vmatpush2.msra.mxu0 0.0
        %5450 = vmatprep.subr.mxu0 0.0
        %5451 = vmatpush2.msra.mxu0 0.0
        %5452 = vmatprep.subr.mxu0 0.0
        %5453 = vmatpush2.msra.mxu0 0.0
        %5454 = vmatprep.subr.mxu0 0.0
        %5455 = vmatpush2.msra.mxu0 0.0
        %5456 = vmatprep.subr.mxu0 0.0
        %5457 = vmatpush2.msra.mxu0 0.0
        %5458 = vmatprep.subr.mxu0 0.0
        %5459 = vmatpush2.msra.mxu0 0.0
        %5460 = vmatprep.subr.mxu0 0.0
        %5461 = vmatpush2.msra.mxu0 0.0
        %5462 = vmatprep.subr.mxu0 0.0
        %5463 = vmatpush2.msra.mxu0 0.0
        %5464 = vmatprep.subr.mxu0 0.0
        %5465 = vmatpush2.msra.mxu0 0.0
        %5466 = vmatprep.subr.mxu0 0.0
        %5467 = vmatpush2.msra.mxu0 0.0
        %5468 = vmatprep.subr.mxu0 0.0
        %5469 = vmatpush2.msra.mxu0 0.0
        %5470 = vmatprep.mubr.f32.mxu0 0.0
        %5471 = vmatmul.mubr.f32.gmra.mxu0 %v1993
        %v5472 = vpop.f32.mrf.mxu0
        %v5473 = vadd.f32 %v5328, %v5472
        %v5474 = vpop.f32.mrf.mxu0
        %5475 = vmatprep.mubr.f32.mxu0 0.0
        %5476 = vmatmul.mubr.f32.gmra.mxu0 %v1995
        %v5477 = vpop.f32.mrf.mxu0
        %v5478 = vadd.f32 %v5333, %v5477
        %v5479 = vpop.f32.mrf.mxu0
        %5480 = vmatprep.mubr.f32.mxu0 0.0
        %5481 = vmatmul.mubr.f32.gmra.mxu0 %v1997
        %v5482 = vpop.f32.mrf.mxu0
        %v5483 = vadd.f32 %v5338, %v5482
        %v5484 = vpop.f32.mrf.mxu0
        %5485 = vmatprep.mubr.f32.mxu0 0.0
        %5486 = vmatmul.mubr.f32.gmra.mxu0 %v1999
        %v5487 = vpop.f32.mrf.mxu0
        %v5488 = vadd.f32 %v5343, %v5487
        %v5489 = vpop.f32.mrf.mxu0
        %5490 = vmatprep.mubr.f32.mxu0 0.0
        %5491 = vmatmul.mubr.f32.gmra.mxu0 %v2001
        %v5492 = vpop.f32.mrf.mxu0
        %v5493 = vadd.f32 %v5348, %v5492
        %v5494 = vpop.f32.mrf.mxu0
        %5495 = vmatprep.mubr.f32.mxu0 0.0
        %5496 = vmatmul.mubr.f32.gmra.mxu0 %v2003
        %v5497 = vpop.f32.mrf.mxu0
        %v5498 = vadd.f32 %v5353, %v5497
        %v5499 = vpop.f32.mrf.mxu0
        %5500 = vmatprep.mubr.f32.mxu0 0.0
        %5501 = vmatmul.mubr.f32.gmra.mxu0 %v2005
        %v5502 = vpop.f32.mrf.mxu0
        %v5503 = vadd.f32 %v5358, %v5502
        %v5504 = vpop.f32.mrf.mxu0
        %5505 = vmatprep.mubr.f32.mxu0 0.0
        %5506 = vmatmul.mubr.f32.gmra.mxu0 %v2007
        %v5507 = vpop.f32.mrf.mxu0
        %v5508 = vadd.f32 %v5363, %v5507
        %v5509 = vpop.f32.mrf.mxu0
        %5510 = vmatprep.mubr.f32.mxu0 0.0
        %5511 = vmatmul.mubr.f32.gmra.mxu0 %v2009
        %v5512 = vpop.f32.mrf.mxu0
        %v5513 = vadd.f32 %v5368, %v5512
        %v5514 = vpop.f32.mrf.mxu0
        %5515 = vmatprep.mubr.f32.mxu0 0.0
        %5516 = vmatmul.mubr.f32.gmra.mxu0 %v2011
        %v5517 = vpop.f32.mrf.mxu0
        %v5518 = vadd.f32 %v5373, %v5517
        %v5519 = vpop.f32.mrf.mxu0
        %5520 = vmatprep.mubr.f32.mxu0 0.0
        %5521 = vmatmul.mubr.f32.gmra.mxu0 %v2013
        %v5522 = vpop.f32.mrf.mxu0
        %v5523 = vadd.f32 %v5378, %v5522
        %v5524 = vpop.f32.mrf.mxu0
        %5525 = vmatprep.mubr.f32.mxu0 0.0
        %5526 = vmatmul.mubr.f32.gmra.mxu0 %v2015
        %v5527 = vpop.f32.mrf.mxu0
        %v5528 = vadd.f32 %v5383, %v5527
        %v5529 = vpop.f32.mrf.mxu0
        %5530 = vmatprep.mubr.f32.mxu0 0.0
        %5531 = vmatmul.mubr.f32.gmra.mxu0 %v2017
        %v5532 = vpop.f32.mrf.mxu0
        %v5533 = vadd.f32 %v5388, %v5532
        %v5534 = vpop.f32.mrf.mxu0
        %5535 = vmatprep.mubr.f32.mxu0 0.0
        %5536 = vmatmul.mubr.f32.gmra.mxu0 %v2019
        %v5537 = vpop.f32.mrf.mxu0
        %v5538 = vadd.f32 %v5393, %v5537
        %v5539 = vpop.f32.mrf.mxu0
        %5540 = vmatprep.mubr.f32.mxu0 0.0
        %5541 = vmatmul.mubr.f32.gmra.mxu0 %v2021
        %v5542 = vpop.f32.mrf.mxu0
        %v5543 = vadd.f32 %v5398, %v5542
        %v5544 = vpop.f32.mrf.mxu0
        %5545 = vmatprep.mubr.f32.mxu0 0.0
        %5546 = vmatmul.mubr.f32.gmra.mxu0 %v2023
        %v5547 = vpop.f32.mrf.mxu0
        %v5548 = vadd.f32 %v5403, %v5547
        %v5549 = vpop.f32.mrf.mxu0
        %5550 = vdwg.mxu0
        %v5551 = vld [vmem:[%s154 + $0x4] sm:$0x1]
        %v5552 = vld [vmem:[%s154 + $0xc] sm:$0x1]
        %v5553 = vld [vmem:[%s154 + $0x14] sm:$0x1]
        %v5554 = vld [vmem:[%s154 + $0x1c] sm:$0x1]
        %v5555 = vld [vmem:[%s154 + $0x24] sm:$0x1]
        %v5556 = vld [vmem:[%s154 + $0x2c] sm:$0x1]
        %v5557 = vld [vmem:[%s154 + $0x34] sm:$0x1]
        %v5558 = vld [vmem:[%s154 + $0x3c] sm:$0x1]
        %v5559 = vld [vmem:[%s154 + $0x44] sm:$0x1]
        %v5560 = vld [vmem:[%s154 + $0x4c] sm:$0x1]
        %v5561 = vld [vmem:[%s154 + $0x54] sm:$0x1]
        %v5562 = vld [vmem:[%s154 + $0x5c] sm:$0x1]
        %v5563 = vld [vmem:[%s154 + $0x64] sm:$0x1]
        %v5564 = vld [vmem:[%s154 + $0x6c] sm:$0x1]
        %v5565 = vld [vmem:[%s154 + $0x74] sm:$0x1]
        %v5566 = vld [vmem:[%s154 + $0x7c] sm:$0x1]
        %v5567 = vld [vmem:[%s154 + $0x84] sm:$0x1]
        %v5568 = vld [vmem:[%s154 + $0x8c] sm:$0x1]
        %v5569 = vld [vmem:[%s154 + $0x94] sm:$0x1]
        %v5570 = vld [vmem:[%s154 + $0x9c] sm:$0x1]
        %v5571 = vld [vmem:[%s154 + $0xa4] sm:$0x1]
        %v5572 = vld [vmem:[%s154 + $0xac] sm:$0x1]
        %v5573 = vld [vmem:[%s154 + $0xb4] sm:$0x1]
        %v5574 = vld [vmem:[%s154 + $0xbc] sm:$0x1]
        %v5575 = vld [vmem:[%s154 + $0xc4] sm:$0x1]
        %v5576 = vld [vmem:[%s154 + $0xcc] sm:$0x1]
        %v5577 = vld [vmem:[%s154 + $0xd4] sm:$0x1]
        %v5578 = vld [vmem:[%s154 + $0xdc] sm:$0x1]
        %v5579 = vld [vmem:[%s154 + $0xe4] sm:$0x1]
        %v5580 = vld [vmem:[%s154 + $0xec] sm:$0x1]
        %v5581 = vld [vmem:[%s154 + $0xf4] sm:$0x1]
        %v5582 = vld [vmem:[%s154 + $0xfc] sm:$0x1]
        %v5583 = vld [vmem:[%s154 + $0x104] sm:$0x1]
        %v5584 = vld [vmem:[%s154 + $0x10c] sm:$0x1]
        %v5585 = vld [vmem:[%s154 + $0x114] sm:$0x1]
        %v5586 = vld [vmem:[%s154 + $0x11c] sm:$0x1]
        %v5587 = vld [vmem:[%s154 + $0x124] sm:$0x1]
        %v5588 = vld [vmem:[%s154 + $0x12c] sm:$0x1]
        %v5589 = vld [vmem:[%s154 + $0x134] sm:$0x1]
        %v5590 = vld [vmem:[%s154 + $0x13c] sm:$0x1]
        %v5591 = vld [vmem:[%s154 + $0x144] sm:$0x1]
        %v5592 = vld [vmem:[%s154 + $0x14c] sm:$0x1]
        %v5593 = vld [vmem:[%s154 + $0x154] sm:$0x1]
        %v5594 = vld [vmem:[%s154 + $0x15c] sm:$0x1]
        %v5595 = vld [vmem:[%s154 + $0x164] sm:$0x1]
        %v5596 = vld [vmem:[%s154 + $0x16c] sm:$0x1]
        %v5597 = vld [vmem:[%s154 + $0x174] sm:$0x1]
        %v5598 = vld [vmem:[%s154 + $0x17c] sm:$0x1]
        %v5599 = vld [vmem:[%s154 + $0x184] sm:$0x1]
        %v5600 = vld [vmem:[%s154 + $0x18c] sm:$0x1]
        %v5601 = vld [vmem:[%s154 + $0x194] sm:$0x1]
        %v5602 = vld [vmem:[%s154 + $0x19c] sm:$0x1]
        %v5603 = vld [vmem:[%s154 + $0x1a4] sm:$0x1]
        %v5604 = vld [vmem:[%s154 + $0x1ac] sm:$0x1]
        %v5605 = vld [vmem:[%s154 + $0x1b4] sm:$0x1]
        %v5606 = vld [vmem:[%s154 + $0x1bc] sm:$0x1]
        %v5607 = vld [vmem:[%s154 + $0x1c4] sm:$0x1]
        %v5608 = vld [vmem:[%s154 + $0x1cc] sm:$0x1]
        %v5609 = vld [vmem:[%s154 + $0x1d4] sm:$0x1]
        %v5610 = vld [vmem:[%s154 + $0x1dc] sm:$0x1]
        %v5611 = vld [vmem:[%s154 + $0x1e4] sm:$0x1]
        %v5612 = vld [vmem:[%s154 + $0x1ec] sm:$0x1]
        %v5613 = vld [vmem:[%s154 + $0x1f4] sm:$0x1]
        %v5614 = vld [vmem:[%s154 + $0x1fc] sm:$0x1]
        %v5615 = vld [vmem:[%s154 + $0x204] sm:$0x1]
        %v5616 = vld [vmem:[%s154 + $0x20c] sm:$0x1]
        %v5617 = vld [vmem:[%s154 + $0x214] sm:$0x1]
        %v5618 = vld [vmem:[%s154 + $0x21c] sm:$0x1]
        %v5619 = vld [vmem:[%s154 + $0x224] sm:$0x1]
        %v5620 = vld [vmem:[%s154 + $0x22c] sm:$0x1]
        %v5621 = vld [vmem:[%s154 + $0x234] sm:$0x1]
        %v5622 = vld [vmem:[%s154 + $0x23c] sm:$0x1]
        %v5623 = vld [vmem:[%s154 + $0x244] sm:$0x1]
        %v5624 = vld [vmem:[%s154 + $0x24c] sm:$0x1]
        %v5625 = vld [vmem:[%s154 + $0x254] sm:$0x1]
        %v5626 = vld [vmem:[%s154 + $0x25c] sm:$0x1]
        %v5627 = vld [vmem:[%s154 + $0x264] sm:$0x1]
        %v5628 = vld [vmem:[%s154 + $0x26c] sm:$0x1]
        %v5629 = vld [vmem:[%s154 + $0x274] sm:$0x1]
        %v5630 = vld [vmem:[%s154 + $0x27c] sm:$0x1]
        %v5631 = vld [vmem:[%s154 + $0x284] sm:$0x1]
        %v5632 = vld [vmem:[%s154 + $0x28c] sm:$0x1]
        %v5633 = vld [vmem:[%s154 + $0x294] sm:$0x1]
        %v5634 = vld [vmem:[%s154 + $0x29c] sm:$0x1]
        %v5635 = vld [vmem:[%s154 + $0x2a4] sm:$0x1]
        %v5636 = vld [vmem:[%s154 + $0x2ac] sm:$0x1]
        %v5637 = vld [vmem:[%s154 + $0x2b4] sm:$0x1]
        %v5638 = vld [vmem:[%s154 + $0x2bc] sm:$0x1]
        %v5639 = vld [vmem:[%s154 + $0x2c4] sm:$0x1]
        %v5640 = vld [vmem:[%s154 + $0x2cc] sm:$0x1]
        %v5641 = vld [vmem:[%s154 + $0x2d4] sm:$0x1]
        %v5642 = vld [vmem:[%s154 + $0x2dc] sm:$0x1]
        %v5643 = vld [vmem:[%s154 + $0x2e4] sm:$0x1]
        %v5644 = vld [vmem:[%s154 + $0x2ec] sm:$0x1]
        %v5645 = vld [vmem:[%s154 + $0x2f4] sm:$0x1]
        %v5646 = vld [vmem:[%s154 + $0x2fc] sm:$0x1]
        %v5647 = vld [vmem:[%s154 + $0x304] sm:$0x1]
        %v5648 = vld [vmem:[%s154 + $0x30c] sm:$0x1]
        %v5649 = vld [vmem:[%s154 + $0x314] sm:$0x1]
        %v5650 = vld [vmem:[%s154 + $0x31c] sm:$0x1]
        %v5651 = vld [vmem:[%s154 + $0x324] sm:$0x1]
        %v5652 = vld [vmem:[%s154 + $0x32c] sm:$0x1]
        %v5653 = vld [vmem:[%s154 + $0x334] sm:$0x1]
        %v5654 = vld [vmem:[%s154 + $0x33c] sm:$0x1]
        %v5655 = vld [vmem:[%s154 + $0x344] sm:$0x1]
        %v5656 = vld [vmem:[%s154 + $0x34c] sm:$0x1]
        %v5657 = vld [vmem:[%s154 + $0x354] sm:$0x1]
        %v5658 = vld [vmem:[%s154 + $0x35c] sm:$0x1]
        %v5659 = vld [vmem:[%s154 + $0x364] sm:$0x1]
        %v5660 = vld [vmem:[%s154 + $0x36c] sm:$0x1]
        %v5661 = vld [vmem:[%s154 + $0x374] sm:$0x1]
        %v5662 = vld [vmem:[%s154 + $0x37c] sm:$0x1]
        %v5663 = vld [vmem:[%s154 + $0x384] sm:$0x1]
        %v5664 = vld [vmem:[%s154 + $0x38c] sm:$0x1]
        %v5665 = vld [vmem:[%s154 + $0x394] sm:$0x1]
        %v5666 = vld [vmem:[%s154 + $0x39c] sm:$0x1]
        %v5667 = vld [vmem:[%s154 + $0x3a4] sm:$0x1]
        %v5668 = vld [vmem:[%s154 + $0x3ac] sm:$0x1]
        %v5669 = vld [vmem:[%s154 + $0x3b4] sm:$0x1]
        %v5670 = vld [vmem:[%s154 + $0x3bc] sm:$0x1]
        %v5671 = vld [vmem:[%s154 + $0x3c4] sm:$0x1]
        %v5672 = vld [vmem:[%s154 + $0x3cc] sm:$0x1]
        %v5673 = vld [vmem:[%s154 + $0x3d4] sm:$0x1]
        %v5674 = vld [vmem:[%s154 + $0x3dc] sm:$0x1]
        %v5675 = vld [vmem:[%s154 + $0x3e4] sm:$0x1]
        %v5676 = vld [vmem:[%s154 + $0x3ec] sm:$0x1]
        %v5677 = vld [vmem:[%s154 + $0x3f4] sm:$0x1]
        %v5678 = vld [vmem:[%s154 + $0x3fc] sm:$0x1]
        %v5807 = vrot.slane %v5552, 7
        %v5808 = vsel %vm576, %v5807, %v5551
        %v5809 = vrot.slane %v5553, 6
        %v5810 = vsel %vm579, %v5809, %v5808
        %v5811 = vrot.slane %v5554, 5
        %v5812 = vsel %vm582, %v5811, %v5810
        %v5813 = vrot.slane %v5555, 4
        %v5814 = vsel %vm585, %v5813, %v5812
        %v5815 = vrot.slane %v5556, 3
        %v5816 = vsel %vm588, %v5815, %v5814
        %v5817 = vrot.slane %v5557, 2
        %v5818 = vsel %vm591, %v5817, %v5816
        %v5819 = vrot.slane %v5558, 1
        %v5820 = vsel %vm594, %v5819, %v5818
        %v5821 = vrot.slane %v5560, 7
        %v5822 = vsel %vm576, %v5821, %v5559
        %v5823 = vrot.slane %v5561, 6
        %v5824 = vsel %vm579, %v5823, %v5822
        %v5825 = vrot.slane %v5562, 5
        %v5826 = vsel %vm582, %v5825, %v5824
        %v5827 = vrot.slane %v5563, 4
        %v5828 = vsel %vm585, %v5827, %v5826
        %v5829 = vrot.slane %v5564, 3
        %v5830 = vsel %vm588, %v5829, %v5828
        %v5831 = vrot.slane %v5565, 2
        %v5832 = vsel %vm591, %v5831, %v5830
        %v5833 = vrot.slane %v5566, 1
        %v5834 = vsel %vm594, %v5833, %v5832
        %v5835 = vrot.slane %v5568, 7
        %v5836 = vsel %vm576, %v5835, %v5567
        %v5837 = vrot.slane %v5569, 6
        %v5838 = vsel %vm579, %v5837, %v5836
        %v5839 = vrot.slane %v5570, 5
        %v5840 = vsel %vm582, %v5839, %v5838
        %v5841 = vrot.slane %v5571, 4
        %v5842 = vsel %vm585, %v5841, %v5840
        %v5843 = vrot.slane %v5572, 3
        %v5844 = vsel %vm588, %v5843, %v5842
        %v5845 = vrot.slane %v5573, 2
        %v5846 = vsel %vm591, %v5845, %v5844
        %v5847 = vrot.slane %v5574, 1
        %v5848 = vsel %vm594, %v5847, %v5846
        %v5849 = vrot.slane %v5576, 7
        %v5850 = vsel %vm576, %v5849, %v5575
        %v5851 = vrot.slane %v5577, 6
        %v5852 = vsel %vm579, %v5851, %v5850
        %v5853 = vrot.slane %v5578, 5
        %v5854 = vsel %vm582, %v5853, %v5852
        %v5855 = vrot.slane %v5579, 4
        %v5856 = vsel %vm585, %v5855, %v5854
        %v5857 = vrot.slane %v5580, 3
        %v5858 = vsel %vm588, %v5857, %v5856
        %v5859 = vrot.slane %v5581, 2
        %v5860 = vsel %vm591, %v5859, %v5858
        %v5861 = vrot.slane %v5582, 1
        %v5862 = vsel %vm594, %v5861, %v5860
        %v5863 = vrot.slane %v5584, 7
        %v5864 = vsel %vm576, %v5863, %v5583
        %v5865 = vrot.slane %v5585, 6
        %v5866 = vsel %vm579, %v5865, %v5864
        %v5867 = vrot.slane %v5586, 5
        %v5868 = vsel %vm582, %v5867, %v5866
        %v5869 = vrot.slane %v5587, 4
        %v5870 = vsel %vm585, %v5869, %v5868
        %v5871 = vrot.slane %v5588, 3
        %v5872 = vsel %vm588, %v5871, %v5870
        %v5873 = vrot.slane %v5589, 2
        %v5874 = vsel %vm591, %v5873, %v5872
        %v5875 = vrot.slane %v5590, 1
        %v5876 = vsel %vm594, %v5875, %v5874
        %v5877 = vrot.slane %v5592, 7
        %v5878 = vsel %vm576, %v5877, %v5591
        %v5879 = vrot.slane %v5593, 6
        %v5880 = vsel %vm579, %v5879, %v5878
        %v5881 = vrot.slane %v5594, 5
        %v5882 = vsel %vm582, %v5881, %v5880
        %v5883 = vrot.slane %v5595, 4
        %v5884 = vsel %vm585, %v5883, %v5882
        %v5885 = vrot.slane %v5596, 3
        %v5886 = vsel %vm588, %v5885, %v5884
        %v5887 = vrot.slane %v5597, 2
        %v5888 = vsel %vm591, %v5887, %v5886
        %v5889 = vrot.slane %v5598, 1
        %v5890 = vsel %vm594, %v5889, %v5888
        %v5891 = vrot.slane %v5600, 7
        %v5892 = vsel %vm576, %v5891, %v5599
        %v5893 = vrot.slane %v5601, 6
        %v5894 = vsel %vm579, %v5893, %v5892
        %v5895 = vrot.slane %v5602, 5
        %v5896 = vsel %vm582, %v5895, %v5894
        %v5897 = vrot.slane %v5603, 4
        %v5898 = vsel %vm585, %v5897, %v5896
        %v5899 = vrot.slane %v5604, 3
        %v5900 = vsel %vm588, %v5899, %v5898
        %v5901 = vrot.slane %v5605, 2
        %v5902 = vsel %vm591, %v5901, %v5900
        %v5903 = vrot.slane %v5606, 1
        %v5904 = vsel %vm594, %v5903, %v5902
        %v5905 = vrot.slane %v5608, 7
        %v5906 = vsel %vm576, %v5905, %v5607
        %v5907 = vrot.slane %v5609, 6
        %v5908 = vsel %vm579, %v5907, %v5906
        %v5909 = vrot.slane %v5610, 5
        %v5910 = vsel %vm582, %v5909, %v5908
        %v5911 = vrot.slane %v5611, 4
        %v5912 = vsel %vm585, %v5911, %v5910
        %v5913 = vrot.slane %v5612, 3
        %v5914 = vsel %vm588, %v5913, %v5912
        %v5915 = vrot.slane %v5613, 2
        %v5916 = vsel %vm591, %v5915, %v5914
        %v5917 = vrot.slane %v5614, 1
        %v5918 = vsel %vm594, %v5917, %v5916
        %v5919 = vrot.slane %v5616, 7
        %v5920 = vsel %vm576, %v5919, %v5615
        %v5921 = vrot.slane %v5617, 6
        %v5922 = vsel %vm579, %v5921, %v5920
        %v5923 = vrot.slane %v5618, 5
        %v5924 = vsel %vm582, %v5923, %v5922
        %v5925 = vrot.slane %v5619, 4
        %v5926 = vsel %vm585, %v5925, %v5924
        %v5927 = vrot.slane %v5620, 3
        %v5928 = vsel %vm588, %v5927, %v5926
        %v5929 = vrot.slane %v5621, 2
        %v5930 = vsel %vm591, %v5929, %v5928
        %v5931 = vrot.slane %v5622, 1
        %v5932 = vsel %vm594, %v5931, %v5930
        %v5933 = vrot.slane %v5624, 7
        %v5934 = vsel %vm576, %v5933, %v5623
        %v5935 = vrot.slane %v5625, 6
        %v5936 = vsel %vm579, %v5935, %v5934
        %v5937 = vrot.slane %v5626, 5
        %v5938 = vsel %vm582, %v5937, %v5936
        %v5939 = vrot.slane %v5627, 4
        %v5940 = vsel %vm585, %v5939, %v5938
        %v5941 = vrot.slane %v5628, 3
        %v5942 = vsel %vm588, %v5941, %v5940
        %v5943 = vrot.slane %v5629, 2
        %v5944 = vsel %vm591, %v5943, %v5942
        %v5945 = vrot.slane %v5630, 1
        %v5946 = vsel %vm594, %v5945, %v5944
        %v5947 = vrot.slane %v5632, 7
        %v5948 = vsel %vm576, %v5947, %v5631
        %v5949 = vrot.slane %v5633, 6
        %v5950 = vsel %vm579, %v5949, %v5948
        %v5951 = vrot.slane %v5634, 5
        %v5952 = vsel %vm582, %v5951, %v5950
        %v5953 = vrot.slane %v5635, 4
        %v5954 = vsel %vm585, %v5953, %v5952
        %v5955 = vrot.slane %v5636, 3
        %v5956 = vsel %vm588, %v5955, %v5954
        %v5957 = vrot.slane %v5637, 2
        %v5958 = vsel %vm591, %v5957, %v5956
        %v5959 = vrot.slane %v5638, 1
        %v5960 = vsel %vm594, %v5959, %v5958
        %v5961 = vrot.slane %v5640, 7
        %v5962 = vsel %vm576, %v5961, %v5639
        %v5963 = vrot.slane %v5641, 6
        %v5964 = vsel %vm579, %v5963, %v5962
        %v5965 = vrot.slane %v5642, 5
        %v5966 = vsel %vm582, %v5965, %v5964
        %v5967 = vrot.slane %v5643, 4
        %v5968 = vsel %vm585, %v5967, %v5966
        %v5969 = vrot.slane %v5644, 3
        %v5970 = vsel %vm588, %v5969, %v5968
        %v5971 = vrot.slane %v5645, 2
        %v5972 = vsel %vm591, %v5971, %v5970
        %v5973 = vrot.slane %v5646, 1
        %v5974 = vsel %vm594, %v5973, %v5972
        %v5975 = vrot.slane %v5648, 7
        %v5976 = vsel %vm576, %v5975, %v5647
        %v5977 = vrot.slane %v5649, 6
        %v5978 = vsel %vm579, %v5977, %v5976
        %v5979 = vrot.slane %v5650, 5
        %v5980 = vsel %vm582, %v5979, %v5978
        %v5981 = vrot.slane %v5651, 4
        %v5982 = vsel %vm585, %v5981, %v5980
        %v5983 = vrot.slane %v5652, 3
        %v5984 = vsel %vm588, %v5983, %v5982
        %v5985 = vrot.slane %v5653, 2
        %v5986 = vsel %vm591, %v5985, %v5984
        %v5987 = vrot.slane %v5654, 1
        %v5988 = vsel %vm594, %v5987, %v5986
        %v5989 = vrot.slane %v5656, 7
        %v5990 = vsel %vm576, %v5989, %v5655
        %v5991 = vrot.slane %v5657, 6
        %v5992 = vsel %vm579, %v5991, %v5990
        %v5993 = vrot.slane %v5658, 5
        %v5994 = vsel %vm582, %v5993, %v5992
        %v5995 = vrot.slane %v5659, 4
        %v5996 = vsel %vm585, %v5995, %v5994
        %v5997 = vrot.slane %v5660, 3
        %v5998 = vsel %vm588, %v5997, %v5996
        %v5999 = vrot.slane %v5661, 2
        %v6000 = vsel %vm591, %v5999, %v5998
        %v6001 = vrot.slane %v5662, 1
        %v6002 = vsel %vm594, %v6001, %v6000
        %v6003 = vrot.slane %v5664, 7
        %v6004 = vsel %vm576, %v6003, %v5663
        %v6005 = vrot.slane %v5665, 6
        %v6006 = vsel %vm579, %v6005, %v6004
        %v6007 = vrot.slane %v5666, 5
        %v6008 = vsel %vm582, %v6007, %v6006
        %v6009 = vrot.slane %v5667, 4
        %v6010 = vsel %vm585, %v6009, %v6008
        %v6011 = vrot.slane %v5668, 3
        %v6012 = vsel %vm588, %v6011, %v6010
        %v6013 = vrot.slane %v5669, 2
        %v6014 = vsel %vm591, %v6013, %v6012
        %v6015 = vrot.slane %v5670, 1
        %v6016 = vsel %vm594, %v6015, %v6014
        %v6017 = vrot.slane %v5672, 7
        %v6018 = vsel %vm576, %v6017, %v5671
        %v6019 = vrot.slane %v5673, 6
        %v6020 = vsel %vm579, %v6019, %v6018
        %v6021 = vrot.slane %v5674, 5
        %v6022 = vsel %vm582, %v6021, %v6020
        %v6023 = vrot.slane %v5675, 4
        %v6024 = vsel %vm585, %v6023, %v6022
        %v6025 = vrot.slane %v5676, 3
        %v6026 = vsel %vm588, %v6025, %v6024
        %v6027 = vrot.slane %v5677, 2
        %v6028 = vsel %vm591, %v6027, %v6026
        %v6029 = vrot.slane %v5678, 1
        %v6030 = vsel %vm594, %v6029, %v6028
        %v6031 = vsel %vm806, %v5820, 0
        %v6033 = vsel %vm806, %v5834, 0
        %v6035 = vsel %vm806, %v5848, 0
        %v6037 = vsel %vm806, %v5862, 0
        %v6039 = vsel %vm806, %v5876, 0
        %v6041 = vsel %vm806, %v5890, 0
        %v6043 = vsel %vm806, %v5904, 0
        %v6045 = vsel %vm806, %v5918, 0
        %v6047 = vsel %vm806, %v5932, 0
        %v6049 = vsel %vm806, %v5946, 0
        %v6051 = vsel %vm806, %v5960, 0
        %v6053 = vsel %vm806, %v5974, 0
        %v6055 = vsel %vm806, %v5988, 0
        %v6057 = vsel %vm806, %v6002, 0
        %v6059 = vsel %vm806, %v6016, 0
        %v6061 = vsel %vm806, %v6030, 0
        %6063 = vmatprep.subr.mxu0 0.0
        %6064 = vmatpush1.msra.mxu0 0.0
        %6065 = vmatprep.subr.mxu0 0.0
        %6066 = vmatpush1.msra.mxu0 0.0
        %6067 = vmatprep.subr.mxu0 0.0
        %6068 = vmatpush1.msra.mxu0 0.0
        %6069 = vmatprep.subr.mxu0 0.0
        %6070 = vmatpush1.msra.mxu0 0.0
        %6071 = vmatprep.subr.mxu0 0.0
        %6072 = vmatpush1.msra.mxu0 0.0
        %6073 = vmatprep.subr.mxu0 0.0
        %6074 = vmatpush1.msra.mxu0 0.0
        %6075 = vmatprep.subr.mxu0 0.0
        %6076 = vmatpush1.msra.mxu0 0.0
        %6077 = vmatprep.subr.mxu0 0.0
        %6078 = vmatpush1.msra.mxu0 0.0
        %6079 = vmatprep.subr.mxu0 0.0
        %6080 = vmatpush1.msra.mxu0 %v190
        %6081 = vmatprep.subr.mxu0 0.0
        %6082 = vmatpush1.msra.mxu0 %v189
        %6083 = vmatprep.subr.mxu0 0.0
        %6084 = vmatpush1.msra.mxu0 %v188
        %6085 = vmatprep.subr.mxu0 0.0
        %6086 = vmatpush1.msra.mxu0 %v187
        %6087 = vmatprep.subr.mxu0 0.0
        %6088 = vmatpush1.msra.mxu0 %v186
        %6089 = vmatprep.subr.mxu0 0.0
        %6090 = vmatpush1.msra.mxu0 %v185
        %6091 = vmatprep.subr.mxu0 0.0
        %6092 = vmatpush1.msra.mxu0 %v184
        %6093 = vmatprep.subr.mxu0 0.0
        %6094 = vmatpush1.msra.mxu0 %v183
        %6095 = vmatprep.subr.mxu0 0.0
        %6096 = vmatpush2.msra.mxu0 0.0
        %6097 = vmatprep.subr.mxu0 0.0
        %6098 = vmatpush2.msra.mxu0 0.0
        %6099 = vmatprep.subr.mxu0 0.0
        %6100 = vmatpush2.msra.mxu0 0.0
        %6101 = vmatprep.subr.mxu0 0.0
        %6102 = vmatpush2.msra.mxu0 0.0
        %6103 = vmatprep.subr.mxu0 0.0
        %6104 = vmatpush2.msra.mxu0 0.0
        %6105 = vmatprep.subr.mxu0 0.0
        %6106 = vmatpush2.msra.mxu0 0.0
        %6107 = vmatprep.subr.mxu0 0.0
        %6108 = vmatpush2.msra.mxu0 0.0
        %6109 = vmatprep.subr.mxu0 0.0
        %6110 = vmatpush2.msra.mxu0 0.0
        %6111 = vmatprep.subr.mxu0 0.0
        %6112 = vmatpush2.msra.mxu0 0.0
        %6113 = vmatprep.subr.mxu0 0.0
        %6114 = vmatpush2.msra.mxu0 0.0
        %6115 = vmatprep.subr.mxu0 0.0
        %6116 = vmatpush2.msra.mxu0 0.0
        %6117 = vmatprep.subr.mxu0 0.0
        %6118 = vmatpush2.msra.mxu0 0.0
        %6119 = vmatprep.subr.mxu0 0.0
        %6120 = vmatpush2.msra.mxu0 0.0
        %6121 = vmatprep.subr.mxu0 0.0
        %6122 = vmatpush2.msra.mxu0 0.0
        %6123 = vmatprep.subr.mxu0 0.0
        %6124 = vmatpush2.msra.mxu0 0.0
        %6125 = vmatprep.subr.mxu0 0.0
        %6126 = vmatpush2.msra.mxu0 0.0
        %6127 = vmatprep.mubr.f32.mxu0 0.0
        %6128 = vmatmul.mubr.f32.gmra.mxu0 %v6031
        %v6129 = vpop.f32.mrf.mxu0
        %v6130 = vadd.f32 0.0, %v6129
        %v6131 = vpop.f32.mrf.mxu0
        %6132 = vmatprep.mubr.f32.mxu0 0.0
        %6133 = vmatmul.mubr.f32.gmra.mxu0 %v6033
        %v6134 = vpop.f32.mrf.mxu0
        %v6135 = vadd.f32 0.0, %v6134
        %v6136 = vpop.f32.mrf.mxu0
        %6137 = vmatprep.mubr.f32.mxu0 0.0
        %6138 = vmatmul.mubr.f32.gmra.mxu0 %v6035
        %v6139 = vpop.f32.mrf.mxu0
        %v6140 = vadd.f32 0.0, %v6139
        %v6141 = vpop.f32.mrf.mxu0
        %6142 = vmatprep.mubr.f32.mxu0 0.0
        %6143 = vmatmul.mubr.f32.gmra.mxu0 %v6037
        %v6144 = vpop.f32.mrf.mxu0
        %v6145 = vadd.f32 0.0, %v6144
        %v6146 = vpop.f32.mrf.mxu0
        %6147 = vmatprep.mubr.f32.mxu0 0.0
        %6148 = vmatmul.mubr.f32.gmra.mxu0 %v6039
        %v6149 = vpop.f32.mrf.mxu0
        %v6150 = vadd.f32 0.0, %v6149
        %v6151 = vpop.f32.mrf.mxu0
        %6152 = vmatprep.mubr.f32.mxu0 0.0
        %6153 = vmatmul.mubr.f32.gmra.mxu0 %v6041
        %v6154 = vpop.f32.mrf.mxu0
        %v6155 = vadd.f32 0.0, %v6154
        %v6156 = vpop.f32.mrf.mxu0
        %6157 = vmatprep.mubr.f32.mxu0 0.0
        %6158 = vmatmul.mubr.f32.gmra.mxu0 %v6043
        %v6159 = vpop.f32.mrf.mxu0
        %v6160 = vadd.f32 0.0, %v6159
        %v6161 = vpop.f32.mrf.mxu0
        %6162 = vmatprep.mubr.f32.mxu0 0.0
        %6163 = vmatmul.mubr.f32.gmra.mxu0 %v6045
        %v6164 = vpop.f32.mrf.mxu0
        %v6165 = vadd.f32 0.0, %v6164
        %v6166 = vpop.f32.mrf.mxu0
        %6167 = vmatprep.mubr.f32.mxu0 0.0
        %6168 = vmatmul.mubr.f32.gmra.mxu0 %v6047
        %v6169 = vpop.f32.mrf.mxu0
        %v6170 = vadd.f32 0.0, %v6169
        %v6171 = vpop.f32.mrf.mxu0
        %6172 = vmatprep.mubr.f32.mxu0 0.0
        %6173 = vmatmul.mubr.f32.gmra.mxu0 %v6049
        %v6174 = vpop.f32.mrf.mxu0
        %v6175 = vadd.f32 0.0, %v6174
        %v6176 = vpop.f32.mrf.mxu0
        %6177 = vmatprep.mubr.f32.mxu0 0.0
        %6178 = vmatmul.mubr.f32.gmra.mxu0 %v6051
        %v6179 = vpop.f32.mrf.mxu0
        %v6180 = vadd.f32 0.0, %v6179
        %v6181 = vpop.f32.mrf.mxu0
        %6182 = vmatprep.mubr.f32.mxu0 0.0
        %6183 = vmatmul.mubr.f32.gmra.mxu0 %v6053
        %v6184 = vpop.f32.mrf.mxu0
        %v6185 = vadd.f32 0.0, %v6184
        %v6186 = vpop.f32.mrf.mxu0
        %6187 = vmatprep.mubr.f32.mxu0 0.0
        %6188 = vmatmul.mubr.f32.gmra.mxu0 %v6055
        %v6189 = vpop.f32.mrf.mxu0
        %v6190 = vadd.f32 0.0, %v6189
        %v6191 = vpop.f32.mrf.mxu0
        %6192 = vmatprep.mubr.f32.mxu0 0.0
        %6193 = vmatmul.mubr.f32.gmra.mxu0 %v6057
        %v6194 = vpop.f32.mrf.mxu0
        %v6195 = vadd.f32 0.0, %v6194
        %v6196 = vpop.f32.mrf.mxu0
        %6197 = vmatprep.mubr.f32.mxu0 0.0
        %6198 = vmatmul.mubr.f32.gmra.mxu0 %v6059
        %v6199 = vpop.f32.mrf.mxu0
        %v6200 = vadd.f32 0.0, %v6199
        %v6201 = vpop.f32.mrf.mxu0
        %6202 = vmatprep.mubr.f32.mxu0 0.0
        %6203 = vmatmul.mubr.f32.gmra.mxu0 %v6061
        %v6204 = vpop.f32.mrf.mxu0
        %v6205 = vadd.f32 0.0, %v6204
        %v6206 = vpop.f32.mrf.mxu0
        %6207 = vdwg.mxu0
        %v6208 = vadd.f32 %v5473, %v6130
        %v6209 = vadd.f32 %v5478, %v6135
        %v6210 = vadd.f32 %v5483, %v6140
        %v6211 = vadd.f32 %v5488, %v6145
        %v6212 = vadd.f32 %v5493, %v6150
        %v6213 = vadd.f32 %v5498, %v6155
        %v6214 = vadd.f32 %v5503, %v6160
        %v6215 = vadd.f32 %v5508, %v6165
        %v6216 = vadd.f32 %v5513, %v6170
        %v6217 = vadd.f32 %v5518, %v6175
        %v6218 = vadd.f32 %v5523, %v6180
        %v6219 = vadd.f32 %v5528, %v6185
        %v6220 = vadd.f32 %v5533, %v6190
        %v6221 = vadd.f32 %v5538, %v6195
        %v6222 = vadd.f32 %v5543, %v6200
        %v6223 = vadd.f32 %v5548, %v6205
        %v6240 = vcombine.high %v6208, %v6208
        %v6242 = vunpack.c.l.s4 1966171168
        %v6243 = vunpack.c.0.s8 %v6242
        %v6244 = vlaneseq
        %v6245 = vshrl.u32 %v6244, 7
        %v6246 = vsub.s32 %v6243, %v6245
        %v6247 = vrot.slane %v6208, %v6246
        %v6249 = vunpack.c.l.s4 1966171168
        %v6250 = vunpack.c.0.s8 %v6249
        %v6251 = vlaneseq
        %v6252 = vshrl.u32 %v6251, 7
        %v6253 = vsub.s32 %v6250, %v6252
        %v6254 = vrot.slane %v6240, %v6253
        %v6255 = vcombine.high %v6247, %v6247
        %v6256 = vcombine.high %v6254, %v6254
        %v6258 = vunpack.c.l.s4 1966171168
        %v6259 = vunpack.c.0.s8 %v6258
        %v6260 = vlaneseq
        %v6261 = vshrl.u32 %v6260, 7
        %v6262 = vsub.s32 %v6259, %v6261
        %v6263 = vrot.slane %v6247, %v6262
        %v6265 = vunpack.c.l.s4 1966171168
        %v6266 = vunpack.c.0.s8 %v6265
        %v6267 = vlaneseq
        %v6268 = vshrl.u32 %v6267, 7
        %v6269 = vsub.s32 %v6266, %v6268
        %v6270 = vrot.slane %v6254, %v6269
        %v6272 = vunpack.c.l.s4 1966171168
        %v6273 = vunpack.c.0.s8 %v6272
        %v6274 = vlaneseq
        %v6275 = vshrl.u32 %v6274, 7
        %v6276 = vsub.s32 %v6273, %v6275
        %v6277 = vrot.slane %v6255, %v6276
        %v6279 = vunpack.c.l.s4 1966171168
        %v6280 = vunpack.c.0.s8 %v6279
        %v6281 = vlaneseq
        %v6282 = vshrl.u32 %v6281, 7
        %v6283 = vsub.s32 %v6280, %v6282
        %v6284 = vrot.slane %v6256, %v6283
        %v6285 = vcombine.high %v6263, %v6263
        %v6286 = vcombine.high %v6270, %v6270
        %v6287 = vcombine.high %v6277, %v6277
        %v6288 = vcombine.high %v6284, %v6284
        %v6289 = vcombine.high %v6209, %v6209
        %v6291 = vunpack.c.l.s4 1966171168
        %v6292 = vunpack.c.0.s8 %v6291
        %v6293 = vlaneseq
        %v6294 = vshrl.u32 %v6293, 7
        %v6295 = vsub.s32 %v6292, %v6294
        %v6296 = vrot.slane %v6209, %v6295
        %v6298 = vunpack.c.l.s4 1966171168
        %v6299 = vunpack.c.0.s8 %v6298
        %v6300 = vlaneseq
        %v6301 = vshrl.u32 %v6300, 7
        %v6302 = vsub.s32 %v6299, %v6301
        %v6303 = vrot.slane %v6289, %v6302
        %v6304 = vcombine.high %v6296, %v6296
        %v6305 = vcombine.high %v6303, %v6303
        %v6307 = vunpack.c.l.s4 1966171168
        %v6308 = vunpack.c.0.s8 %v6307
        %v6309 = vlaneseq
        %v6310 = vshrl.u32 %v6309, 7
        %v6311 = vsub.s32 %v6308, %v6310
        %v6312 = vrot.slane %v6296, %v6311
        %v6314 = vunpack.c.l.s4 1966171168
        %v6315 = vunpack.c.0.s8 %v6314
        %v6316 = vlaneseq
        %v6317 = vshrl.u32 %v6316, 7
        %v6318 = vsub.s32 %v6315, %v6317
        %v6319 = vrot.slane %v6303, %v6318
        %v6321 = vunpack.c.l.s4 1966171168
        %v6322 = vunpack.c.0.s8 %v6321
        %v6323 = vlaneseq
        %v6324 = vshrl.u32 %v6323, 7
        %v6325 = vsub.s32 %v6322, %v6324
        %v6326 = vrot.slane %v6304, %v6325
        %v6328 = vunpack.c.l.s4 1966171168
        %v6329 = vunpack.c.0.s8 %v6328
        %v6330 = vlaneseq
        %v6331 = vshrl.u32 %v6330, 7
        %v6332 = vsub.s32 %v6329, %v6331
        %v6333 = vrot.slane %v6305, %v6332
        %v6334 = vcombine.high %v6312, %v6312
        %v6335 = vcombine.high %v6319, %v6319
        %v6336 = vcombine.high %v6326, %v6326
        %v6337 = vcombine.high %v6333, %v6333
        %v6338 = vcombine.high %v6210, %v6210
        %v6340 = vunpack.c.l.s4 1966171168
        %v6341 = vunpack.c.0.s8 %v6340
        %v6342 = vlaneseq
        %v6343 = vshrl.u32 %v6342, 7
        %v6344 = vsub.s32 %v6341, %v6343
        %v6345 = vrot.slane %v6210, %v6344
        %v6347 = vunpack.c.l.s4 1966171168
        %v6348 = vunpack.c.0.s8 %v6347
        %v6349 = vlaneseq
        %v6350 = vshrl.u32 %v6349, 7
        %v6351 = vsub.s32 %v6348, %v6350
        %v6352 = vrot.slane %v6338, %v6351
        %v6353 = vcombine.high %v6345, %v6345
        %v6354 = vcombine.high %v6352, %v6352
        %v6356 = vunpack.c.l.s4 1966171168
        %v6357 = vunpack.c.0.s8 %v6356
        %v6358 = vlaneseq
        %v6359 = vshrl.u32 %v6358, 7
        %v6360 = vsub.s32 %v6357, %v6359
        %v6361 = vrot.slane %v6345, %v6360
        %v6363 = vunpack.c.l.s4 1966171168
        %v6364 = vunpack.c.0.s8 %v6363
        %v6365 = vlaneseq
        %v6366 = vshrl.u32 %v6365, 7
        %v6367 = vsub.s32 %v6364, %v6366
        %v6368 = vrot.slane %v6352, %v6367
        %v6370 = vunpack.c.l.s4 1966171168
        %v6371 = vunpack.c.0.s8 %v6370
        %v6372 = vlaneseq
        %v6373 = vshrl.u32 %v6372, 7
        %v6374 = vsub.s32 %v6371, %v6373
        %v6375 = vrot.slane %v6353, %v6374
        %v6377 = vunpack.c.l.s4 1966171168
        %v6378 = vunpack.c.0.s8 %v6377
        %v6379 = vlaneseq
        %v6380 = vshrl.u32 %v6379, 7
        %v6381 = vsub.s32 %v6378, %v6380
        %v6382 = vrot.slane %v6354, %v6381
        %v6383 = vcombine.high %v6361, %v6361
        %v6384 = vcombine.high %v6368, %v6368
        %v6385 = vcombine.high %v6375, %v6375
        %v6386 = vcombine.high %v6382, %v6382
        %v6387 = vcombine.high %v6211, %v6211
        %v6389 = vunpack.c.l.s4 1966171168
        %v6390 = vunpack.c.0.s8 %v6389
        %v6391 = vlaneseq
        %v6392 = vshrl.u32 %v6391, 7
        %v6393 = vsub.s32 %v6390, %v6392
        %v6394 = vrot.slane %v6211, %v6393
        %v6396 = vunpack.c.l.s4 1966171168
        %v6397 = vunpack.c.0.s8 %v6396
        %v6398 = vlaneseq
        %v6399 = vshrl.u32 %v6398, 7
        %v6400 = vsub.s32 %v6397, %v6399
        %v6401 = vrot.slane %v6387, %v6400
        %v6402 = vcombine.high %v6394, %v6394
        %v6403 = vcombine.high %v6401, %v6401
        %v6405 = vunpack.c.l.s4 1966171168
        %v6406 = vunpack.c.0.s8 %v6405
        %v6407 = vlaneseq
        %v6408 = vshrl.u32 %v6407, 7
        %v6409 = vsub.s32 %v6406, %v6408
        %v6410 = vrot.slane %v6394, %v6409
        %v6412 = vunpack.c.l.s4 1966171168
        %v6413 = vunpack.c.0.s8 %v6412
        %v6414 = vlaneseq
        %v6415 = vshrl.u32 %v6414, 7
        %v6416 = vsub.s32 %v6413, %v6415
        %v6417 = vrot.slane %v6401, %v6416
        %v6419 = vunpack.c.l.s4 1966171168
        %v6420 = vunpack.c.0.s8 %v6419
        %v6421 = vlaneseq
        %v6422 = vshrl.u32 %v6421, 7
        %v6423 = vsub.s32 %v6420, %v6422
        %v6424 = vrot.slane %v6402, %v6423
        %v6426 = vunpack.c.l.s4 1966171168
        %v6427 = vunpack.c.0.s8 %v6426
        %v6428 = vlaneseq
        %v6429 = vshrl.u32 %v6428, 7
        %v6430 = vsub.s32 %v6427, %v6429
        %v6431 = vrot.slane %v6403, %v6430
        %v6432 = vcombine.high %v6410, %v6410
        %v6433 = vcombine.high %v6417, %v6417
        %v6434 = vcombine.high %v6424, %v6424
        %v6435 = vcombine.high %v6431, %v6431
        %v6436 = vcombine.high %v6212, %v6212
        %v6438 = vunpack.c.l.s4 1966171168
        %v6439 = vunpack.c.0.s8 %v6438
        %v6440 = vlaneseq
        %v6441 = vshrl.u32 %v6440, 7
        %v6442 = vsub.s32 %v6439, %v6441
        %v6443 = vrot.slane %v6212, %v6442
        %v6445 = vunpack.c.l.s4 1966171168
        %v6446 = vunpack.c.0.s8 %v6445
        %v6447 = vlaneseq
        %v6448 = vshrl.u32 %v6447, 7
        %v6449 = vsub.s32 %v6446, %v6448
        %v6450 = vrot.slane %v6436, %v6449
        %v6451 = vcombine.high %v6443, %v6443
        %v6452 = vcombine.high %v6450, %v6450
        %v6454 = vunpack.c.l.s4 1966171168
        %v6455 = vunpack.c.0.s8 %v6454
        %v6456 = vlaneseq
        %v6457 = vshrl.u32 %v6456, 7
        %v6458 = vsub.s32 %v6455, %v6457
        %v6459 = vrot.slane %v6443, %v6458
        %v6461 = vunpack.c.l.s4 1966171168
        %v6462 = vunpack.c.0.s8 %v6461
        %v6463 = vlaneseq
        %v6464 = vshrl.u32 %v6463, 7
        %v6465 = vsub.s32 %v6462, %v6464
        %v6466 = vrot.slane %v6450, %v6465
        %v6468 = vunpack.c.l.s4 1966171168
        %v6469 = vunpack.c.0.s8 %v6468
        %v6470 = vlaneseq
        %v6471 = vshrl.u32 %v6470, 7
        %v6472 = vsub.s32 %v6469, %v6471
        %v6473 = vrot.slane %v6451, %v6472
        %v6475 = vunpack.c.l.s4 1966171168
        %v6476 = vunpack.c.0.s8 %v6475
        %v6477 = vlaneseq
        %v6478 = vshrl.u32 %v6477, 7
        %v6479 = vsub.s32 %v6476, %v6478
        %v6480 = vrot.slane %v6452, %v6479
        %v6481 = vcombine.high %v6459, %v6459
        %v6482 = vcombine.high %v6466, %v6466
        %v6483 = vcombine.high %v6473, %v6473
        %v6484 = vcombine.high %v6480, %v6480
        %v6485 = vcombine.high %v6213, %v6213
        %v6487 = vunpack.c.l.s4 1966171168
        %v6488 = vunpack.c.0.s8 %v6487
        %v6489 = vlaneseq
        %v6490 = vshrl.u32 %v6489, 7
        %v6491 = vsub.s32 %v6488, %v6490
        %v6492 = vrot.slane %v6213, %v6491
        %v6494 = vunpack.c.l.s4 1966171168
        %v6495 = vunpack.c.0.s8 %v6494
        %v6496 = vlaneseq
        %v6497 = vshrl.u32 %v6496, 7
        %v6498 = vsub.s32 %v6495, %v6497
        %v6499 = vrot.slane %v6485, %v6498
        %v6500 = vcombine.high %v6492, %v6492
        %v6501 = vcombine.high %v6499, %v6499
        %v6503 = vunpack.c.l.s4 1966171168
        %v6504 = vunpack.c.0.s8 %v6503
        %v6505 = vlaneseq
        %v6506 = vshrl.u32 %v6505, 7
        %v6507 = vsub.s32 %v6504, %v6506
        %v6508 = vrot.slane %v6492, %v6507
        %v6510 = vunpack.c.l.s4 1966171168
        %v6511 = vunpack.c.0.s8 %v6510
        %v6512 = vlaneseq
        %v6513 = vshrl.u32 %v6512, 7
        %v6514 = vsub.s32 %v6511, %v6513
        %v6515 = vrot.slane %v6499, %v6514
        %v6517 = vunpack.c.l.s4 1966171168
        %v6518 = vunpack.c.0.s8 %v6517
        %v6519 = vlaneseq
        %v6520 = vshrl.u32 %v6519, 7
        %v6521 = vsub.s32 %v6518, %v6520
        %v6522 = vrot.slane %v6500, %v6521
        %v6524 = vunpack.c.l.s4 1966171168
        %v6525 = vunpack.c.0.s8 %v6524
        %v6526 = vlaneseq
        %v6527 = vshrl.u32 %v6526, 7
        %v6528 = vsub.s32 %v6525, %v6527
        %v6529 = vrot.slane %v6501, %v6528
        %v6530 = vcombine.high %v6508, %v6508
        %v6531 = vcombine.high %v6515, %v6515
        %v6532 = vcombine.high %v6522, %v6522
        %v6533 = vcombine.high %v6529, %v6529
        %v6534 = vcombine.high %v6214, %v6214
        %v6536 = vunpack.c.l.s4 1966171168
        %v6537 = vunpack.c.0.s8 %v6536
        %v6538 = vlaneseq
        %v6539 = vshrl.u32 %v6538, 7
        %v6540 = vsub.s32 %v6537, %v6539
        %v6541 = vrot.slane %v6214, %v6540
        %v6543 = vunpack.c.l.s4 1966171168
        %v6544 = vunpack.c.0.s8 %v6543
        %v6545 = vlaneseq
        %v6546 = vshrl.u32 %v6545, 7
        %v6547 = vsub.s32 %v6544, %v6546
        %v6548 = vrot.slane %v6534, %v6547
        %v6549 = vcombine.high %v6541, %v6541
        %v6550 = vcombine.high %v6548, %v6548
        %v6552 = vunpack.c.l.s4 1966171168
        %v6553 = vunpack.c.0.s8 %v6552
        %v6554 = vlaneseq
        %v6555 = vshrl.u32 %v6554, 7
        %v6556 = vsub.s32 %v6553, %v6555
        %v6557 = vrot.slane %v6541, %v6556
        %v6559 = vunpack.c.l.s4 1966171168
        %v6560 = vunpack.c.0.s8 %v6559
        %v6561 = vlaneseq
        %v6562 = vshrl.u32 %v6561, 7
        %v6563 = vsub.s32 %v6560, %v6562
        %v6564 = vrot.slane %v6548, %v6563
        %v6566 = vunpack.c.l.s4 1966171168
        %v6567 = vunpack.c.0.s8 %v6566
        %v6568 = vlaneseq
        %v6569 = vshrl.u32 %v6568, 7
        %v6570 = vsub.s32 %v6567, %v6569
        %v6571 = vrot.slane %v6549, %v6570
        %v6573 = vunpack.c.l.s4 1966171168
        %v6574 = vunpack.c.0.s8 %v6573
        %v6575 = vlaneseq
        %v6576 = vshrl.u32 %v6575, 7
        %v6577 = vsub.s32 %v6574, %v6576
        %v6578 = vrot.slane %v6550, %v6577
        %v6579 = vcombine.high %v6557, %v6557
        %v6580 = vcombine.high %v6564, %v6564
        %v6581 = vcombine.high %v6571, %v6571
        %v6582 = vcombine.high %v6578, %v6578
        %v6583 = vcombine.high %v6215, %v6215
        %v6585 = vunpack.c.l.s4 1966171168
        %v6586 = vunpack.c.0.s8 %v6585
        %v6587 = vlaneseq
        %v6588 = vshrl.u32 %v6587, 7
        %v6589 = vsub.s32 %v6586, %v6588
        %v6590 = vrot.slane %v6215, %v6589
        %v6592 = vunpack.c.l.s4 1966171168
        %v6593 = vunpack.c.0.s8 %v6592
        %v6594 = vlaneseq
        %v6595 = vshrl.u32 %v6594, 7
        %v6596 = vsub.s32 %v6593, %v6595
        %v6597 = vrot.slane %v6583, %v6596
        %v6598 = vcombine.high %v6590, %v6590
        %v6599 = vcombine.high %v6597, %v6597
        %v6601 = vunpack.c.l.s4 1966171168
        %v6602 = vunpack.c.0.s8 %v6601
        %v6603 = vlaneseq
        %v6604 = vshrl.u32 %v6603, 7
        %v6605 = vsub.s32 %v6602, %v6604
        %v6606 = vrot.slane %v6590, %v6605
        %v6608 = vunpack.c.l.s4 1966171168
        %v6609 = vunpack.c.0.s8 %v6608
        %v6610 = vlaneseq
        %v6611 = vshrl.u32 %v6610, 7
        %v6612 = vsub.s32 %v6609, %v6611
        %v6613 = vrot.slane %v6597, %v6612
        %v6615 = vunpack.c.l.s4 1966171168
        %v6616 = vunpack.c.0.s8 %v6615
        %v6617 = vlaneseq
        %v6618 = vshrl.u32 %v6617, 7
        %v6619 = vsub.s32 %v6616, %v6618
        %v6620 = vrot.slane %v6598, %v6619
        %v6622 = vunpack.c.l.s4 1966171168
        %v6623 = vunpack.c.0.s8 %v6622
        %v6624 = vlaneseq
        %v6625 = vshrl.u32 %v6624, 7
        %v6626 = vsub.s32 %v6623, %v6625
        %v6627 = vrot.slane %v6599, %v6626
        %v6628 = vcombine.high %v6606, %v6606
        %v6629 = vcombine.high %v6613, %v6613
        %v6630 = vcombine.high %v6620, %v6620
        %v6631 = vcombine.high %v6627, %v6627
        %v6632 = vcombine.high %v6216, %v6216
        %v6634 = vunpack.c.l.s4 1966171168
        %v6635 = vunpack.c.0.s8 %v6634
        %v6636 = vlaneseq
        %v6637 = vshrl.u32 %v6636, 7
        %v6638 = vsub.s32 %v6635, %v6637
        %v6639 = vrot.slane %v6216, %v6638
        %v6641 = vunpack.c.l.s4 1966171168
        %v6642 = vunpack.c.0.s8 %v6641
        %v6643 = vlaneseq
        %v6644 = vshrl.u32 %v6643, 7
        %v6645 = vsub.s32 %v6642, %v6644
        %v6646 = vrot.slane %v6632, %v6645
        %v6647 = vcombine.high %v6639, %v6639
        %v6648 = vcombine.high %v6646, %v6646
        %v6650 = vunpack.c.l.s4 1966171168
        %v6651 = vunpack.c.0.s8 %v6650
        %v6652 = vlaneseq
        %v6653 = vshrl.u32 %v6652, 7
        %v6654 = vsub.s32 %v6651, %v6653
        %v6655 = vrot.slane %v6639, %v6654
        %v6657 = vunpack.c.l.s4 1966171168
        %v6658 = vunpack.c.0.s8 %v6657
        %v6659 = vlaneseq
        %v6660 = vshrl.u32 %v6659, 7
        %v6661 = vsub.s32 %v6658, %v6660
        %v6662 = vrot.slane %v6646, %v6661
        %v6664 = vunpack.c.l.s4 1966171168
        %v6665 = vunpack.c.0.s8 %v6664
        %v6666 = vlaneseq
        %v6667 = vshrl.u32 %v6666, 7
        %v6668 = vsub.s32 %v6665, %v6667
        %v6669 = vrot.slane %v6647, %v6668
        %v6671 = vunpack.c.l.s4 1966171168
        %v6672 = vunpack.c.0.s8 %v6671
        %v6673 = vlaneseq
        %v6674 = vshrl.u32 %v6673, 7
        %v6675 = vsub.s32 %v6672, %v6674
        %v6676 = vrot.slane %v6648, %v6675
        %v6677 = vcombine.high %v6655, %v6655
        %v6678 = vcombine.high %v6662, %v6662
        %v6679 = vcombine.high %v6669, %v6669
        %v6680 = vcombine.high %v6676, %v6676
        %v6681 = vcombine.high %v6217, %v6217
        %v6683 = vunpack.c.l.s4 1966171168
        %v6684 = vunpack.c.0.s8 %v6683
        %v6685 = vlaneseq
        %v6686 = vshrl.u32 %v6685, 7
        %v6687 = vsub.s32 %v6684, %v6686
        %v6688 = vrot.slane %v6217, %v6687
        %v6690 = vunpack.c.l.s4 1966171168
        %v6691 = vunpack.c.0.s8 %v6690
        %v6692 = vlaneseq
        %v6693 = vshrl.u32 %v6692, 7
        %v6694 = vsub.s32 %v6691, %v6693
        %v6695 = vrot.slane %v6681, %v6694
        %v6696 = vcombine.high %v6688, %v6688
        %v6697 = vcombine.high %v6695, %v6695
        %v6699 = vunpack.c.l.s4 1966171168
        %v6700 = vunpack.c.0.s8 %v6699
        %v6701 = vlaneseq
        %v6702 = vshrl.u32 %v6701, 7
        %v6703 = vsub.s32 %v6700, %v6702
        %v6704 = vrot.slane %v6688, %v6703
        %v6706 = vunpack.c.l.s4 1966171168
        %v6707 = vunpack.c.0.s8 %v6706
        %v6708 = vlaneseq
        %v6709 = vshrl.u32 %v6708, 7
        %v6710 = vsub.s32 %v6707, %v6709
        %v6711 = vrot.slane %v6695, %v6710
        %v6713 = vunpack.c.l.s4 1966171168
        %v6714 = vunpack.c.0.s8 %v6713
        %v6715 = vlaneseq
        %v6716 = vshrl.u32 %v6715, 7
        %v6717 = vsub.s32 %v6714, %v6716
        %v6718 = vrot.slane %v6696, %v6717
        %v6720 = vunpack.c.l.s4 1966171168
        %v6721 = vunpack.c.0.s8 %v6720
        %v6722 = vlaneseq
        %v6723 = vshrl.u32 %v6722, 7
        %v6724 = vsub.s32 %v6721, %v6723
        %v6725 = vrot.slane %v6697, %v6724
        %v6726 = vcombine.high %v6704, %v6704
        %v6727 = vcombine.high %v6711, %v6711
        %v6728 = vcombine.high %v6718, %v6718
        %v6729 = vcombine.high %v6725, %v6725
        %v6730 = vcombine.high %v6218, %v6218
        %v6732 = vunpack.c.l.s4 1966171168
        %v6733 = vunpack.c.0.s8 %v6732
        %v6734 = vlaneseq
        %v6735 = vshrl.u32 %v6734, 7
        %v6736 = vsub.s32 %v6733, %v6735
        %v6737 = vrot.slane %v6218, %v6736
        %v6739 = vunpack.c.l.s4 1966171168
        %v6740 = vunpack.c.0.s8 %v6739
        %v6741 = vlaneseq
        %v6742 = vshrl.u32 %v6741, 7
        %v6743 = vsub.s32 %v6740, %v6742
        %v6744 = vrot.slane %v6730, %v6743
        %v6745 = vcombine.high %v6737, %v6737
        %v6746 = vcombine.high %v6744, %v6744
        %v6748 = vunpack.c.l.s4 1966171168
        %v6749 = vunpack.c.0.s8 %v6748
        %v6750 = vlaneseq
        %v6751 = vshrl.u32 %v6750, 7
        %v6752 = vsub.s32 %v6749, %v6751
        %v6753 = vrot.slane %v6737, %v6752
        %v6755 = vunpack.c.l.s4 1966171168
        %v6756 = vunpack.c.0.s8 %v6755
        %v6757 = vlaneseq
        %v6758 = vshrl.u32 %v6757, 7
        %v6759 = vsub.s32 %v6756, %v6758
        %v6760 = vrot.slane %v6744, %v6759
        %v6762 = vunpack.c.l.s4 1966171168
        %v6763 = vunpack.c.0.s8 %v6762
        %v6764 = vlaneseq
        %v6765 = vshrl.u32 %v6764, 7
        %v6766 = vsub.s32 %v6763, %v6765
        %v6767 = vrot.slane %v6745, %v6766
        %v6769 = vunpack.c.l.s4 1966171168
        %v6770 = vunpack.c.0.s8 %v6769
        %v6771 = vlaneseq
        %v6772 = vshrl.u32 %v6771, 7
        %v6773 = vsub.s32 %v6770, %v6772
        %v6774 = vrot.slane %v6746, %v6773
        %v6775 = vcombine.high %v6753, %v6753
        %v6776 = vcombine.high %v6760, %v6760
        %v6777 = vcombine.high %v6767, %v6767
        %v6778 = vcombine.high %v6774, %v6774
        %v6779 = vcombine.high %v6219, %v6219
        %v6781 = vunpack.c.l.s4 1966171168
        %v6782 = vunpack.c.0.s8 %v6781
        %v6783 = vlaneseq
        %v6784 = vshrl.u32 %v6783, 7
        %v6785 = vsub.s32 %v6782, %v6784
        %v6786 = vrot.slane %v6219, %v6785
        %v6788 = vunpack.c.l.s4 1966171168
        %v6789 = vunpack.c.0.s8 %v6788
        %v6790 = vlaneseq
        %v6791 = vshrl.u32 %v6790, 7
        %v6792 = vsub.s32 %v6789, %v6791
        %v6793 = vrot.slane %v6779, %v6792
        %v6794 = vcombine.high %v6786, %v6786
        %v6795 = vcombine.high %v6793, %v6793
        %v6797 = vunpack.c.l.s4 1966171168
        %v6798 = vunpack.c.0.s8 %v6797
        %v6799 = vlaneseq
        %v6800 = vshrl.u32 %v6799, 7
        %v6801 = vsub.s32 %v6798, %v6800
        %v6802 = vrot.slane %v6786, %v6801
        %v6804 = vunpack.c.l.s4 1966171168
        %v6805 = vunpack.c.0.s8 %v6804
        %v6806 = vlaneseq
        %v6807 = vshrl.u32 %v6806, 7
        %v6808 = vsub.s32 %v6805, %v6807
        %v6809 = vrot.slane %v6793, %v6808
        %v6811 = vunpack.c.l.s4 1966171168
        %v6812 = vunpack.c.0.s8 %v6811
        %v6813 = vlaneseq
        %v6814 = vshrl.u32 %v6813, 7
        %v6815 = vsub.s32 %v6812, %v6814
        %v6816 = vrot.slane %v6794, %v6815
        %v6818 = vunpack.c.l.s4 1966171168
        %v6819 = vunpack.c.0.s8 %v6818
        %v6820 = vlaneseq
        %v6821 = vshrl.u32 %v6820, 7
        %v6822 = vsub.s32 %v6819, %v6821
        %v6823 = vrot.slane %v6795, %v6822
        %v6824 = vcombine.high %v6802, %v6802
        %v6825 = vcombine.high %v6809, %v6809
        %v6826 = vcombine.high %v6816, %v6816
        %v6827 = vcombine.high %v6823, %v6823
        %v6828 = vcombine.high %v6220, %v6220
        %v6830 = vunpack.c.l.s4 1966171168
        %v6831 = vunpack.c.0.s8 %v6830
        %v6832 = vlaneseq
        %v6833 = vshrl.u32 %v6832, 7
        %v6834 = vsub.s32 %v6831, %v6833
        %v6835 = vrot.slane %v6220, %v6834
        %v6837 = vunpack.c.l.s4 1966171168
        %v6838 = vunpack.c.0.s8 %v6837
        %v6839 = vlaneseq
        %v6840 = vshrl.u32 %v6839, 7
        %v6841 = vsub.s32 %v6838, %v6840
        %v6842 = vrot.slane %v6828, %v6841
        %v6843 = vcombine.high %v6835, %v6835
        %v6844 = vcombine.high %v6842, %v6842
        %v6846 = vunpack.c.l.s4 1966171168
        %v6847 = vunpack.c.0.s8 %v6846
        %v6848 = vlaneseq
        %v6849 = vshrl.u32 %v6848, 7
        %v6850 = vsub.s32 %v6847, %v6849
        %v6851 = vrot.slane %v6835, %v6850
        %v6853 = vunpack.c.l.s4 1966171168
        %v6854 = vunpack.c.0.s8 %v6853
        %v6855 = vlaneseq
        %v6856 = vshrl.u32 %v6855, 7
        %v6857 = vsub.s32 %v6854, %v6856
        %v6858 = vrot.slane %v6842, %v6857
        %v6860 = vunpack.c.l.s4 1966171168
        %v6861 = vunpack.c.0.s8 %v6860
        %v6862 = vlaneseq
        %v6863 = vshrl.u32 %v6862, 7
        %v6864 = vsub.s32 %v6861, %v6863
        %v6865 = vrot.slane %v6843, %v6864
        %v6867 = vunpack.c.l.s4 1966171168
        %v6868 = vunpack.c.0.s8 %v6867
        %v6869 = vlaneseq
        %v6870 = vshrl.u32 %v6869, 7
        %v6871 = vsub.s32 %v6868, %v6870
        %v6872 = vrot.slane %v6844, %v6871
        %v6873 = vcombine.high %v6851, %v6851
        %v6874 = vcombine.high %v6858, %v6858
        %v6875 = vcombine.high %v6865, %v6865
        %v6876 = vcombine.high %v6872, %v6872
        %v6877 = vcombine.high %v6221, %v6221
        %v6879 = vunpack.c.l.s4 1966171168
        %v6880 = vunpack.c.0.s8 %v6879
        %v6881 = vlaneseq
        %v6882 = vshrl.u32 %v6881, 7
        %v6883 = vsub.s32 %v6880, %v6882
        %v6884 = vrot.slane %v6221, %v6883
        %v6886 = vunpack.c.l.s4 1966171168
        %v6887 = vunpack.c.0.s8 %v6886
        %v6888 = vlaneseq
        %v6889 = vshrl.u32 %v6888, 7
        %v6890 = vsub.s32 %v6887, %v6889
        %v6891 = vrot.slane %v6877, %v6890
        %v6892 = vcombine.high %v6884, %v6884
        %v6893 = vcombine.high %v6891, %v6891
        %v6895 = vunpack.c.l.s4 1966171168
        %v6896 = vunpack.c.0.s8 %v6895
        %v6897 = vlaneseq
        %v6898 = vshrl.u32 %v6897, 7
        %v6899 = vsub.s32 %v6896, %v6898
        %v6900 = vrot.slane %v6884, %v6899
        %v6902 = vunpack.c.l.s4 1966171168
        %v6903 = vunpack.c.0.s8 %v6902
        %v6904 = vlaneseq
        %v6905 = vshrl.u32 %v6904, 7
        %v6906 = vsub.s32 %v6903, %v6905
        %v6907 = vrot.slane %v6891, %v6906
        %v6909 = vunpack.c.l.s4 1966171168
        %v6910 = vunpack.c.0.s8 %v6909
        %v6911 = vlaneseq
        %v6912 = vshrl.u32 %v6911, 7
        %v6913 = vsub.s32 %v6910, %v6912
        %v6914 = vrot.slane %v6892, %v6913
        %v6916 = vunpack.c.l.s4 1966171168
        %v6917 = vunpack.c.0.s8 %v6916
        %v6918 = vlaneseq
        %v6919 = vshrl.u32 %v6918, 7
        %v6920 = vsub.s32 %v6917, %v6919
        %v6921 = vrot.slane %v6893, %v6920
        %v6922 = vcombine.high %v6900, %v6900
        %v6923 = vcombine.high %v6907, %v6907
        %v6924 = vcombine.high %v6914, %v6914
        %v6925 = vcombine.high %v6921, %v6921
        %v6926 = vcombine.high %v6222, %v6222
        %v6928 = vunpack.c.l.s4 1966171168
        %v6929 = vunpack.c.0.s8 %v6928
        %v6930 = vlaneseq
        %v6931 = vshrl.u32 %v6930, 7
        %v6932 = vsub.s32 %v6929, %v6931
        %v6933 = vrot.slane %v6222, %v6932
        %v6935 = vunpack.c.l.s4 1966171168
        %v6936 = vunpack.c.0.s8 %v6935
        %v6937 = vlaneseq
        %v6938 = vshrl.u32 %v6937, 7
        %v6939 = vsub.s32 %v6936, %v6938
        %v6940 = vrot.slane %v6926, %v6939
        %v6941 = vcombine.high %v6933, %v6933
        %v6942 = vcombine.high %v6940, %v6940
        %v6944 = vunpack.c.l.s4 1966171168
        %v6945 = vunpack.c.0.s8 %v6944
        %v6946 = vlaneseq
        %v6947 = vshrl.u32 %v6946, 7
        %v6948 = vsub.s32 %v6945, %v6947
        %v6949 = vrot.slane %v6933, %v6948
        %v6951 = vunpack.c.l.s4 1966171168
        %v6952 = vunpack.c.0.s8 %v6951
        %v6953 = vlaneseq
        %v6954 = vshrl.u32 %v6953, 7
        %v6955 = vsub.s32 %v6952, %v6954
        %v6956 = vrot.slane %v6940, %v6955
        %v6958 = vunpack.c.l.s4 1966171168
        %v6959 = vunpack.c.0.s8 %v6958
        %v6960 = vlaneseq
        %v6961 = vshrl.u32 %v6960, 7
        %v6962 = vsub.s32 %v6959, %v6961
        %v6963 = vrot.slane %v6941, %v6962
        %v6965 = vunpack.c.l.s4 1966171168
        %v6966 = vunpack.c.0.s8 %v6965
        %v6967 = vlaneseq
        %v6968 = vshrl.u32 %v6967, 7
        %v6969 = vsub.s32 %v6966, %v6968
        %v6970 = vrot.slane %v6942, %v6969
        %v6971 = vcombine.high %v6949, %v6949
        %v6972 = vcombine.high %v6956, %v6956
        %v6973 = vcombine.high %v6963, %v6963
        %v6974 = vcombine.high %v6970, %v6970
        %v6975 = vcombine.high %v6223, %v6223
        %v6977 = vunpack.c.l.s4 1966171168
        %v6978 = vunpack.c.0.s8 %v6977
        %v6979 = vlaneseq
        %v6980 = vshrl.u32 %v6979, 7
        %v6981 = vsub.s32 %v6978, %v6980
        %v6982 = vrot.slane %v6223, %v6981
        %v6984 = vunpack.c.l.s4 1966171168
        %v6985 = vunpack.c.0.s8 %v6984
        %v6986 = vlaneseq
        %v6987 = vshrl.u32 %v6986, 7
        %v6988 = vsub.s32 %v6985, %v6987
        %v6989 = vrot.slane %v6975, %v6988
        %v6990 = vcombine.high %v6982, %v6982
        %v6991 = vcombine.high %v6989, %v6989
        %v6993 = vunpack.c.l.s4 1966171168
        %v6994 = vunpack.c.0.s8 %v6993
        %v6995 = vlaneseq
        %v6996 = vshrl.u32 %v6995, 7
        %v6997 = vsub.s32 %v6994, %v6996
        %v6998 = vrot.slane %v6982, %v6997
        %v7000 = vunpack.c.l.s4 1966171168
        %v7001 = vunpack.c.0.s8 %v7000
        %v7002 = vlaneseq
        %v7003 = vshrl.u32 %v7002, 7
        %v7004 = vsub.s32 %v7001, %v7003
        %v7005 = vrot.slane %v6989, %v7004
        %v7007 = vunpack.c.l.s4 1966171168
        %v7008 = vunpack.c.0.s8 %v7007
        %v7009 = vlaneseq
        %v7010 = vshrl.u32 %v7009, 7
        %v7011 = vsub.s32 %v7008, %v7010
        %v7012 = vrot.slane %v6990, %v7011
        %v7014 = vunpack.c.l.s4 1966171168
        %v7015 = vunpack.c.0.s8 %v7014
        %v7016 = vlaneseq
        %v7017 = vshrl.u32 %v7016, 7
        %v7018 = vsub.s32 %v7015, %v7017
        %v7019 = vrot.slane %v6991, %v7018
        %v7020 = vcombine.high %v6998, %v6998
        %v7021 = vcombine.high %v7005, %v7005
        %v7022 = vcombine.high %v7012, %v7012
        %v7023 = vcombine.high %v7019, %v7019
        %7152 = vst [vmem:[%s145 + $0x2] sm:$0x1] %v6263
        %7153 = vst [vmem:[%s145 + $0xa] sm:$0x1] %v6277
        %7154 = vst [vmem:[%s145 + $0x12] sm:$0x1] %v6285
        %7155 = vst [vmem:[%s145 + $0x1a] sm:$0x1] %v6287
        %7156 = vst [vmem:[%s145 + $0x22] sm:$0x1] %v6270
        %7157 = vst [vmem:[%s145 + $0x2a] sm:$0x1] %v6284
        %7158 = vst [vmem:[%s145 + $0x32] sm:$0x1] %v6286
        %7159 = vst [vmem:[%s145 + $0x3a] sm:$0x1] %v6288
        %7160 = vst [vmem:[%s145 + $0x42] sm:$0x1] %v6312
        %7161 = vst [vmem:[%s145 + $0x4a] sm:$0x1] %v6326
        %7162 = vst [vmem:[%s145 + $0x52] sm:$0x1] %v6334
        %7163 = vst [vmem:[%s145 + $0x5a] sm:$0x1] %v6336
        %7164 = vst [vmem:[%s145 + $0x62] sm:$0x1] %v6319
        %7165 = vst [vmem:[%s145 + $0x6a] sm:$0x1] %v6333
        %7166 = vst [vmem:[%s145 + $0x72] sm:$0x1] %v6335
        %7167 = vst [vmem:[%s145 + $0x7a] sm:$0x1] %v6337
        %7168 = vst [vmem:[%s145 + $0x82] sm:$0x1] %v6361
        %7169 = vst [vmem:[%s145 + $0x8a] sm:$0x1] %v6375
        %7170 = vst [vmem:[%s145 + $0x92] sm:$0x1] %v6383
        %7171 = vst [vmem:[%s145 + $0x9a] sm:$0x1] %v6385
        %7172 = vst [vmem:[%s145 + $0xa2] sm:$0x1] %v6368
        %7173 = vst [vmem:[%s145 + $0xaa] sm:$0x1] %v6382
        %7174 = vst [vmem:[%s145 + $0xb2] sm:$0x1] %v6384
        %7175 = vst [vmem:[%s145 + $0xba] sm:$0x1] %v6386
        %7176 = vst [vmem:[%s145 + $0xc2] sm:$0x1] %v6410
        %7177 = vst [vmem:[%s145 + $0xca] sm:$0x1] %v6424
        %7178 = vst [vmem:[%s145 + $0xd2] sm:$0x1] %v6432
        %7179 = vst [vmem:[%s145 + $0xda] sm:$0x1] %v6434
        %7180 = vst [vmem:[%s145 + $0xe2] sm:$0x1] %v6417
        %7181 = vst [vmem:[%s145 + $0xea] sm:$0x1] %v6431
        %7182 = vst [vmem:[%s145 + $0xf2] sm:$0x1] %v6433
        %7183 = vst [vmem:[%s145 + $0xfa] sm:$0x1] %v6435
        %7184 = vst [vmem:[%s145 + $0x102] sm:$0x1] %v6459
        %7185 = vst [vmem:[%s145 + $0x10a] sm:$0x1] %v6473
        %7186 = vst [vmem:[%s145 + $0x112] sm:$0x1] %v6481
        %7187 = vst [vmem:[%s145 + $0x11a] sm:$0x1] %v6483
        %7188 = vst [vmem:[%s145 + $0x122] sm:$0x1] %v6466
        %7189 = vst [vmem:[%s145 + $0x12a] sm:$0x1] %v6480
        %7190 = vst [vmem:[%s145 + $0x132] sm:$0x1] %v6482
        %7191 = vst [vmem:[%s145 + $0x13a] sm:$0x1] %v6484
        %7192 = vst [vmem:[%s145 + $0x142] sm:$0x1] %v6508
        %7193 = vst [vmem:[%s145 + $0x14a] sm:$0x1] %v6522
        %7194 = vst [vmem:[%s145 + $0x152] sm:$0x1] %v6530
        %7195 = vst [vmem:[%s145 + $0x15a] sm:$0x1] %v6532
        %7196 = vst [vmem:[%s145 + $0x162] sm:$0x1] %v6515
        %7197 = vst [vmem:[%s145 + $0x16a] sm:$0x1] %v6529
        %7198 = vst [vmem:[%s145 + $0x172] sm:$0x1] %v6531
        %7199 = vst [vmem:[%s145 + $0x17a] sm:$0x1] %v6533
        %7200 = vst [vmem:[%s145 + $0x182] sm:$0x1] %v6557
        %7201 = vst [vmem:[%s145 + $0x18a] sm:$0x1] %v6571
        %7202 = vst [vmem:[%s145 + $0x192] sm:$0x1] %v6579
        %7203 = vst [vmem:[%s145 + $0x19a] sm:$0x1] %v6581
        %7204 = vst [vmem:[%s145 + $0x1a2] sm:$0x1] %v6564
        %7205 = vst [vmem:[%s145 + $0x1aa] sm:$0x1] %v6578
        %7206 = vst [vmem:[%s145 + $0x1b2] sm:$0x1] %v6580
        %7207 = vst [vmem:[%s145 + $0x1ba] sm:$0x1] %v6582
        %7208 = vst [vmem:[%s145 + $0x1c2] sm:$0x1] %v6606
        %7209 = vst [vmem:[%s145 + $0x1ca] sm:$0x1] %v6620
        %7210 = vst [vmem:[%s145 + $0x1d2] sm:$0x1] %v6628
        %7211 = vst [vmem:[%s145 + $0x1da] sm:$0x1] %v6630
        %7212 = vst [vmem:[%s145 + $0x1e2] sm:$0x1] %v6613
        %7213 = vst [vmem:[%s145 + $0x1ea] sm:$0x1] %v6627
        %7214 = vst [vmem:[%s145 + $0x1f2] sm:$0x1] %v6629
        %7215 = vst [vmem:[%s145 + $0x1fa] sm:$0x1] %v6631
        %7216 = vst [vmem:[%s145 + $0x202] sm:$0x1] %v6655
        %7217 = vst [vmem:[%s145 + $0x20a] sm:$0x1] %v6669
        %7218 = vst [vmem:[%s145 + $0x212] sm:$0x1] %v6677
        %7219 = vst [vmem:[%s145 + $0x21a] sm:$0x1] %v6679
        %7220 = vst [vmem:[%s145 + $0x222] sm:$0x1] %v6662
        %7221 = vst [vmem:[%s145 + $0x22a] sm:$0x1] %v6676
        %7222 = vst [vmem:[%s145 + $0x232] sm:$0x1] %v6678
        %7223 = vst [vmem:[%s145 + $0x23a] sm:$0x1] %v6680
        %7224 = vst [vmem:[%s145 + $0x242] sm:$0x1] %v6704
        %7225 = vst [vmem:[%s145 + $0x24a] sm:$0x1] %v6718
        %7226 = vst [vmem:[%s145 + $0x252] sm:$0x1] %v6726
        %7227 = vst [vmem:[%s145 + $0x25a] sm:$0x1] %v6728
        %7228 = vst [vmem:[%s145 + $0x262] sm:$0x1] %v6711
        %7229 = vst [vmem:[%s145 + $0x26a] sm:$0x1] %v6725
        %7230 = vst [vmem:[%s145 + $0x272] sm:$0x1] %v6727
        %7231 = vst [vmem:[%s145 + $0x27a] sm:$0x1] %v6729
        %7232 = vst [vmem:[%s145 + $0x282] sm:$0x1] %v6753
        %7233 = vst [vmem:[%s145 + $0x28a] sm:$0x1] %v6767
        %7234 = vst [vmem:[%s145 + $0x292] sm:$0x1] %v6775
        %7235 = vst [vmem:[%s145 + $0x29a] sm:$0x1] %v6777
        %7236 = vst [vmem:[%s145 + $0x2a2] sm:$0x1] %v6760
        %7237 = vst [vmem:[%s145 + $0x2aa] sm:$0x1] %v6774
        %7238 = vst [vmem:[%s145 + $0x2b2] sm:$0x1] %v6776
        %7239 = vst [vmem:[%s145 + $0x2ba] sm:$0x1] %v6778
        %7240 = vst [vmem:[%s145 + $0x2c2] sm:$0x1] %v6802
        %7241 = vst [vmem:[%s145 + $0x2ca] sm:$0x1] %v6816
        %7242 = vst [vmem:[%s145 + $0x2d2] sm:$0x1] %v6824
        %7243 = vst [vmem:[%s145 + $0x2da] sm:$0x1] %v6826
        %7244 = vst [vmem:[%s145 + $0x2e2] sm:$0x1] %v6809
        %7245 = vst [vmem:[%s145 + $0x2ea] sm:$0x1] %v6823
        %7246 = vst [vmem:[%s145 + $0x2f2] sm:$0x1] %v6825
        %7247 = vst [vmem:[%s145 + $0x2fa] sm:$0x1] %v6827
        %7248 = vst [vmem:[%s145 + $0x302] sm:$0x1] %v6851
        %7249 = vst [vmem:[%s145 + $0x30a] sm:$0x1] %v6865
        %7250 = vst [vmem:[%s145 + $0x312] sm:$0x1] %v6873
        %7251 = vst [vmem:[%s145 + $0x31a] sm:$0x1] %v6875
        %7252 = vst [vmem:[%s145 + $0x322] sm:$0x1] %v6858
        %7253 = vst [vmem:[%s145 + $0x32a] sm:$0x1] %v6872
        %7254 = vst [vmem:[%s145 + $0x332] sm:$0x1] %v6874
        %7255 = vst [vmem:[%s145 + $0x33a] sm:$0x1] %v6876
        %7256 = vst [vmem:[%s145 + $0x342] sm:$0x1] %v6900
        %7257 = vst [vmem:[%s145 + $0x34a] sm:$0x1] %v6914
        %7258 = vst [vmem:[%s145 + $0x352] sm:$0x1] %v6922
        %7259 = vst [vmem:[%s145 + $0x35a] sm:$0x1] %v6924
        %7260 = vst [vmem:[%s145 + $0x362] sm:$0x1] %v6907
        %7261 = vst [vmem:[%s145 + $0x36a] sm:$0x1] %v6921
        %7262 = vst [vmem:[%s145 + $0x372] sm:$0x1] %v6923
        %7263 = vst [vmem:[%s145 + $0x37a] sm:$0x1] %v6925
        %7264 = vst [vmem:[%s145 + $0x382] sm:$0x1] %v6949
        %7265 = vst [vmem:[%s145 + $0x38a] sm:$0x1] %v6963
        %7266 = vst [vmem:[%s145 + $0x392] sm:$0x1] %v6971
        %7267 = vst [vmem:[%s145 + $0x39a] sm:$0x1] %v6973
        %7268 = vst [vmem:[%s145 + $0x3a2] sm:$0x1] %v6956
        %7269 = vst [vmem:[%s145 + $0x3aa] sm:$0x1] %v6970
        %7270 = vst [vmem:[%s145 + $0x3b2] sm:$0x1] %v6972
        %7271 = vst [vmem:[%s145 + $0x3ba] sm:$0x1] %v6974
        %7272 = vst [vmem:[%s145 + $0x3c2] sm:$0x1] %v6998
        %7273 = vst [vmem:[%s145 + $0x3ca] sm:$0x1] %v7012
        %7274 = vst [vmem:[%s145 + $0x3d2] sm:$0x1] %v7020
        %7275 = vst [vmem:[%s145 + $0x3da] sm:$0x1] %v7022
        %7276 = vst [vmem:[%s145 + $0x3e2] sm:$0x1] %v7005
        %7277 = vst [vmem:[%s145 + $0x3ea] sm:$0x1] %v7019
        %7278 = vst [vmem:[%s145 + $0x3f2] sm:$0x1] %v7021
        %7279 = vst [vmem:[%s145 + $0x3fa] sm:$0x1] %v7023
        %7280 = vmatprep.subr.mxu0 0.0
        %7281 = vmatpush1.msra.mxu0 0.0
        %7282 = vmatprep.subr.mxu0 0.0
        %7283 = vmatpush1.msra.mxu0 0.0
        %7284 = vmatprep.subr.mxu0 0.0
        %7285 = vmatpush1.msra.mxu0 0.0
        %7286 = vmatprep.subr.mxu0 0.0
        %7287 = vmatpush1.msra.mxu0 0.0
        %7288 = vmatprep.subr.mxu0 0.0
        %7289 = vmatpush1.msra.mxu0 0.0
        %7290 = vmatprep.subr.mxu0 0.0
        %7291 = vmatpush1.msra.mxu0 0.0
        %7292 = vmatprep.subr.mxu0 0.0
        %7293 = vmatpush1.msra.mxu0 0.0
        %7294 = vmatprep.subr.mxu0 0.0
        %7295 = vmatpush1.msra.mxu0 0.0
        %7296 = vmatprep.subr.mxu0 0.0
        %7297 = vmatpush1.msra.mxu0 %v181
        %7298 = vmatprep.subr.mxu0 0.0
        %7299 = vmatpush1.msra.mxu0 %v180
        %7300 = vmatprep.subr.mxu0 0.0
        %7301 = vmatpush1.msra.mxu0 %v179
        %7302 = vmatprep.subr.mxu0 0.0
        %7303 = vmatpush1.msra.mxu0 %v178
        %7304 = vmatprep.subr.mxu0 0.0
        %7305 = vmatpush1.msra.mxu0 %v177
        %7306 = vmatprep.subr.mxu0 0.0
        %7307 = vmatpush1.msra.mxu0 %v176
        %7308 = vmatprep.subr.mxu0 0.0
        %7309 = vmatpush1.msra.mxu0 %v175
        %7310 = vmatprep.subr.mxu0 0.0
        %7311 = vmatpush1.msra.mxu0 %v174
        %7312 = vmatprep.subr.mxu0 0.0
        %7313 = vmatpush2.msra.mxu0 0.0
        %7314 = vmatprep.subr.mxu0 0.0
        %7315 = vmatpush2.msra.mxu0 0.0
        %7316 = vmatprep.subr.mxu0 0.0
        %7317 = vmatpush2.msra.mxu0 0.0
        %7318 = vmatprep.subr.mxu0 0.0
        %7319 = vmatpush2.msra.mxu0 0.0
        %7320 = vmatprep.subr.mxu0 0.0
        %7321 = vmatpush2.msra.mxu0 0.0
        %7322 = vmatprep.subr.mxu0 0.0
        %7323 = vmatpush2.msra.mxu0 0.0
        %7324 = vmatprep.subr.mxu0 0.0
        %7325 = vmatpush2.msra.mxu0 0.0
        %7326 = vmatprep.subr.mxu0 0.0
        %7327 = vmatpush2.msra.mxu0 0.0
        %7328 = vmatprep.subr.mxu0 0.0
        %7329 = vmatpush2.msra.mxu0 0.0
        %7330 = vmatprep.subr.mxu0 0.0
        %7331 = vmatpush2.msra.mxu0 0.0
        %7332 = vmatprep.subr.mxu0 0.0
        %7333 = vmatpush2.msra.mxu0 0.0
        %7334 = vmatprep.subr.mxu0 0.0
        %7335 = vmatpush2.msra.mxu0 0.0
        %7336 = vmatprep.subr.mxu0 0.0
        %7337 = vmatpush2.msra.mxu0 0.0
        %7338 = vmatprep.subr.mxu0 0.0
        %7339 = vmatpush2.msra.mxu0 0.0
        %7340 = vmatprep.subr.mxu0 0.0
        %7341 = vmatpush2.msra.mxu0 0.0
        %7342 = vmatprep.subr.mxu0 0.0
        %7343 = vmatpush2.msra.mxu0 0.0
        %7344 = vmatprep.mubr.f32.mxu0 0.0
        %7345 = vmatmul.mubr.f32.gmra.mxu0 %v6031
        %v7346 = vpop.f32.mrf.mxu0
        %v7347 = vadd.f32 0.0, %v7346
        %v7348 = vpop.f32.mrf.mxu0
        %7349 = vmatprep.mubr.f32.mxu0 0.0
        %7350 = vmatmul.mubr.f32.gmra.mxu0 %v6033
        %v7351 = vpop.f32.mrf.mxu0
        %v7352 = vadd.f32 0.0, %v7351
        %v7353 = vpop.f32.mrf.mxu0
        %7354 = vmatprep.mubr.f32.mxu0 0.0
        %7355 = vmatmul.mubr.f32.gmra.mxu0 %v6035
        %v7356 = vpop.f32.mrf.mxu0
        %v7357 = vadd.f32 0.0, %v7356
        %v7358 = vpop.f32.mrf.mxu0
        %7359 = vmatprep.mubr.f32.mxu0 0.0
        %7360 = vmatmul.mubr.f32.gmra.mxu0 %v6037
        %v7361 = vpop.f32.mrf.mxu0
        %v7362 = vadd.f32 0.0, %v7361
        %v7363 = vpop.f32.mrf.mxu0
        %7364 = vmatprep.mubr.f32.mxu0 0.0
        %7365 = vmatmul.mubr.f32.gmra.mxu0 %v6039
        %v7366 = vpop.f32.mrf.mxu0
        %v7367 = vadd.f32 0.0, %v7366
        %v7368 = vpop.f32.mrf.mxu0
        %7369 = vmatprep.mubr.f32.mxu0 0.0
        %7370 = vmatmul.mubr.f32.gmra.mxu0 %v6041
        %v7371 = vpop.f32.mrf.mxu0
        %v7372 = vadd.f32 0.0, %v7371
        %v7373 = vpop.f32.mrf.mxu0
        %7374 = vmatprep.mubr.f32.mxu0 0.0
        %7375 = vmatmul.mubr.f32.gmra.mxu0 %v6043
        %v7376 = vpop.f32.mrf.mxu0
        %v7377 = vadd.f32 0.0, %v7376
        %v7378 = vpop.f32.mrf.mxu0
        %7379 = vmatprep.mubr.f32.mxu0 0.0
        %7380 = vmatmul.mubr.f32.gmra.mxu0 %v6045
        %v7381 = vpop.f32.mrf.mxu0
        %v7382 = vadd.f32 0.0, %v7381
        %v7383 = vpop.f32.mrf.mxu0
        %7384 = vmatprep.mubr.f32.mxu0 0.0
        %7385 = vmatmul.mubr.f32.gmra.mxu0 %v6047
        %v7386 = vpop.f32.mrf.mxu0
        %v7387 = vadd.f32 0.0, %v7386
        %v7388 = vpop.f32.mrf.mxu0
        %7389 = vmatprep.mubr.f32.mxu0 0.0
        %7390 = vmatmul.mubr.f32.gmra.mxu0 %v6049
        %v7391 = vpop.f32.mrf.mxu0
        %v7392 = vadd.f32 0.0, %v7391
        %v7393 = vpop.f32.mrf.mxu0
        %7394 = vmatprep.mubr.f32.mxu0 0.0
        %7395 = vmatmul.mubr.f32.gmra.mxu0 %v6051
        %v7396 = vpop.f32.mrf.mxu0
        %v7397 = vadd.f32 0.0, %v7396
        %v7398 = vpop.f32.mrf.mxu0
        %7399 = vmatprep.mubr.f32.mxu0 0.0
        %7400 = vmatmul.mubr.f32.gmra.mxu0 %v6053
        %v7401 = vpop.f32.mrf.mxu0
        %v7402 = vadd.f32 0.0, %v7401
        %v7403 = vpop.f32.mrf.mxu0
        %7404 = vmatprep.mubr.f32.mxu0 0.0
        %7405 = vmatmul.mubr.f32.gmra.mxu0 %v6055
        %v7406 = vpop.f32.mrf.mxu0
        %v7407 = vadd.f32 0.0, %v7406
        %v7408 = vpop.f32.mrf.mxu0
        %7409 = vmatprep.mubr.f32.mxu0 0.0
        %7410 = vmatmul.mubr.f32.gmra.mxu0 %v6057
        %v7411 = vpop.f32.mrf.mxu0
        %v7412 = vadd.f32 0.0, %v7411
        %v7413 = vpop.f32.mrf.mxu0
        %7414 = vmatprep.mubr.f32.mxu0 0.0
        %7415 = vmatmul.mubr.f32.gmra.mxu0 %v6059
        %v7416 = vpop.f32.mrf.mxu0
        %v7417 = vadd.f32 0.0, %v7416
        %v7418 = vpop.f32.mrf.mxu0
        %7419 = vmatprep.mubr.f32.mxu0 0.0
        %7420 = vmatmul.mubr.f32.gmra.mxu0 %v6061
        %v7421 = vpop.f32.mrf.mxu0
        %v7422 = vadd.f32 0.0, %v7421
        %v7423 = vpop.f32.mrf.mxu0
        %7424 = vdwg.mxu0
        %7425 = vmatprep.subr.mxu0 0.0
        %7426 = vmatpush1.msra.mxu0 0.0
        %7427 = vmatprep.subr.mxu0 0.0
        %7428 = vmatpush1.msra.mxu0 0.0
        %7429 = vmatprep.subr.mxu0 0.0
        %7430 = vmatpush1.msra.mxu0 0.0
        %7431 = vmatprep.subr.mxu0 0.0
        %7432 = vmatpush1.msra.mxu0 0.0
        %7433 = vmatprep.subr.mxu0 0.0
        %7434 = vmatpush1.msra.mxu0 0.0
        %7435 = vmatprep.subr.mxu0 0.0
        %7436 = vmatpush1.msra.mxu0 0.0
        %7437 = vmatprep.subr.mxu0 0.0
        %7438 = vmatpush1.msra.mxu0 0.0
        %7439 = vmatprep.subr.mxu0 0.0
        %7440 = vmatpush1.msra.mxu0 0.0
        %7441 = vmatprep.subr.mxu0 0.0
        %7442 = vmatpush1.msra.mxu0 %v172
        %7443 = vmatprep.subr.mxu0 0.0
        %7444 = vmatpush1.msra.mxu0 %v171
        %7445 = vmatprep.subr.mxu0 0.0
        %7446 = vmatpush1.msra.mxu0 %v170
        %7447 = vmatprep.subr.mxu0 0.0
        %7448 = vmatpush1.msra.mxu0 %v169
        %7449 = vmatprep.subr.mxu0 0.0
        %7450 = vmatpush1.msra.mxu0 %v168
        %7451 = vmatprep.subr.mxu0 0.0
        %7452 = vmatpush1.msra.mxu0 %v167
        %7453 = vmatprep.subr.mxu0 0.0
        %7454 = vmatpush1.msra.mxu0 %v166
        %7455 = vmatprep.subr.mxu0 0.0
        %7456 = vmatpush1.msra.mxu0 %v165
        %7457 = vmatprep.subr.mxu0 0.0
        %7458 = vmatpush2.msra.mxu0 0.0
        %7459 = vmatprep.subr.mxu0 0.0
        %7460 = vmatpush2.msra.mxu0 0.0
        %7461 = vmatprep.subr.mxu0 0.0
        %7462 = vmatpush2.msra.mxu0 0.0
        %7463 = vmatprep.subr.mxu0 0.0
        %7464 = vmatpush2.msra.mxu0 0.0
        %7465 = vmatprep.subr.mxu0 0.0
        %7466 = vmatpush2.msra.mxu0 0.0
        %7467 = vmatprep.subr.mxu0 0.0
        %7468 = vmatpush2.msra.mxu0 0.0
        %7469 = vmatprep.subr.mxu0 0.0
        %7470 = vmatpush2.msra.mxu0 0.0
        %7471 = vmatprep.subr.mxu0 0.0
        %7472 = vmatpush2.msra.mxu0 0.0
        %7473 = vmatprep.subr.mxu0 0.0
        %7474 = vmatpush2.msra.mxu0 0.0
        %7475 = vmatprep.subr.mxu0 0.0
        %7476 = vmatpush2.msra.mxu0 0.0
        %7477 = vmatprep.subr.mxu0 0.0
        %7478 = vmatpush2.msra.mxu0 0.0
        %7479 = vmatprep.subr.mxu0 0.0
        %7480 = vmatpush2.msra.mxu0 0.0
        %7481 = vmatprep.subr.mxu0 0.0
        %7482 = vmatpush2.msra.mxu0 0.0
        %7483 = vmatprep.subr.mxu0 0.0
        %7484 = vmatpush2.msra.mxu0 0.0
        %7485 = vmatprep.subr.mxu0 0.0
        %7486 = vmatpush2.msra.mxu0 0.0
        %7487 = vmatprep.subr.mxu0 0.0
        %7488 = vmatpush2.msra.mxu0 0.0
        %7489 = vmatprep.mubr.f32.mxu0 0.0
        %7490 = vmatmul.mubr.f32.gmra.mxu0 %v4012
        %v7491 = vpop.f32.mrf.mxu0
        %v7492 = vadd.f32 %v7347, %v7491
        %v7493 = vpop.f32.mrf.mxu0
        %7494 = vmatprep.mubr.f32.mxu0 0.0
        %7495 = vmatmul.mubr.f32.gmra.mxu0 %v4014
        %v7496 = vpop.f32.mrf.mxu0
        %v7497 = vadd.f32 %v7352, %v7496
        %v7498 = vpop.f32.mrf.mxu0
        %7499 = vmatprep.mubr.f32.mxu0 0.0
        %7500 = vmatmul.mubr.f32.gmra.mxu0 %v4016
        %v7501 = vpop.f32.mrf.mxu0
        %v7502 = vadd.f32 %v7357, %v7501
        %v7503 = vpop.f32.mrf.mxu0
        %7504 = vmatprep.mubr.f32.mxu0 0.0
        %7505 = vmatmul.mubr.f32.gmra.mxu0 %v4018
        %v7506 = vpop.f32.mrf.mxu0
        %v7507 = vadd.f32 %v7362, %v7506
        %v7508 = vpop.f32.mrf.mxu0
        %7509 = vmatprep.mubr.f32.mxu0 0.0
        %7510 = vmatmul.mubr.f32.gmra.mxu0 %v4020
        %v7511 = vpop.f32.mrf.mxu0
        %v7512 = vadd.f32 %v7367, %v7511
        %v7513 = vpop.f32.mrf.mxu0
        %7514 = vmatprep.mubr.f32.mxu0 0.0
        %7515 = vmatmul.mubr.f32.gmra.mxu0 %v4022
        %v7516 = vpop.f32.mrf.mxu0
        %v7517 = vadd.f32 %v7372, %v7516
        %v7518 = vpop.f32.mrf.mxu0
        %7519 = vmatprep.mubr.f32.mxu0 0.0
        %7520 = vmatmul.mubr.f32.gmra.mxu0 %v4024
        %v7521 = vpop.f32.mrf.mxu0
        %v7522 = vadd.f32 %v7377, %v7521
        %v7523 = vpop.f32.mrf.mxu0
        %7524 = vmatprep.mubr.f32.mxu0 0.0
        %7525 = vmatmul.mubr.f32.gmra.mxu0 %v4026
        %v7526 = vpop.f32.mrf.mxu0
        %v7527 = vadd.f32 %v7382, %v7526
        %v7528 = vpop.f32.mrf.mxu0
        %7529 = vmatprep.mubr.f32.mxu0 0.0
        %7530 = vmatmul.mubr.f32.gmra.mxu0 %v4028
        %v7531 = vpop.f32.mrf.mxu0
        %v7532 = vadd.f32 %v7387, %v7531
        %v7533 = vpop.f32.mrf.mxu0
        %7534 = vmatprep.mubr.f32.mxu0 0.0
        %7535 = vmatmul.mubr.f32.gmra.mxu0 %v4030
        %v7536 = vpop.f32.mrf.mxu0
        %v7537 = vadd.f32 %v7392, %v7536
        %v7538 = vpop.f32.mrf.mxu0
        %7539 = vmatprep.mubr.f32.mxu0 0.0
        %7540 = vmatmul.mubr.f32.gmra.mxu0 %v4032
        %v7541 = vpop.f32.mrf.mxu0
        %v7542 = vadd.f32 %v7397, %v7541
        %v7543 = vpop.f32.mrf.mxu0
        %7544 = vmatprep.mubr.f32.mxu0 0.0
        %7545 = vmatmul.mubr.f32.gmra.mxu0 %v4034
        %v7546 = vpop.f32.mrf.mxu0
        %v7547 = vadd.f32 %v7402, %v7546
        %v7548 = vpop.f32.mrf.mxu0
        %7549 = vmatprep.mubr.f32.mxu0 0.0
        %7550 = vmatmul.mubr.f32.gmra.mxu0 %v4036
        %v7551 = vpop.f32.mrf.mxu0
        %v7552 = vadd.f32 %v7407, %v7551
        %v7553 = vpop.f32.mrf.mxu0
        %7554 = vmatprep.mubr.f32.mxu0 0.0
        %7555 = vmatmul.mubr.f32.gmra.mxu0 %v4038
        %v7556 = vpop.f32.mrf.mxu0
        %v7557 = vadd.f32 %v7412, %v7556
        %v7558 = vpop.f32.mrf.mxu0
        %7559 = vmatprep.mubr.f32.mxu0 0.0
        %7560 = vmatmul.mubr.f32.gmra.mxu0 %v4040
        %v7561 = vpop.f32.mrf.mxu0
        %v7562 = vadd.f32 %v7417, %v7561
        %v7563 = vpop.f32.mrf.mxu0
        %7564 = vmatprep.mubr.f32.mxu0 0.0
        %7565 = vmatmul.mubr.f32.gmra.mxu0 %v4042
        %v7566 = vpop.f32.mrf.mxu0
        %v7567 = vadd.f32 %v7422, %v7566
        %v7568 = vpop.f32.mrf.mxu0
        %7569 = vdwg.mxu0
        %v7570 = vld [vmem:[%s154 + $0x5] sm:$0x1]
        %v7571 = vld [vmem:[%s154 + $0xd] sm:$0x1]
        %v7572 = vld [vmem:[%s154 + $0x15] sm:$0x1]
        %v7573 = vld [vmem:[%s154 + $0x1d] sm:$0x1]
        %v7574 = vld [vmem:[%s154 + $0x25] sm:$0x1]
        %v7575 = vld [vmem:[%s154 + $0x2d] sm:$0x1]
        %v7576 = vld [vmem:[%s154 + $0x35] sm:$0x1]
        %v7577 = vld [vmem:[%s154 + $0x3d] sm:$0x1]
        %v7578 = vld [vmem:[%s154 + $0x45] sm:$0x1]
        %v7579 = vld [vmem:[%s154 + $0x4d] sm:$0x1]
        %v7580 = vld [vmem:[%s154 + $0x55] sm:$0x1]
        %v7581 = vld [vmem:[%s154 + $0x5d] sm:$0x1]
        %v7582 = vld [vmem:[%s154 + $0x65] sm:$0x1]
        %v7583 = vld [vmem:[%s154 + $0x6d] sm:$0x1]
        %v7584 = vld [vmem:[%s154 + $0x75] sm:$0x1]
        %v7585 = vld [vmem:[%s154 + $0x7d] sm:$0x1]
        %v7586 = vld [vmem:[%s154 + $0x85] sm:$0x1]
        %v7587 = vld [vmem:[%s154 + $0x8d] sm:$0x1]
        %v7588 = vld [vmem:[%s154 + $0x95] sm:$0x1]
        %v7589 = vld [vmem:[%s154 + $0x9d] sm:$0x1]
        %v7590 = vld [vmem:[%s154 + $0xa5] sm:$0x1]
        %v7591 = vld [vmem:[%s154 + $0xad] sm:$0x1]
        %v7592 = vld [vmem:[%s154 + $0xb5] sm:$0x1]
        %v7593 = vld [vmem:[%s154 + $0xbd] sm:$0x1]
        %v7594 = vld [vmem:[%s154 + $0xc5] sm:$0x1]
        %v7595 = vld [vmem:[%s154 + $0xcd] sm:$0x1]
        %v7596 = vld [vmem:[%s154 + $0xd5] sm:$0x1]
        %v7597 = vld [vmem:[%s154 + $0xdd] sm:$0x1]
        %v7598 = vld [vmem:[%s154 + $0xe5] sm:$0x1]
        %v7599 = vld [vmem:[%s154 + $0xed] sm:$0x1]
        %v7600 = vld [vmem:[%s154 + $0xf5] sm:$0x1]
        %v7601 = vld [vmem:[%s154 + $0xfd] sm:$0x1]
        %v7602 = vld [vmem:[%s154 + $0x105] sm:$0x1]
        %v7603 = vld [vmem:[%s154 + $0x10d] sm:$0x1]
        %v7604 = vld [vmem:[%s154 + $0x115] sm:$0x1]
        %v7605 = vld [vmem:[%s154 + $0x11d] sm:$0x1]
        %v7606 = vld [vmem:[%s154 + $0x125] sm:$0x1]
        %v7607 = vld [vmem:[%s154 + $0x12d] sm:$0x1]
        %v7608 = vld [vmem:[%s154 + $0x135] sm:$0x1]
        %v7609 = vld [vmem:[%s154 + $0x13d] sm:$0x1]
        %v7610 = vld [vmem:[%s154 + $0x145] sm:$0x1]
        %v7611 = vld [vmem:[%s154 + $0x14d] sm:$0x1]
        %v7612 = vld [vmem:[%s154 + $0x155] sm:$0x1]
        %v7613 = vld [vmem:[%s154 + $0x15d] sm:$0x1]
        %v7614 = vld [vmem:[%s154 + $0x165] sm:$0x1]
        %v7615 = vld [vmem:[%s154 + $0x16d] sm:$0x1]
        %v7616 = vld [vmem:[%s154 + $0x175] sm:$0x1]
        %v7617 = vld [vmem:[%s154 + $0x17d] sm:$0x1]
        %v7618 = vld [vmem:[%s154 + $0x185] sm:$0x1]
        %v7619 = vld [vmem:[%s154 + $0x18d] sm:$0x1]
        %v7620 = vld [vmem:[%s154 + $0x195] sm:$0x1]
        %v7621 = vld [vmem:[%s154 + $0x19d] sm:$0x1]
        %v7622 = vld [vmem:[%s154 + $0x1a5] sm:$0x1]
        %v7623 = vld [vmem:[%s154 + $0x1ad] sm:$0x1]
        %v7624 = vld [vmem:[%s154 + $0x1b5] sm:$0x1]
        %v7625 = vld [vmem:[%s154 + $0x1bd] sm:$0x1]
        %v7626 = vld [vmem:[%s154 + $0x1c5] sm:$0x1]
        %v7627 = vld [vmem:[%s154 + $0x1cd] sm:$0x1]
        %v7628 = vld [vmem:[%s154 + $0x1d5] sm:$0x1]
        %v7629 = vld [vmem:[%s154 + $0x1dd] sm:$0x1]
        %v7630 = vld [vmem:[%s154 + $0x1e5] sm:$0x1]
        %v7631 = vld [vmem:[%s154 + $0x1ed] sm:$0x1]
        %v7632 = vld [vmem:[%s154 + $0x1f5] sm:$0x1]
        %v7633 = vld [vmem:[%s154 + $0x1fd] sm:$0x1]
        %v7634 = vld [vmem:[%s154 + $0x205] sm:$0x1]
        %v7635 = vld [vmem:[%s154 + $0x20d] sm:$0x1]
        %v7636 = vld [vmem:[%s154 + $0x215] sm:$0x1]
        %v7637 = vld [vmem:[%s154 + $0x21d] sm:$0x1]
        %v7638 = vld [vmem:[%s154 + $0x225] sm:$0x1]
        %v7639 = vld [vmem:[%s154 + $0x22d] sm:$0x1]
        %v7640 = vld [vmem:[%s154 + $0x235] sm:$0x1]
        %v7641 = vld [vmem:[%s154 + $0x23d] sm:$0x1]
        %v7642 = vld [vmem:[%s154 + $0x245] sm:$0x1]
        %v7643 = vld [vmem:[%s154 + $0x24d] sm:$0x1]
        %v7644 = vld [vmem:[%s154 + $0x255] sm:$0x1]
        %v7645 = vld [vmem:[%s154 + $0x25d] sm:$0x1]
        %v7646 = vld [vmem:[%s154 + $0x265] sm:$0x1]
        %v7647 = vld [vmem:[%s154 + $0x26d] sm:$0x1]
        %v7648 = vld [vmem:[%s154 + $0x275] sm:$0x1]
        %v7649 = vld [vmem:[%s154 + $0x27d] sm:$0x1]
        %v7650 = vld [vmem:[%s154 + $0x285] sm:$0x1]
        %v7651 = vld [vmem:[%s154 + $0x28d] sm:$0x1]
        %v7652 = vld [vmem:[%s154 + $0x295] sm:$0x1]
        %v7653 = vld [vmem:[%s154 + $0x29d] sm:$0x1]
        %v7654 = vld [vmem:[%s154 + $0x2a5] sm:$0x1]
        %v7655 = vld [vmem:[%s154 + $0x2ad] sm:$0x1]
        %v7656 = vld [vmem:[%s154 + $0x2b5] sm:$0x1]
        %v7657 = vld [vmem:[%s154 + $0x2bd] sm:$0x1]
        %v7658 = vld [vmem:[%s154 + $0x2c5] sm:$0x1]
        %v7659 = vld [vmem:[%s154 + $0x2cd] sm:$0x1]
        %v7660 = vld [vmem:[%s154 + $0x2d5] sm:$0x1]
        %v7661 = vld [vmem:[%s154 + $0x2dd] sm:$0x1]
        %v7662 = vld [vmem:[%s154 + $0x2e5] sm:$0x1]
        %v7663 = vld [vmem:[%s154 + $0x2ed] sm:$0x1]
        %v7664 = vld [vmem:[%s154 + $0x2f5] sm:$0x1]
        %v7665 = vld [vmem:[%s154 + $0x2fd] sm:$0x1]
        %v7666 = vld [vmem:[%s154 + $0x305] sm:$0x1]
        %v7667 = vld [vmem:[%s154 + $0x30d] sm:$0x1]
        %v7668 = vld [vmem:[%s154 + $0x315] sm:$0x1]
        %v7669 = vld [vmem:[%s154 + $0x31d] sm:$0x1]
        %v7670 = vld [vmem:[%s154 + $0x325] sm:$0x1]
        %v7671 = vld [vmem:[%s154 + $0x32d] sm:$0x1]
        %v7672 = vld [vmem:[%s154 + $0x335] sm:$0x1]
        %v7673 = vld [vmem:[%s154 + $0x33d] sm:$0x1]
        %v7674 = vld [vmem:[%s154 + $0x345] sm:$0x1]
        %v7675 = vld [vmem:[%s154 + $0x34d] sm:$0x1]
        %v7676 = vld [vmem:[%s154 + $0x355] sm:$0x1]
        %v7677 = vld [vmem:[%s154 + $0x35d] sm:$0x1]
        %v7678 = vld [vmem:[%s154 + $0x365] sm:$0x1]
        %v7679 = vld [vmem:[%s154 + $0x36d] sm:$0x1]
        %v7680 = vld [vmem:[%s154 + $0x375] sm:$0x1]
        %v7681 = vld [vmem:[%s154 + $0x37d] sm:$0x1]
        %v7682 = vld [vmem:[%s154 + $0x385] sm:$0x1]
        %v7683 = vld [vmem:[%s154 + $0x38d] sm:$0x1]
        %v7684 = vld [vmem:[%s154 + $0x395] sm:$0x1]
        %v7685 = vld [vmem:[%s154 + $0x39d] sm:$0x1]
        %v7686 = vld [vmem:[%s154 + $0x3a5] sm:$0x1]
        %v7687 = vld [vmem:[%s154 + $0x3ad] sm:$0x1]
        %v7688 = vld [vmem:[%s154 + $0x3b5] sm:$0x1]
        %v7689 = vld [vmem:[%s154 + $0x3bd] sm:$0x1]
        %v7690 = vld [vmem:[%s154 + $0x3c5] sm:$0x1]
        %v7691 = vld [vmem:[%s154 + $0x3cd] sm:$0x1]
        %v7692 = vld [vmem:[%s154 + $0x3d5] sm:$0x1]
        %v7693 = vld [vmem:[%s154 + $0x3dd] sm:$0x1]
        %v7694 = vld [vmem:[%s154 + $0x3e5] sm:$0x1]
        %v7695 = vld [vmem:[%s154 + $0x3ed] sm:$0x1]
        %v7696 = vld [vmem:[%s154 + $0x3f5] sm:$0x1]
        %v7697 = vld [vmem:[%s154 + $0x3fd] sm:$0x1]
        %v7826 = vrot.slane %v7571, 7
        %v7827 = vsel %vm576, %v7826, %v7570
        %v7828 = vrot.slane %v7572, 6
        %v7829 = vsel %vm579, %v7828, %v7827
        %v7830 = vrot.slane %v7573, 5
        %v7831 = vsel %vm582, %v7830, %v7829
        %v7832 = vrot.slane %v7574, 4
        %v7833 = vsel %vm585, %v7832, %v7831
        %v7834 = vrot.slane %v7575, 3
        %v7835 = vsel %vm588, %v7834, %v7833
        %v7836 = vrot.slane %v7576, 2
        %v7837 = vsel %vm591, %v7836, %v7835
        %v7838 = vrot.slane %v7577, 1
        %v7839 = vsel %vm594, %v7838, %v7837
        %v7840 = vrot.slane %v7579, 7
        %v7841 = vsel %vm576, %v7840, %v7578
        %v7842 = vrot.slane %v7580, 6
        %v7843 = vsel %vm579, %v7842, %v7841
        %v7844 = vrot.slane %v7581, 5
        %v7845 = vsel %vm582, %v7844, %v7843
        %v7846 = vrot.slane %v7582, 4
        %v7847 = vsel %vm585, %v7846, %v7845
        %v7848 = vrot.slane %v7583, 3
        %v7849 = vsel %vm588, %v7848, %v7847
        %v7850 = vrot.slane %v7584, 2
        %v7851 = vsel %vm591, %v7850, %v7849
        %v7852 = vrot.slane %v7585, 1
        %v7853 = vsel %vm594, %v7852, %v7851
        %v7854 = vrot.slane %v7587, 7
        %v7855 = vsel %vm576, %v7854, %v7586
        %v7856 = vrot.slane %v7588, 6
        %v7857 = vsel %vm579, %v7856, %v7855
        %v7858 = vrot.slane %v7589, 5
        %v7859 = vsel %vm582, %v7858, %v7857
        %v7860 = vrot.slane %v7590, 4
        %v7861 = vsel %vm585, %v7860, %v7859
        %v7862 = vrot.slane %v7591, 3
        %v7863 = vsel %vm588, %v7862, %v7861
        %v7864 = vrot.slane %v7592, 2
        %v7865 = vsel %vm591, %v7864, %v7863
        %v7866 = vrot.slane %v7593, 1
        %v7867 = vsel %vm594, %v7866, %v7865
        %v7868 = vrot.slane %v7595, 7
        %v7869 = vsel %vm576, %v7868, %v7594
        %v7870 = vrot.slane %v7596, 6
        %v7871 = vsel %vm579, %v7870, %v7869
        %v7872 = vrot.slane %v7597, 5
        %v7873 = vsel %vm582, %v7872, %v7871
        %v7874 = vrot.slane %v7598, 4
        %v7875 = vsel %vm585, %v7874, %v7873
        %v7876 = vrot.slane %v7599, 3
        %v7877 = vsel %vm588, %v7876, %v7875
        %v7878 = vrot.slane %v7600, 2
        %v7879 = vsel %vm591, %v7878, %v7877
        %v7880 = vrot.slane %v7601, 1
        %v7881 = vsel %vm594, %v7880, %v7879
        %v7882 = vrot.slane %v7603, 7
        %v7883 = vsel %vm576, %v7882, %v7602
        %v7884 = vrot.slane %v7604, 6
        %v7885 = vsel %vm579, %v7884, %v7883
        %v7886 = vrot.slane %v7605, 5
        %v7887 = vsel %vm582, %v7886, %v7885
        %v7888 = vrot.slane %v7606, 4
        %v7889 = vsel %vm585, %v7888, %v7887
        %v7890 = vrot.slane %v7607, 3
        %v7891 = vsel %vm588, %v7890, %v7889
        %v7892 = vrot.slane %v7608, 2
        %v7893 = vsel %vm591, %v7892, %v7891
        %v7894 = vrot.slane %v7609, 1
        %v7895 = vsel %vm594, %v7894, %v7893
        %v7896 = vrot.slane %v7611, 7
        %v7897 = vsel %vm576, %v7896, %v7610
        %v7898 = vrot.slane %v7612, 6
        %v7899 = vsel %vm579, %v7898, %v7897
        %v7900 = vrot.slane %v7613, 5
        %v7901 = vsel %vm582, %v7900, %v7899
        %v7902 = vrot.slane %v7614, 4
        %v7903 = vsel %vm585, %v7902, %v7901
        %v7904 = vrot.slane %v7615, 3
        %v7905 = vsel %vm588, %v7904, %v7903
        %v7906 = vrot.slane %v7616, 2
        %v7907 = vsel %vm591, %v7906, %v7905
        %v7908 = vrot.slane %v7617, 1
        %v7909 = vsel %vm594, %v7908, %v7907
        %v7910 = vrot.slane %v7619, 7
        %v7911 = vsel %vm576, %v7910, %v7618
        %v7912 = vrot.slane %v7620, 6
        %v7913 = vsel %vm579, %v7912, %v7911
        %v7914 = vrot.slane %v7621, 5
        %v7915 = vsel %vm582, %v7914, %v7913
        %v7916 = vrot.slane %v7622, 4
        %v7917 = vsel %vm585, %v7916, %v7915
        %v7918 = vrot.slane %v7623, 3
        %v7919 = vsel %vm588, %v7918, %v7917
        %v7920 = vrot.slane %v7624, 2
        %v7921 = vsel %vm591, %v7920, %v7919
        %v7922 = vrot.slane %v7625, 1
        %v7923 = vsel %vm594, %v7922, %v7921
        %v7924 = vrot.slane %v7627, 7
        %v7925 = vsel %vm576, %v7924, %v7626
        %v7926 = vrot.slane %v7628, 6
        %v7927 = vsel %vm579, %v7926, %v7925
        %v7928 = vrot.slane %v7629, 5
        %v7929 = vsel %vm582, %v7928, %v7927
        %v7930 = vrot.slane %v7630, 4
        %v7931 = vsel %vm585, %v7930, %v7929
        %v7932 = vrot.slane %v7631, 3
        %v7933 = vsel %vm588, %v7932, %v7931
        %v7934 = vrot.slane %v7632, 2
        %v7935 = vsel %vm591, %v7934, %v7933
        %v7936 = vrot.slane %v7633, 1
        %v7937 = vsel %vm594, %v7936, %v7935
        %v7938 = vrot.slane %v7635, 7
        %v7939 = vsel %vm576, %v7938, %v7634
        %v7940 = vrot.slane %v7636, 6
        %v7941 = vsel %vm579, %v7940, %v7939
        %v7942 = vrot.slane %v7637, 5
        %v7943 = vsel %vm582, %v7942, %v7941
        %v7944 = vrot.slane %v7638, 4
        %v7945 = vsel %vm585, %v7944, %v7943
        %v7946 = vrot.slane %v7639, 3
        %v7947 = vsel %vm588, %v7946, %v7945
        %v7948 = vrot.slane %v7640, 2
        %v7949 = vsel %vm591, %v7948, %v7947
        %v7950 = vrot.slane %v7641, 1
        %v7951 = vsel %vm594, %v7950, %v7949
        %v7952 = vrot.slane %v7643, 7
        %v7953 = vsel %vm576, %v7952, %v7642
        %v7954 = vrot.slane %v7644, 6
        %v7955 = vsel %vm579, %v7954, %v7953
        %v7956 = vrot.slane %v7645, 5
        %v7957 = vsel %vm582, %v7956, %v7955
        %v7958 = vrot.slane %v7646, 4
        %v7959 = vsel %vm585, %v7958, %v7957
        %v7960 = vrot.slane %v7647, 3
        %v7961 = vsel %vm588, %v7960, %v7959
        %v7962 = vrot.slane %v7648, 2
        %v7963 = vsel %vm591, %v7962, %v7961
        %v7964 = vrot.slane %v7649, 1
        %v7965 = vsel %vm594, %v7964, %v7963
        %v7966 = vrot.slane %v7651, 7
        %v7967 = vsel %vm576, %v7966, %v7650
        %v7968 = vrot.slane %v7652, 6
        %v7969 = vsel %vm579, %v7968, %v7967
        %v7970 = vrot.slane %v7653, 5
        %v7971 = vsel %vm582, %v7970, %v7969
        %v7972 = vrot.slane %v7654, 4
        %v7973 = vsel %vm585, %v7972, %v7971
        %v7974 = vrot.slane %v7655, 3
        %v7975 = vsel %vm588, %v7974, %v7973
        %v7976 = vrot.slane %v7656, 2
        %v7977 = vsel %vm591, %v7976, %v7975
        %v7978 = vrot.slane %v7657, 1
        %v7979 = vsel %vm594, %v7978, %v7977
        %v7980 = vrot.slane %v7659, 7
        %v7981 = vsel %vm576, %v7980, %v7658
        %v7982 = vrot.slane %v7660, 6
        %v7983 = vsel %vm579, %v7982, %v7981
        %v7984 = vrot.slane %v7661, 5
        %v7985 = vsel %vm582, %v7984, %v7983
        %v7986 = vrot.slane %v7662, 4
        %v7987 = vsel %vm585, %v7986, %v7985
        %v7988 = vrot.slane %v7663, 3
        %v7989 = vsel %vm588, %v7988, %v7987
        %v7990 = vrot.slane %v7664, 2
        %v7991 = vsel %vm591, %v7990, %v7989
        %v7992 = vrot.slane %v7665, 1
        %v7993 = vsel %vm594, %v7992, %v7991
        %v7994 = vrot.slane %v7667, 7
        %v7995 = vsel %vm576, %v7994, %v7666
        %v7996 = vrot.slane %v7668, 6
        %v7997 = vsel %vm579, %v7996, %v7995
        %v7998 = vrot.slane %v7669, 5
        %v7999 = vsel %vm582, %v7998, %v7997
        %v8000 = vrot.slane %v7670, 4
        %v8001 = vsel %vm585, %v8000, %v7999
        %v8002 = vrot.slane %v7671, 3
        %v8003 = vsel %vm588, %v8002, %v8001
        %v8004 = vrot.slane %v7672, 2
        %v8005 = vsel %vm591, %v8004, %v8003
        %v8006 = vrot.slane %v7673, 1
        %v8007 = vsel %vm594, %v8006, %v8005
        %v8008 = vrot.slane %v7675, 7
        %v8009 = vsel %vm576, %v8008, %v7674
        %v8010 = vrot.slane %v7676, 6
        %v8011 = vsel %vm579, %v8010, %v8009
        %v8012 = vrot.slane %v7677, 5
        %v8013 = vsel %vm582, %v8012, %v8011
        %v8014 = vrot.slane %v7678, 4
        %v8015 = vsel %vm585, %v8014, %v8013
        %v8016 = vrot.slane %v7679, 3
        %v8017 = vsel %vm588, %v8016, %v8015
        %v8018 = vrot.slane %v7680, 2
        %v8019 = vsel %vm591, %v8018, %v8017
        %v8020 = vrot.slane %v7681, 1
        %v8021 = vsel %vm594, %v8020, %v8019
        %v8022 = vrot.slane %v7683, 7
        %v8023 = vsel %vm576, %v8022, %v7682
        %v8024 = vrot.slane %v7684, 6
        %v8025 = vsel %vm579, %v8024, %v8023
        %v8026 = vrot.slane %v7685, 5
        %v8027 = vsel %vm582, %v8026, %v8025
        %v8028 = vrot.slane %v7686, 4
        %v8029 = vsel %vm585, %v8028, %v8027
        %v8030 = vrot.slane %v7687, 3
        %v8031 = vsel %vm588, %v8030, %v8029
        %v8032 = vrot.slane %v7688, 2
        %v8033 = vsel %vm591, %v8032, %v8031
        %v8034 = vrot.slane %v7689, 1
        %v8035 = vsel %vm594, %v8034, %v8033
        %v8036 = vrot.slane %v7691, 7
        %v8037 = vsel %vm576, %v8036, %v7690
        %v8038 = vrot.slane %v7692, 6
        %v8039 = vsel %vm579, %v8038, %v8037
        %v8040 = vrot.slane %v7693, 5
        %v8041 = vsel %vm582, %v8040, %v8039
        %v8042 = vrot.slane %v7694, 4
        %v8043 = vsel %vm585, %v8042, %v8041
        %v8044 = vrot.slane %v7695, 3
        %v8045 = vsel %vm588, %v8044, %v8043
        %v8046 = vrot.slane %v7696, 2
        %v8047 = vsel %vm591, %v8046, %v8045
        %v8048 = vrot.slane %v7697, 1
        %v8049 = vsel %vm594, %v8048, %v8047
        %v8050 = vsel %vm806, %v7839, 0
        %v8052 = vsel %vm806, %v7853, 0
        %v8054 = vsel %vm806, %v7867, 0
        %v8056 = vsel %vm806, %v7881, 0
        %v8058 = vsel %vm806, %v7895, 0
        %v8060 = vsel %vm806, %v7909, 0
        %v8062 = vsel %vm806, %v7923, 0
        %v8064 = vsel %vm806, %v7937, 0
        %v8066 = vsel %vm806, %v7951, 0
        %v8068 = vsel %vm806, %v7965, 0
        %v8070 = vsel %vm806, %v7979, 0
        %v8072 = vsel %vm806, %v7993, 0
        %v8074 = vsel %vm806, %v8007, 0
        %v8076 = vsel %vm806, %v8021, 0
        %v8078 = vsel %vm806, %v8035, 0
        %v8080 = vsel %vm806, %v8049, 0
        %8082 = vmatprep.subr.mxu0 0.0
        %8083 = vmatpush1.msra.mxu0 0.0
        %8084 = vmatprep.subr.mxu0 0.0
        %8085 = vmatpush1.msra.mxu0 0.0
        %8086 = vmatprep.subr.mxu0 0.0
        %8087 = vmatpush1.msra.mxu0 0.0
        %8088 = vmatprep.subr.mxu0 0.0
        %8089 = vmatpush1.msra.mxu0 0.0
        %8090 = vmatprep.subr.mxu0 0.0
        %8091 = vmatpush1.msra.mxu0 0.0
        %8092 = vmatprep.subr.mxu0 0.0
        %8093 = vmatpush1.msra.mxu0 0.0
        %8094 = vmatprep.subr.mxu0 0.0
        %8095 = vmatpush1.msra.mxu0 0.0
        %8096 = vmatprep.subr.mxu0 0.0
        %8097 = vmatpush1.msra.mxu0 0.0
        %8098 = vmatprep.subr.mxu0 0.0
        %8099 = vmatpush1.msra.mxu0 %v190
        %8100 = vmatprep.subr.mxu0 0.0
        %8101 = vmatpush1.msra.mxu0 %v189
        %8102 = vmatprep.subr.mxu0 0.0
        %8103 = vmatpush1.msra.mxu0 %v188
        %8104 = vmatprep.subr.mxu0 0.0
        %8105 = vmatpush1.msra.mxu0 %v187
        %8106 = vmatprep.subr.mxu0 0.0
        %8107 = vmatpush1.msra.mxu0 %v186
        %8108 = vmatprep.subr.mxu0 0.0
        %8109 = vmatpush1.msra.mxu0 %v185
        %8110 = vmatprep.subr.mxu0 0.0
        %8111 = vmatpush1.msra.mxu0 %v184
        %8112 = vmatprep.subr.mxu0 0.0
        %8113 = vmatpush1.msra.mxu0 %v183
        %8114 = vmatprep.subr.mxu0 0.0
        %8115 = vmatpush2.msra.mxu0 0.0
        %8116 = vmatprep.subr.mxu0 0.0
        %8117 = vmatpush2.msra.mxu0 0.0
        %8118 = vmatprep.subr.mxu0 0.0
        %8119 = vmatpush2.msra.mxu0 0.0
        %8120 = vmatprep.subr.mxu0 0.0
        %8121 = vmatpush2.msra.mxu0 0.0
        %8122 = vmatprep.subr.mxu0 0.0
        %8123 = vmatpush2.msra.mxu0 0.0
        %8124 = vmatprep.subr.mxu0 0.0
        %8125 = vmatpush2.msra.mxu0 0.0
        %8126 = vmatprep.subr.mxu0 0.0
        %8127 = vmatpush2.msra.mxu0 0.0
        %8128 = vmatprep.subr.mxu0 0.0
        %8129 = vmatpush2.msra.mxu0 0.0
        %8130 = vmatprep.subr.mxu0 0.0
        %8131 = vmatpush2.msra.mxu0 0.0
        %8132 = vmatprep.subr.mxu0 0.0
        %8133 = vmatpush2.msra.mxu0 0.0
        %8134 = vmatprep.subr.mxu0 0.0
        %8135 = vmatpush2.msra.mxu0 0.0
        %8136 = vmatprep.subr.mxu0 0.0
        %8137 = vmatpush2.msra.mxu0 0.0
        %8138 = vmatprep.subr.mxu0 0.0
        %8139 = vmatpush2.msra.mxu0 0.0
        %8140 = vmatprep.subr.mxu0 0.0
        %8141 = vmatpush2.msra.mxu0 0.0
        %8142 = vmatprep.subr.mxu0 0.0
        %8143 = vmatpush2.msra.mxu0 0.0
        %8144 = vmatprep.subr.mxu0 0.0
        %8145 = vmatpush2.msra.mxu0 0.0
        %8146 = vmatprep.mubr.f32.mxu0 0.0
        %8147 = vmatmul.mubr.f32.gmra.mxu0 %v8050
        %v8148 = vpop.f32.mrf.mxu0
        %v8149 = vadd.f32 0.0, %v8148
        %v8150 = vpop.f32.mrf.mxu0
        %8151 = vmatprep.mubr.f32.mxu0 0.0
        %8152 = vmatmul.mubr.f32.gmra.mxu0 %v8052
        %v8153 = vpop.f32.mrf.mxu0
        %v8154 = vadd.f32 0.0, %v8153
        %v8155 = vpop.f32.mrf.mxu0
        %8156 = vmatprep.mubr.f32.mxu0 0.0
        %8157 = vmatmul.mubr.f32.gmra.mxu0 %v8054
        %v8158 = vpop.f32.mrf.mxu0
        %v8159 = vadd.f32 0.0, %v8158
        %v8160 = vpop.f32.mrf.mxu0
        %8161 = vmatprep.mubr.f32.mxu0 0.0
        %8162 = vmatmul.mubr.f32.gmra.mxu0 %v8056
        %v8163 = vpop.f32.mrf.mxu0
        %v8164 = vadd.f32 0.0, %v8163
        %v8165 = vpop.f32.mrf.mxu0
        %8166 = vmatprep.mubr.f32.mxu0 0.0
        %8167 = vmatmul.mubr.f32.gmra.mxu0 %v8058
        %v8168 = vpop.f32.mrf.mxu0
        %v8169 = vadd.f32 0.0, %v8168
        %v8170 = vpop.f32.mrf.mxu0
        %8171 = vmatprep.mubr.f32.mxu0 0.0
        %8172 = vmatmul.mubr.f32.gmra.mxu0 %v8060
        %v8173 = vpop.f32.mrf.mxu0
        %v8174 = vadd.f32 0.0, %v8173
        %v8175 = vpop.f32.mrf.mxu0
        %8176 = vmatprep.mubr.f32.mxu0 0.0
        %8177 = vmatmul.mubr.f32.gmra.mxu0 %v8062
        %v8178 = vpop.f32.mrf.mxu0
        %v8179 = vadd.f32 0.0, %v8178
        %v8180 = vpop.f32.mrf.mxu0
        %8181 = vmatprep.mubr.f32.mxu0 0.0
        %8182 = vmatmul.mubr.f32.gmra.mxu0 %v8064
        %v8183 = vpop.f32.mrf.mxu0
        %v8184 = vadd.f32 0.0, %v8183
        %v8185 = vpop.f32.mrf.mxu0
        %8186 = vmatprep.mubr.f32.mxu0 0.0
        %8187 = vmatmul.mubr.f32.gmra.mxu0 %v8066
        %v8188 = vpop.f32.mrf.mxu0
        %v8189 = vadd.f32 0.0, %v8188
        %v8190 = vpop.f32.mrf.mxu0
        %8191 = vmatprep.mubr.f32.mxu0 0.0
        %8192 = vmatmul.mubr.f32.gmra.mxu0 %v8068
        %v8193 = vpop.f32.mrf.mxu0
        %v8194 = vadd.f32 0.0, %v8193
        %v8195 = vpop.f32.mrf.mxu0
        %8196 = vmatprep.mubr.f32.mxu0 0.0
        %8197 = vmatmul.mubr.f32.gmra.mxu0 %v8070
        %v8198 = vpop.f32.mrf.mxu0
        %v8199 = vadd.f32 0.0, %v8198
        %v8200 = vpop.f32.mrf.mxu0
        %8201 = vmatprep.mubr.f32.mxu0 0.0
        %8202 = vmatmul.mubr.f32.gmra.mxu0 %v8072
        %v8203 = vpop.f32.mrf.mxu0
        %v8204 = vadd.f32 0.0, %v8203
        %v8205 = vpop.f32.mrf.mxu0
        %8206 = vmatprep.mubr.f32.mxu0 0.0
        %8207 = vmatmul.mubr.f32.gmra.mxu0 %v8074
        %v8208 = vpop.f32.mrf.mxu0
        %v8209 = vadd.f32 0.0, %v8208
        %v8210 = vpop.f32.mrf.mxu0
        %8211 = vmatprep.mubr.f32.mxu0 0.0
        %8212 = vmatmul.mubr.f32.gmra.mxu0 %v8076
        %v8213 = vpop.f32.mrf.mxu0
        %v8214 = vadd.f32 0.0, %v8213
        %v8215 = vpop.f32.mrf.mxu0
        %8216 = vmatprep.mubr.f32.mxu0 0.0
        %8217 = vmatmul.mubr.f32.gmra.mxu0 %v8078
        %v8218 = vpop.f32.mrf.mxu0
        %v8219 = vadd.f32 0.0, %v8218
        %v8220 = vpop.f32.mrf.mxu0
        %8221 = vmatprep.mubr.f32.mxu0 0.0
        %8222 = vmatmul.mubr.f32.gmra.mxu0 %v8080
        %v8223 = vpop.f32.mrf.mxu0
        %v8224 = vadd.f32 0.0, %v8223
        %v8225 = vpop.f32.mrf.mxu0
        %8226 = vdwg.mxu0
        %v8227 = vadd.f32 %v7492, %v8149
        %v8228 = vadd.f32 %v7497, %v8154
        %v8229 = vadd.f32 %v7502, %v8159
        %v8230 = vadd.f32 %v7507, %v8164
        %v8231 = vadd.f32 %v7512, %v8169
        %v8232 = vadd.f32 %v7517, %v8174
        %v8233 = vadd.f32 %v7522, %v8179
        %v8234 = vadd.f32 %v7527, %v8184
        %v8235 = vadd.f32 %v7532, %v8189
        %v8236 = vadd.f32 %v7537, %v8194
        %v8237 = vadd.f32 %v7542, %v8199
        %v8238 = vadd.f32 %v7547, %v8204
        %v8239 = vadd.f32 %v7552, %v8209
        %v8240 = vadd.f32 %v7557, %v8214
        %v8241 = vadd.f32 %v7562, %v8219
        %v8242 = vadd.f32 %v7567, %v8224
        %v8259 = vcombine.high %v8227, %v8227
        %v8261 = vunpack.c.l.s4 1966171168
        %v8262 = vunpack.c.0.s8 %v8261
        %v8263 = vlaneseq
        %v8264 = vshrl.u32 %v8263, 7
        %v8265 = vsub.s32 %v8262, %v8264
        %v8266 = vrot.slane %v8227, %v8265
        %v8268 = vunpack.c.l.s4 1966171168
        %v8269 = vunpack.c.0.s8 %v8268
        %v8270 = vlaneseq
        %v8271 = vshrl.u32 %v8270, 7
        %v8272 = vsub.s32 %v8269, %v8271
        %v8273 = vrot.slane %v8259, %v8272
        %v8274 = vcombine.high %v8266, %v8266
        %v8275 = vcombine.high %v8273, %v8273
        %v8277 = vunpack.c.l.s4 1966171168
        %v8278 = vunpack.c.0.s8 %v8277
        %v8279 = vlaneseq
        %v8280 = vshrl.u32 %v8279, 7
        %v8281 = vsub.s32 %v8278, %v8280
        %v8282 = vrot.slane %v8266, %v8281
        %v8284 = vunpack.c.l.s4 1966171168
        %v8285 = vunpack.c.0.s8 %v8284
        %v8286 = vlaneseq
        %v8287 = vshrl.u32 %v8286, 7
        %v8288 = vsub.s32 %v8285, %v8287
        %v8289 = vrot.slane %v8273, %v8288
        %v8291 = vunpack.c.l.s4 1966171168
        %v8292 = vunpack.c.0.s8 %v8291
        %v8293 = vlaneseq
        %v8294 = vshrl.u32 %v8293, 7
        %v8295 = vsub.s32 %v8292, %v8294
        %v8296 = vrot.slane %v8274, %v8295
        %v8298 = vunpack.c.l.s4 1966171168
        %v8299 = vunpack.c.0.s8 %v8298
        %v8300 = vlaneseq
        %v8301 = vshrl.u32 %v8300, 7
        %v8302 = vsub.s32 %v8299, %v8301
        %v8303 = vrot.slane %v8275, %v8302
        %v8304 = vcombine.high %v8282, %v8282
        %v8305 = vcombine.high %v8289, %v8289
        %v8306 = vcombine.high %v8296, %v8296
        %v8307 = vcombine.high %v8303, %v8303
        %v8308 = vcombine.high %v8228, %v8228
        %v8310 = vunpack.c.l.s4 1966171168
        %v8311 = vunpack.c.0.s8 %v8310
        %v8312 = vlaneseq
        %v8313 = vshrl.u32 %v8312, 7
        %v8314 = vsub.s32 %v8311, %v8313
        %v8315 = vrot.slane %v8228, %v8314
        %v8317 = vunpack.c.l.s4 1966171168
        %v8318 = vunpack.c.0.s8 %v8317
        %v8319 = vlaneseq
        %v8320 = vshrl.u32 %v8319, 7
        %v8321 = vsub.s32 %v8318, %v8320
        %v8322 = vrot.slane %v8308, %v8321
        %v8323 = vcombine.high %v8315, %v8315
        %v8324 = vcombine.high %v8322, %v8322
        %v8326 = vunpack.c.l.s4 1966171168
        %v8327 = vunpack.c.0.s8 %v8326
        %v8328 = vlaneseq
        %v8329 = vshrl.u32 %v8328, 7
        %v8330 = vsub.s32 %v8327, %v8329
        %v8331 = vrot.slane %v8315, %v8330
        %v8333 = vunpack.c.l.s4 1966171168
        %v8334 = vunpack.c.0.s8 %v8333
        %v8335 = vlaneseq
        %v8336 = vshrl.u32 %v8335, 7
        %v8337 = vsub.s32 %v8334, %v8336
        %v8338 = vrot.slane %v8322, %v8337
        %v8340 = vunpack.c.l.s4 1966171168
        %v8341 = vunpack.c.0.s8 %v8340
        %v8342 = vlaneseq
        %v8343 = vshrl.u32 %v8342, 7
        %v8344 = vsub.s32 %v8341, %v8343
        %v8345 = vrot.slane %v8323, %v8344
        %v8347 = vunpack.c.l.s4 1966171168
        %v8348 = vunpack.c.0.s8 %v8347
        %v8349 = vlaneseq
        %v8350 = vshrl.u32 %v8349, 7
        %v8351 = vsub.s32 %v8348, %v8350
        %v8352 = vrot.slane %v8324, %v8351
        %v8353 = vcombine.high %v8331, %v8331
        %v8354 = vcombine.high %v8338, %v8338
        %v8355 = vcombine.high %v8345, %v8345
        %v8356 = vcombine.high %v8352, %v8352
        %v8357 = vcombine.high %v8229, %v8229
        %v8359 = vunpack.c.l.s4 1966171168
        %v8360 = vunpack.c.0.s8 %v8359
        %v8361 = vlaneseq
        %v8362 = vshrl.u32 %v8361, 7
        %v8363 = vsub.s32 %v8360, %v8362
        %v8364 = vrot.slane %v8229, %v8363
        %v8366 = vunpack.c.l.s4 1966171168
        %v8367 = vunpack.c.0.s8 %v8366
        %v8368 = vlaneseq
        %v8369 = vshrl.u32 %v8368, 7
        %v8370 = vsub.s32 %v8367, %v8369
        %v8371 = vrot.slane %v8357, %v8370
        %v8372 = vcombine.high %v8364, %v8364
        %v8373 = vcombine.high %v8371, %v8371
        %v8375 = vunpack.c.l.s4 1966171168
        %v8376 = vunpack.c.0.s8 %v8375
        %v8377 = vlaneseq
        %v8378 = vshrl.u32 %v8377, 7
        %v8379 = vsub.s32 %v8376, %v8378
        %v8380 = vrot.slane %v8364, %v8379
        %v8382 = vunpack.c.l.s4 1966171168
        %v8383 = vunpack.c.0.s8 %v8382
        %v8384 = vlaneseq
        %v8385 = vshrl.u32 %v8384, 7
        %v8386 = vsub.s32 %v8383, %v8385
        %v8387 = vrot.slane %v8371, %v8386
        %v8389 = vunpack.c.l.s4 1966171168
        %v8390 = vunpack.c.0.s8 %v8389
        %v8391 = vlaneseq
        %v8392 = vshrl.u32 %v8391, 7
        %v8393 = vsub.s32 %v8390, %v8392
        %v8394 = vrot.slane %v8372, %v8393
        %v8396 = vunpack.c.l.s4 1966171168
        %v8397 = vunpack.c.0.s8 %v8396
        %v8398 = vlaneseq
        %v8399 = vshrl.u32 %v8398, 7
        %v8400 = vsub.s32 %v8397, %v8399
        %v8401 = vrot.slane %v8373, %v8400
        %v8402 = vcombine.high %v8380, %v8380
        %v8403 = vcombine.high %v8387, %v8387
        %v8404 = vcombine.high %v8394, %v8394
        %v8405 = vcombine.high %v8401, %v8401
        %v8406 = vcombine.high %v8230, %v8230
        %v8408 = vunpack.c.l.s4 1966171168
        %v8409 = vunpack.c.0.s8 %v8408
        %v8410 = vlaneseq
        %v8411 = vshrl.u32 %v8410, 7
        %v8412 = vsub.s32 %v8409, %v8411
        %v8413 = vrot.slane %v8230, %v8412
        %v8415 = vunpack.c.l.s4 1966171168
        %v8416 = vunpack.c.0.s8 %v8415
        %v8417 = vlaneseq
        %v8418 = vshrl.u32 %v8417, 7
        %v8419 = vsub.s32 %v8416, %v8418
        %v8420 = vrot.slane %v8406, %v8419
        %v8421 = vcombine.high %v8413, %v8413
        %v8422 = vcombine.high %v8420, %v8420
        %v8424 = vunpack.c.l.s4 1966171168
        %v8425 = vunpack.c.0.s8 %v8424
        %v8426 = vlaneseq
        %v8427 = vshrl.u32 %v8426, 7
        %v8428 = vsub.s32 %v8425, %v8427
        %v8429 = vrot.slane %v8413, %v8428
        %v8431 = vunpack.c.l.s4 1966171168
        %v8432 = vunpack.c.0.s8 %v8431
        %v8433 = vlaneseq
        %v8434 = vshrl.u32 %v8433, 7
        %v8435 = vsub.s32 %v8432, %v8434
        %v8436 = vrot.slane %v8420, %v8435
        %v8438 = vunpack.c.l.s4 1966171168
        %v8439 = vunpack.c.0.s8 %v8438
        %v8440 = vlaneseq
        %v8441 = vshrl.u32 %v8440, 7
        %v8442 = vsub.s32 %v8439, %v8441
        %v8443 = vrot.slane %v8421, %v8442
        %v8445 = vunpack.c.l.s4 1966171168
        %v8446 = vunpack.c.0.s8 %v8445
        %v8447 = vlaneseq
        %v8448 = vshrl.u32 %v8447, 7
        %v8449 = vsub.s32 %v8446, %v8448
        %v8450 = vrot.slane %v8422, %v8449
        %v8451 = vcombine.high %v8429, %v8429
        %v8452 = vcombine.high %v8436, %v8436
        %v8453 = vcombine.high %v8443, %v8443
        %v8454 = vcombine.high %v8450, %v8450
        %v8455 = vcombine.high %v8231, %v8231
        %v8457 = vunpack.c.l.s4 1966171168
        %v8458 = vunpack.c.0.s8 %v8457
        %v8459 = vlaneseq
        %v8460 = vshrl.u32 %v8459, 7
        %v8461 = vsub.s32 %v8458, %v8460
        %v8462 = vrot.slane %v8231, %v8461
        %v8464 = vunpack.c.l.s4 1966171168
        %v8465 = vunpack.c.0.s8 %v8464
        %v8466 = vlaneseq
        %v8467 = vshrl.u32 %v8466, 7
        %v8468 = vsub.s32 %v8465, %v8467
        %v8469 = vrot.slane %v8455, %v8468
        %v8470 = vcombine.high %v8462, %v8462
        %v8471 = vcombine.high %v8469, %v8469
        %v8473 = vunpack.c.l.s4 1966171168
        %v8474 = vunpack.c.0.s8 %v8473
        %v8475 = vlaneseq
        %v8476 = vshrl.u32 %v8475, 7
        %v8477 = vsub.s32 %v8474, %v8476
        %v8478 = vrot.slane %v8462, %v8477
        %v8480 = vunpack.c.l.s4 1966171168
        %v8481 = vunpack.c.0.s8 %v8480
        %v8482 = vlaneseq
        %v8483 = vshrl.u32 %v8482, 7
        %v8484 = vsub.s32 %v8481, %v8483
        %v8485 = vrot.slane %v8469, %v8484
        %v8487 = vunpack.c.l.s4 1966171168
        %v8488 = vunpack.c.0.s8 %v8487
        %v8489 = vlaneseq
        %v8490 = vshrl.u32 %v8489, 7
        %v8491 = vsub.s32 %v8488, %v8490
        %v8492 = vrot.slane %v8470, %v8491
        %v8494 = vunpack.c.l.s4 1966171168
        %v8495 = vunpack.c.0.s8 %v8494
        %v8496 = vlaneseq
        %v8497 = vshrl.u32 %v8496, 7
        %v8498 = vsub.s32 %v8495, %v8497
        %v8499 = vrot.slane %v8471, %v8498
        %v8500 = vcombine.high %v8478, %v8478
        %v8501 = vcombine.high %v8485, %v8485
        %v8502 = vcombine.high %v8492, %v8492
        %v8503 = vcombine.high %v8499, %v8499
        %v8504 = vcombine.high %v8232, %v8232
        %v8506 = vunpack.c.l.s4 1966171168
        %v8507 = vunpack.c.0.s8 %v8506
        %v8508 = vlaneseq
        %v8509 = vshrl.u32 %v8508, 7
        %v8510 = vsub.s32 %v8507, %v8509
        %v8511 = vrot.slane %v8232, %v8510
        %v8513 = vunpack.c.l.s4 1966171168
        %v8514 = vunpack.c.0.s8 %v8513
        %v8515 = vlaneseq
        %v8516 = vshrl.u32 %v8515, 7
        %v8517 = vsub.s32 %v8514, %v8516
        %v8518 = vrot.slane %v8504, %v8517
        %v8519 = vcombine.high %v8511, %v8511
        %v8520 = vcombine.high %v8518, %v8518
        %v8522 = vunpack.c.l.s4 1966171168
        %v8523 = vunpack.c.0.s8 %v8522
        %v8524 = vlaneseq
        %v8525 = vshrl.u32 %v8524, 7
        %v8526 = vsub.s32 %v8523, %v8525
        %v8527 = vrot.slane %v8511, %v8526
        %v8529 = vunpack.c.l.s4 1966171168
        %v8530 = vunpack.c.0.s8 %v8529
        %v8531 = vlaneseq
        %v8532 = vshrl.u32 %v8531, 7
        %v8533 = vsub.s32 %v8530, %v8532
        %v8534 = vrot.slane %v8518, %v8533
        %v8536 = vunpack.c.l.s4 1966171168
        %v8537 = vunpack.c.0.s8 %v8536
        %v8538 = vlaneseq
        %v8539 = vshrl.u32 %v8538, 7
        %v8540 = vsub.s32 %v8537, %v8539
        %v8541 = vrot.slane %v8519, %v8540
        %v8543 = vunpack.c.l.s4 1966171168
        %v8544 = vunpack.c.0.s8 %v8543
        %v8545 = vlaneseq
        %v8546 = vshrl.u32 %v8545, 7
        %v8547 = vsub.s32 %v8544, %v8546
        %v8548 = vrot.slane %v8520, %v8547
        %v8549 = vcombine.high %v8527, %v8527
        %v8550 = vcombine.high %v8534, %v8534
        %v8551 = vcombine.high %v8541, %v8541
        %v8552 = vcombine.high %v8548, %v8548
        %v8553 = vcombine.high %v8233, %v8233
        %v8555 = vunpack.c.l.s4 1966171168
        %v8556 = vunpack.c.0.s8 %v8555
        %v8557 = vlaneseq
        %v8558 = vshrl.u32 %v8557, 7
        %v8559 = vsub.s32 %v8556, %v8558
        %v8560 = vrot.slane %v8233, %v8559
        %v8562 = vunpack.c.l.s4 1966171168
        %v8563 = vunpack.c.0.s8 %v8562
        %v8564 = vlaneseq
        %v8565 = vshrl.u32 %v8564, 7
        %v8566 = vsub.s32 %v8563, %v8565
        %v8567 = vrot.slane %v8553, %v8566
        %v8568 = vcombine.high %v8560, %v8560
        %v8569 = vcombine.high %v8567, %v8567
        %v8571 = vunpack.c.l.s4 1966171168
        %v8572 = vunpack.c.0.s8 %v8571
        %v8573 = vlaneseq
        %v8574 = vshrl.u32 %v8573, 7
        %v8575 = vsub.s32 %v8572, %v8574
        %v8576 = vrot.slane %v8560, %v8575
        %v8578 = vunpack.c.l.s4 1966171168
        %v8579 = vunpack.c.0.s8 %v8578
        %v8580 = vlaneseq
        %v8581 = vshrl.u32 %v8580, 7
        %v8582 = vsub.s32 %v8579, %v8581
        %v8583 = vrot.slane %v8567, %v8582
        %v8585 = vunpack.c.l.s4 1966171168
        %v8586 = vunpack.c.0.s8 %v8585
        %v8587 = vlaneseq
        %v8588 = vshrl.u32 %v8587, 7
        %v8589 = vsub.s32 %v8586, %v8588
        %v8590 = vrot.slane %v8568, %v8589
        %v8592 = vunpack.c.l.s4 1966171168
        %v8593 = vunpack.c.0.s8 %v8592
        %v8594 = vlaneseq
        %v8595 = vshrl.u32 %v8594, 7
        %v8596 = vsub.s32 %v8593, %v8595
        %v8597 = vrot.slane %v8569, %v8596
        %v8598 = vcombine.high %v8576, %v8576
        %v8599 = vcombine.high %v8583, %v8583
        %v8600 = vcombine.high %v8590, %v8590
        %v8601 = vcombine.high %v8597, %v8597
        %v8602 = vcombine.high %v8234, %v8234
        %v8604 = vunpack.c.l.s4 1966171168
        %v8605 = vunpack.c.0.s8 %v8604
        %v8606 = vlaneseq
        %v8607 = vshrl.u32 %v8606, 7
        %v8608 = vsub.s32 %v8605, %v8607
        %v8609 = vrot.slane %v8234, %v8608
        %v8611 = vunpack.c.l.s4 1966171168
        %v8612 = vunpack.c.0.s8 %v8611
        %v8613 = vlaneseq
        %v8614 = vshrl.u32 %v8613, 7
        %v8615 = vsub.s32 %v8612, %v8614
        %v8616 = vrot.slane %v8602, %v8615
        %v8617 = vcombine.high %v8609, %v8609
        %v8618 = vcombine.high %v8616, %v8616
        %v8620 = vunpack.c.l.s4 1966171168
        %v8621 = vunpack.c.0.s8 %v8620
        %v8622 = vlaneseq
        %v8623 = vshrl.u32 %v8622, 7
        %v8624 = vsub.s32 %v8621, %v8623
        %v8625 = vrot.slane %v8609, %v8624
        %v8627 = vunpack.c.l.s4 1966171168
        %v8628 = vunpack.c.0.s8 %v8627
        %v8629 = vlaneseq
        %v8630 = vshrl.u32 %v8629, 7
        %v8631 = vsub.s32 %v8628, %v8630
        %v8632 = vrot.slane %v8616, %v8631
        %v8634 = vunpack.c.l.s4 1966171168
        %v8635 = vunpack.c.0.s8 %v8634
        %v8636 = vlaneseq
        %v8637 = vshrl.u32 %v8636, 7
        %v8638 = vsub.s32 %v8635, %v8637
        %v8639 = vrot.slane %v8617, %v8638
        %v8641 = vunpack.c.l.s4 1966171168
        %v8642 = vunpack.c.0.s8 %v8641
        %v8643 = vlaneseq
        %v8644 = vshrl.u32 %v8643, 7
        %v8645 = vsub.s32 %v8642, %v8644
        %v8646 = vrot.slane %v8618, %v8645
        %v8647 = vcombine.high %v8625, %v8625
        %v8648 = vcombine.high %v8632, %v8632
        %v8649 = vcombine.high %v8639, %v8639
        %v8650 = vcombine.high %v8646, %v8646
        %v8651 = vcombine.high %v8235, %v8235
        %v8653 = vunpack.c.l.s4 1966171168
        %v8654 = vunpack.c.0.s8 %v8653
        %v8655 = vlaneseq
        %v8656 = vshrl.u32 %v8655, 7
        %v8657 = vsub.s32 %v8654, %v8656
        %v8658 = vrot.slane %v8235, %v8657
        %v8660 = vunpack.c.l.s4 1966171168
        %v8661 = vunpack.c.0.s8 %v8660
        %v8662 = vlaneseq
        %v8663 = vshrl.u32 %v8662, 7
        %v8664 = vsub.s32 %v8661, %v8663
        %v8665 = vrot.slane %v8651, %v8664
        %v8666 = vcombine.high %v8658, %v8658
        %v8667 = vcombine.high %v8665, %v8665
        %v8669 = vunpack.c.l.s4 1966171168
        %v8670 = vunpack.c.0.s8 %v8669
        %v8671 = vlaneseq
        %v8672 = vshrl.u32 %v8671, 7
        %v8673 = vsub.s32 %v8670, %v8672
        %v8674 = vrot.slane %v8658, %v8673
        %v8676 = vunpack.c.l.s4 1966171168
        %v8677 = vunpack.c.0.s8 %v8676
        %v8678 = vlaneseq
        %v8679 = vshrl.u32 %v8678, 7
        %v8680 = vsub.s32 %v8677, %v8679
        %v8681 = vrot.slane %v8665, %v8680
        %v8683 = vunpack.c.l.s4 1966171168
        %v8684 = vunpack.c.0.s8 %v8683
        %v8685 = vlaneseq
        %v8686 = vshrl.u32 %v8685, 7
        %v8687 = vsub.s32 %v8684, %v8686
        %v8688 = vrot.slane %v8666, %v8687
        %v8690 = vunpack.c.l.s4 1966171168
        %v8691 = vunpack.c.0.s8 %v8690
        %v8692 = vlaneseq
        %v8693 = vshrl.u32 %v8692, 7
        %v8694 = vsub.s32 %v8691, %v8693
        %v8695 = vrot.slane %v8667, %v8694
        %v8696 = vcombine.high %v8674, %v8674
        %v8697 = vcombine.high %v8681, %v8681
        %v8698 = vcombine.high %v8688, %v8688
        %v8699 = vcombine.high %v8695, %v8695
        %v8700 = vcombine.high %v8236, %v8236
        %v8702 = vunpack.c.l.s4 1966171168
        %v8703 = vunpack.c.0.s8 %v8702
        %v8704 = vlaneseq
        %v8705 = vshrl.u32 %v8704, 7
        %v8706 = vsub.s32 %v8703, %v8705
        %v8707 = vrot.slane %v8236, %v8706
        %v8709 = vunpack.c.l.s4 1966171168
        %v8710 = vunpack.c.0.s8 %v8709
        %v8711 = vlaneseq
        %v8712 = vshrl.u32 %v8711, 7
        %v8713 = vsub.s32 %v8710, %v8712
        %v8714 = vrot.slane %v8700, %v8713
        %v8715 = vcombine.high %v8707, %v8707
        %v8716 = vcombine.high %v8714, %v8714
        %v8718 = vunpack.c.l.s4 1966171168
        %v8719 = vunpack.c.0.s8 %v8718
        %v8720 = vlaneseq
        %v8721 = vshrl.u32 %v8720, 7
        %v8722 = vsub.s32 %v8719, %v8721
        %v8723 = vrot.slane %v8707, %v8722
        %v8725 = vunpack.c.l.s4 1966171168
        %v8726 = vunpack.c.0.s8 %v8725
        %v8727 = vlaneseq
        %v8728 = vshrl.u32 %v8727, 7
        %v8729 = vsub.s32 %v8726, %v8728
        %v8730 = vrot.slane %v8714, %v8729
        %v8732 = vunpack.c.l.s4 1966171168
        %v8733 = vunpack.c.0.s8 %v8732
        %v8734 = vlaneseq
        %v8735 = vshrl.u32 %v8734, 7
        %v8736 = vsub.s32 %v8733, %v8735
        %v8737 = vrot.slane %v8715, %v8736
        %v8739 = vunpack.c.l.s4 1966171168
        %v8740 = vunpack.c.0.s8 %v8739
        %v8741 = vlaneseq
        %v8742 = vshrl.u32 %v8741, 7
        %v8743 = vsub.s32 %v8740, %v8742
        %v8744 = vrot.slane %v8716, %v8743
        %v8745 = vcombine.high %v8723, %v8723
        %v8746 = vcombine.high %v8730, %v8730
        %v8747 = vcombine.high %v8737, %v8737
        %v8748 = vcombine.high %v8744, %v8744
        %v8749 = vcombine.high %v8237, %v8237
        %v8751 = vunpack.c.l.s4 1966171168
        %v8752 = vunpack.c.0.s8 %v8751
        %v8753 = vlaneseq
        %v8754 = vshrl.u32 %v8753, 7
        %v8755 = vsub.s32 %v8752, %v8754
        %v8756 = vrot.slane %v8237, %v8755
        %v8758 = vunpack.c.l.s4 1966171168
        %v8759 = vunpack.c.0.s8 %v8758
        %v8760 = vlaneseq
        %v8761 = vshrl.u32 %v8760, 7
        %v8762 = vsub.s32 %v8759, %v8761
        %v8763 = vrot.slane %v8749, %v8762
        %v8764 = vcombine.high %v8756, %v8756
        %v8765 = vcombine.high %v8763, %v8763
        %v8767 = vunpack.c.l.s4 1966171168
        %v8768 = vunpack.c.0.s8 %v8767
        %v8769 = vlaneseq
        %v8770 = vshrl.u32 %v8769, 7
        %v8771 = vsub.s32 %v8768, %v8770
        %v8772 = vrot.slane %v8756, %v8771
        %v8774 = vunpack.c.l.s4 1966171168
        %v8775 = vunpack.c.0.s8 %v8774
        %v8776 = vlaneseq
        %v8777 = vshrl.u32 %v8776, 7
        %v8778 = vsub.s32 %v8775, %v8777
        %v8779 = vrot.slane %v8763, %v8778
        %v8781 = vunpack.c.l.s4 1966171168
        %v8782 = vunpack.c.0.s8 %v8781
        %v8783 = vlaneseq
        %v8784 = vshrl.u32 %v8783, 7
        %v8785 = vsub.s32 %v8782, %v8784
        %v8786 = vrot.slane %v8764, %v8785
        %v8788 = vunpack.c.l.s4 1966171168
        %v8789 = vunpack.c.0.s8 %v8788
        %v8790 = vlaneseq
        %v8791 = vshrl.u32 %v8790, 7
        %v8792 = vsub.s32 %v8789, %v8791
        %v8793 = vrot.slane %v8765, %v8792
        %v8794 = vcombine.high %v8772, %v8772
        %v8795 = vcombine.high %v8779, %v8779
        %v8796 = vcombine.high %v8786, %v8786
        %v8797 = vcombine.high %v8793, %v8793
        %v8798 = vcombine.high %v8238, %v8238
        %v8800 = vunpack.c.l.s4 1966171168
        %v8801 = vunpack.c.0.s8 %v8800
        %v8802 = vlaneseq
        %v8803 = vshrl.u32 %v8802, 7
        %v8804 = vsub.s32 %v8801, %v8803
        %v8805 = vrot.slane %v8238, %v8804
        %v8807 = vunpack.c.l.s4 1966171168
        %v8808 = vunpack.c.0.s8 %v8807
        %v8809 = vlaneseq
        %v8810 = vshrl.u32 %v8809, 7
        %v8811 = vsub.s32 %v8808, %v8810
        %v8812 = vrot.slane %v8798, %v8811
        %v8813 = vcombine.high %v8805, %v8805
        %v8814 = vcombine.high %v8812, %v8812
        %v8816 = vunpack.c.l.s4 1966171168
        %v8817 = vunpack.c.0.s8 %v8816
        %v8818 = vlaneseq
        %v8819 = vshrl.u32 %v8818, 7
        %v8820 = vsub.s32 %v8817, %v8819
        %v8821 = vrot.slane %v8805, %v8820
        %v8823 = vunpack.c.l.s4 1966171168
        %v8824 = vunpack.c.0.s8 %v8823
        %v8825 = vlaneseq
        %v8826 = vshrl.u32 %v8825, 7
        %v8827 = vsub.s32 %v8824, %v8826
        %v8828 = vrot.slane %v8812, %v8827
        %v8830 = vunpack.c.l.s4 1966171168
        %v8831 = vunpack.c.0.s8 %v8830
        %v8832 = vlaneseq
        %v8833 = vshrl.u32 %v8832, 7
        %v8834 = vsub.s32 %v8831, %v8833
        %v8835 = vrot.slane %v8813, %v8834
        %v8837 = vunpack.c.l.s4 1966171168
        %v8838 = vunpack.c.0.s8 %v8837
        %v8839 = vlaneseq
        %v8840 = vshrl.u32 %v8839, 7
        %v8841 = vsub.s32 %v8838, %v8840
        %v8842 = vrot.slane %v8814, %v8841
        %v8843 = vcombine.high %v8821, %v8821
        %v8844 = vcombine.high %v8828, %v8828
        %v8845 = vcombine.high %v8835, %v8835
        %v8846 = vcombine.high %v8842, %v8842
        %v8847 = vcombine.high %v8239, %v8239
        %v8849 = vunpack.c.l.s4 1966171168
        %v8850 = vunpack.c.0.s8 %v8849
        %v8851 = vlaneseq
        %v8852 = vshrl.u32 %v8851, 7
        %v8853 = vsub.s32 %v8850, %v8852
        %v8854 = vrot.slane %v8239, %v8853
        %v8856 = vunpack.c.l.s4 1966171168
        %v8857 = vunpack.c.0.s8 %v8856
        %v8858 = vlaneseq
        %v8859 = vshrl.u32 %v8858, 7
        %v8860 = vsub.s32 %v8857, %v8859
        %v8861 = vrot.slane %v8847, %v8860
        %v8862 = vcombine.high %v8854, %v8854
        %v8863 = vcombine.high %v8861, %v8861
        %v8865 = vunpack.c.l.s4 1966171168
        %v8866 = vunpack.c.0.s8 %v8865
        %v8867 = vlaneseq
        %v8868 = vshrl.u32 %v8867, 7
        %v8869 = vsub.s32 %v8866, %v8868
        %v8870 = vrot.slane %v8854, %v8869
        %v8872 = vunpack.c.l.s4 1966171168
        %v8873 = vunpack.c.0.s8 %v8872
        %v8874 = vlaneseq
        %v8875 = vshrl.u32 %v8874, 7
        %v8876 = vsub.s32 %v8873, %v8875
        %v8877 = vrot.slane %v8861, %v8876
        %v8879 = vunpack.c.l.s4 1966171168
        %v8880 = vunpack.c.0.s8 %v8879
        %v8881 = vlaneseq
        %v8882 = vshrl.u32 %v8881, 7
        %v8883 = vsub.s32 %v8880, %v8882
        %v8884 = vrot.slane %v8862, %v8883
        %v8886 = vunpack.c.l.s4 1966171168
        %v8887 = vunpack.c.0.s8 %v8886
        %v8888 = vlaneseq
        %v8889 = vshrl.u32 %v8888, 7
        %v8890 = vsub.s32 %v8887, %v8889
        %v8891 = vrot.slane %v8863, %v8890
        %v8892 = vcombine.high %v8870, %v8870
        %v8893 = vcombine.high %v8877, %v8877
        %v8894 = vcombine.high %v8884, %v8884
        %v8895 = vcombine.high %v8891, %v8891
        %v8896 = vcombine.high %v8240, %v8240
        %v8898 = vunpack.c.l.s4 1966171168
        %v8899 = vunpack.c.0.s8 %v8898
        %v8900 = vlaneseq
        %v8901 = vshrl.u32 %v8900, 7
        %v8902 = vsub.s32 %v8899, %v8901
        %v8903 = vrot.slane %v8240, %v8902
        %v8905 = vunpack.c.l.s4 1966171168
        %v8906 = vunpack.c.0.s8 %v8905
        %v8907 = vlaneseq
        %v8908 = vshrl.u32 %v8907, 7
        %v8909 = vsub.s32 %v8906, %v8908
        %v8910 = vrot.slane %v8896, %v8909
        %v8911 = vcombine.high %v8903, %v8903
        %v8912 = vcombine.high %v8910, %v8910
        %v8914 = vunpack.c.l.s4 1966171168
        %v8915 = vunpack.c.0.s8 %v8914
        %v8916 = vlaneseq
        %v8917 = vshrl.u32 %v8916, 7
        %v8918 = vsub.s32 %v8915, %v8917
        %v8919 = vrot.slane %v8903, %v8918
        %v8921 = vunpack.c.l.s4 1966171168
        %v8922 = vunpack.c.0.s8 %v8921
        %v8923 = vlaneseq
        %v8924 = vshrl.u32 %v8923, 7
        %v8925 = vsub.s32 %v8922, %v8924
        %v8926 = vrot.slane %v8910, %v8925
        %v8928 = vunpack.c.l.s4 1966171168
        %v8929 = vunpack.c.0.s8 %v8928
        %v8930 = vlaneseq
        %v8931 = vshrl.u32 %v8930, 7
        %v8932 = vsub.s32 %v8929, %v8931
        %v8933 = vrot.slane %v8911, %v8932
        %v8935 = vunpack.c.l.s4 1966171168
        %v8936 = vunpack.c.0.s8 %v8935
        %v8937 = vlaneseq
        %v8938 = vshrl.u32 %v8937, 7
        %v8939 = vsub.s32 %v8936, %v8938
        %v8940 = vrot.slane %v8912, %v8939
        %v8941 = vcombine.high %v8919, %v8919
        %v8942 = vcombine.high %v8926, %v8926
        %v8943 = vcombine.high %v8933, %v8933
        %v8944 = vcombine.high %v8940, %v8940
        %v8945 = vcombine.high %v8241, %v8241
        %v8947 = vunpack.c.l.s4 1966171168
        %v8948 = vunpack.c.0.s8 %v8947
        %v8949 = vlaneseq
        %v8950 = vshrl.u32 %v8949, 7
        %v8951 = vsub.s32 %v8948, %v8950
        %v8952 = vrot.slane %v8241, %v8951
        %v8954 = vunpack.c.l.s4 1966171168
        %v8955 = vunpack.c.0.s8 %v8954
        %v8956 = vlaneseq
        %v8957 = vshrl.u32 %v8956, 7
        %v8958 = vsub.s32 %v8955, %v8957
        %v8959 = vrot.slane %v8945, %v8958
        %v8960 = vcombine.high %v8952, %v8952
        %v8961 = vcombine.high %v8959, %v8959
        %v8963 = vunpack.c.l.s4 1966171168
        %v8964 = vunpack.c.0.s8 %v8963
        %v8965 = vlaneseq
        %v8966 = vshrl.u32 %v8965, 7
        %v8967 = vsub.s32 %v8964, %v8966
        %v8968 = vrot.slane %v8952, %v8967
        %v8970 = vunpack.c.l.s4 1966171168
        %v8971 = vunpack.c.0.s8 %v8970
        %v8972 = vlaneseq
        %v8973 = vshrl.u32 %v8972, 7
        %v8974 = vsub.s32 %v8971, %v8973
        %v8975 = vrot.slane %v8959, %v8974
        %v8977 = vunpack.c.l.s4 1966171168
        %v8978 = vunpack.c.0.s8 %v8977
        %v8979 = vlaneseq
        %v8980 = vshrl.u32 %v8979, 7
        %v8981 = vsub.s32 %v8978, %v8980
        %v8982 = vrot.slane %v8960, %v8981
        %v8984 = vunpack.c.l.s4 1966171168
        %v8985 = vunpack.c.0.s8 %v8984
        %v8986 = vlaneseq
        %v8987 = vshrl.u32 %v8986, 7
        %v8988 = vsub.s32 %v8985, %v8987
        %v8989 = vrot.slane %v8961, %v8988
        %v8990 = vcombine.high %v8968, %v8968
        %v8991 = vcombine.high %v8975, %v8975
        %v8992 = vcombine.high %v8982, %v8982
        %v8993 = vcombine.high %v8989, %v8989
        %v8994 = vcombine.high %v8242, %v8242
        %v8996 = vunpack.c.l.s4 1966171168
        %v8997 = vunpack.c.0.s8 %v8996
        %v8998 = vlaneseq
        %v8999 = vshrl.u32 %v8998, 7
        %v9000 = vsub.s32 %v8997, %v8999
        %v9001 = vrot.slane %v8242, %v9000
        %v9003 = vunpack.c.l.s4 1966171168
        %v9004 = vunpack.c.0.s8 %v9003
        %v9005 = vlaneseq
        %v9006 = vshrl.u32 %v9005, 7
        %v9007 = vsub.s32 %v9004, %v9006
        %v9008 = vrot.slane %v8994, %v9007
        %v9009 = vcombine.high %v9001, %v9001
        %v9010 = vcombine.high %v9008, %v9008
        %v9012 = vunpack.c.l.s4 1966171168
        %v9013 = vunpack.c.0.s8 %v9012
        %v9014 = vlaneseq
        %v9015 = vshrl.u32 %v9014, 7
        %v9016 = vsub.s32 %v9013, %v9015
        %v9017 = vrot.slane %v9001, %v9016
        %v9019 = vunpack.c.l.s4 1966171168
        %v9020 = vunpack.c.0.s8 %v9019
        %v9021 = vlaneseq
        %v9022 = vshrl.u32 %v9021, 7
        %v9023 = vsub.s32 %v9020, %v9022
        %v9024 = vrot.slane %v9008, %v9023
        %v9026 = vunpack.c.l.s4 1966171168
        %v9027 = vunpack.c.0.s8 %v9026
        %v9028 = vlaneseq
        %v9029 = vshrl.u32 %v9028, 7
        %v9030 = vsub.s32 %v9027, %v9029
        %v9031 = vrot.slane %v9009, %v9030
        %v9033 = vunpack.c.l.s4 1966171168
        %v9034 = vunpack.c.0.s8 %v9033
        %v9035 = vlaneseq
        %v9036 = vshrl.u32 %v9035, 7
        %v9037 = vsub.s32 %v9034, %v9036
        %v9038 = vrot.slane %v9010, %v9037
        %v9039 = vcombine.high %v9017, %v9017
        %v9040 = vcombine.high %v9024, %v9024
        %v9041 = vcombine.high %v9031, %v9031
        %v9042 = vcombine.high %v9038, %v9038
        %9171 = vst [vmem:[%s145 + $0x3] sm:$0x1] %v8282
        %9172 = vst [vmem:[%s145 + $0xb] sm:$0x1] %v8296
        %9173 = vst [vmem:[%s145 + $0x13] sm:$0x1] %v8304
        %9174 = vst [vmem:[%s145 + $0x1b] sm:$0x1] %v8306
        %9175 = vst [vmem:[%s145 + $0x23] sm:$0x1] %v8289
        %9176 = vst [vmem:[%s145 + $0x2b] sm:$0x1] %v8303
        %9177 = vst [vmem:[%s145 + $0x33] sm:$0x1] %v8305
        %9178 = vst [vmem:[%s145 + $0x3b] sm:$0x1] %v8307
        %9179 = vst [vmem:[%s145 + $0x43] sm:$0x1] %v8331
        %9180 = vst [vmem:[%s145 + $0x4b] sm:$0x1] %v8345
        %9181 = vst [vmem:[%s145 + $0x53] sm:$0x1] %v8353
        %9182 = vst [vmem:[%s145 + $0x5b] sm:$0x1] %v8355
        %9183 = vst [vmem:[%s145 + $0x63] sm:$0x1] %v8338
        %9184 = vst [vmem:[%s145 + $0x6b] sm:$0x1] %v8352
        %9185 = vst [vmem:[%s145 + $0x73] sm:$0x1] %v8354
        %9186 = vst [vmem:[%s145 + $0x7b] sm:$0x1] %v8356
        %9187 = vst [vmem:[%s145 + $0x83] sm:$0x1] %v8380
        %9188 = vst [vmem:[%s145 + $0x8b] sm:$0x1] %v8394
        %9189 = vst [vmem:[%s145 + $0x93] sm:$0x1] %v8402
        %9190 = vst [vmem:[%s145 + $0x9b] sm:$0x1] %v8404
        %9191 = vst [vmem:[%s145 + $0xa3] sm:$0x1] %v8387
        %9192 = vst [vmem:[%s145 + $0xab] sm:$0x1] %v8401
        %9193 = vst [vmem:[%s145 + $0xb3] sm:$0x1] %v8403
        %9194 = vst [vmem:[%s145 + $0xbb] sm:$0x1] %v8405
        %9195 = vst [vmem:[%s145 + $0xc3] sm:$0x1] %v8429
        %9196 = vst [vmem:[%s145 + $0xcb] sm:$0x1] %v8443
        %9197 = vst [vmem:[%s145 + $0xd3] sm:$0x1] %v8451
        %9198 = vst [vmem:[%s145 + $0xdb] sm:$0x1] %v8453
        %9199 = vst [vmem:[%s145 + $0xe3] sm:$0x1] %v8436
        %9200 = vst [vmem:[%s145 + $0xeb] sm:$0x1] %v8450
        %9201 = vst [vmem:[%s145 + $0xf3] sm:$0x1] %v8452
        %9202 = vst [vmem:[%s145 + $0xfb] sm:$0x1] %v8454
        %9203 = vst [vmem:[%s145 + $0x103] sm:$0x1] %v8478
        %9204 = vst [vmem:[%s145 + $0x10b] sm:$0x1] %v8492
        %9205 = vst [vmem:[%s145 + $0x113] sm:$0x1] %v8500
        %9206 = vst [vmem:[%s145 + $0x11b] sm:$0x1] %v8502
        %9207 = vst [vmem:[%s145 + $0x123] sm:$0x1] %v8485
        %9208 = vst [vmem:[%s145 + $0x12b] sm:$0x1] %v8499
        %9209 = vst [vmem:[%s145 + $0x133] sm:$0x1] %v8501
        %9210 = vst [vmem:[%s145 + $0x13b] sm:$0x1] %v8503
        %9211 = vst [vmem:[%s145 + $0x143] sm:$0x1] %v8527
        %9212 = vst [vmem:[%s145 + $0x14b] sm:$0x1] %v8541
        %9213 = vst [vmem:[%s145 + $0x153] sm:$0x1] %v8549
        %9214 = vst [vmem:[%s145 + $0x15b] sm:$0x1] %v8551
        %9215 = vst [vmem:[%s145 + $0x163] sm:$0x1] %v8534
        %9216 = vst [vmem:[%s145 + $0x16b] sm:$0x1] %v8548
        %9217 = vst [vmem:[%s145 + $0x173] sm:$0x1] %v8550
        %9218 = vst [vmem:[%s145 + $0x17b] sm:$0x1] %v8552
        %9219 = vst [vmem:[%s145 + $0x183] sm:$0x1] %v8576
        %9220 = vst [vmem:[%s145 + $0x18b] sm:$0x1] %v8590
        %9221 = vst [vmem:[%s145 + $0x193] sm:$0x1] %v8598
        %9222 = vst [vmem:[%s145 + $0x19b] sm:$0x1] %v8600
        %9223 = vst [vmem:[%s145 + $0x1a3] sm:$0x1] %v8583
        %9224 = vst [vmem:[%s145 + $0x1ab] sm:$0x1] %v8597
        %9225 = vst [vmem:[%s145 + $0x1b3] sm:$0x1] %v8599
        %9226 = vst [vmem:[%s145 + $0x1bb] sm:$0x1] %v8601
        %9227 = vst [vmem:[%s145 + $0x1c3] sm:$0x1] %v8625
        %9228 = vst [vmem:[%s145 + $0x1cb] sm:$0x1] %v8639
        %9229 = vst [vmem:[%s145 + $0x1d3] sm:$0x1] %v8647
        %9230 = vst [vmem:[%s145 + $0x1db] sm:$0x1] %v8649
        %9231 = vst [vmem:[%s145 + $0x1e3] sm:$0x1] %v8632
        %9232 = vst [vmem:[%s145 + $0x1eb] sm:$0x1] %v8646
        %9233 = vst [vmem:[%s145 + $0x1f3] sm:$0x1] %v8648
        %9234 = vst [vmem:[%s145 + $0x1fb] sm:$0x1] %v8650
        %9235 = vst [vmem:[%s145 + $0x203] sm:$0x1] %v8674
        %9236 = vst [vmem:[%s145 + $0x20b] sm:$0x1] %v8688
        %9237 = vst [vmem:[%s145 + $0x213] sm:$0x1] %v8696
        %9238 = vst [vmem:[%s145 + $0x21b] sm:$0x1] %v8698
        %9239 = vst [vmem:[%s145 + $0x223] sm:$0x1] %v8681
        %9240 = vst [vmem:[%s145 + $0x22b] sm:$0x1] %v8695
        %9241 = vst [vmem:[%s145 + $0x233] sm:$0x1] %v8697
        %9242 = vst [vmem:[%s145 + $0x23b] sm:$0x1] %v8699
        %9243 = vst [vmem:[%s145 + $0x243] sm:$0x1] %v8723
        %9244 = vst [vmem:[%s145 + $0x24b] sm:$0x1] %v8737
        %9245 = vst [vmem:[%s145 + $0x253] sm:$0x1] %v8745
        %9246 = vst [vmem:[%s145 + $0x25b] sm:$0x1] %v8747
        %9247 = vst [vmem:[%s145 + $0x263] sm:$0x1] %v8730
        %9248 = vst [vmem:[%s145 + $0x26b] sm:$0x1] %v8744
        %9249 = vst [vmem:[%s145 + $0x273] sm:$0x1] %v8746
        %9250 = vst [vmem:[%s145 + $0x27b] sm:$0x1] %v8748
        %9251 = vst [vmem:[%s145 + $0x283] sm:$0x1] %v8772
        %9252 = vst [vmem:[%s145 + $0x28b] sm:$0x1] %v8786
        %9253 = vst [vmem:[%s145 + $0x293] sm:$0x1] %v8794
        %9254 = vst [vmem:[%s145 + $0x29b] sm:$0x1] %v8796
        %9255 = vst [vmem:[%s145 + $0x2a3] sm:$0x1] %v8779
        %9256 = vst [vmem:[%s145 + $0x2ab] sm:$0x1] %v8793
        %9257 = vst [vmem:[%s145 + $0x2b3] sm:$0x1] %v8795
        %9258 = vst [vmem:[%s145 + $0x2bb] sm:$0x1] %v8797
        %9259 = vst [vmem:[%s145 + $0x2c3] sm:$0x1] %v8821
        %9260 = vst [vmem:[%s145 + $0x2cb] sm:$0x1] %v8835
        %9261 = vst [vmem:[%s145 + $0x2d3] sm:$0x1] %v8843
        %9262 = vst [vmem:[%s145 + $0x2db] sm:$0x1] %v8845
        %9263 = vst [vmem:[%s145 + $0x2e3] sm:$0x1] %v8828
        %9264 = vst [vmem:[%s145 + $0x2eb] sm:$0x1] %v8842
        %9265 = vst [vmem:[%s145 + $0x2f3] sm:$0x1] %v8844
        %9266 = vst [vmem:[%s145 + $0x2fb] sm:$0x1] %v8846
        %9267 = vst [vmem:[%s145 + $0x303] sm:$0x1] %v8870
        %9268 = vst [vmem:[%s145 + $0x30b] sm:$0x1] %v8884
        %9269 = vst [vmem:[%s145 + $0x313] sm:$0x1] %v8892
        %9270 = vst [vmem:[%s145 + $0x31b] sm:$0x1] %v8894
        %9271 = vst [vmem:[%s145 + $0x323] sm:$0x1] %v8877
        %9272 = vst [vmem:[%s145 + $0x32b] sm:$0x1] %v8891
        %9273 = vst [vmem:[%s145 + $0x333] sm:$0x1] %v8893
        %9274 = vst [vmem:[%s145 + $0x33b] sm:$0x1] %v8895
        %9275 = vst [vmem:[%s145 + $0x343] sm:$0x1] %v8919
        %9276 = vst [vmem:[%s145 + $0x34b] sm:$0x1] %v8933
        %9277 = vst [vmem:[%s145 + $0x353] sm:$0x1] %v8941
        %9278 = vst [vmem:[%s145 + $0x35b] sm:$0x1] %v8943
        %9279 = vst [vmem:[%s145 + $0x363] sm:$0x1] %v8926
        %9280 = vst [vmem:[%s145 + $0x36b] sm:$0x1] %v8940
        %9281 = vst [vmem:[%s145 + $0x373] sm:$0x1] %v8942
        %9282 = vst [vmem:[%s145 + $0x37b] sm:$0x1] %v8944
        %9283 = vst [vmem:[%s145 + $0x383] sm:$0x1] %v8968
        %9284 = vst [vmem:[%s145 + $0x38b] sm:$0x1] %v8982
        %9285 = vst [vmem:[%s145 + $0x393] sm:$0x1] %v8990
        %9286 = vst [vmem:[%s145 + $0x39b] sm:$0x1] %v8992
        %9287 = vst [vmem:[%s145 + $0x3a3] sm:$0x1] %v8975
        %9288 = vst [vmem:[%s145 + $0x3ab] sm:$0x1] %v8989
        %9289 = vst [vmem:[%s145 + $0x3b3] sm:$0x1] %v8991
        %9290 = vst [vmem:[%s145 + $0x3bb] sm:$0x1] %v8993
        %9291 = vst [vmem:[%s145 + $0x3c3] sm:$0x1] %v9017
        %9292 = vst [vmem:[%s145 + $0x3cb] sm:$0x1] %v9031
        %9293 = vst [vmem:[%s145 + $0x3d3] sm:$0x1] %v9039
        %9294 = vst [vmem:[%s145 + $0x3db] sm:$0x1] %v9041
        %9295 = vst [vmem:[%s145 + $0x3e3] sm:$0x1] %v9024
        %9296 = vst [vmem:[%s145 + $0x3eb] sm:$0x1] %v9038
        %9297 = vst [vmem:[%s145 + $0x3f3] sm:$0x1] %v9040
        %9298 = vst [vmem:[%s145 + $0x3fb] sm:$0x1] %v9042
        %9299 = vmatprep.subr.mxu0 0.0
        %9300 = vmatpush1.msra.mxu0 0.0
        %9301 = vmatprep.subr.mxu0 0.0
        %9302 = vmatpush1.msra.mxu0 0.0
        %9303 = vmatprep.subr.mxu0 0.0
        %9304 = vmatpush1.msra.mxu0 0.0
        %9305 = vmatprep.subr.mxu0 0.0
        %9306 = vmatpush1.msra.mxu0 0.0
        %9307 = vmatprep.subr.mxu0 0.0
        %9308 = vmatpush1.msra.mxu0 0.0
        %9309 = vmatprep.subr.mxu0 0.0
        %9310 = vmatpush1.msra.mxu0 0.0
        %9311 = vmatprep.subr.mxu0 0.0
        %9312 = vmatpush1.msra.mxu0 0.0
        %9313 = vmatprep.subr.mxu0 0.0
        %9314 = vmatpush1.msra.mxu0 0.0
        %9315 = vmatprep.subr.mxu0 0.0
        %9316 = vmatpush1.msra.mxu0 %v181
        %9317 = vmatprep.subr.mxu0 0.0
        %9318 = vmatpush1.msra.mxu0 %v180
        %9319 = vmatprep.subr.mxu0 0.0
        %9320 = vmatpush1.msra.mxu0 %v179
        %9321 = vmatprep.subr.mxu0 0.0
        %9322 = vmatpush1.msra.mxu0 %v178
        %9323 = vmatprep.subr.mxu0 0.0
        %9324 = vmatpush1.msra.mxu0 %v177
        %9325 = vmatprep.subr.mxu0 0.0
        %9326 = vmatpush1.msra.mxu0 %v176
        %9327 = vmatprep.subr.mxu0 0.0
        %9328 = vmatpush1.msra.mxu0 %v175
        %9329 = vmatprep.subr.mxu0 0.0
        %9330 = vmatpush1.msra.mxu0 %v174
        %9331 = vmatprep.subr.mxu0 0.0
        %9332 = vmatpush2.msra.mxu0 0.0
        %9333 = vmatprep.subr.mxu0 0.0
        %9334 = vmatpush2.msra.mxu0 0.0
        %9335 = vmatprep.subr.mxu0 0.0
        %9336 = vmatpush2.msra.mxu0 0.0
        %9337 = vmatprep.subr.mxu0 0.0
        %9338 = vmatpush2.msra.mxu0 0.0
        %9339 = vmatprep.subr.mxu0 0.0
        %9340 = vmatpush2.msra.mxu0 0.0
        %9341 = vmatprep.subr.mxu0 0.0
        %9342 = vmatpush2.msra.mxu0 0.0
        %9343 = vmatprep.subr.mxu0 0.0
        %9344 = vmatpush2.msra.mxu0 0.0
        %9345 = vmatprep.subr.mxu0 0.0
        %9346 = vmatpush2.msra.mxu0 0.0
        %9347 = vmatprep.subr.mxu0 0.0
        %9348 = vmatpush2.msra.mxu0 0.0
        %9349 = vmatprep.subr.mxu0 0.0
        %9350 = vmatpush2.msra.mxu0 0.0
        %9351 = vmatprep.subr.mxu0 0.0
        %9352 = vmatpush2.msra.mxu0 0.0
        %9353 = vmatprep.subr.mxu0 0.0
        %9354 = vmatpush2.msra.mxu0 0.0
        %9355 = vmatprep.subr.mxu0 0.0
        %9356 = vmatpush2.msra.mxu0 0.0
        %9357 = vmatprep.subr.mxu0 0.0
        %9358 = vmatpush2.msra.mxu0 0.0
        %9359 = vmatprep.subr.mxu0 0.0
        %9360 = vmatpush2.msra.mxu0 0.0
        %9361 = vmatprep.subr.mxu0 0.0
        %9362 = vmatpush2.msra.mxu0 0.0
        %9363 = vmatprep.mubr.f32.mxu0 0.0
        %9364 = vmatmul.mubr.f32.gmra.mxu0 %v8050
        %v9365 = vpop.f32.mrf.mxu0
        %v9366 = vadd.f32 0.0, %v9365
        %v9367 = vpop.f32.mrf.mxu0
        %9368 = vmatprep.mubr.f32.mxu0 0.0
        %9369 = vmatmul.mubr.f32.gmra.mxu0 %v8052
        %v9370 = vpop.f32.mrf.mxu0
        %v9371 = vadd.f32 0.0, %v9370
        %v9372 = vpop.f32.mrf.mxu0
        %9373 = vmatprep.mubr.f32.mxu0 0.0
        %9374 = vmatmul.mubr.f32.gmra.mxu0 %v8054
        %v9375 = vpop.f32.mrf.mxu0
        %v9376 = vadd.f32 0.0, %v9375
        %v9377 = vpop.f32.mrf.mxu0
        %9378 = vmatprep.mubr.f32.mxu0 0.0
        %9379 = vmatmul.mubr.f32.gmra.mxu0 %v8056
        %v9380 = vpop.f32.mrf.mxu0
        %v9381 = vadd.f32 0.0, %v9380
        %v9382 = vpop.f32.mrf.mxu0
        %9383 = vmatprep.mubr.f32.mxu0 0.0
        %9384 = vmatmul.mubr.f32.gmra.mxu0 %v8058
        %v9385 = vpop.f32.mrf.mxu0
        %v9386 = vadd.f32 0.0, %v9385
        %v9387 = vpop.f32.mrf.mxu0
        %9388 = vmatprep.mubr.f32.mxu0 0.0
        %9389 = vmatmul.mubr.f32.gmra.mxu0 %v8060
        %v9390 = vpop.f32.mrf.mxu0
        %v9391 = vadd.f32 0.0, %v9390
        %v9392 = vpop.f32.mrf.mxu0
        %9393 = vmatprep.mubr.f32.mxu0 0.0
        %9394 = vmatmul.mubr.f32.gmra.mxu0 %v8062
        %v9395 = vpop.f32.mrf.mxu0
        %v9396 = vadd.f32 0.0, %v9395
        %v9397 = vpop.f32.mrf.mxu0
        %9398 = vmatprep.mubr.f32.mxu0 0.0
        %9399 = vmatmul.mubr.f32.gmra.mxu0 %v8064
        %v9400 = vpop.f32.mrf.mxu0
        %v9401 = vadd.f32 0.0, %v9400
        %v9402 = vpop.f32.mrf.mxu0
        %9403 = vmatprep.mubr.f32.mxu0 0.0
        %9404 = vmatmul.mubr.f32.gmra.mxu0 %v8066
        %v9405 = vpop.f32.mrf.mxu0
        %v9406 = vadd.f32 0.0, %v9405
        %v9407 = vpop.f32.mrf.mxu0
        %9408 = vmatprep.mubr.f32.mxu0 0.0
        %9409 = vmatmul.mubr.f32.gmra.mxu0 %v8068
        %v9410 = vpop.f32.mrf.mxu0
        %v9411 = vadd.f32 0.0, %v9410
        %v9412 = vpop.f32.mrf.mxu0
        %9413 = vmatprep.mubr.f32.mxu0 0.0
        %9414 = vmatmul.mubr.f32.gmra.mxu0 %v8070
        %v9415 = vpop.f32.mrf.mxu0
        %v9416 = vadd.f32 0.0, %v9415
        %v9417 = vpop.f32.mrf.mxu0
        %9418 = vmatprep.mubr.f32.mxu0 0.0
        %9419 = vmatmul.mubr.f32.gmra.mxu0 %v8072
        %v9420 = vpop.f32.mrf.mxu0
        %v9421 = vadd.f32 0.0, %v9420
        %v9422 = vpop.f32.mrf.mxu0
        %9423 = vmatprep.mubr.f32.mxu0 0.0
        %9424 = vmatmul.mubr.f32.gmra.mxu0 %v8074
        %v9425 = vpop.f32.mrf.mxu0
        %v9426 = vadd.f32 0.0, %v9425
        %v9427 = vpop.f32.mrf.mxu0
        %9428 = vmatprep.mubr.f32.mxu0 0.0
        %9429 = vmatmul.mubr.f32.gmra.mxu0 %v8076
        %v9430 = vpop.f32.mrf.mxu0
        %v9431 = vadd.f32 0.0, %v9430
        %v9432 = vpop.f32.mrf.mxu0
        %9433 = vmatprep.mubr.f32.mxu0 0.0
        %9434 = vmatmul.mubr.f32.gmra.mxu0 %v8078
        %v9435 = vpop.f32.mrf.mxu0
        %v9436 = vadd.f32 0.0, %v9435
        %v9437 = vpop.f32.mrf.mxu0
        %9438 = vmatprep.mubr.f32.mxu0 0.0
        %9439 = vmatmul.mubr.f32.gmra.mxu0 %v8080
        %v9440 = vpop.f32.mrf.mxu0
        %v9441 = vadd.f32 0.0, %v9440
        %v9442 = vpop.f32.mrf.mxu0
        %9443 = vdwg.mxu0
        %9444 = vmatprep.subr.mxu0 0.0
        %9445 = vmatpush1.msra.mxu0 0.0
        %9446 = vmatprep.subr.mxu0 0.0
        %9447 = vmatpush1.msra.mxu0 0.0
        %9448 = vmatprep.subr.mxu0 0.0
        %9449 = vmatpush1.msra.mxu0 0.0
        %9450 = vmatprep.subr.mxu0 0.0
        %9451 = vmatpush1.msra.mxu0 0.0
        %9452 = vmatprep.subr.mxu0 0.0
        %9453 = vmatpush1.msra.mxu0 0.0
        %9454 = vmatprep.subr.mxu0 0.0
        %9455 = vmatpush1.msra.mxu0 0.0
        %9456 = vmatprep.subr.mxu0 0.0
        %9457 = vmatpush1.msra.mxu0 0.0
        %9458 = vmatprep.subr.mxu0 0.0
        %9459 = vmatpush1.msra.mxu0 0.0
        %9460 = vmatprep.subr.mxu0 0.0
        %9461 = vmatpush1.msra.mxu0 %v172
        %9462 = vmatprep.subr.mxu0 0.0
        %9463 = vmatpush1.msra.mxu0 %v171
        %9464 = vmatprep.subr.mxu0 0.0
        %9465 = vmatpush1.msra.mxu0 %v170
        %9466 = vmatprep.subr.mxu0 0.0
        %9467 = vmatpush1.msra.mxu0 %v169
        %9468 = vmatprep.subr.mxu0 0.0
        %9469 = vmatpush1.msra.mxu0 %v168
        %9470 = vmatprep.subr.mxu0 0.0
        %9471 = vmatpush1.msra.mxu0 %v167
        %9472 = vmatprep.subr.mxu0 0.0
        %9473 = vmatpush1.msra.mxu0 %v166
        %9474 = vmatprep.subr.mxu0 0.0
        %9475 = vmatpush1.msra.mxu0 %v165
        %9476 = vmatprep.subr.mxu0 0.0
        %9477 = vmatpush2.msra.mxu0 0.0
        %9478 = vmatprep.subr.mxu0 0.0
        %9479 = vmatpush2.msra.mxu0 0.0
        %9480 = vmatprep.subr.mxu0 0.0
        %9481 = vmatpush2.msra.mxu0 0.0
        %9482 = vmatprep.subr.mxu0 0.0
        %9483 = vmatpush2.msra.mxu0 0.0
        %9484 = vmatprep.subr.mxu0 0.0
        %9485 = vmatpush2.msra.mxu0 0.0
        %9486 = vmatprep.subr.mxu0 0.0
        %9487 = vmatpush2.msra.mxu0 0.0
        %9488 = vmatprep.subr.mxu0 0.0
        %9489 = vmatpush2.msra.mxu0 0.0
        %9490 = vmatprep.subr.mxu0 0.0
        %9491 = vmatpush2.msra.mxu0 0.0
        %9492 = vmatprep.subr.mxu0 0.0
        %9493 = vmatpush2.msra.mxu0 0.0
        %9494 = vmatprep.subr.mxu0 0.0
        %9495 = vmatpush2.msra.mxu0 0.0
        %9496 = vmatprep.subr.mxu0 0.0
        %9497 = vmatpush2.msra.mxu0 0.0
        %9498 = vmatprep.subr.mxu0 0.0
        %9499 = vmatpush2.msra.mxu0 0.0
        %9500 = vmatprep.subr.mxu0 0.0
        %9501 = vmatpush2.msra.mxu0 0.0
        %9502 = vmatprep.subr.mxu0 0.0
        %9503 = vmatpush2.msra.mxu0 0.0
        %9504 = vmatprep.subr.mxu0 0.0
        %9505 = vmatpush2.msra.mxu0 0.0
        %9506 = vmatprep.subr.mxu0 0.0
        %9507 = vmatpush2.msra.mxu0 0.0
        %9508 = vmatprep.mubr.f32.mxu0 0.0
        %9509 = vmatmul.mubr.f32.gmra.mxu0 %v6031
        %v9510 = vpop.f32.mrf.mxu0
        %v9511 = vadd.f32 %v9366, %v9510
        %v9512 = vpop.f32.mrf.mxu0
        %9513 = vmatprep.mubr.f32.mxu0 0.0
        %9514 = vmatmul.mubr.f32.gmra.mxu0 %v6033
        %v9515 = vpop.f32.mrf.mxu0
        %v9516 = vadd.f32 %v9371, %v9515
        %v9517 = vpop.f32.mrf.mxu0
        %9518 = vmatprep.mubr.f32.mxu0 0.0
        %9519 = vmatmul.mubr.f32.gmra.mxu0 %v6035
        %v9520 = vpop.f32.mrf.mxu0
        %v9521 = vadd.f32 %v9376, %v9520
        %v9522 = vpop.f32.mrf.mxu0
        %9523 = vmatprep.mubr.f32.mxu0 0.0
        %9524 = vmatmul.mubr.f32.gmra.mxu0 %v6037
        %v9525 = vpop.f32.mrf.mxu0
        %v9526 = vadd.f32 %v9381, %v9525
        %v9527 = vpop.f32.mrf.mxu0
        %9528 = vmatprep.mubr.f32.mxu0 0.0
        %9529 = vmatmul.mubr.f32.gmra.mxu0 %v6039
        %v9530 = vpop.f32.mrf.mxu0
        %v9531 = vadd.f32 %v9386, %v9530
        %v9532 = vpop.f32.mrf.mxu0
        %9533 = vmatprep.mubr.f32.mxu0 0.0
        %9534 = vmatmul.mubr.f32.gmra.mxu0 %v6041
        %v9535 = vpop.f32.mrf.mxu0
        %v9536 = vadd.f32 %v9391, %v9535
        %v9537 = vpop.f32.mrf.mxu0
        %9538 = vmatprep.mubr.f32.mxu0 0.0
        %9539 = vmatmul.mubr.f32.gmra.mxu0 %v6043
        %v9540 = vpop.f32.mrf.mxu0
        %v9541 = vadd.f32 %v9396, %v9540
        %v9542 = vpop.f32.mrf.mxu0
        %9543 = vmatprep.mubr.f32.mxu0 0.0
        %9544 = vmatmul.mubr.f32.gmra.mxu0 %v6045
        %v9545 = vpop.f32.mrf.mxu0
        %v9546 = vadd.f32 %v9401, %v9545
        %v9547 = vpop.f32.mrf.mxu0
        %9548 = vmatprep.mubr.f32.mxu0 0.0
        %9549 = vmatmul.mubr.f32.gmra.mxu0 %v6047
        %v9550 = vpop.f32.mrf.mxu0
        %v9551 = vadd.f32 %v9406, %v9550
        %v9552 = vpop.f32.mrf.mxu0
        %9553 = vmatprep.mubr.f32.mxu0 0.0
        %9554 = vmatmul.mubr.f32.gmra.mxu0 %v6049
        %v9555 = vpop.f32.mrf.mxu0
        %v9556 = vadd.f32 %v9411, %v9555
        %v9557 = vpop.f32.mrf.mxu0
        %9558 = vmatprep.mubr.f32.mxu0 0.0
        %9559 = vmatmul.mubr.f32.gmra.mxu0 %v6051
        %v9560 = vpop.f32.mrf.mxu0
        %v9561 = vadd.f32 %v9416, %v9560
        %v9562 = vpop.f32.mrf.mxu0
        %9563 = vmatprep.mubr.f32.mxu0 0.0
        %9564 = vmatmul.mubr.f32.gmra.mxu0 %v6053
        %v9565 = vpop.f32.mrf.mxu0
        %v9566 = vadd.f32 %v9421, %v9565
        %v9567 = vpop.f32.mrf.mxu0
        %9568 = vmatprep.mubr.f32.mxu0 0.0
        %9569 = vmatmul.mubr.f32.gmra.mxu0 %v6055
        %v9570 = vpop.f32.mrf.mxu0
        %v9571 = vadd.f32 %v9426, %v9570
        %v9572 = vpop.f32.mrf.mxu0
        %9573 = vmatprep.mubr.f32.mxu0 0.0
        %9574 = vmatmul.mubr.f32.gmra.mxu0 %v6057
        %v9575 = vpop.f32.mrf.mxu0
        %v9576 = vadd.f32 %v9431, %v9575
        %v9577 = vpop.f32.mrf.mxu0
        %9578 = vmatprep.mubr.f32.mxu0 0.0
        %9579 = vmatmul.mubr.f32.gmra.mxu0 %v6059
        %v9580 = vpop.f32.mrf.mxu0
        %v9581 = vadd.f32 %v9436, %v9580
        %v9582 = vpop.f32.mrf.mxu0
        %9583 = vmatprep.mubr.f32.mxu0 0.0
        %9584 = vmatmul.mubr.f32.gmra.mxu0 %v6061
        %v9585 = vpop.f32.mrf.mxu0
        %v9586 = vadd.f32 %v9441, %v9585
        %v9587 = vpop.f32.mrf.mxu0
        %9588 = vdwg.mxu0
        %9589 = vmatprep.subr.mxu0 0.0
        %9590 = vmatpush1.msra.mxu0 0.0
        %9591 = vmatprep.subr.mxu0 0.0
        %9592 = vmatpush1.msra.mxu0 0.0
        %9593 = vmatprep.subr.mxu0 0.0
        %9594 = vmatpush1.msra.mxu0 0.0
        %9595 = vmatprep.subr.mxu0 0.0
        %9596 = vmatpush1.msra.mxu0 0.0
        %9597 = vmatprep.subr.mxu0 0.0
        %9598 = vmatpush1.msra.mxu0 0.0
        %9599 = vmatprep.subr.mxu0 0.0
        %9600 = vmatpush1.msra.mxu0 0.0
        %9601 = vmatprep.subr.mxu0 0.0
        %9602 = vmatpush1.msra.mxu0 0.0
        %9603 = vmatprep.subr.mxu0 0.0
        %9604 = vmatpush1.msra.mxu0 0.0
        %9605 = vmatprep.subr.mxu0 0.0
        %9606 = vmatpush1.msra.mxu0 %v190
        %9607 = vmatprep.subr.mxu0 0.0
        %9608 = vmatpush1.msra.mxu0 %v189
        %9609 = vmatprep.subr.mxu0 0.0
        %9610 = vmatpush1.msra.mxu0 %v188
        %9611 = vmatprep.subr.mxu0 0.0
        %9612 = vmatpush1.msra.mxu0 %v187
        %9613 = vmatprep.subr.mxu0 0.0
        %9614 = vmatpush1.msra.mxu0 %v186
        %9615 = vmatprep.subr.mxu0 0.0
        %9616 = vmatpush1.msra.mxu0 %v185
        %9617 = vmatprep.subr.mxu0 0.0
        %9618 = vmatpush1.msra.mxu0 %v184
        %9619 = vmatprep.subr.mxu0 0.0
        %9620 = vmatpush1.msra.mxu0 %v183
        %9621 = vmatprep.subr.mxu0 0.0
        %9622 = vmatpush2.msra.mxu0 0.0
        %9623 = vmatprep.subr.mxu0 0.0
        %9624 = vmatpush2.msra.mxu0 0.0
        %9625 = vmatprep.subr.mxu0 0.0
        %9626 = vmatpush2.msra.mxu0 0.0
        %9627 = vmatprep.subr.mxu0 0.0
        %9628 = vmatpush2.msra.mxu0 0.0
        %9629 = vmatprep.subr.mxu0 0.0
        %9630 = vmatpush2.msra.mxu0 0.0
        %9631 = vmatprep.subr.mxu0 0.0
        %9632 = vmatpush2.msra.mxu0 0.0
        %9633 = vmatprep.subr.mxu0 0.0
        %9634 = vmatpush2.msra.mxu0 0.0
        %9635 = vmatprep.subr.mxu0 0.0
        %9636 = vmatpush2.msra.mxu0 0.0
        %9637 = vmatprep.subr.mxu0 0.0
        %9638 = vmatpush2.msra.mxu0 0.0
        %9639 = vmatprep.subr.mxu0 0.0
        %9640 = vmatpush2.msra.mxu0 0.0
        %9641 = vmatprep.subr.mxu0 0.0
        %9642 = vmatpush2.msra.mxu0 0.0
        %9643 = vmatprep.subr.mxu0 0.0
        %9644 = vmatpush2.msra.mxu0 0.0
        %9645 = vmatprep.subr.mxu0 0.0
        %9646 = vmatpush2.msra.mxu0 0.0
        %9647 = vmatprep.subr.mxu0 0.0
        %9648 = vmatpush2.msra.mxu0 0.0
        %9649 = vmatprep.subr.mxu0 0.0
        %9650 = vmatpush2.msra.mxu0 0.0
        %9651 = vmatprep.subr.mxu0 0.0
        %9652 = vmatpush2.msra.mxu0 0.0
        %9653 = vmatprep.mubr.f32.mxu0 0.0
        %9654 = vmatmul.mubr.f32.gmra.mxu0 %v1336
        %v9655 = vpop.f32.mrf.mxu0
        %v9656 = vadd.f32 0.0, %v9655
        %v9657 = vpop.f32.mrf.mxu0
        %9658 = vmatprep.mubr.f32.mxu0 0.0
        %9659 = vmatmul.mubr.f32.gmra.mxu0 %v1338
        %v9660 = vpop.f32.mrf.mxu0
        %v9661 = vadd.f32 0.0, %v9660
        %v9662 = vpop.f32.mrf.mxu0
        %9663 = vmatprep.mubr.f32.mxu0 0.0
        %9664 = vmatmul.mubr.f32.gmra.mxu0 %v1340
        %v9665 = vpop.f32.mrf.mxu0
        %v9666 = vadd.f32 0.0, %v9665
        %v9667 = vpop.f32.mrf.mxu0
        %9668 = vmatprep.mubr.f32.mxu0 0.0
        %9669 = vmatmul.mubr.f32.gmra.mxu0 %v1342
        %v9670 = vpop.f32.mrf.mxu0
        %v9671 = vadd.f32 0.0, %v9670
        %v9672 = vpop.f32.mrf.mxu0
        %9673 = vmatprep.mubr.f32.mxu0 0.0
        %9674 = vmatmul.mubr.f32.gmra.mxu0 %v1344
        %v9675 = vpop.f32.mrf.mxu0
        %v9676 = vadd.f32 0.0, %v9675
        %v9677 = vpop.f32.mrf.mxu0
        %9678 = vmatprep.mubr.f32.mxu0 0.0
        %9679 = vmatmul.mubr.f32.gmra.mxu0 %v1346
        %v9680 = vpop.f32.mrf.mxu0
        %v9681 = vadd.f32 0.0, %v9680
        %v9682 = vpop.f32.mrf.mxu0
        %9683 = vmatprep.mubr.f32.mxu0 0.0
        %9684 = vmatmul.mubr.f32.gmra.mxu0 %v1348
        %v9685 = vpop.f32.mrf.mxu0
        %v9686 = vadd.f32 0.0, %v9685
        %v9687 = vpop.f32.mrf.mxu0
        %9688 = vmatprep.mubr.f32.mxu0 0.0
        %9689 = vmatmul.mubr.f32.gmra.mxu0 %v1350
        %v9690 = vpop.f32.mrf.mxu0
        %v9691 = vadd.f32 0.0, %v9690
        %v9692 = vpop.f32.mrf.mxu0
        %9693 = vmatprep.mubr.f32.mxu0 0.0
        %9694 = vmatmul.mubr.f32.gmra.mxu0 %v1352
        %v9695 = vpop.f32.mrf.mxu0
        %v9696 = vadd.f32 0.0, %v9695
        %v9697 = vpop.f32.mrf.mxu0
        %9698 = vmatprep.mubr.f32.mxu0 0.0
        %9699 = vmatmul.mubr.f32.gmra.mxu0 %v1354
        %v9700 = vpop.f32.mrf.mxu0
        %v9701 = vadd.f32 0.0, %v9700
        %v9702 = vpop.f32.mrf.mxu0
        %9703 = vmatprep.mubr.f32.mxu0 0.0
        %9704 = vmatmul.mubr.f32.gmra.mxu0 %v1356
        %v9705 = vpop.f32.mrf.mxu0
        %v9706 = vadd.f32 0.0, %v9705
        %v9707 = vpop.f32.mrf.mxu0
        %9708 = vmatprep.mubr.f32.mxu0 0.0
        %9709 = vmatmul.mubr.f32.gmra.mxu0 %v1358
        %v9710 = vpop.f32.mrf.mxu0
        %v9711 = vadd.f32 0.0, %v9710
        %v9712 = vpop.f32.mrf.mxu0
        %9713 = vmatprep.mubr.f32.mxu0 0.0
        %9714 = vmatmul.mubr.f32.gmra.mxu0 %v1360
        %v9715 = vpop.f32.mrf.mxu0
        %v9716 = vadd.f32 0.0, %v9715
        %v9717 = vpop.f32.mrf.mxu0
        %9718 = vmatprep.mubr.f32.mxu0 0.0
        %9719 = vmatmul.mubr.f32.gmra.mxu0 %v1362
        %v9720 = vpop.f32.mrf.mxu0
        %v9721 = vadd.f32 0.0, %v9720
        %v9722 = vpop.f32.mrf.mxu0
        %9723 = vmatprep.mubr.f32.mxu0 0.0
        %9724 = vmatmul.mubr.f32.gmra.mxu0 %v1364
        %v9725 = vpop.f32.mrf.mxu0
        %v9726 = vadd.f32 0.0, %v9725
        %v9727 = vpop.f32.mrf.mxu0
        %9728 = vmatprep.mubr.f32.mxu0 0.0
        %9729 = vmatmul.mubr.f32.gmra.mxu0 %v1366
        %v9730 = vpop.f32.mrf.mxu0
        %v9731 = vadd.f32 0.0, %v9730
        %v9732 = vpop.f32.mrf.mxu0
        %9733 = vdwg.mxu0
        %v9734 = vadd.f32 %v9511, %v9656
        %v9735 = vadd.f32 %v9516, %v9661
        %v9736 = vadd.f32 %v9521, %v9666
        %v9737 = vadd.f32 %v9526, %v9671
        %v9738 = vadd.f32 %v9531, %v9676
        %v9739 = vadd.f32 %v9536, %v9681
        %v9740 = vadd.f32 %v9541, %v9686
        %v9741 = vadd.f32 %v9546, %v9691
        %v9742 = vadd.f32 %v9551, %v9696
        %v9743 = vadd.f32 %v9556, %v9701
        %v9744 = vadd.f32 %v9561, %v9706
        %v9745 = vadd.f32 %v9566, %v9711
        %v9746 = vadd.f32 %v9571, %v9716
        %v9747 = vadd.f32 %v9576, %v9721
        %v9748 = vadd.f32 %v9581, %v9726
        %v9749 = vadd.f32 %v9586, %v9731
        %v9766 = vcombine.high %v9734, %v9734
        %v9768 = vunpack.c.l.s4 1966171168
        %v9769 = vunpack.c.0.s8 %v9768
        %v9770 = vlaneseq
        %v9771 = vshrl.u32 %v9770, 7
        %v9772 = vsub.s32 %v9769, %v9771
        %v9773 = vrot.slane %v9734, %v9772
        %v9775 = vunpack.c.l.s4 1966171168
        %v9776 = vunpack.c.0.s8 %v9775
        %v9777 = vlaneseq
        %v9778 = vshrl.u32 %v9777, 7
        %v9779 = vsub.s32 %v9776, %v9778
        %v9780 = vrot.slane %v9766, %v9779
        %v9781 = vcombine.high %v9773, %v9773
        %v9782 = vcombine.high %v9780, %v9780
        %v9784 = vunpack.c.l.s4 1966171168
        %v9785 = vunpack.c.0.s8 %v9784
        %v9786 = vlaneseq
        %v9787 = vshrl.u32 %v9786, 7
        %v9788 = vsub.s32 %v9785, %v9787
        %v9789 = vrot.slane %v9773, %v9788
        %v9791 = vunpack.c.l.s4 1966171168
        %v9792 = vunpack.c.0.s8 %v9791
        %v9793 = vlaneseq
        %v9794 = vshrl.u32 %v9793, 7
        %v9795 = vsub.s32 %v9792, %v9794
        %v9796 = vrot.slane %v9780, %v9795
        %v9798 = vunpack.c.l.s4 1966171168
        %v9799 = vunpack.c.0.s8 %v9798
        %v9800 = vlaneseq
        %v9801 = vshrl.u32 %v9800, 7
        %v9802 = vsub.s32 %v9799, %v9801
        %v9803 = vrot.slane %v9781, %v9802
        %v9805 = vunpack.c.l.s4 1966171168
        %v9806 = vunpack.c.0.s8 %v9805
        %v9807 = vlaneseq
        %v9808 = vshrl.u32 %v9807, 7
        %v9809 = vsub.s32 %v9806, %v9808
        %v9810 = vrot.slane %v9782, %v9809
        %v9811 = vcombine.high %v9789, %v9789
        %v9812 = vcombine.high %v9796, %v9796
        %v9813 = vcombine.high %v9803, %v9803
        %v9814 = vcombine.high %v9810, %v9810
        %v9815 = vcombine.high %v9735, %v9735
        %v9817 = vunpack.c.l.s4 1966171168
        %v9818 = vunpack.c.0.s8 %v9817
        %v9819 = vlaneseq
        %v9820 = vshrl.u32 %v9819, 7
        %v9821 = vsub.s32 %v9818, %v9820
        %v9822 = vrot.slane %v9735, %v9821
        %v9824 = vunpack.c.l.s4 1966171168
        %v9825 = vunpack.c.0.s8 %v9824
        %v9826 = vlaneseq
        %v9827 = vshrl.u32 %v9826, 7
        %v9828 = vsub.s32 %v9825, %v9827
        %v9829 = vrot.slane %v9815, %v9828
        %v9830 = vcombine.high %v9822, %v9822
        %v9831 = vcombine.high %v9829, %v9829
        %v9833 = vunpack.c.l.s4 1966171168
        %v9834 = vunpack.c.0.s8 %v9833
        %v9835 = vlaneseq
        %v9836 = vshrl.u32 %v9835, 7
        %v9837 = vsub.s32 %v9834, %v9836
        %v9838 = vrot.slane %v9822, %v9837
        %v9840 = vunpack.c.l.s4 1966171168
        %v9841 = vunpack.c.0.s8 %v9840
        %v9842 = vlaneseq
        %v9843 = vshrl.u32 %v9842, 7
        %v9844 = vsub.s32 %v9841, %v9843
        %v9845 = vrot.slane %v9829, %v9844
        %v9847 = vunpack.c.l.s4 1966171168
        %v9848 = vunpack.c.0.s8 %v9847
        %v9849 = vlaneseq
        %v9850 = vshrl.u32 %v9849, 7
        %v9851 = vsub.s32 %v9848, %v9850
        %v9852 = vrot.slane %v9830, %v9851
        %v9854 = vunpack.c.l.s4 1966171168
        %v9855 = vunpack.c.0.s8 %v9854
        %v9856 = vlaneseq
        %v9857 = vshrl.u32 %v9856, 7
        %v9858 = vsub.s32 %v9855, %v9857
        %v9859 = vrot.slane %v9831, %v9858
        %v9860 = vcombine.high %v9838, %v9838
        %v9861 = vcombine.high %v9845, %v9845
        %v9862 = vcombine.high %v9852, %v9852
        %v9863 = vcombine.high %v9859, %v9859
        %v9864 = vcombine.high %v9736, %v9736
        %v9866 = vunpack.c.l.s4 1966171168
        %v9867 = vunpack.c.0.s8 %v9866
        %v9868 = vlaneseq
        %v9869 = vshrl.u32 %v9868, 7
        %v9870 = vsub.s32 %v9867, %v9869
        %v9871 = vrot.slane %v9736, %v9870
        %v9873 = vunpack.c.l.s4 1966171168
        %v9874 = vunpack.c.0.s8 %v9873
        %v9875 = vlaneseq
        %v9876 = vshrl.u32 %v9875, 7
        %v9877 = vsub.s32 %v9874, %v9876
        %v9878 = vrot.slane %v9864, %v9877
        %v9879 = vcombine.high %v9871, %v9871
        %v9880 = vcombine.high %v9878, %v9878
        %v9882 = vunpack.c.l.s4 1966171168
        %v9883 = vunpack.c.0.s8 %v9882
        %v9884 = vlaneseq
        %v9885 = vshrl.u32 %v9884, 7
        %v9886 = vsub.s32 %v9883, %v9885
        %v9887 = vrot.slane %v9871, %v9886
        %v9889 = vunpack.c.l.s4 1966171168
        %v9890 = vunpack.c.0.s8 %v9889
        %v9891 = vlaneseq
        %v9892 = vshrl.u32 %v9891, 7
        %v9893 = vsub.s32 %v9890, %v9892
        %v9894 = vrot.slane %v9878, %v9893
        %v9896 = vunpack.c.l.s4 1966171168
        %v9897 = vunpack.c.0.s8 %v9896
        %v9898 = vlaneseq
        %v9899 = vshrl.u32 %v9898, 7
        %v9900 = vsub.s32 %v9897, %v9899
        %v9901 = vrot.slane %v9879, %v9900
        %v9903 = vunpack.c.l.s4 1966171168
        %v9904 = vunpack.c.0.s8 %v9903
        %v9905 = vlaneseq
        %v9906 = vshrl.u32 %v9905, 7
        %v9907 = vsub.s32 %v9904, %v9906
        %v9908 = vrot.slane %v9880, %v9907
        %v9909 = vcombine.high %v9887, %v9887
        %v9910 = vcombine.high %v9894, %v9894
        %v9911 = vcombine.high %v9901, %v9901
        %v9912 = vcombine.high %v9908, %v9908
        %v9913 = vcombine.high %v9737, %v9737
        %v9915 = vunpack.c.l.s4 1966171168
        %v9916 = vunpack.c.0.s8 %v9915
        %v9917 = vlaneseq
        %v9918 = vshrl.u32 %v9917, 7
        %v9919 = vsub.s32 %v9916, %v9918
        %v9920 = vrot.slane %v9737, %v9919
        %v9922 = vunpack.c.l.s4 1966171168
        %v9923 = vunpack.c.0.s8 %v9922
        %v9924 = vlaneseq
        %v9925 = vshrl.u32 %v9924, 7
        %v9926 = vsub.s32 %v9923, %v9925
        %v9927 = vrot.slane %v9913, %v9926
        %v9928 = vcombine.high %v9920, %v9920
        %v9929 = vcombine.high %v9927, %v9927
        %v9931 = vunpack.c.l.s4 1966171168
        %v9932 = vunpack.c.0.s8 %v9931
        %v9933 = vlaneseq
        %v9934 = vshrl.u32 %v9933, 7
        %v9935 = vsub.s32 %v9932, %v9934
        %v9936 = vrot.slane %v9920, %v9935
        %v9938 = vunpack.c.l.s4 1966171168
        %v9939 = vunpack.c.0.s8 %v9938
        %v9940 = vlaneseq
        %v9941 = vshrl.u32 %v9940, 7
        %v9942 = vsub.s32 %v9939, %v9941
        %v9943 = vrot.slane %v9927, %v9942
        %v9945 = vunpack.c.l.s4 1966171168
        %v9946 = vunpack.c.0.s8 %v9945
        %v9947 = vlaneseq
        %v9948 = vshrl.u32 %v9947, 7
        %v9949 = vsub.s32 %v9946, %v9948
        %v9950 = vrot.slane %v9928, %v9949
        %v9952 = vunpack.c.l.s4 1966171168
        %v9953 = vunpack.c.0.s8 %v9952
        %v9954 = vlaneseq
        %v9955 = vshrl.u32 %v9954, 7
        %v9956 = vsub.s32 %v9953, %v9955
        %v9957 = vrot.slane %v9929, %v9956
        %v9958 = vcombine.high %v9936, %v9936
        %v9959 = vcombine.high %v9943, %v9943
        %v9960 = vcombine.high %v9950, %v9950
        %v9961 = vcombine.high %v9957, %v9957
        %v9962 = vcombine.high %v9738, %v9738
        %v9964 = vunpack.c.l.s4 1966171168
        %v9965 = vunpack.c.0.s8 %v9964
        %v9966 = vlaneseq
        %v9967 = vshrl.u32 %v9966, 7
        %v9968 = vsub.s32 %v9965, %v9967
        %v9969 = vrot.slane %v9738, %v9968
        %v9971 = vunpack.c.l.s4 1966171168
        %v9972 = vunpack.c.0.s8 %v9971
        %v9973 = vlaneseq
        %v9974 = vshrl.u32 %v9973, 7
        %v9975 = vsub.s32 %v9972, %v9974
        %v9976 = vrot.slane %v9962, %v9975
        %v9977 = vcombine.high %v9969, %v9969
        %v9978 = vcombine.high %v9976, %v9976
        %v9980 = vunpack.c.l.s4 1966171168
        %v9981 = vunpack.c.0.s8 %v9980
        %v9982 = vlaneseq
        %v9983 = vshrl.u32 %v9982, 7
        %v9984 = vsub.s32 %v9981, %v9983
        %v9985 = vrot.slane %v9969, %v9984
        %v9987 = vunpack.c.l.s4 1966171168
        %v9988 = vunpack.c.0.s8 %v9987
        %v9989 = vlaneseq
        %v9990 = vshrl.u32 %v9989, 7
        %v9991 = vsub.s32 %v9988, %v9990
        %v9992 = vrot.slane %v9976, %v9991
        %v9994 = vunpack.c.l.s4 1966171168
        %v9995 = vunpack.c.0.s8 %v9994
        %v9996 = vlaneseq
        %v9997 = vshrl.u32 %v9996, 7
        %v9998 = vsub.s32 %v9995, %v9997
        %v9999 = vrot.slane %v9977, %v9998
        %v10001 = vunpack.c.l.s4 1966171168
        %v10002 = vunpack.c.0.s8 %v10001
        %v10003 = vlaneseq
        %v10004 = vshrl.u32 %v10003, 7
        %v10005 = vsub.s32 %v10002, %v10004
        %v10006 = vrot.slane %v9978, %v10005
        %v10007 = vcombine.high %v9985, %v9985
        %v10008 = vcombine.high %v9992, %v9992
        %v10009 = vcombine.high %v9999, %v9999
        %v10010 = vcombine.high %v10006, %v10006
        %v10011 = vcombine.high %v9739, %v9739
        %v10013 = vunpack.c.l.s4 1966171168
        %v10014 = vunpack.c.0.s8 %v10013
        %v10015 = vlaneseq
        %v10016 = vshrl.u32 %v10015, 7
        %v10017 = vsub.s32 %v10014, %v10016
        %v10018 = vrot.slane %v9739, %v10017
        %v10020 = vunpack.c.l.s4 1966171168
        %v10021 = vunpack.c.0.s8 %v10020
        %v10022 = vlaneseq
        %v10023 = vshrl.u32 %v10022, 7
        %v10024 = vsub.s32 %v10021, %v10023
        %v10025 = vrot.slane %v10011, %v10024
        %v10026 = vcombine.high %v10018, %v10018
        %v10027 = vcombine.high %v10025, %v10025
        %v10029 = vunpack.c.l.s4 1966171168
        %v10030 = vunpack.c.0.s8 %v10029
        %v10031 = vlaneseq
        %v10032 = vshrl.u32 %v10031, 7
        %v10033 = vsub.s32 %v10030, %v10032
        %v10034 = vrot.slane %v10018, %v10033
        %v10036 = vunpack.c.l.s4 1966171168
        %v10037 = vunpack.c.0.s8 %v10036
        %v10038 = vlaneseq
        %v10039 = vshrl.u32 %v10038, 7
        %v10040 = vsub.s32 %v10037, %v10039
        %v10041 = vrot.slane %v10025, %v10040
        %v10043 = vunpack.c.l.s4 1966171168
        %v10044 = vunpack.c.0.s8 %v10043
        %v10045 = vlaneseq
        %v10046 = vshrl.u32 %v10045, 7
        %v10047 = vsub.s32 %v10044, %v10046
        %v10048 = vrot.slane %v10026, %v10047
        %v10050 = vunpack.c.l.s4 1966171168
        %v10051 = vunpack.c.0.s8 %v10050
        %v10052 = vlaneseq
        %v10053 = vshrl.u32 %v10052, 7
        %v10054 = vsub.s32 %v10051, %v10053
        %v10055 = vrot.slane %v10027, %v10054
        %v10056 = vcombine.high %v10034, %v10034
        %v10057 = vcombine.high %v10041, %v10041
        %v10058 = vcombine.high %v10048, %v10048
        %v10059 = vcombine.high %v10055, %v10055
        %v10060 = vcombine.high %v9740, %v9740
        %v10062 = vunpack.c.l.s4 1966171168
        %v10063 = vunpack.c.0.s8 %v10062
        %v10064 = vlaneseq
        %v10065 = vshrl.u32 %v10064, 7
        %v10066 = vsub.s32 %v10063, %v10065
        %v10067 = vrot.slane %v9740, %v10066
        %v10069 = vunpack.c.l.s4 1966171168
        %v10070 = vunpack.c.0.s8 %v10069
        %v10071 = vlaneseq
        %v10072 = vshrl.u32 %v10071, 7
        %v10073 = vsub.s32 %v10070, %v10072
        %v10074 = vrot.slane %v10060, %v10073
        %v10075 = vcombine.high %v10067, %v10067
        %v10076 = vcombine.high %v10074, %v10074
        %v10078 = vunpack.c.l.s4 1966171168
        %v10079 = vunpack.c.0.s8 %v10078
        %v10080 = vlaneseq
        %v10081 = vshrl.u32 %v10080, 7
        %v10082 = vsub.s32 %v10079, %v10081
        %v10083 = vrot.slane %v10067, %v10082
        %v10085 = vunpack.c.l.s4 1966171168
        %v10086 = vunpack.c.0.s8 %v10085
        %v10087 = vlaneseq
        %v10088 = vshrl.u32 %v10087, 7
        %v10089 = vsub.s32 %v10086, %v10088
        %v10090 = vrot.slane %v10074, %v10089
        %v10092 = vunpack.c.l.s4 1966171168
        %v10093 = vunpack.c.0.s8 %v10092
        %v10094 = vlaneseq
        %v10095 = vshrl.u32 %v10094, 7
        %v10096 = vsub.s32 %v10093, %v10095
        %v10097 = vrot.slane %v10075, %v10096
        %v10099 = vunpack.c.l.s4 1966171168
        %v10100 = vunpack.c.0.s8 %v10099
        %v10101 = vlaneseq
        %v10102 = vshrl.u32 %v10101, 7
        %v10103 = vsub.s32 %v10100, %v10102
        %v10104 = vrot.slane %v10076, %v10103
        %v10105 = vcombine.high %v10083, %v10083
        %v10106 = vcombine.high %v10090, %v10090
        %v10107 = vcombine.high %v10097, %v10097
        %v10108 = vcombine.high %v10104, %v10104
        %v10109 = vcombine.high %v9741, %v9741
        %v10111 = vunpack.c.l.s4 1966171168
        %v10112 = vunpack.c.0.s8 %v10111
        %v10113 = vlaneseq
        %v10114 = vshrl.u32 %v10113, 7
        %v10115 = vsub.s32 %v10112, %v10114
        %v10116 = vrot.slane %v9741, %v10115
        %v10118 = vunpack.c.l.s4 1966171168
        %v10119 = vunpack.c.0.s8 %v10118
        %v10120 = vlaneseq
        %v10121 = vshrl.u32 %v10120, 7
        %v10122 = vsub.s32 %v10119, %v10121
        %v10123 = vrot.slane %v10109, %v10122
        %v10124 = vcombine.high %v10116, %v10116
        %v10125 = vcombine.high %v10123, %v10123
        %v10127 = vunpack.c.l.s4 1966171168
        %v10128 = vunpack.c.0.s8 %v10127
        %v10129 = vlaneseq
        %v10130 = vshrl.u32 %v10129, 7
        %v10131 = vsub.s32 %v10128, %v10130
        %v10132 = vrot.slane %v10116, %v10131
        %v10134 = vunpack.c.l.s4 1966171168
        %v10135 = vunpack.c.0.s8 %v10134
        %v10136 = vlaneseq
        %v10137 = vshrl.u32 %v10136, 7
        %v10138 = vsub.s32 %v10135, %v10137
        %v10139 = vrot.slane %v10123, %v10138
        %v10141 = vunpack.c.l.s4 1966171168
        %v10142 = vunpack.c.0.s8 %v10141
        %v10143 = vlaneseq
        %v10144 = vshrl.u32 %v10143, 7
        %v10145 = vsub.s32 %v10142, %v10144
        %v10146 = vrot.slane %v10124, %v10145
        %v10148 = vunpack.c.l.s4 1966171168
        %v10149 = vunpack.c.0.s8 %v10148
        %v10150 = vlaneseq
        %v10151 = vshrl.u32 %v10150, 7
        %v10152 = vsub.s32 %v10149, %v10151
        %v10153 = vrot.slane %v10125, %v10152
        %v10154 = vcombine.high %v10132, %v10132
        %v10155 = vcombine.high %v10139, %v10139
        %v10156 = vcombine.high %v10146, %v10146
        %v10157 = vcombine.high %v10153, %v10153
        %v10158 = vcombine.high %v9742, %v9742
        %v10160 = vunpack.c.l.s4 1966171168
        %v10161 = vunpack.c.0.s8 %v10160
        %v10162 = vlaneseq
        %v10163 = vshrl.u32 %v10162, 7
        %v10164 = vsub.s32 %v10161, %v10163
        %v10165 = vrot.slane %v9742, %v10164
        %v10167 = vunpack.c.l.s4 1966171168
        %v10168 = vunpack.c.0.s8 %v10167
        %v10169 = vlaneseq
        %v10170 = vshrl.u32 %v10169, 7
        %v10171 = vsub.s32 %v10168, %v10170
        %v10172 = vrot.slane %v10158, %v10171
        %v10173 = vcombine.high %v10165, %v10165
        %v10174 = vcombine.high %v10172, %v10172
        %v10176 = vunpack.c.l.s4 1966171168
        %v10177 = vunpack.c.0.s8 %v10176
        %v10178 = vlaneseq
        %v10179 = vshrl.u32 %v10178, 7
        %v10180 = vsub.s32 %v10177, %v10179
        %v10181 = vrot.slane %v10165, %v10180
        %v10183 = vunpack.c.l.s4 1966171168
        %v10184 = vunpack.c.0.s8 %v10183
        %v10185 = vlaneseq
        %v10186 = vshrl.u32 %v10185, 7
        %v10187 = vsub.s32 %v10184, %v10186
        %v10188 = vrot.slane %v10172, %v10187
        %v10190 = vunpack.c.l.s4 1966171168
        %v10191 = vunpack.c.0.s8 %v10190
        %v10192 = vlaneseq
        %v10193 = vshrl.u32 %v10192, 7
        %v10194 = vsub.s32 %v10191, %v10193
        %v10195 = vrot.slane %v10173, %v10194
        %v10197 = vunpack.c.l.s4 1966171168
        %v10198 = vunpack.c.0.s8 %v10197
        %v10199 = vlaneseq
        %v10200 = vshrl.u32 %v10199, 7
        %v10201 = vsub.s32 %v10198, %v10200
        %v10202 = vrot.slane %v10174, %v10201
        %v10203 = vcombine.high %v10181, %v10181
        %v10204 = vcombine.high %v10188, %v10188
        %v10205 = vcombine.high %v10195, %v10195
        %v10206 = vcombine.high %v10202, %v10202
        %v10207 = vcombine.high %v9743, %v9743
        %v10209 = vunpack.c.l.s4 1966171168
        %v10210 = vunpack.c.0.s8 %v10209
        %v10211 = vlaneseq
        %v10212 = vshrl.u32 %v10211, 7
        %v10213 = vsub.s32 %v10210, %v10212
        %v10214 = vrot.slane %v9743, %v10213
        %v10216 = vunpack.c.l.s4 1966171168
        %v10217 = vunpack.c.0.s8 %v10216
        %v10218 = vlaneseq
        %v10219 = vshrl.u32 %v10218, 7
        %v10220 = vsub.s32 %v10217, %v10219
        %v10221 = vrot.slane %v10207, %v10220
        %v10222 = vcombine.high %v10214, %v10214
        %v10223 = vcombine.high %v10221, %v10221
        %v10225 = vunpack.c.l.s4 1966171168
        %v10226 = vunpack.c.0.s8 %v10225
        %v10227 = vlaneseq
        %v10228 = vshrl.u32 %v10227, 7
        %v10229 = vsub.s32 %v10226, %v10228
        %v10230 = vrot.slane %v10214, %v10229
        %v10232 = vunpack.c.l.s4 1966171168
        %v10233 = vunpack.c.0.s8 %v10232
        %v10234 = vlaneseq
        %v10235 = vshrl.u32 %v10234, 7
        %v10236 = vsub.s32 %v10233, %v10235
        %v10237 = vrot.slane %v10221, %v10236
        %v10239 = vunpack.c.l.s4 1966171168
        %v10240 = vunpack.c.0.s8 %v10239
        %v10241 = vlaneseq
        %v10242 = vshrl.u32 %v10241, 7
        %v10243 = vsub.s32 %v10240, %v10242
        %v10244 = vrot.slane %v10222, %v10243
        %v10246 = vunpack.c.l.s4 1966171168
        %v10247 = vunpack.c.0.s8 %v10246
        %v10248 = vlaneseq
        %v10249 = vshrl.u32 %v10248, 7
        %v10250 = vsub.s32 %v10247, %v10249
        %v10251 = vrot.slane %v10223, %v10250
        %v10252 = vcombine.high %v10230, %v10230
        %v10253 = vcombine.high %v10237, %v10237
        %v10254 = vcombine.high %v10244, %v10244
        %v10255 = vcombine.high %v10251, %v10251
        %v10256 = vcombine.high %v9744, %v9744
        %v10258 = vunpack.c.l.s4 1966171168
        %v10259 = vunpack.c.0.s8 %v10258
        %v10260 = vlaneseq
        %v10261 = vshrl.u32 %v10260, 7
        %v10262 = vsub.s32 %v10259, %v10261
        %v10263 = vrot.slane %v9744, %v10262
        %v10265 = vunpack.c.l.s4 1966171168
        %v10266 = vunpack.c.0.s8 %v10265
        %v10267 = vlaneseq
        %v10268 = vshrl.u32 %v10267, 7
        %v10269 = vsub.s32 %v10266, %v10268
        %v10270 = vrot.slane %v10256, %v10269
        %v10271 = vcombine.high %v10263, %v10263
        %v10272 = vcombine.high %v10270, %v10270
        %v10274 = vunpack.c.l.s4 1966171168
        %v10275 = vunpack.c.0.s8 %v10274
        %v10276 = vlaneseq
        %v10277 = vshrl.u32 %v10276, 7
        %v10278 = vsub.s32 %v10275, %v10277
        %v10279 = vrot.slane %v10263, %v10278
        %v10281 = vunpack.c.l.s4 1966171168
        %v10282 = vunpack.c.0.s8 %v10281
        %v10283 = vlaneseq
        %v10284 = vshrl.u32 %v10283, 7
        %v10285 = vsub.s32 %v10282, %v10284
        %v10286 = vrot.slane %v10270, %v10285
        %v10288 = vunpack.c.l.s4 1966171168
        %v10289 = vunpack.c.0.s8 %v10288
        %v10290 = vlaneseq
        %v10291 = vshrl.u32 %v10290, 7
        %v10292 = vsub.s32 %v10289, %v10291
        %v10293 = vrot.slane %v10271, %v10292
        %v10295 = vunpack.c.l.s4 1966171168
        %v10296 = vunpack.c.0.s8 %v10295
        %v10297 = vlaneseq
        %v10298 = vshrl.u32 %v10297, 7
        %v10299 = vsub.s32 %v10296, %v10298
        %v10300 = vrot.slane %v10272, %v10299
        %v10301 = vcombine.high %v10279, %v10279
        %v10302 = vcombine.high %v10286, %v10286
        %v10303 = vcombine.high %v10293, %v10293
        %v10304 = vcombine.high %v10300, %v10300
        %v10305 = vcombine.high %v9745, %v9745
        %v10307 = vunpack.c.l.s4 1966171168
        %v10308 = vunpack.c.0.s8 %v10307
        %v10309 = vlaneseq
        %v10310 = vshrl.u32 %v10309, 7
        %v10311 = vsub.s32 %v10308, %v10310
        %v10312 = vrot.slane %v9745, %v10311
        %v10314 = vunpack.c.l.s4 1966171168
        %v10315 = vunpack.c.0.s8 %v10314
        %v10316 = vlaneseq
        %v10317 = vshrl.u32 %v10316, 7
        %v10318 = vsub.s32 %v10315, %v10317
        %v10319 = vrot.slane %v10305, %v10318
        %v10320 = vcombine.high %v10312, %v10312
        %v10321 = vcombine.high %v10319, %v10319
        %v10323 = vunpack.c.l.s4 1966171168
        %v10324 = vunpack.c.0.s8 %v10323
        %v10325 = vlaneseq
        %v10326 = vshrl.u32 %v10325, 7
        %v10327 = vsub.s32 %v10324, %v10326
        %v10328 = vrot.slane %v10312, %v10327
        %v10330 = vunpack.c.l.s4 1966171168
        %v10331 = vunpack.c.0.s8 %v10330
        %v10332 = vlaneseq
        %v10333 = vshrl.u32 %v10332, 7
        %v10334 = vsub.s32 %v10331, %v10333
        %v10335 = vrot.slane %v10319, %v10334
        %v10337 = vunpack.c.l.s4 1966171168
        %v10338 = vunpack.c.0.s8 %v10337
        %v10339 = vlaneseq
        %v10340 = vshrl.u32 %v10339, 7
        %v10341 = vsub.s32 %v10338, %v10340
        %v10342 = vrot.slane %v10320, %v10341
        %v10344 = vunpack.c.l.s4 1966171168
        %v10345 = vunpack.c.0.s8 %v10344
        %v10346 = vlaneseq
        %v10347 = vshrl.u32 %v10346, 7
        %v10348 = vsub.s32 %v10345, %v10347
        %v10349 = vrot.slane %v10321, %v10348
        %v10350 = vcombine.high %v10328, %v10328
        %v10351 = vcombine.high %v10335, %v10335
        %v10352 = vcombine.high %v10342, %v10342
        %v10353 = vcombine.high %v10349, %v10349
        %v10354 = vcombine.high %v9746, %v9746
        %v10356 = vunpack.c.l.s4 1966171168
        %v10357 = vunpack.c.0.s8 %v10356
        %v10358 = vlaneseq
        %v10359 = vshrl.u32 %v10358, 7
        %v10360 = vsub.s32 %v10357, %v10359
        %v10361 = vrot.slane %v9746, %v10360
        %v10363 = vunpack.c.l.s4 1966171168
        %v10364 = vunpack.c.0.s8 %v10363
        %v10365 = vlaneseq
        %v10366 = vshrl.u32 %v10365, 7
        %v10367 = vsub.s32 %v10364, %v10366
        %v10368 = vrot.slane %v10354, %v10367
        %v10369 = vcombine.high %v10361, %v10361
        %v10370 = vcombine.high %v10368, %v10368
        %v10372 = vunpack.c.l.s4 1966171168
        %v10373 = vunpack.c.0.s8 %v10372
        %v10374 = vlaneseq
        %v10375 = vshrl.u32 %v10374, 7
        %v10376 = vsub.s32 %v10373, %v10375
        %v10377 = vrot.slane %v10361, %v10376
        %v10379 = vunpack.c.l.s4 1966171168
        %v10380 = vunpack.c.0.s8 %v10379
        %v10381 = vlaneseq
        %v10382 = vshrl.u32 %v10381, 7
        %v10383 = vsub.s32 %v10380, %v10382
        %v10384 = vrot.slane %v10368, %v10383
        %v10386 = vunpack.c.l.s4 1966171168
        %v10387 = vunpack.c.0.s8 %v10386
        %v10388 = vlaneseq
        %v10389 = vshrl.u32 %v10388, 7
        %v10390 = vsub.s32 %v10387, %v10389
        %v10391 = vrot.slane %v10369, %v10390
        %v10393 = vunpack.c.l.s4 1966171168
        %v10394 = vunpack.c.0.s8 %v10393
        %v10395 = vlaneseq
        %v10396 = vshrl.u32 %v10395, 7
        %v10397 = vsub.s32 %v10394, %v10396
        %v10398 = vrot.slane %v10370, %v10397
        %v10399 = vcombine.high %v10377, %v10377
        %v10400 = vcombine.high %v10384, %v10384
        %v10401 = vcombine.high %v10391, %v10391
        %v10402 = vcombine.high %v10398, %v10398
        %v10403 = vcombine.high %v9747, %v9747
        %v10405 = vunpack.c.l.s4 1966171168
        %v10406 = vunpack.c.0.s8 %v10405
        %v10407 = vlaneseq
        %v10408 = vshrl.u32 %v10407, 7
        %v10409 = vsub.s32 %v10406, %v10408
        %v10410 = vrot.slane %v9747, %v10409
        %v10412 = vunpack.c.l.s4 1966171168
        %v10413 = vunpack.c.0.s8 %v10412
        %v10414 = vlaneseq
        %v10415 = vshrl.u32 %v10414, 7
        %v10416 = vsub.s32 %v10413, %v10415
        %v10417 = vrot.slane %v10403, %v10416
        %v10418 = vcombine.high %v10410, %v10410
        %v10419 = vcombine.high %v10417, %v10417
        %v10421 = vunpack.c.l.s4 1966171168
        %v10422 = vunpack.c.0.s8 %v10421
        %v10423 = vlaneseq
        %v10424 = vshrl.u32 %v10423, 7
        %v10425 = vsub.s32 %v10422, %v10424
        %v10426 = vrot.slane %v10410, %v10425
        %v10428 = vunpack.c.l.s4 1966171168
        %v10429 = vunpack.c.0.s8 %v10428
        %v10430 = vlaneseq
        %v10431 = vshrl.u32 %v10430, 7
        %v10432 = vsub.s32 %v10429, %v10431
        %v10433 = vrot.slane %v10417, %v10432
        %v10435 = vunpack.c.l.s4 1966171168
        %v10436 = vunpack.c.0.s8 %v10435
        %v10437 = vlaneseq
        %v10438 = vshrl.u32 %v10437, 7
        %v10439 = vsub.s32 %v10436, %v10438
        %v10440 = vrot.slane %v10418, %v10439
        %v10442 = vunpack.c.l.s4 1966171168
        %v10443 = vunpack.c.0.s8 %v10442
        %v10444 = vlaneseq
        %v10445 = vshrl.u32 %v10444, 7
        %v10446 = vsub.s32 %v10443, %v10445
        %v10447 = vrot.slane %v10419, %v10446
        %v10448 = vcombine.high %v10426, %v10426
        %v10449 = vcombine.high %v10433, %v10433
        %v10450 = vcombine.high %v10440, %v10440
        %v10451 = vcombine.high %v10447, %v10447
        %v10452 = vcombine.high %v9748, %v9748
        %v10454 = vunpack.c.l.s4 1966171168
        %v10455 = vunpack.c.0.s8 %v10454
        %v10456 = vlaneseq
        %v10457 = vshrl.u32 %v10456, 7
        %v10458 = vsub.s32 %v10455, %v10457
        %v10459 = vrot.slane %v9748, %v10458
        %v10461 = vunpack.c.l.s4 1966171168
        %v10462 = vunpack.c.0.s8 %v10461
        %v10463 = vlaneseq
        %v10464 = vshrl.u32 %v10463, 7
        %v10465 = vsub.s32 %v10462, %v10464
        %v10466 = vrot.slane %v10452, %v10465
        %v10467 = vcombine.high %v10459, %v10459
        %v10468 = vcombine.high %v10466, %v10466
        %v10470 = vunpack.c.l.s4 1966171168
        %v10471 = vunpack.c.0.s8 %v10470
        %v10472 = vlaneseq
        %v10473 = vshrl.u32 %v10472, 7
        %v10474 = vsub.s32 %v10471, %v10473
        %v10475 = vrot.slane %v10459, %v10474
        %v10477 = vunpack.c.l.s4 1966171168
        %v10478 = vunpack.c.0.s8 %v10477
        %v10479 = vlaneseq
        %v10480 = vshrl.u32 %v10479, 7
        %v10481 = vsub.s32 %v10478, %v10480
        %v10482 = vrot.slane %v10466, %v10481
        %v10484 = vunpack.c.l.s4 1966171168
        %v10485 = vunpack.c.0.s8 %v10484
        %v10486 = vlaneseq
        %v10487 = vshrl.u32 %v10486, 7
        %v10488 = vsub.s32 %v10485, %v10487
        %v10489 = vrot.slane %v10467, %v10488
        %v10491 = vunpack.c.l.s4 1966171168
        %v10492 = vunpack.c.0.s8 %v10491
        %v10493 = vlaneseq
        %v10494 = vshrl.u32 %v10493, 7
        %v10495 = vsub.s32 %v10492, %v10494
        %v10496 = vrot.slane %v10468, %v10495
        %v10497 = vcombine.high %v10475, %v10475
        %v10498 = vcombine.high %v10482, %v10482
        %v10499 = vcombine.high %v10489, %v10489
        %v10500 = vcombine.high %v10496, %v10496
        %v10501 = vcombine.high %v9749, %v9749
        %v10503 = vunpack.c.l.s4 1966171168
        %v10504 = vunpack.c.0.s8 %v10503
        %v10505 = vlaneseq
        %v10506 = vshrl.u32 %v10505, 7
        %v10507 = vsub.s32 %v10504, %v10506
        %v10508 = vrot.slane %v9749, %v10507
        %v10510 = vunpack.c.l.s4 1966171168
        %v10511 = vunpack.c.0.s8 %v10510
        %v10512 = vlaneseq
        %v10513 = vshrl.u32 %v10512, 7
        %v10514 = vsub.s32 %v10511, %v10513
        %v10515 = vrot.slane %v10501, %v10514
        %v10516 = vcombine.high %v10508, %v10508
        %v10517 = vcombine.high %v10515, %v10515
        %v10519 = vunpack.c.l.s4 1966171168
        %v10520 = vunpack.c.0.s8 %v10519
        %v10521 = vlaneseq
        %v10522 = vshrl.u32 %v10521, 7
        %v10523 = vsub.s32 %v10520, %v10522
        %v10524 = vrot.slane %v10508, %v10523
        %v10526 = vunpack.c.l.s4 1966171168
        %v10527 = vunpack.c.0.s8 %v10526
        %v10528 = vlaneseq
        %v10529 = vshrl.u32 %v10528, 7
        %v10530 = vsub.s32 %v10527, %v10529
        %v10531 = vrot.slane %v10515, %v10530
        %v10533 = vunpack.c.l.s4 1966171168
        %v10534 = vunpack.c.0.s8 %v10533
        %v10535 = vlaneseq
        %v10536 = vshrl.u32 %v10535, 7
        %v10537 = vsub.s32 %v10534, %v10536
        %v10538 = vrot.slane %v10516, %v10537
        %v10540 = vunpack.c.l.s4 1966171168
        %v10541 = vunpack.c.0.s8 %v10540
        %v10542 = vlaneseq
        %v10543 = vshrl.u32 %v10542, 7
        %v10544 = vsub.s32 %v10541, %v10543
        %v10545 = vrot.slane %v10517, %v10544
        %v10546 = vcombine.high %v10524, %v10524
        %v10547 = vcombine.high %v10531, %v10531
        %v10548 = vcombine.high %v10538, %v10538
        %v10549 = vcombine.high %v10545, %v10545
        %10678 = vst [vmem:[%s145 + $0x4] sm:$0x1] %v9789
        %10679 = vst [vmem:[%s145 + $0xc] sm:$0x1] %v9803
        %10680 = vst [vmem:[%s145 + $0x14] sm:$0x1] %v9811
        %10681 = vst [vmem:[%s145 + $0x1c] sm:$0x1] %v9813
        %10682 = vst [vmem:[%s145 + $0x24] sm:$0x1] %v9796
        %10683 = vst [vmem:[%s145 + $0x2c] sm:$0x1] %v9810
        %10684 = vst [vmem:[%s145 + $0x34] sm:$0x1] %v9812
        %10685 = vst [vmem:[%s145 + $0x3c] sm:$0x1] %v9814
        %10686 = vst [vmem:[%s145 + $0x44] sm:$0x1] %v9838
        %10687 = vst [vmem:[%s145 + $0x4c] sm:$0x1] %v9852
        %10688 = vst [vmem:[%s145 + $0x54] sm:$0x1] %v9860
        %10689 = vst [vmem:[%s145 + $0x5c] sm:$0x1] %v9862
        %10690 = vst [vmem:[%s145 + $0x64] sm:$0x1] %v9845
        %10691 = vst [vmem:[%s145 + $0x6c] sm:$0x1] %v9859
        %10692 = vst [vmem:[%s145 + $0x74] sm:$0x1] %v9861
        %10693 = vst [vmem:[%s145 + $0x7c] sm:$0x1] %v9863
        %10694 = vst [vmem:[%s145 + $0x84] sm:$0x1] %v9887
        %10695 = vst [vmem:[%s145 + $0x8c] sm:$0x1] %v9901
        %10696 = vst [vmem:[%s145 + $0x94] sm:$0x1] %v9909
        %10697 = vst [vmem:[%s145 + $0x9c] sm:$0x1] %v9911
        %10698 = vst [vmem:[%s145 + $0xa4] sm:$0x1] %v9894
        %10699 = vst [vmem:[%s145 + $0xac] sm:$0x1] %v9908
        %10700 = vst [vmem:[%s145 + $0xb4] sm:$0x1] %v9910
        %10701 = vst [vmem:[%s145 + $0xbc] sm:$0x1] %v9912
        %10702 = vst [vmem:[%s145 + $0xc4] sm:$0x1] %v9936
        %10703 = vst [vmem:[%s145 + $0xcc] sm:$0x1] %v9950
        %10704 = vst [vmem:[%s145 + $0xd4] sm:$0x1] %v9958
        %10705 = vst [vmem:[%s145 + $0xdc] sm:$0x1] %v9960
        %10706 = vst [vmem:[%s145 + $0xe4] sm:$0x1] %v9943
        %10707 = vst [vmem:[%s145 + $0xec] sm:$0x1] %v9957
        %10708 = vst [vmem:[%s145 + $0xf4] sm:$0x1] %v9959
        %10709 = vst [vmem:[%s145 + $0xfc] sm:$0x1] %v9961
        %10710 = vst [vmem:[%s145 + $0x104] sm:$0x1] %v9985
        %10711 = vst [vmem:[%s145 + $0x10c] sm:$0x1] %v9999
        %10712 = vst [vmem:[%s145 + $0x114] sm:$0x1] %v10007
        %10713 = vst [vmem:[%s145 + $0x11c] sm:$0x1] %v10009
        %10714 = vst [vmem:[%s145 + $0x124] sm:$0x1] %v9992
        %10715 = vst [vmem:[%s145 + $0x12c] sm:$0x1] %v10006
        %10716 = vst [vmem:[%s145 + $0x134] sm:$0x1] %v10008
        %10717 = vst [vmem:[%s145 + $0x13c] sm:$0x1] %v10010
        %10718 = vst [vmem:[%s145 + $0x144] sm:$0x1] %v10034
        %10719 = vst [vmem:[%s145 + $0x14c] sm:$0x1] %v10048
        %10720 = vst [vmem:[%s145 + $0x154] sm:$0x1] %v10056
        %10721 = vst [vmem:[%s145 + $0x15c] sm:$0x1] %v10058
        %10722 = vst [vmem:[%s145 + $0x164] sm:$0x1] %v10041
        %10723 = vst [vmem:[%s145 + $0x16c] sm:$0x1] %v10055
        %10724 = vst [vmem:[%s145 + $0x174] sm:$0x1] %v10057
        %10725 = vst [vmem:[%s145 + $0x17c] sm:$0x1] %v10059
        %10726 = vst [vmem:[%s145 + $0x184] sm:$0x1] %v10083
        %10727 = vst [vmem:[%s145 + $0x18c] sm:$0x1] %v10097
        %10728 = vst [vmem:[%s145 + $0x194] sm:$0x1] %v10105
        %10729 = vst [vmem:[%s145 + $0x19c] sm:$0x1] %v10107
        %10730 = vst [vmem:[%s145 + $0x1a4] sm:$0x1] %v10090
        %10731 = vst [vmem:[%s145 + $0x1ac] sm:$0x1] %v10104
        %10732 = vst [vmem:[%s145 + $0x1b4] sm:$0x1] %v10106
        %10733 = vst [vmem:[%s145 + $0x1bc] sm:$0x1] %v10108
        %10734 = vst [vmem:[%s145 + $0x1c4] sm:$0x1] %v10132
        %10735 = vst [vmem:[%s145 + $0x1cc] sm:$0x1] %v10146
        %10736 = vst [vmem:[%s145 + $0x1d4] sm:$0x1] %v10154
        %10737 = vst [vmem:[%s145 + $0x1dc] sm:$0x1] %v10156
        %10738 = vst [vmem:[%s145 + $0x1e4] sm:$0x1] %v10139
        %10739 = vst [vmem:[%s145 + $0x1ec] sm:$0x1] %v10153
        %10740 = vst [vmem:[%s145 + $0x1f4] sm:$0x1] %v10155
        %10741 = vst [vmem:[%s145 + $0x1fc] sm:$0x1] %v10157
        %10742 = vst [vmem:[%s145 + $0x204] sm:$0x1] %v10181
        %10743 = vst [vmem:[%s145 + $0x20c] sm:$0x1] %v10195
        %10744 = vst [vmem:[%s145 + $0x214] sm:$0x1] %v10203
        %10745 = vst [vmem:[%s145 + $0x21c] sm:$0x1] %v10205
        %10746 = vst [vmem:[%s145 + $0x224] sm:$0x1] %v10188
        %10747 = vst [vmem:[%s145 + $0x22c] sm:$0x1] %v10202
        %10748 = vst [vmem:[%s145 + $0x234] sm:$0x1] %v10204
        %10749 = vst [vmem:[%s145 + $0x23c] sm:$0x1] %v10206
        %10750 = vst [vmem:[%s145 + $0x244] sm:$0x1] %v10230
        %10751 = vst [vmem:[%s145 + $0x24c] sm:$0x1] %v10244
        %10752 = vst [vmem:[%s145 + $0x254] sm:$0x1] %v10252
        %10753 = vst [vmem:[%s145 + $0x25c] sm:$0x1] %v10254
        %10754 = vst [vmem:[%s145 + $0x264] sm:$0x1] %v10237
        %10755 = vst [vmem:[%s145 + $0x26c] sm:$0x1] %v10251
        %10756 = vst [vmem:[%s145 + $0x274] sm:$0x1] %v10253
        %10757 = vst [vmem:[%s145 + $0x27c] sm:$0x1] %v10255
        %10758 = vst [vmem:[%s145 + $0x284] sm:$0x1] %v10279
        %10759 = vst [vmem:[%s145 + $0x28c] sm:$0x1] %v10293
        %10760 = vst [vmem:[%s145 + $0x294] sm:$0x1] %v10301
        %10761 = vst [vmem:[%s145 + $0x29c] sm:$0x1] %v10303
        %10762 = vst [vmem:[%s145 + $0x2a4] sm:$0x1] %v10286
        %10763 = vst [vmem:[%s145 + $0x2ac] sm:$0x1] %v10300
        %10764 = vst [vmem:[%s145 + $0x2b4] sm:$0x1] %v10302
        %10765 = vst [vmem:[%s145 + $0x2bc] sm:$0x1] %v10304
        %10766 = vst [vmem:[%s145 + $0x2c4] sm:$0x1] %v10328
        %10767 = vst [vmem:[%s145 + $0x2cc] sm:$0x1] %v10342
        %10768 = vst [vmem:[%s145 + $0x2d4] sm:$0x1] %v10350
        %10769 = vst [vmem:[%s145 + $0x2dc] sm:$0x1] %v10352
        %10770 = vst [vmem:[%s145 + $0x2e4] sm:$0x1] %v10335
        %10771 = vst [vmem:[%s145 + $0x2ec] sm:$0x1] %v10349
        %10772 = vst [vmem:[%s145 + $0x2f4] sm:$0x1] %v10351
        %10773 = vst [vmem:[%s145 + $0x2fc] sm:$0x1] %v10353
        %10774 = vst [vmem:[%s145 + $0x304] sm:$0x1] %v10377
        %10775 = vst [vmem:[%s145 + $0x30c] sm:$0x1] %v10391
        %10776 = vst [vmem:[%s145 + $0x314] sm:$0x1] %v10399
        %10777 = vst [vmem:[%s145 + $0x31c] sm:$0x1] %v10401
        %10778 = vst [vmem:[%s145 + $0x324] sm:$0x1] %v10384
        %10779 = vst [vmem:[%s145 + $0x32c] sm:$0x1] %v10398
        %10780 = vst [vmem:[%s145 + $0x334] sm:$0x1] %v10400
        %10781 = vst [vmem:[%s145 + $0x33c] sm:$0x1] %v10402
        %10782 = vst [vmem:[%s145 + $0x344] sm:$0x1] %v10426
        %10783 = vst [vmem:[%s145 + $0x34c] sm:$0x1] %v10440
        %10784 = vst [vmem:[%s145 + $0x354] sm:$0x1] %v10448
        %10785 = vst [vmem:[%s145 + $0x35c] sm:$0x1] %v10450
        %10786 = vst [vmem:[%s145 + $0x364] sm:$0x1] %v10433
        %10787 = vst [vmem:[%s145 + $0x36c] sm:$0x1] %v10447
        %10788 = vst [vmem:[%s145 + $0x374] sm:$0x1] %v10449
        %10789 = vst [vmem:[%s145 + $0x37c] sm:$0x1] %v10451
        %10790 = vst [vmem:[%s145 + $0x384] sm:$0x1] %v10475
        %10791 = vst [vmem:[%s145 + $0x38c] sm:$0x1] %v10489
        %10792 = vst [vmem:[%s145 + $0x394] sm:$0x1] %v10497
        %10793 = vst [vmem:[%s145 + $0x39c] sm:$0x1] %v10499
        %10794 = vst [vmem:[%s145 + $0x3a4] sm:$0x1] %v10482
        %10795 = vst [vmem:[%s145 + $0x3ac] sm:$0x1] %v10496
        %10796 = vst [vmem:[%s145 + $0x3b4] sm:$0x1] %v10498
        %10797 = vst [vmem:[%s145 + $0x3bc] sm:$0x1] %v10500
        %10798 = vst [vmem:[%s145 + $0x3c4] sm:$0x1] %v10524
        %10799 = vst [vmem:[%s145 + $0x3cc] sm:$0x1] %v10538
        %10800 = vst [vmem:[%s145 + $0x3d4] sm:$0x1] %v10546
        %10801 = vst [vmem:[%s145 + $0x3dc] sm:$0x1] %v10548
        %10802 = vst [vmem:[%s145 + $0x3e4] sm:$0x1] %v10531
        %10803 = vst [vmem:[%s145 + $0x3ec] sm:$0x1] %v10545
        %10804 = vst [vmem:[%s145 + $0x3f4] sm:$0x1] %v10547
        %10805 = vst [vmem:[%s145 + $0x3fc] sm:$0x1] %v10549
        %10806 = vmatprep.subr.mxu0 0.0
        %10807 = vmatpush1.msra.mxu0 0.0
        %10808 = vmatprep.subr.mxu0 0.0
        %10809 = vmatpush1.msra.mxu0 0.0
        %10810 = vmatprep.subr.mxu0 0.0
        %10811 = vmatpush1.msra.mxu0 0.0
        %10812 = vmatprep.subr.mxu0 0.0
        %10813 = vmatpush1.msra.mxu0 0.0
        %10814 = vmatprep.subr.mxu0 0.0
        %10815 = vmatpush1.msra.mxu0 0.0
        %10816 = vmatprep.subr.mxu0 0.0
        %10817 = vmatpush1.msra.mxu0 0.0
        %10818 = vmatprep.subr.mxu0 0.0
        %10819 = vmatpush1.msra.mxu0 0.0
        %10820 = vmatprep.subr.mxu0 0.0
        %10821 = vmatpush1.msra.mxu0 0.0
        %10822 = vmatprep.subr.mxu0 0.0
        %10823 = vmatpush1.msra.mxu0 %v181
        %10824 = vmatprep.subr.mxu0 0.0
        %10825 = vmatpush1.msra.mxu0 %v180
        %10826 = vmatprep.subr.mxu0 0.0
        %10827 = vmatpush1.msra.mxu0 %v179
        %10828 = vmatprep.subr.mxu0 0.0
        %10829 = vmatpush1.msra.mxu0 %v178
        %10830 = vmatprep.subr.mxu0 0.0
        %10831 = vmatpush1.msra.mxu0 %v177
        %10832 = vmatprep.subr.mxu0 0.0
        %10833 = vmatpush1.msra.mxu0 %v176
        %10834 = vmatprep.subr.mxu0 0.0
        %10835 = vmatpush1.msra.mxu0 %v175
        %10836 = vmatprep.subr.mxu0 0.0
        %10837 = vmatpush1.msra.mxu0 %v174
        %10838 = vmatprep.subr.mxu0 0.0
        %10839 = vmatpush2.msra.mxu0 0.0
        %10840 = vmatprep.subr.mxu0 0.0
        %10841 = vmatpush2.msra.mxu0 0.0
        %10842 = vmatprep.subr.mxu0 0.0
        %10843 = vmatpush2.msra.mxu0 0.0
        %10844 = vmatprep.subr.mxu0 0.0
        %10845 = vmatpush2.msra.mxu0 0.0
        %10846 = vmatprep.subr.mxu0 0.0
        %10847 = vmatpush2.msra.mxu0 0.0
        %10848 = vmatprep.subr.mxu0 0.0
        %10849 = vmatpush2.msra.mxu0 0.0
        %10850 = vmatprep.subr.mxu0 0.0
        %10851 = vmatpush2.msra.mxu0 0.0
        %10852 = vmatprep.subr.mxu0 0.0
        %10853 = vmatpush2.msra.mxu0 0.0
        %10854 = vmatprep.subr.mxu0 0.0
        %10855 = vmatpush2.msra.mxu0 0.0
        %10856 = vmatprep.subr.mxu0 0.0
        %10857 = vmatpush2.msra.mxu0 0.0
        %10858 = vmatprep.subr.mxu0 0.0
        %10859 = vmatpush2.msra.mxu0 0.0
        %10860 = vmatprep.subr.mxu0 0.0
        %10861 = vmatpush2.msra.mxu0 0.0
        %10862 = vmatprep.subr.mxu0 0.0
        %10863 = vmatpush2.msra.mxu0 0.0
        %10864 = vmatprep.subr.mxu0 0.0
        %10865 = vmatpush2.msra.mxu0 0.0
        %10866 = vmatprep.subr.mxu0 0.0
        %10867 = vmatpush2.msra.mxu0 0.0
        %10868 = vmatprep.subr.mxu0 0.0
        %10869 = vmatpush2.msra.mxu0 0.0
        %10870 = vmatprep.mubr.f32.mxu0 0.0
        %10871 = vmatmul.mubr.f32.gmra.mxu0 %v1336
        %v10872 = vpop.f32.mrf.mxu0
        %v10873 = vadd.f32 0.0, %v10872
        %v10874 = vpop.f32.mrf.mxu0
        %10875 = vmatprep.mubr.f32.mxu0 0.0
        %10876 = vmatmul.mubr.f32.gmra.mxu0 %v1338
        %v10877 = vpop.f32.mrf.mxu0
        %v10878 = vadd.f32 0.0, %v10877
        %v10879 = vpop.f32.mrf.mxu0
        %10880 = vmatprep.mubr.f32.mxu0 0.0
        %10881 = vmatmul.mubr.f32.gmra.mxu0 %v1340
        %v10882 = vpop.f32.mrf.mxu0
        %v10883 = vadd.f32 0.0, %v10882
        %v10884 = vpop.f32.mrf.mxu0
        %10885 = vmatprep.mubr.f32.mxu0 0.0
        %10886 = vmatmul.mubr.f32.gmra.mxu0 %v1342
        %v10887 = vpop.f32.mrf.mxu0
        %v10888 = vadd.f32 0.0, %v10887
        %v10889 = vpop.f32.mrf.mxu0
        %10890 = vmatprep.mubr.f32.mxu0 0.0
        %10891 = vmatmul.mubr.f32.gmra.mxu0 %v1344
        %v10892 = vpop.f32.mrf.mxu0
        %v10893 = vadd.f32 0.0, %v10892
        %v10894 = vpop.f32.mrf.mxu0
        %10895 = vmatprep.mubr.f32.mxu0 0.0
        %10896 = vmatmul.mubr.f32.gmra.mxu0 %v1346
        %v10897 = vpop.f32.mrf.mxu0
        %v10898 = vadd.f32 0.0, %v10897
        %v10899 = vpop.f32.mrf.mxu0
        %10900 = vmatprep.mubr.f32.mxu0 0.0
        %10901 = vmatmul.mubr.f32.gmra.mxu0 %v1348
        %v10902 = vpop.f32.mrf.mxu0
        %v10903 = vadd.f32 0.0, %v10902
        %v10904 = vpop.f32.mrf.mxu0
        %10905 = vmatprep.mubr.f32.mxu0 0.0
        %10906 = vmatmul.mubr.f32.gmra.mxu0 %v1350
        %v10907 = vpop.f32.mrf.mxu0
        %v10908 = vadd.f32 0.0, %v10907
        %v10909 = vpop.f32.mrf.mxu0
        %10910 = vmatprep.mubr.f32.mxu0 0.0
        %10911 = vmatmul.mubr.f32.gmra.mxu0 %v1352
        %v10912 = vpop.f32.mrf.mxu0
        %v10913 = vadd.f32 0.0, %v10912
        %v10914 = vpop.f32.mrf.mxu0
        %10915 = vmatprep.mubr.f32.mxu0 0.0
        %10916 = vmatmul.mubr.f32.gmra.mxu0 %v1354
        %v10917 = vpop.f32.mrf.mxu0
        %v10918 = vadd.f32 0.0, %v10917
        %v10919 = vpop.f32.mrf.mxu0
        %10920 = vmatprep.mubr.f32.mxu0 0.0
        %10921 = vmatmul.mubr.f32.gmra.mxu0 %v1356
        %v10922 = vpop.f32.mrf.mxu0
        %v10923 = vadd.f32 0.0, %v10922
        %v10924 = vpop.f32.mrf.mxu0
        %10925 = vmatprep.mubr.f32.mxu0 0.0
        %10926 = vmatmul.mubr.f32.gmra.mxu0 %v1358
        %v10927 = vpop.f32.mrf.mxu0
        %v10928 = vadd.f32 0.0, %v10927
        %v10929 = vpop.f32.mrf.mxu0
        %10930 = vmatprep.mubr.f32.mxu0 0.0
        %10931 = vmatmul.mubr.f32.gmra.mxu0 %v1360
        %v10932 = vpop.f32.mrf.mxu0
        %v10933 = vadd.f32 0.0, %v10932
        %v10934 = vpop.f32.mrf.mxu0
        %10935 = vmatprep.mubr.f32.mxu0 0.0
        %10936 = vmatmul.mubr.f32.gmra.mxu0 %v1362
        %v10937 = vpop.f32.mrf.mxu0
        %v10938 = vadd.f32 0.0, %v10937
        %v10939 = vpop.f32.mrf.mxu0
        %10940 = vmatprep.mubr.f32.mxu0 0.0
        %10941 = vmatmul.mubr.f32.gmra.mxu0 %v1364
        %v10942 = vpop.f32.mrf.mxu0
        %v10943 = vadd.f32 0.0, %v10942
        %v10944 = vpop.f32.mrf.mxu0
        %10945 = vmatprep.mubr.f32.mxu0 0.0
        %10946 = vmatmul.mubr.f32.gmra.mxu0 %v1366
        %v10947 = vpop.f32.mrf.mxu0
        %v10948 = vadd.f32 0.0, %v10947
        %v10949 = vpop.f32.mrf.mxu0
        %10950 = vdwg.mxu0
        %10951 = vmatprep.subr.mxu0 0.0
        %10952 = vmatpush1.msra.mxu0 0.0
        %10953 = vmatprep.subr.mxu0 0.0
        %10954 = vmatpush1.msra.mxu0 0.0
        %10955 = vmatprep.subr.mxu0 0.0
        %10956 = vmatpush1.msra.mxu0 0.0
        %10957 = vmatprep.subr.mxu0 0.0
        %10958 = vmatpush1.msra.mxu0 0.0
        %10959 = vmatprep.subr.mxu0 0.0
        %10960 = vmatpush1.msra.mxu0 0.0
        %10961 = vmatprep.subr.mxu0 0.0
        %10962 = vmatpush1.msra.mxu0 0.0
        %10963 = vmatprep.subr.mxu0 0.0
        %10964 = vmatpush1.msra.mxu0 0.0
        %10965 = vmatprep.subr.mxu0 0.0
        %10966 = vmatpush1.msra.mxu0 0.0
        %10967 = vmatprep.subr.mxu0 0.0
        %10968 = vmatpush1.msra.mxu0 %v172
        %10969 = vmatprep.subr.mxu0 0.0
        %10970 = vmatpush1.msra.mxu0 %v171
        %10971 = vmatprep.subr.mxu0 0.0
        %10972 = vmatpush1.msra.mxu0 %v170
        %10973 = vmatprep.subr.mxu0 0.0
        %10974 = vmatpush1.msra.mxu0 %v169
        %10975 = vmatprep.subr.mxu0 0.0
        %10976 = vmatpush1.msra.mxu0 %v168
        %10977 = vmatprep.subr.mxu0 0.0
        %10978 = vmatpush1.msra.mxu0 %v167
        %10979 = vmatprep.subr.mxu0 0.0
        %10980 = vmatpush1.msra.mxu0 %v166
        %10981 = vmatprep.subr.mxu0 0.0
        %10982 = vmatpush1.msra.mxu0 %v165
        %10983 = vmatprep.subr.mxu0 0.0
        %10984 = vmatpush2.msra.mxu0 0.0
        %10985 = vmatprep.subr.mxu0 0.0
        %10986 = vmatpush2.msra.mxu0 0.0
        %10987 = vmatprep.subr.mxu0 0.0
        %10988 = vmatpush2.msra.mxu0 0.0
        %10989 = vmatprep.subr.mxu0 0.0
        %10990 = vmatpush2.msra.mxu0 0.0
        %10991 = vmatprep.subr.mxu0 0.0
        %10992 = vmatpush2.msra.mxu0 0.0
        %10993 = vmatprep.subr.mxu0 0.0
        %10994 = vmatpush2.msra.mxu0 0.0
        %10995 = vmatprep.subr.mxu0 0.0
        %10996 = vmatpush2.msra.mxu0 0.0
        %10997 = vmatprep.subr.mxu0 0.0
        %10998 = vmatpush2.msra.mxu0 0.0
        %10999 = vmatprep.subr.mxu0 0.0
        %11000 = vmatpush2.msra.mxu0 0.0
        %11001 = vmatprep.subr.mxu0 0.0
        %11002 = vmatpush2.msra.mxu0 0.0
        %11003 = vmatprep.subr.mxu0 0.0
        %11004 = vmatpush2.msra.mxu0 0.0
        %11005 = vmatprep.subr.mxu0 0.0
        %11006 = vmatpush2.msra.mxu0 0.0
        %11007 = vmatprep.subr.mxu0 0.0
        %11008 = vmatpush2.msra.mxu0 0.0
        %11009 = vmatprep.subr.mxu0 0.0
        %11010 = vmatpush2.msra.mxu0 0.0
        %11011 = vmatprep.subr.mxu0 0.0
        %11012 = vmatpush2.msra.mxu0 0.0
        %11013 = vmatprep.subr.mxu0 0.0
        %11014 = vmatpush2.msra.mxu0 0.0
        %11015 = vmatprep.mubr.f32.mxu0 0.0
        %11016 = vmatmul.mubr.f32.gmra.mxu0 %v8050
        %v11017 = vpop.f32.mrf.mxu0
        %v11018 = vadd.f32 %v10873, %v11017
        %v11019 = vpop.f32.mrf.mxu0
        %11020 = vmatprep.mubr.f32.mxu0 0.0
        %11021 = vmatmul.mubr.f32.gmra.mxu0 %v8052
        %v11022 = vpop.f32.mrf.mxu0
        %v11023 = vadd.f32 %v10878, %v11022
        %v11024 = vpop.f32.mrf.mxu0
        %11025 = vmatprep.mubr.f32.mxu0 0.0
        %11026 = vmatmul.mubr.f32.gmra.mxu0 %v8054
        %v11027 = vpop.f32.mrf.mxu0
        %v11028 = vadd.f32 %v10883, %v11027
        %v11029 = vpop.f32.mrf.mxu0
        %11030 = vmatprep.mubr.f32.mxu0 0.0
        %11031 = vmatmul.mubr.f32.gmra.mxu0 %v8056
        %v11032 = vpop.f32.mrf.mxu0
        %v11033 = vadd.f32 %v10888, %v11032
        %v11034 = vpop.f32.mrf.mxu0
        %11035 = vmatprep.mubr.f32.mxu0 0.0
        %11036 = vmatmul.mubr.f32.gmra.mxu0 %v8058
        %v11037 = vpop.f32.mrf.mxu0
        %v11038 = vadd.f32 %v10893, %v11037
        %v11039 = vpop.f32.mrf.mxu0
        %11040 = vmatprep.mubr.f32.mxu0 0.0
        %11041 = vmatmul.mubr.f32.gmra.mxu0 %v8060
        %v11042 = vpop.f32.mrf.mxu0
        %v11043 = vadd.f32 %v10898, %v11042
        %v11044 = vpop.f32.mrf.mxu0
        %11045 = vmatprep.mubr.f32.mxu0 0.0
        %11046 = vmatmul.mubr.f32.gmra.mxu0 %v8062
        %v11047 = vpop.f32.mrf.mxu0
        %v11048 = vadd.f32 %v10903, %v11047
        %v11049 = vpop.f32.mrf.mxu0
        %11050 = vmatprep.mubr.f32.mxu0 0.0
        %11051 = vmatmul.mubr.f32.gmra.mxu0 %v8064
        %v11052 = vpop.f32.mrf.mxu0
        %v11053 = vadd.f32 %v10908, %v11052
        %v11054 = vpop.f32.mrf.mxu0
        %11055 = vmatprep.mubr.f32.mxu0 0.0
        %11056 = vmatmul.mubr.f32.gmra.mxu0 %v8066
        %v11057 = vpop.f32.mrf.mxu0
        %v11058 = vadd.f32 %v10913, %v11057
        %v11059 = vpop.f32.mrf.mxu0
        %11060 = vmatprep.mubr.f32.mxu0 0.0
        %11061 = vmatmul.mubr.f32.gmra.mxu0 %v8068
        %v11062 = vpop.f32.mrf.mxu0
        %v11063 = vadd.f32 %v10918, %v11062
        %v11064 = vpop.f32.mrf.mxu0
        %11065 = vmatprep.mubr.f32.mxu0 0.0
        %11066 = vmatmul.mubr.f32.gmra.mxu0 %v8070
        %v11067 = vpop.f32.mrf.mxu0
        %v11068 = vadd.f32 %v10923, %v11067
        %v11069 = vpop.f32.mrf.mxu0
        %11070 = vmatprep.mubr.f32.mxu0 0.0
        %11071 = vmatmul.mubr.f32.gmra.mxu0 %v8072
        %v11072 = vpop.f32.mrf.mxu0
        %v11073 = vadd.f32 %v10928, %v11072
        %v11074 = vpop.f32.mrf.mxu0
        %11075 = vmatprep.mubr.f32.mxu0 0.0
        %11076 = vmatmul.mubr.f32.gmra.mxu0 %v8074
        %v11077 = vpop.f32.mrf.mxu0
        %v11078 = vadd.f32 %v10933, %v11077
        %v11079 = vpop.f32.mrf.mxu0
        %11080 = vmatprep.mubr.f32.mxu0 0.0
        %11081 = vmatmul.mubr.f32.gmra.mxu0 %v8076
        %v11082 = vpop.f32.mrf.mxu0
        %v11083 = vadd.f32 %v10938, %v11082
        %v11084 = vpop.f32.mrf.mxu0
        %11085 = vmatprep.mubr.f32.mxu0 0.0
        %11086 = vmatmul.mubr.f32.gmra.mxu0 %v8078
        %v11087 = vpop.f32.mrf.mxu0
        %v11088 = vadd.f32 %v10943, %v11087
        %v11089 = vpop.f32.mrf.mxu0
        %11090 = vmatprep.mubr.f32.mxu0 0.0
        %11091 = vmatmul.mubr.f32.gmra.mxu0 %v8080
        %v11092 = vpop.f32.mrf.mxu0
        %v11093 = vadd.f32 %v10948, %v11092
        %v11094 = vpop.f32.mrf.mxu0
        %11095 = vdwg.mxu0
        %11096 = vmatprep.subr.mxu0 0.0
        %11097 = vmatpush1.msra.mxu0 0.0
        %11098 = vmatprep.subr.mxu0 0.0
        %11099 = vmatpush1.msra.mxu0 0.0
        %11100 = vmatprep.subr.mxu0 0.0
        %11101 = vmatpush1.msra.mxu0 0.0
        %11102 = vmatprep.subr.mxu0 0.0
        %11103 = vmatpush1.msra.mxu0 0.0
        %11104 = vmatprep.subr.mxu0 0.0
        %11105 = vmatpush1.msra.mxu0 0.0
        %11106 = vmatprep.subr.mxu0 0.0
        %11107 = vmatpush1.msra.mxu0 0.0
        %11108 = vmatprep.subr.mxu0 0.0
        %11109 = vmatpush1.msra.mxu0 0.0
        %11110 = vmatprep.subr.mxu0 0.0
        %11111 = vmatpush1.msra.mxu0 0.0
        %11112 = vmatprep.subr.mxu0 0.0
        %11113 = vmatpush1.msra.mxu0 %v190
        %11114 = vmatprep.subr.mxu0 0.0
        %11115 = vmatpush1.msra.mxu0 %v189
        %11116 = vmatprep.subr.mxu0 0.0
        %11117 = vmatpush1.msra.mxu0 %v188
        %11118 = vmatprep.subr.mxu0 0.0
        %11119 = vmatpush1.msra.mxu0 %v187
        %11120 = vmatprep.subr.mxu0 0.0
        %11121 = vmatpush1.msra.mxu0 %v186
        %11122 = vmatprep.subr.mxu0 0.0
        %11123 = vmatpush1.msra.mxu0 %v185
        %11124 = vmatprep.subr.mxu0 0.0
        %11125 = vmatpush1.msra.mxu0 %v184
        %11126 = vmatprep.subr.mxu0 0.0
        %11127 = vmatpush1.msra.mxu0 %v183
        %11128 = vmatprep.subr.mxu0 0.0
        %11129 = vmatpush2.msra.mxu0 0.0
        %11130 = vmatprep.subr.mxu0 0.0
        %11131 = vmatpush2.msra.mxu0 0.0
        %11132 = vmatprep.subr.mxu0 0.0
        %11133 = vmatpush2.msra.mxu0 0.0
        %11134 = vmatprep.subr.mxu0 0.0
        %11135 = vmatpush2.msra.mxu0 0.0
        %11136 = vmatprep.subr.mxu0 0.0
        %11137 = vmatpush2.msra.mxu0 0.0
        %11138 = vmatprep.subr.mxu0 0.0
        %11139 = vmatpush2.msra.mxu0 0.0
        %11140 = vmatprep.subr.mxu0 0.0
        %11141 = vmatpush2.msra.mxu0 0.0
        %11142 = vmatprep.subr.mxu0 0.0
        %11143 = vmatpush2.msra.mxu0 0.0
        %11144 = vmatprep.subr.mxu0 0.0
        %11145 = vmatpush2.msra.mxu0 0.0
        %11146 = vmatprep.subr.mxu0 0.0
        %11147 = vmatpush2.msra.mxu0 0.0
        %11148 = vmatprep.subr.mxu0 0.0
        %11149 = vmatpush2.msra.mxu0 0.0
        %11150 = vmatprep.subr.mxu0 0.0
        %11151 = vmatpush2.msra.mxu0 0.0
        %11152 = vmatprep.subr.mxu0 0.0
        %11153 = vmatpush2.msra.mxu0 0.0
        %11154 = vmatprep.subr.mxu0 0.0
        %11155 = vmatpush2.msra.mxu0 0.0
        %11156 = vmatprep.subr.mxu0 0.0
        %11157 = vmatpush2.msra.mxu0 0.0
        %11158 = vmatprep.subr.mxu0 0.0
        %11159 = vmatpush2.msra.mxu0 0.0
        %11160 = vmatprep.mubr.f32.mxu0 0.0
        %11161 = vmatmul.mubr.f32.gmra.mxu0 %v807
        %v11162 = vpop.f32.mrf.mxu0
        %v11163 = vadd.f32 0.0, %v11162
        %v11164 = vpop.f32.mrf.mxu0
        %11165 = vmatprep.mubr.f32.mxu0 0.0
        %11166 = vmatmul.mubr.f32.gmra.mxu0 %v809
        %v11167 = vpop.f32.mrf.mxu0
        %v11168 = vadd.f32 0.0, %v11167
        %v11169 = vpop.f32.mrf.mxu0
        %11170 = vmatprep.mubr.f32.mxu0 0.0
        %11171 = vmatmul.mubr.f32.gmra.mxu0 %v811
        %v11172 = vpop.f32.mrf.mxu0
        %v11173 = vadd.f32 0.0, %v11172
        %v11174 = vpop.f32.mrf.mxu0
        %11175 = vmatprep.mubr.f32.mxu0 0.0
        %11176 = vmatmul.mubr.f32.gmra.mxu0 %v813
        %v11177 = vpop.f32.mrf.mxu0
        %v11178 = vadd.f32 0.0, %v11177
        %v11179 = vpop.f32.mrf.mxu0
        %11180 = vmatprep.mubr.f32.mxu0 0.0
        %11181 = vmatmul.mubr.f32.gmra.mxu0 %v815
        %v11182 = vpop.f32.mrf.mxu0
        %v11183 = vadd.f32 0.0, %v11182
        %v11184 = vpop.f32.mrf.mxu0
        %11185 = vmatprep.mubr.f32.mxu0 0.0
        %11186 = vmatmul.mubr.f32.gmra.mxu0 %v817
        %v11187 = vpop.f32.mrf.mxu0
        %v11188 = vadd.f32 0.0, %v11187
        %v11189 = vpop.f32.mrf.mxu0
        %11190 = vmatprep.mubr.f32.mxu0 0.0
        %11191 = vmatmul.mubr.f32.gmra.mxu0 %v819
        %v11192 = vpop.f32.mrf.mxu0
        %v11193 = vadd.f32 0.0, %v11192
        %v11194 = vpop.f32.mrf.mxu0
        %11195 = vmatprep.mubr.f32.mxu0 0.0
        %11196 = vmatmul.mubr.f32.gmra.mxu0 %v821
        %v11197 = vpop.f32.mrf.mxu0
        %v11198 = vadd.f32 0.0, %v11197
        %v11199 = vpop.f32.mrf.mxu0
        %11200 = vmatprep.mubr.f32.mxu0 0.0
        %11201 = vmatmul.mubr.f32.gmra.mxu0 %v823
        %v11202 = vpop.f32.mrf.mxu0
        %v11203 = vadd.f32 0.0, %v11202
        %v11204 = vpop.f32.mrf.mxu0
        %11205 = vmatprep.mubr.f32.mxu0 0.0
        %11206 = vmatmul.mubr.f32.gmra.mxu0 %v825
        %v11207 = vpop.f32.mrf.mxu0
        %v11208 = vadd.f32 0.0, %v11207
        %v11209 = vpop.f32.mrf.mxu0
        %11210 = vmatprep.mubr.f32.mxu0 0.0
        %11211 = vmatmul.mubr.f32.gmra.mxu0 %v827
        %v11212 = vpop.f32.mrf.mxu0
        %v11213 = vadd.f32 0.0, %v11212
        %v11214 = vpop.f32.mrf.mxu0
        %11215 = vmatprep.mubr.f32.mxu0 0.0
        %11216 = vmatmul.mubr.f32.gmra.mxu0 %v829
        %v11217 = vpop.f32.mrf.mxu0
        %v11218 = vadd.f32 0.0, %v11217
        %v11219 = vpop.f32.mrf.mxu0
        %11220 = vmatprep.mubr.f32.mxu0 0.0
        %11221 = vmatmul.mubr.f32.gmra.mxu0 %v831
        %v11222 = vpop.f32.mrf.mxu0
        %v11223 = vadd.f32 0.0, %v11222
        %v11224 = vpop.f32.mrf.mxu0
        %11225 = vmatprep.mubr.f32.mxu0 0.0
        %11226 = vmatmul.mubr.f32.gmra.mxu0 %v833
        %v11227 = vpop.f32.mrf.mxu0
        %v11228 = vadd.f32 0.0, %v11227
        %v11229 = vpop.f32.mrf.mxu0
        %11230 = vmatprep.mubr.f32.mxu0 0.0
        %11231 = vmatmul.mubr.f32.gmra.mxu0 %v835
        %v11232 = vpop.f32.mrf.mxu0
        %v11233 = vadd.f32 0.0, %v11232
        %v11234 = vpop.f32.mrf.mxu0
        %11235 = vmatprep.mubr.f32.mxu0 0.0
        %11236 = vmatmul.mubr.f32.gmra.mxu0 %v837
        %v11237 = vpop.f32.mrf.mxu0
        %v11238 = vadd.f32 0.0, %v11237
        %v11239 = vpop.f32.mrf.mxu0
        %11240 = vdwg.mxu0
        %v11241 = vadd.f32 %v11018, %v11163
        %v11242 = vadd.f32 %v11023, %v11168
        %v11243 = vadd.f32 %v11028, %v11173
        %v11244 = vadd.f32 %v11033, %v11178
        %v11245 = vadd.f32 %v11038, %v11183
        %v11246 = vadd.f32 %v11043, %v11188
        %v11247 = vadd.f32 %v11048, %v11193
        %v11248 = vadd.f32 %v11053, %v11198
        %v11249 = vadd.f32 %v11058, %v11203
        %v11250 = vadd.f32 %v11063, %v11208
        %v11251 = vadd.f32 %v11068, %v11213
        %v11252 = vadd.f32 %v11073, %v11218
        %v11253 = vadd.f32 %v11078, %v11223
        %v11254 = vadd.f32 %v11083, %v11228
        %v11255 = vadd.f32 %v11088, %v11233
        %v11256 = vadd.f32 %v11093, %v11238
        %v11273 = vcombine.high %v11241, %v11241
        %v11275 = vunpack.c.l.s4 1966171168
        %v11276 = vunpack.c.0.s8 %v11275
        %v11277 = vlaneseq
        %v11278 = vshrl.u32 %v11277, 7
        %v11279 = vsub.s32 %v11276, %v11278
        %v11280 = vrot.slane %v11241, %v11279
        %v11282 = vunpack.c.l.s4 1966171168
        %v11283 = vunpack.c.0.s8 %v11282
        %v11284 = vlaneseq
        %v11285 = vshrl.u32 %v11284, 7
        %v11286 = vsub.s32 %v11283, %v11285
        %v11287 = vrot.slane %v11273, %v11286
        %v11288 = vcombine.high %v11280, %v11280
        %v11289 = vcombine.high %v11287, %v11287
        %v11291 = vunpack.c.l.s4 1966171168
        %v11292 = vunpack.c.0.s8 %v11291
        %v11293 = vlaneseq
        %v11294 = vshrl.u32 %v11293, 7
        %v11295 = vsub.s32 %v11292, %v11294
        %v11296 = vrot.slane %v11280, %v11295
        %v11298 = vunpack.c.l.s4 1966171168
        %v11299 = vunpack.c.0.s8 %v11298
        %v11300 = vlaneseq
        %v11301 = vshrl.u32 %v11300, 7
        %v11302 = vsub.s32 %v11299, %v11301
        %v11303 = vrot.slane %v11287, %v11302
        %v11305 = vunpack.c.l.s4 1966171168
        %v11306 = vunpack.c.0.s8 %v11305
        %v11307 = vlaneseq
        %v11308 = vshrl.u32 %v11307, 7
        %v11309 = vsub.s32 %v11306, %v11308
        %v11310 = vrot.slane %v11288, %v11309
        %v11312 = vunpack.c.l.s4 1966171168
        %v11313 = vunpack.c.0.s8 %v11312
        %v11314 = vlaneseq
        %v11315 = vshrl.u32 %v11314, 7
        %v11316 = vsub.s32 %v11313, %v11315
        %v11317 = vrot.slane %v11289, %v11316
        %v11318 = vcombine.high %v11296, %v11296
        %v11319 = vcombine.high %v11303, %v11303
        %v11320 = vcombine.high %v11310, %v11310
        %v11321 = vcombine.high %v11317, %v11317
        %v11322 = vcombine.high %v11242, %v11242
        %v11324 = vunpack.c.l.s4 1966171168
        %v11325 = vunpack.c.0.s8 %v11324
        %v11326 = vlaneseq
        %v11327 = vshrl.u32 %v11326, 7
        %v11328 = vsub.s32 %v11325, %v11327
        %v11329 = vrot.slane %v11242, %v11328
        %v11331 = vunpack.c.l.s4 1966171168
        %v11332 = vunpack.c.0.s8 %v11331
        %v11333 = vlaneseq
        %v11334 = vshrl.u32 %v11333, 7
        %v11335 = vsub.s32 %v11332, %v11334
        %v11336 = vrot.slane %v11322, %v11335
        %v11337 = vcombine.high %v11329, %v11329
        %v11338 = vcombine.high %v11336, %v11336
        %v11340 = vunpack.c.l.s4 1966171168
        %v11341 = vunpack.c.0.s8 %v11340
        %v11342 = vlaneseq
        %v11343 = vshrl.u32 %v11342, 7
        %v11344 = vsub.s32 %v11341, %v11343
        %v11345 = vrot.slane %v11329, %v11344
        %v11347 = vunpack.c.l.s4 1966171168
        %v11348 = vunpack.c.0.s8 %v11347
        %v11349 = vlaneseq
        %v11350 = vshrl.u32 %v11349, 7
        %v11351 = vsub.s32 %v11348, %v11350
        %v11352 = vrot.slane %v11336, %v11351
        %v11354 = vunpack.c.l.s4 1966171168
        %v11355 = vunpack.c.0.s8 %v11354
        %v11356 = vlaneseq
        %v11357 = vshrl.u32 %v11356, 7
        %v11358 = vsub.s32 %v11355, %v11357
        %v11359 = vrot.slane %v11337, %v11358
        %v11361 = vunpack.c.l.s4 1966171168
        %v11362 = vunpack.c.0.s8 %v11361
        %v11363 = vlaneseq
        %v11364 = vshrl.u32 %v11363, 7
        %v11365 = vsub.s32 %v11362, %v11364
        %v11366 = vrot.slane %v11338, %v11365
        %v11367 = vcombine.high %v11345, %v11345
        %v11368 = vcombine.high %v11352, %v11352
        %v11369 = vcombine.high %v11359, %v11359
        %v11370 = vcombine.high %v11366, %v11366
        %v11371 = vcombine.high %v11243, %v11243
        %v11373 = vunpack.c.l.s4 1966171168
        %v11374 = vunpack.c.0.s8 %v11373
        %v11375 = vlaneseq
        %v11376 = vshrl.u32 %v11375, 7
        %v11377 = vsub.s32 %v11374, %v11376
        %v11378 = vrot.slane %v11243, %v11377
        %v11380 = vunpack.c.l.s4 1966171168
        %v11381 = vunpack.c.0.s8 %v11380
        %v11382 = vlaneseq
        %v11383 = vshrl.u32 %v11382, 7
        %v11384 = vsub.s32 %v11381, %v11383
        %v11385 = vrot.slane %v11371, %v11384
        %v11386 = vcombine.high %v11378, %v11378
        %v11387 = vcombine.high %v11385, %v11385
        %v11389 = vunpack.c.l.s4 1966171168
        %v11390 = vunpack.c.0.s8 %v11389
        %v11391 = vlaneseq
        %v11392 = vshrl.u32 %v11391, 7
        %v11393 = vsub.s32 %v11390, %v11392
        %v11394 = vrot.slane %v11378, %v11393
        %v11396 = vunpack.c.l.s4 1966171168
        %v11397 = vunpack.c.0.s8 %v11396
        %v11398 = vlaneseq
        %v11399 = vshrl.u32 %v11398, 7
        %v11400 = vsub.s32 %v11397, %v11399
        %v11401 = vrot.slane %v11385, %v11400
        %v11403 = vunpack.c.l.s4 1966171168
        %v11404 = vunpack.c.0.s8 %v11403
        %v11405 = vlaneseq
        %v11406 = vshrl.u32 %v11405, 7
        %v11407 = vsub.s32 %v11404, %v11406
        %v11408 = vrot.slane %v11386, %v11407
        %v11410 = vunpack.c.l.s4 1966171168
        %v11411 = vunpack.c.0.s8 %v11410
        %v11412 = vlaneseq
        %v11413 = vshrl.u32 %v11412, 7
        %v11414 = vsub.s32 %v11411, %v11413
        %v11415 = vrot.slane %v11387, %v11414
        %v11416 = vcombine.high %v11394, %v11394
        %v11417 = vcombine.high %v11401, %v11401
        %v11418 = vcombine.high %v11408, %v11408
        %v11419 = vcombine.high %v11415, %v11415
        %v11420 = vcombine.high %v11244, %v11244
        %v11422 = vunpack.c.l.s4 1966171168
        %v11423 = vunpack.c.0.s8 %v11422
        %v11424 = vlaneseq
        %v11425 = vshrl.u32 %v11424, 7
        %v11426 = vsub.s32 %v11423, %v11425
        %v11427 = vrot.slane %v11244, %v11426
        %v11429 = vunpack.c.l.s4 1966171168
        %v11430 = vunpack.c.0.s8 %v11429
        %v11431 = vlaneseq
        %v11432 = vshrl.u32 %v11431, 7
        %v11433 = vsub.s32 %v11430, %v11432
        %v11434 = vrot.slane %v11420, %v11433
        %v11435 = vcombine.high %v11427, %v11427
        %v11436 = vcombine.high %v11434, %v11434
        %v11438 = vunpack.c.l.s4 1966171168
        %v11439 = vunpack.c.0.s8 %v11438
        %v11440 = vlaneseq
        %v11441 = vshrl.u32 %v11440, 7
        %v11442 = vsub.s32 %v11439, %v11441
        %v11443 = vrot.slane %v11427, %v11442
        %v11445 = vunpack.c.l.s4 1966171168
        %v11446 = vunpack.c.0.s8 %v11445
        %v11447 = vlaneseq
        %v11448 = vshrl.u32 %v11447, 7
        %v11449 = vsub.s32 %v11446, %v11448
        %v11450 = vrot.slane %v11434, %v11449
        %v11452 = vunpack.c.l.s4 1966171168
        %v11453 = vunpack.c.0.s8 %v11452
        %v11454 = vlaneseq
        %v11455 = vshrl.u32 %v11454, 7
        %v11456 = vsub.s32 %v11453, %v11455
        %v11457 = vrot.slane %v11435, %v11456
        %v11459 = vunpack.c.l.s4 1966171168
        %v11460 = vunpack.c.0.s8 %v11459
        %v11461 = vlaneseq
        %v11462 = vshrl.u32 %v11461, 7
        %v11463 = vsub.s32 %v11460, %v11462
        %v11464 = vrot.slane %v11436, %v11463
        %v11465 = vcombine.high %v11443, %v11443
        %v11466 = vcombine.high %v11450, %v11450
        %v11467 = vcombine.high %v11457, %v11457
        %v11468 = vcombine.high %v11464, %v11464
        %v11469 = vcombine.high %v11245, %v11245
        %v11471 = vunpack.c.l.s4 1966171168
        %v11472 = vunpack.c.0.s8 %v11471
        %v11473 = vlaneseq
        %v11474 = vshrl.u32 %v11473, 7
        %v11475 = vsub.s32 %v11472, %v11474
        %v11476 = vrot.slane %v11245, %v11475
        %v11478 = vunpack.c.l.s4 1966171168
        %v11479 = vunpack.c.0.s8 %v11478
        %v11480 = vlaneseq
        %v11481 = vshrl.u32 %v11480, 7
        %v11482 = vsub.s32 %v11479, %v11481
        %v11483 = vrot.slane %v11469, %v11482
        %v11484 = vcombine.high %v11476, %v11476
        %v11485 = vcombine.high %v11483, %v11483
        %v11487 = vunpack.c.l.s4 1966171168
        %v11488 = vunpack.c.0.s8 %v11487
        %v11489 = vlaneseq
        %v11490 = vshrl.u32 %v11489, 7
        %v11491 = vsub.s32 %v11488, %v11490
        %v11492 = vrot.slane %v11476, %v11491
        %v11494 = vunpack.c.l.s4 1966171168
        %v11495 = vunpack.c.0.s8 %v11494
        %v11496 = vlaneseq
        %v11497 = vshrl.u32 %v11496, 7
        %v11498 = vsub.s32 %v11495, %v11497
        %v11499 = vrot.slane %v11483, %v11498
        %v11501 = vunpack.c.l.s4 1966171168
        %v11502 = vunpack.c.0.s8 %v11501
        %v11503 = vlaneseq
        %v11504 = vshrl.u32 %v11503, 7
        %v11505 = vsub.s32 %v11502, %v11504
        %v11506 = vrot.slane %v11484, %v11505
        %v11508 = vunpack.c.l.s4 1966171168
        %v11509 = vunpack.c.0.s8 %v11508
        %v11510 = vlaneseq
        %v11511 = vshrl.u32 %v11510, 7
        %v11512 = vsub.s32 %v11509, %v11511
        %v11513 = vrot.slane %v11485, %v11512
        %v11514 = vcombine.high %v11492, %v11492
        %v11515 = vcombine.high %v11499, %v11499
        %v11516 = vcombine.high %v11506, %v11506
        %v11517 = vcombine.high %v11513, %v11513
        %v11518 = vcombine.high %v11246, %v11246
        %v11520 = vunpack.c.l.s4 1966171168
        %v11521 = vunpack.c.0.s8 %v11520
        %v11522 = vlaneseq
        %v11523 = vshrl.u32 %v11522, 7
        %v11524 = vsub.s32 %v11521, %v11523
        %v11525 = vrot.slane %v11246, %v11524
        %v11527 = vunpack.c.l.s4 1966171168
        %v11528 = vunpack.c.0.s8 %v11527
        %v11529 = vlaneseq
        %v11530 = vshrl.u32 %v11529, 7
        %v11531 = vsub.s32 %v11528, %v11530
        %v11532 = vrot.slane %v11518, %v11531
        %v11533 = vcombine.high %v11525, %v11525
        %v11534 = vcombine.high %v11532, %v11532
        %v11536 = vunpack.c.l.s4 1966171168
        %v11537 = vunpack.c.0.s8 %v11536
        %v11538 = vlaneseq
        %v11539 = vshrl.u32 %v11538, 7
        %v11540 = vsub.s32 %v11537, %v11539
        %v11541 = vrot.slane %v11525, %v11540
        %v11543 = vunpack.c.l.s4 1966171168
        %v11544 = vunpack.c.0.s8 %v11543
        %v11545 = vlaneseq
        %v11546 = vshrl.u32 %v11545, 7
        %v11547 = vsub.s32 %v11544, %v11546
        %v11548 = vrot.slane %v11532, %v11547
        %v11550 = vunpack.c.l.s4 1966171168
        %v11551 = vunpack.c.0.s8 %v11550
        %v11552 = vlaneseq
        %v11553 = vshrl.u32 %v11552, 7
        %v11554 = vsub.s32 %v11551, %v11553
        %v11555 = vrot.slane %v11533, %v11554
        %v11557 = vunpack.c.l.s4 1966171168
        %v11558 = vunpack.c.0.s8 %v11557
        %v11559 = vlaneseq
        %v11560 = vshrl.u32 %v11559, 7
        %v11561 = vsub.s32 %v11558, %v11560
        %v11562 = vrot.slane %v11534, %v11561
        %v11563 = vcombine.high %v11541, %v11541
        %v11564 = vcombine.high %v11548, %v11548
        %v11565 = vcombine.high %v11555, %v11555
        %v11566 = vcombine.high %v11562, %v11562
        %v11567 = vcombine.high %v11247, %v11247
        %v11569 = vunpack.c.l.s4 1966171168
        %v11570 = vunpack.c.0.s8 %v11569
        %v11571 = vlaneseq
        %v11572 = vshrl.u32 %v11571, 7
        %v11573 = vsub.s32 %v11570, %v11572
        %v11574 = vrot.slane %v11247, %v11573
        %v11576 = vunpack.c.l.s4 1966171168
        %v11577 = vunpack.c.0.s8 %v11576
        %v11578 = vlaneseq
        %v11579 = vshrl.u32 %v11578, 7
        %v11580 = vsub.s32 %v11577, %v11579
        %v11581 = vrot.slane %v11567, %v11580
        %v11582 = vcombine.high %v11574, %v11574
        %v11583 = vcombine.high %v11581, %v11581
        %v11585 = vunpack.c.l.s4 1966171168
        %v11586 = vunpack.c.0.s8 %v11585
        %v11587 = vlaneseq
        %v11588 = vshrl.u32 %v11587, 7
        %v11589 = vsub.s32 %v11586, %v11588
        %v11590 = vrot.slane %v11574, %v11589
        %v11592 = vunpack.c.l.s4 1966171168
        %v11593 = vunpack.c.0.s8 %v11592
        %v11594 = vlaneseq
        %v11595 = vshrl.u32 %v11594, 7
        %v11596 = vsub.s32 %v11593, %v11595
        %v11597 = vrot.slane %v11581, %v11596
        %v11599 = vunpack.c.l.s4 1966171168
        %v11600 = vunpack.c.0.s8 %v11599
        %v11601 = vlaneseq
        %v11602 = vshrl.u32 %v11601, 7
        %v11603 = vsub.s32 %v11600, %v11602
        %v11604 = vrot.slane %v11582, %v11603
        %v11606 = vunpack.c.l.s4 1966171168
        %v11607 = vunpack.c.0.s8 %v11606
        %v11608 = vlaneseq
        %v11609 = vshrl.u32 %v11608, 7
        %v11610 = vsub.s32 %v11607, %v11609
        %v11611 = vrot.slane %v11583, %v11610
        %v11612 = vcombine.high %v11590, %v11590
        %v11613 = vcombine.high %v11597, %v11597
        %v11614 = vcombine.high %v11604, %v11604
        %v11615 = vcombine.high %v11611, %v11611
        %v11616 = vcombine.high %v11248, %v11248
        %v11618 = vunpack.c.l.s4 1966171168
        %v11619 = vunpack.c.0.s8 %v11618
        %v11620 = vlaneseq
        %v11621 = vshrl.u32 %v11620, 7
        %v11622 = vsub.s32 %v11619, %v11621
        %v11623 = vrot.slane %v11248, %v11622
        %v11625 = vunpack.c.l.s4 1966171168
        %v11626 = vunpack.c.0.s8 %v11625
        %v11627 = vlaneseq
        %v11628 = vshrl.u32 %v11627, 7
        %v11629 = vsub.s32 %v11626, %v11628
        %v11630 = vrot.slane %v11616, %v11629
        %v11631 = vcombine.high %v11623, %v11623
        %v11632 = vcombine.high %v11630, %v11630
        %v11634 = vunpack.c.l.s4 1966171168
        %v11635 = vunpack.c.0.s8 %v11634
        %v11636 = vlaneseq
        %v11637 = vshrl.u32 %v11636, 7
        %v11638 = vsub.s32 %v11635, %v11637
        %v11639 = vrot.slane %v11623, %v11638
        %v11641 = vunpack.c.l.s4 1966171168
        %v11642 = vunpack.c.0.s8 %v11641
        %v11643 = vlaneseq
        %v11644 = vshrl.u32 %v11643, 7
        %v11645 = vsub.s32 %v11642, %v11644
        %v11646 = vrot.slane %v11630, %v11645
        %v11648 = vunpack.c.l.s4 1966171168
        %v11649 = vunpack.c.0.s8 %v11648
        %v11650 = vlaneseq
        %v11651 = vshrl.u32 %v11650, 7
        %v11652 = vsub.s32 %v11649, %v11651
        %v11653 = vrot.slane %v11631, %v11652
        %v11655 = vunpack.c.l.s4 1966171168
        %v11656 = vunpack.c.0.s8 %v11655
        %v11657 = vlaneseq
        %v11658 = vshrl.u32 %v11657, 7
        %v11659 = vsub.s32 %v11656, %v11658
        %v11660 = vrot.slane %v11632, %v11659
        %v11661 = vcombine.high %v11639, %v11639
        %v11662 = vcombine.high %v11646, %v11646
        %v11663 = vcombine.high %v11653, %v11653
        %v11664 = vcombine.high %v11660, %v11660
        %v11665 = vcombine.high %v11249, %v11249
        %v11667 = vunpack.c.l.s4 1966171168
        %v11668 = vunpack.c.0.s8 %v11667
        %v11669 = vlaneseq
        %v11670 = vshrl.u32 %v11669, 7
        %v11671 = vsub.s32 %v11668, %v11670
        %v11672 = vrot.slane %v11249, %v11671
        %v11674 = vunpack.c.l.s4 1966171168
        %v11675 = vunpack.c.0.s8 %v11674
        %v11676 = vlaneseq
        %v11677 = vshrl.u32 %v11676, 7
        %v11678 = vsub.s32 %v11675, %v11677
        %v11679 = vrot.slane %v11665, %v11678
        %v11680 = vcombine.high %v11672, %v11672
        %v11681 = vcombine.high %v11679, %v11679
        %v11683 = vunpack.c.l.s4 1966171168
        %v11684 = vunpack.c.0.s8 %v11683
        %v11685 = vlaneseq
        %v11686 = vshrl.u32 %v11685, 7
        %v11687 = vsub.s32 %v11684, %v11686
        %v11688 = vrot.slane %v11672, %v11687
        %v11690 = vunpack.c.l.s4 1966171168
        %v11691 = vunpack.c.0.s8 %v11690
        %v11692 = vlaneseq
        %v11693 = vshrl.u32 %v11692, 7
        %v11694 = vsub.s32 %v11691, %v11693
        %v11695 = vrot.slane %v11679, %v11694
        %v11697 = vunpack.c.l.s4 1966171168
        %v11698 = vunpack.c.0.s8 %v11697
        %v11699 = vlaneseq
        %v11700 = vshrl.u32 %v11699, 7
        %v11701 = vsub.s32 %v11698, %v11700
        %v11702 = vrot.slane %v11680, %v11701
        %v11704 = vunpack.c.l.s4 1966171168
        %v11705 = vunpack.c.0.s8 %v11704
        %v11706 = vlaneseq
        %v11707 = vshrl.u32 %v11706, 7
        %v11708 = vsub.s32 %v11705, %v11707
        %v11709 = vrot.slane %v11681, %v11708
        %v11710 = vcombine.high %v11688, %v11688
        %v11711 = vcombine.high %v11695, %v11695
        %v11712 = vcombine.high %v11702, %v11702
        %v11713 = vcombine.high %v11709, %v11709
        %v11714 = vcombine.high %v11250, %v11250
        %v11716 = vunpack.c.l.s4 1966171168
        %v11717 = vunpack.c.0.s8 %v11716
        %v11718 = vlaneseq
        %v11719 = vshrl.u32 %v11718, 7
        %v11720 = vsub.s32 %v11717, %v11719
        %v11721 = vrot.slane %v11250, %v11720
        %v11723 = vunpack.c.l.s4 1966171168
        %v11724 = vunpack.c.0.s8 %v11723
        %v11725 = vlaneseq
        %v11726 = vshrl.u32 %v11725, 7
        %v11727 = vsub.s32 %v11724, %v11726
        %v11728 = vrot.slane %v11714, %v11727
        %v11729 = vcombine.high %v11721, %v11721
        %v11730 = vcombine.high %v11728, %v11728
        %v11732 = vunpack.c.l.s4 1966171168
        %v11733 = vunpack.c.0.s8 %v11732
        %v11734 = vlaneseq
        %v11735 = vshrl.u32 %v11734, 7
        %v11736 = vsub.s32 %v11733, %v11735
        %v11737 = vrot.slane %v11721, %v11736
        %v11739 = vunpack.c.l.s4 1966171168
        %v11740 = vunpack.c.0.s8 %v11739
        %v11741 = vlaneseq
        %v11742 = vshrl.u32 %v11741, 7
        %v11743 = vsub.s32 %v11740, %v11742
        %v11744 = vrot.slane %v11728, %v11743
        %v11746 = vunpack.c.l.s4 1966171168
        %v11747 = vunpack.c.0.s8 %v11746
        %v11748 = vlaneseq
        %v11749 = vshrl.u32 %v11748, 7
        %v11750 = vsub.s32 %v11747, %v11749
        %v11751 = vrot.slane %v11729, %v11750
        %v11753 = vunpack.c.l.s4 1966171168
        %v11754 = vunpack.c.0.s8 %v11753
        %v11755 = vlaneseq
        %v11756 = vshrl.u32 %v11755, 7
        %v11757 = vsub.s32 %v11754, %v11756
        %v11758 = vrot.slane %v11730, %v11757
        %v11759 = vcombine.high %v11737, %v11737
        %v11760 = vcombine.high %v11744, %v11744
        %v11761 = vcombine.high %v11751, %v11751
        %v11762 = vcombine.high %v11758, %v11758
        %v11763 = vcombine.high %v11251, %v11251
        %v11765 = vunpack.c.l.s4 1966171168
        %v11766 = vunpack.c.0.s8 %v11765
        %v11767 = vlaneseq
        %v11768 = vshrl.u32 %v11767, 7
        %v11769 = vsub.s32 %v11766, %v11768
        %v11770 = vrot.slane %v11251, %v11769
        %v11772 = vunpack.c.l.s4 1966171168
        %v11773 = vunpack.c.0.s8 %v11772
        %v11774 = vlaneseq
        %v11775 = vshrl.u32 %v11774, 7
        %v11776 = vsub.s32 %v11773, %v11775
        %v11777 = vrot.slane %v11763, %v11776
        %v11778 = vcombine.high %v11770, %v11770
        %v11779 = vcombine.high %v11777, %v11777
        %v11781 = vunpack.c.l.s4 1966171168
        %v11782 = vunpack.c.0.s8 %v11781
        %v11783 = vlaneseq
        %v11784 = vshrl.u32 %v11783, 7
        %v11785 = vsub.s32 %v11782, %v11784
        %v11786 = vrot.slane %v11770, %v11785
        %v11788 = vunpack.c.l.s4 1966171168
        %v11789 = vunpack.c.0.s8 %v11788
        %v11790 = vlaneseq
        %v11791 = vshrl.u32 %v11790, 7
        %v11792 = vsub.s32 %v11789, %v11791
        %v11793 = vrot.slane %v11777, %v11792
        %v11795 = vunpack.c.l.s4 1966171168
        %v11796 = vunpack.c.0.s8 %v11795
        %v11797 = vlaneseq
        %v11798 = vshrl.u32 %v11797, 7
        %v11799 = vsub.s32 %v11796, %v11798
        %v11800 = vrot.slane %v11778, %v11799
        %v11802 = vunpack.c.l.s4 1966171168
        %v11803 = vunpack.c.0.s8 %v11802
        %v11804 = vlaneseq
        %v11805 = vshrl.u32 %v11804, 7
        %v11806 = vsub.s32 %v11803, %v11805
        %v11807 = vrot.slane %v11779, %v11806
        %v11808 = vcombine.high %v11786, %v11786
        %v11809 = vcombine.high %v11793, %v11793
        %v11810 = vcombine.high %v11800, %v11800
        %v11811 = vcombine.high %v11807, %v11807
        %v11812 = vcombine.high %v11252, %v11252
        %v11814 = vunpack.c.l.s4 1966171168
        %v11815 = vunpack.c.0.s8 %v11814
        %v11816 = vlaneseq
        %v11817 = vshrl.u32 %v11816, 7
        %v11818 = vsub.s32 %v11815, %v11817
        %v11819 = vrot.slane %v11252, %v11818
        %v11821 = vunpack.c.l.s4 1966171168
        %v11822 = vunpack.c.0.s8 %v11821
        %v11823 = vlaneseq
        %v11824 = vshrl.u32 %v11823, 7
        %v11825 = vsub.s32 %v11822, %v11824
        %v11826 = vrot.slane %v11812, %v11825
        %v11827 = vcombine.high %v11819, %v11819
        %v11828 = vcombine.high %v11826, %v11826
        %v11830 = vunpack.c.l.s4 1966171168
        %v11831 = vunpack.c.0.s8 %v11830
        %v11832 = vlaneseq
        %v11833 = vshrl.u32 %v11832, 7
        %v11834 = vsub.s32 %v11831, %v11833
        %v11835 = vrot.slane %v11819, %v11834
        %v11837 = vunpack.c.l.s4 1966171168
        %v11838 = vunpack.c.0.s8 %v11837
        %v11839 = vlaneseq
        %v11840 = vshrl.u32 %v11839, 7
        %v11841 = vsub.s32 %v11838, %v11840
        %v11842 = vrot.slane %v11826, %v11841
        %v11844 = vunpack.c.l.s4 1966171168
        %v11845 = vunpack.c.0.s8 %v11844
        %v11846 = vlaneseq
        %v11847 = vshrl.u32 %v11846, 7
        %v11848 = vsub.s32 %v11845, %v11847
        %v11849 = vrot.slane %v11827, %v11848
        %v11851 = vunpack.c.l.s4 1966171168
        %v11852 = vunpack.c.0.s8 %v11851
        %v11853 = vlaneseq
        %v11854 = vshrl.u32 %v11853, 7
        %v11855 = vsub.s32 %v11852, %v11854
        %v11856 = vrot.slane %v11828, %v11855
        %v11857 = vcombine.high %v11835, %v11835
        %v11858 = vcombine.high %v11842, %v11842
        %v11859 = vcombine.high %v11849, %v11849
        %v11860 = vcombine.high %v11856, %v11856
        %v11861 = vcombine.high %v11253, %v11253
        %v11863 = vunpack.c.l.s4 1966171168
        %v11864 = vunpack.c.0.s8 %v11863
        %v11865 = vlaneseq
        %v11866 = vshrl.u32 %v11865, 7
        %v11867 = vsub.s32 %v11864, %v11866
        %v11868 = vrot.slane %v11253, %v11867
        %v11870 = vunpack.c.l.s4 1966171168
        %v11871 = vunpack.c.0.s8 %v11870
        %v11872 = vlaneseq
        %v11873 = vshrl.u32 %v11872, 7
        %v11874 = vsub.s32 %v11871, %v11873
        %v11875 = vrot.slane %v11861, %v11874
        %v11876 = vcombine.high %v11868, %v11868
        %v11877 = vcombine.high %v11875, %v11875
        %v11879 = vunpack.c.l.s4 1966171168
        %v11880 = vunpack.c.0.s8 %v11879
        %v11881 = vlaneseq
        %v11882 = vshrl.u32 %v11881, 7
        %v11883 = vsub.s32 %v11880, %v11882
        %v11884 = vrot.slane %v11868, %v11883
        %v11886 = vunpack.c.l.s4 1966171168
        %v11887 = vunpack.c.0.s8 %v11886
        %v11888 = vlaneseq
        %v11889 = vshrl.u32 %v11888, 7
        %v11890 = vsub.s32 %v11887, %v11889
        %v11891 = vrot.slane %v11875, %v11890
        %v11893 = vunpack.c.l.s4 1966171168
        %v11894 = vunpack.c.0.s8 %v11893
        %v11895 = vlaneseq
        %v11896 = vshrl.u32 %v11895, 7
        %v11897 = vsub.s32 %v11894, %v11896
        %v11898 = vrot.slane %v11876, %v11897
        %v11900 = vunpack.c.l.s4 1966171168
        %v11901 = vunpack.c.0.s8 %v11900
        %v11902 = vlaneseq
        %v11903 = vshrl.u32 %v11902, 7
        %v11904 = vsub.s32 %v11901, %v11903
        %v11905 = vrot.slane %v11877, %v11904
        %v11906 = vcombine.high %v11884, %v11884
        %v11907 = vcombine.high %v11891, %v11891
        %v11908 = vcombine.high %v11898, %v11898
        %v11909 = vcombine.high %v11905, %v11905
        %v11910 = vcombine.high %v11254, %v11254
        %v11912 = vunpack.c.l.s4 1966171168
        %v11913 = vunpack.c.0.s8 %v11912
        %v11914 = vlaneseq
        %v11915 = vshrl.u32 %v11914, 7
        %v11916 = vsub.s32 %v11913, %v11915
        %v11917 = vrot.slane %v11254, %v11916
        %v11919 = vunpack.c.l.s4 1966171168
        %v11920 = vunpack.c.0.s8 %v11919
        %v11921 = vlaneseq
        %v11922 = vshrl.u32 %v11921, 7
        %v11923 = vsub.s32 %v11920, %v11922
        %v11924 = vrot.slane %v11910, %v11923
        %v11925 = vcombine.high %v11917, %v11917
        %v11926 = vcombine.high %v11924, %v11924
        %v11928 = vunpack.c.l.s4 1966171168
        %v11929 = vunpack.c.0.s8 %v11928
        %v11930 = vlaneseq
        %v11931 = vshrl.u32 %v11930, 7
        %v11932 = vsub.s32 %v11929, %v11931
        %v11933 = vrot.slane %v11917, %v11932
        %v11935 = vunpack.c.l.s4 1966171168
        %v11936 = vunpack.c.0.s8 %v11935
        %v11937 = vlaneseq
        %v11938 = vshrl.u32 %v11937, 7
        %v11939 = vsub.s32 %v11936, %v11938
        %v11940 = vrot.slane %v11924, %v11939
        %v11942 = vunpack.c.l.s4 1966171168
        %v11943 = vunpack.c.0.s8 %v11942
        %v11944 = vlaneseq
        %v11945 = vshrl.u32 %v11944, 7
        %v11946 = vsub.s32 %v11943, %v11945
        %v11947 = vrot.slane %v11925, %v11946
        %v11949 = vunpack.c.l.s4 1966171168
        %v11950 = vunpack.c.0.s8 %v11949
        %v11951 = vlaneseq
        %v11952 = vshrl.u32 %v11951, 7
        %v11953 = vsub.s32 %v11950, %v11952
        %v11954 = vrot.slane %v11926, %v11953
        %v11955 = vcombine.high %v11933, %v11933
        %v11956 = vcombine.high %v11940, %v11940
        %v11957 = vcombine.high %v11947, %v11947
        %v11958 = vcombine.high %v11954, %v11954
        %v11959 = vcombine.high %v11255, %v11255
        %v11961 = vunpack.c.l.s4 1966171168
        %v11962 = vunpack.c.0.s8 %v11961
        %v11963 = vlaneseq
        %v11964 = vshrl.u32 %v11963, 7
        %v11965 = vsub.s32 %v11962, %v11964
        %v11966 = vrot.slane %v11255, %v11965
        %v11968 = vunpack.c.l.s4 1966171168
        %v11969 = vunpack.c.0.s8 %v11968
        %v11970 = vlaneseq
        %v11971 = vshrl.u32 %v11970, 7
        %v11972 = vsub.s32 %v11969, %v11971
        %v11973 = vrot.slane %v11959, %v11972
        %v11974 = vcombine.high %v11966, %v11966
        %v11975 = vcombine.high %v11973, %v11973
        %v11977 = vunpack.c.l.s4 1966171168
        %v11978 = vunpack.c.0.s8 %v11977
        %v11979 = vlaneseq
        %v11980 = vshrl.u32 %v11979, 7
        %v11981 = vsub.s32 %v11978, %v11980
        %v11982 = vrot.slane %v11966, %v11981
        %v11984 = vunpack.c.l.s4 1966171168
        %v11985 = vunpack.c.0.s8 %v11984
        %v11986 = vlaneseq
        %v11987 = vshrl.u32 %v11986, 7
        %v11988 = vsub.s32 %v11985, %v11987
        %v11989 = vrot.slane %v11973, %v11988
        %v11991 = vunpack.c.l.s4 1966171168
        %v11992 = vunpack.c.0.s8 %v11991
        %v11993 = vlaneseq
        %v11994 = vshrl.u32 %v11993, 7
        %v11995 = vsub.s32 %v11992, %v11994
        %v11996 = vrot.slane %v11974, %v11995
        %v11998 = vunpack.c.l.s4 1966171168
        %v11999 = vunpack.c.0.s8 %v11998
        %v12000 = vlaneseq
        %v12001 = vshrl.u32 %v12000, 7
        %v12002 = vsub.s32 %v11999, %v12001
        %v12003 = vrot.slane %v11975, %v12002
        %v12004 = vcombine.high %v11982, %v11982
        %v12005 = vcombine.high %v11989, %v11989
        %v12006 = vcombine.high %v11996, %v11996
        %v12007 = vcombine.high %v12003, %v12003
        %v12008 = vcombine.high %v11256, %v11256
        %v12010 = vunpack.c.l.s4 1966171168
        %v12011 = vunpack.c.0.s8 %v12010
        %v12012 = vlaneseq
        %v12013 = vshrl.u32 %v12012, 7
        %v12014 = vsub.s32 %v12011, %v12013
        %v12015 = vrot.slane %v11256, %v12014
        %v12017 = vunpack.c.l.s4 1966171168
        %v12018 = vunpack.c.0.s8 %v12017
        %v12019 = vlaneseq
        %v12020 = vshrl.u32 %v12019, 7
        %v12021 = vsub.s32 %v12018, %v12020
        %v12022 = vrot.slane %v12008, %v12021
        %v12023 = vcombine.high %v12015, %v12015
        %v12024 = vcombine.high %v12022, %v12022
        %v12026 = vunpack.c.l.s4 1966171168
        %v12027 = vunpack.c.0.s8 %v12026
        %v12028 = vlaneseq
        %v12029 = vshrl.u32 %v12028, 7
        %v12030 = vsub.s32 %v12027, %v12029
        %v12031 = vrot.slane %v12015, %v12030
        %v12033 = vunpack.c.l.s4 1966171168
        %v12034 = vunpack.c.0.s8 %v12033
        %v12035 = vlaneseq
        %v12036 = vshrl.u32 %v12035, 7
        %v12037 = vsub.s32 %v12034, %v12036
        %v12038 = vrot.slane %v12022, %v12037
        %v12040 = vunpack.c.l.s4 1966171168
        %v12041 = vunpack.c.0.s8 %v12040
        %v12042 = vlaneseq
        %v12043 = vshrl.u32 %v12042, 7
        %v12044 = vsub.s32 %v12041, %v12043
        %v12045 = vrot.slane %v12023, %v12044
        %v12047 = vunpack.c.l.s4 1966171168
        %v12048 = vunpack.c.0.s8 %v12047
        %v12049 = vlaneseq
        %v12050 = vshrl.u32 %v12049, 7
        %v12051 = vsub.s32 %v12048, %v12050
        %v12052 = vrot.slane %v12024, %v12051
        %v12053 = vcombine.high %v12031, %v12031
        %v12054 = vcombine.high %v12038, %v12038
        %v12055 = vcombine.high %v12045, %v12045
        %v12056 = vcombine.high %v12052, %v12052
        %12185 = vst [vmem:[%s145 + $0x5] sm:$0x1] %v11296
        %12186 = vst [vmem:[%s145 + $0xd] sm:$0x1] %v11310
        %12187 = vst [vmem:[%s145 + $0x15] sm:$0x1] %v11318
        %12188 = vst [vmem:[%s145 + $0x1d] sm:$0x1] %v11320
        %12189 = vst [vmem:[%s145 + $0x25] sm:$0x1] %v11303
        %12190 = vst [vmem:[%s145 + $0x2d] sm:$0x1] %v11317
        %12191 = vst [vmem:[%s145 + $0x35] sm:$0x1] %v11319
        %12192 = vst [vmem:[%s145 + $0x3d] sm:$0x1] %v11321
        %12193 = vst [vmem:[%s145 + $0x45] sm:$0x1] %v11345
        %12194 = vst [vmem:[%s145 + $0x4d] sm:$0x1] %v11359
        %12195 = vst [vmem:[%s145 + $0x55] sm:$0x1] %v11367
        %12196 = vst [vmem:[%s145 + $0x5d] sm:$0x1] %v11369
        %12197 = vst [vmem:[%s145 + $0x65] sm:$0x1] %v11352
        %12198 = vst [vmem:[%s145 + $0x6d] sm:$0x1] %v11366
        %12199 = vst [vmem:[%s145 + $0x75] sm:$0x1] %v11368
        %12200 = vst [vmem:[%s145 + $0x7d] sm:$0x1] %v11370
        %12201 = vst [vmem:[%s145 + $0x85] sm:$0x1] %v11394
        %12202 = vst [vmem:[%s145 + $0x8d] sm:$0x1] %v11408
        %12203 = vst [vmem:[%s145 + $0x95] sm:$0x1] %v11416
        %12204 = vst [vmem:[%s145 + $0x9d] sm:$0x1] %v11418
        %12205 = vst [vmem:[%s145 + $0xa5] sm:$0x1] %v11401
        %12206 = vst [vmem:[%s145 + $0xad] sm:$0x1] %v11415
        %12207 = vst [vmem:[%s145 + $0xb5] sm:$0x1] %v11417
        %12208 = vst [vmem:[%s145 + $0xbd] sm:$0x1] %v11419
        %12209 = vst [vmem:[%s145 + $0xc5] sm:$0x1] %v11443
        %12210 = vst [vmem:[%s145 + $0xcd] sm:$0x1] %v11457
        %12211 = vst [vmem:[%s145 + $0xd5] sm:$0x1] %v11465
        %12212 = vst [vmem:[%s145 + $0xdd] sm:$0x1] %v11467
        %12213 = vst [vmem:[%s145 + $0xe5] sm:$0x1] %v11450
        %12214 = vst [vmem:[%s145 + $0xed] sm:$0x1] %v11464
        %12215 = vst [vmem:[%s145 + $0xf5] sm:$0x1] %v11466
        %12216 = vst [vmem:[%s145 + $0xfd] sm:$0x1] %v11468
        %12217 = vst [vmem:[%s145 + $0x105] sm:$0x1] %v11492
        %12218 = vst [vmem:[%s145 + $0x10d] sm:$0x1] %v11506
        %12219 = vst [vmem:[%s145 + $0x115] sm:$0x1] %v11514
        %12220 = vst [vmem:[%s145 + $0x11d] sm:$0x1] %v11516
        %12221 = vst [vmem:[%s145 + $0x125] sm:$0x1] %v11499
        %12222 = vst [vmem:[%s145 + $0x12d] sm:$0x1] %v11513
        %12223 = vst [vmem:[%s145 + $0x135] sm:$0x1] %v11515
        %12224 = vst [vmem:[%s145 + $0x13d] sm:$0x1] %v11517
        %12225 = vst [vmem:[%s145 + $0x145] sm:$0x1] %v11541
        %12226 = vst [vmem:[%s145 + $0x14d] sm:$0x1] %v11555
        %12227 = vst [vmem:[%s145 + $0x155] sm:$0x1] %v11563
        %12228 = vst [vmem:[%s145 + $0x15d] sm:$0x1] %v11565
        %12229 = vst [vmem:[%s145 + $0x165] sm:$0x1] %v11548
        %12230 = vst [vmem:[%s145 + $0x16d] sm:$0x1] %v11562
        %12231 = vst [vmem:[%s145 + $0x175] sm:$0x1] %v11564
        %12232 = vst [vmem:[%s145 + $0x17d] sm:$0x1] %v11566
        %12233 = vst [vmem:[%s145 + $0x185] sm:$0x1] %v11590
        %12234 = vst [vmem:[%s145 + $0x18d] sm:$0x1] %v11604
        %12235 = vst [vmem:[%s145 + $0x195] sm:$0x1] %v11612
        %12236 = vst [vmem:[%s145 + $0x19d] sm:$0x1] %v11614
        %12237 = vst [vmem:[%s145 + $0x1a5] sm:$0x1] %v11597
        %12238 = vst [vmem:[%s145 + $0x1ad] sm:$0x1] %v11611
        %12239 = vst [vmem:[%s145 + $0x1b5] sm:$0x1] %v11613
        %12240 = vst [vmem:[%s145 + $0x1bd] sm:$0x1] %v11615
        %12241 = vst [vmem:[%s145 + $0x1c5] sm:$0x1] %v11639
        %12242 = vst [vmem:[%s145 + $0x1cd] sm:$0x1] %v11653
        %12243 = vst [vmem:[%s145 + $0x1d5] sm:$0x1] %v11661
        %12244 = vst [vmem:[%s145 + $0x1dd] sm:$0x1] %v11663
        %12245 = vst [vmem:[%s145 + $0x1e5] sm:$0x1] %v11646
        %12246 = vst [vmem:[%s145 + $0x1ed] sm:$0x1] %v11660
        %12247 = vst [vmem:[%s145 + $0x1f5] sm:$0x1] %v11662
        %12248 = vst [vmem:[%s145 + $0x1fd] sm:$0x1] %v11664
        %12249 = vst [vmem:[%s145 + $0x205] sm:$0x1] %v11688
        %12250 = vst [vmem:[%s145 + $0x20d] sm:$0x1] %v11702
        %12251 = vst [vmem:[%s145 + $0x215] sm:$0x1] %v11710
        %12252 = vst [vmem:[%s145 + $0x21d] sm:$0x1] %v11712
        %12253 = vst [vmem:[%s145 + $0x225] sm:$0x1] %v11695
        %12254 = vst [vmem:[%s145 + $0x22d] sm:$0x1] %v11709
        %12255 = vst [vmem:[%s145 + $0x235] sm:$0x1] %v11711
        %12256 = vst [vmem:[%s145 + $0x23d] sm:$0x1] %v11713
        %12257 = vst [vmem:[%s145 + $0x245] sm:$0x1] %v11737
        %12258 = vst [vmem:[%s145 + $0x24d] sm:$0x1] %v11751
        %12259 = vst [vmem:[%s145 + $0x255] sm:$0x1] %v11759
        %12260 = vst [vmem:[%s145 + $0x25d] sm:$0x1] %v11761
        %12261 = vst [vmem:[%s145 + $0x265] sm:$0x1] %v11744
        %12262 = vst [vmem:[%s145 + $0x26d] sm:$0x1] %v11758
        %12263 = vst [vmem:[%s145 + $0x275] sm:$0x1] %v11760
        %12264 = vst [vmem:[%s145 + $0x27d] sm:$0x1] %v11762
        %12265 = vst [vmem:[%s145 + $0x285] sm:$0x1] %v11786
        %12266 = vst [vmem:[%s145 + $0x28d] sm:$0x1] %v11800
        %12267 = vst [vmem:[%s145 + $0x295] sm:$0x1] %v11808
        %12268 = vst [vmem:[%s145 + $0x29d] sm:$0x1] %v11810
        %12269 = vst [vmem:[%s145 + $0x2a5] sm:$0x1] %v11793
        %12270 = vst [vmem:[%s145 + $0x2ad] sm:$0x1] %v11807
        %12271 = vst [vmem:[%s145 + $0x2b5] sm:$0x1] %v11809
        %12272 = vst [vmem:[%s145 + $0x2bd] sm:$0x1] %v11811
        %12273 = vst [vmem:[%s145 + $0x2c5] sm:$0x1] %v11835
        %12274 = vst [vmem:[%s145 + $0x2cd] sm:$0x1] %v11849
        %12275 = vst [vmem:[%s145 + $0x2d5] sm:$0x1] %v11857
        %12276 = vst [vmem:[%s145 + $0x2dd] sm:$0x1] %v11859
        %12277 = vst [vmem:[%s145 + $0x2e5] sm:$0x1] %v11842
        %12278 = vst [vmem:[%s145 + $0x2ed] sm:$0x1] %v11856
        %12279 = vst [vmem:[%s145 + $0x2f5] sm:$0x1] %v11858
        %12280 = vst [vmem:[%s145 + $0x2fd] sm:$0x1] %v11860
        %12281 = vst [vmem:[%s145 + $0x305] sm:$0x1] %v11884
        %12282 = vst [vmem:[%s145 + $0x30d] sm:$0x1] %v11898
        %12283 = vst [vmem:[%s145 + $0x315] sm:$0x1] %v11906
        %12284 = vst [vmem:[%s145 + $0x31d] sm:$0x1] %v11908
        %12285 = vst [vmem:[%s145 + $0x325] sm:$0x1] %v11891
        %12286 = vst [vmem:[%s145 + $0x32d] sm:$0x1] %v11905
        %12287 = vst [vmem:[%s145 + $0x335] sm:$0x1] %v11907
        %12288 = vst [vmem:[%s145 + $0x33d] sm:$0x1] %v11909
        %12289 = vst [vmem:[%s145 + $0x345] sm:$0x1] %v11933
        %12290 = vst [vmem:[%s145 + $0x34d] sm:$0x1] %v11947
        %12291 = vst [vmem:[%s145 + $0x355] sm:$0x1] %v11955
        %12292 = vst [vmem:[%s145 + $0x35d] sm:$0x1] %v11957
        %12293 = vst [vmem:[%s145 + $0x365] sm:$0x1] %v11940
        %12294 = vst [vmem:[%s145 + $0x36d] sm:$0x1] %v11954
        %12295 = vst [vmem:[%s145 + $0x375] sm:$0x1] %v11956
        %12296 = vst [vmem:[%s145 + $0x37d] sm:$0x1] %v11958
        %12297 = vst [vmem:[%s145 + $0x385] sm:$0x1] %v11982
        %12298 = vst [vmem:[%s145 + $0x38d] sm:$0x1] %v11996
        %12299 = vst [vmem:[%s145 + $0x395] sm:$0x1] %v12004
        %12300 = vst [vmem:[%s145 + $0x39d] sm:$0x1] %v12006
        %12301 = vst [vmem:[%s145 + $0x3a5] sm:$0x1] %v11989
        %12302 = vst [vmem:[%s145 + $0x3ad] sm:$0x1] %v12003
        %12303 = vst [vmem:[%s145 + $0x3b5] sm:$0x1] %v12005
        %12304 = vst [vmem:[%s145 + $0x3bd] sm:$0x1] %v12007
        %12305 = vst [vmem:[%s145 + $0x3c5] sm:$0x1] %v12031
        %12306 = vst [vmem:[%s145 + $0x3cd] sm:$0x1] %v12045
        %12307 = vst [vmem:[%s145 + $0x3d5] sm:$0x1] %v12053
        %12308 = vst [vmem:[%s145 + $0x3dd] sm:$0x1] %v12055
        %12309 = vst [vmem:[%s145 + $0x3e5] sm:$0x1] %v12038
        %12310 = vst [vmem:[%s145 + $0x3ed] sm:$0x1] %v12052
        %12311 = vst [vmem:[%s145 + $0x3f5] sm:$0x1] %v12054
        %12312 = vst [vmem:[%s145 + $0x3fd] sm:$0x1] %v12056
        %s12313 = sand.u32 %s68, 1
        %s12314 = sand.u32 %s68, 1
        %s12315 = smul.addr %s12314, 1024
        %s12316 = scalar_lea.vmem [#allocation2], %s12315
        // Predicated region
        $region29: #{tpu_custom_call.1} parent=27 // pred_check
          %p12317 = pneg %p78
        $region30: #{tpu_custom_call.1} parent=27 // pred_check_branch
          %12319 = sbr.rel (%p12317) target = $region32
        $region31: #{tpu_custom_call.1} parent=27 // pred_region
          %s12320 = smul.u32 128, %s13
          %s12321 = ssub.s32 200, %s12320
          %p12322 = scmp.lt.s32.totalorder %s12321, 128
          %s12323 = scalar_select %p12322, %s12321, 128
          %s12324 = smul.u32 128, %s12323
          %p12325 = scmp.ne.s32.totalorder 0, %s12324
          %s12326 = smul.addr %s12320, 8
          %s12327 = scalar_lea.vmem %s2, %s12326
          // Predicated region
          $region33: #{tpu_custom_call.1} parent=31 // pred_check
            %p12328 = pneg %p12325
          $region34: #{tpu_custom_call.1} parent=31 // pred_check_branch
            %12330 = sbr.rel (%p12328) target = $region36
          $region35: #{tpu_custom_call.1} parent=31 // pred_region
            // Predicated region
            $region37: #{tpu_custom_call.1} parent=35 // pred_check
              _
            $region38: #{tpu_custom_call.1} parent=35 // pred_check_branch
              %12332 = sbr.rel (0) target = $region40
            $region39: #{tpu_custom_call.1} parent=35 // pred_region
              // Predicated region
              $region59: #{tpu_custom_call.1} parent=39 // pred_check
                _
              $region60: #{tpu_custom_call.1} parent=39 // pred_check_branch
                %12508 = sbr.rel (0) target = $region62
              $region61: #{tpu_custom_call.1} parent=39 // pred_region
                %s12509 = sshrl.u32 %s12323, 6
                // While loop
                $region63: #{tpu_custom_call.1} parent=61 // loop_pre_header
                  _
                $region64: #{tpu_custom_call.1} parent=61 // loop_header
                  %s12511 = sphi 0, %s12513
                  %p12512 = scmp.ge.s32.totalorder %s12511, %s12509
                  %s12516 = sphi 0, %s12649
                  %s12517 = sphi %s12316, %s12652
                  %s12518 = sphi %s12327, %s12653
                $region65: #{tpu_custom_call.1} parent=61 // loop_header_branch
                  %12515 = sbr.rel (%p12512) target = $region69
                $region66: #{tpu_custom_call.1} parent=61 // loop_body
                  %v12519 = vld [vmem:[%s12517] sm:$0xff]
                  %12520 = vst [vmem:[%s12518] sm:$0xff] %v12519
                  %v12521 = vld [vmem:[%s12517 + $0x8] sm:$0xff]
                  %12522 = vst [vmem:[%s12518 + $0x8] sm:$0xff] %v12521
                  %v12523 = vld [vmem:[%s12517 + $0x10] sm:$0xff]
                  %12524 = vst [vmem:[%s12518 + $0x10] sm:$0xff] %v12523
                  %v12525 = vld [vmem:[%s12517 + $0x18] sm:$0xff]
                  %12526 = vst [vmem:[%s12518 + $0x18] sm:$0xff] %v12525
                  %v12527 = vld [vmem:[%s12517 + $0x20] sm:$0xff]
                  %12528 = vst [vmem:[%s12518 + $0x20] sm:$0xff] %v12527
                  %v12529 = vld [vmem:[%s12517 + $0x28] sm:$0xff]
                  %12530 = vst [vmem:[%s12518 + $0x28] sm:$0xff] %v12529
                  %v12531 = vld [vmem:[%s12517 + $0x30] sm:$0xff]
                  %12532 = vst [vmem:[%s12518 + $0x30] sm:$0xff] %v12531
                  %v12533 = vld [vmem:[%s12517 + $0x38] sm:$0xff]
                  %12534 = vst [vmem:[%s12518 + $0x38] sm:$0xff] %v12533
                  %v12535 = vld [vmem:[%s12517 + $0x40] sm:$0xff]
                  %12536 = vst [vmem:[%s12518 + $0x40] sm:$0xff] %v12535
                  %v12537 = vld [vmem:[%s12517 + $0x48] sm:$0xff]
                  %12538 = vst [vmem:[%s12518 + $0x48] sm:$0xff] %v12537
                  %v12539 = vld [vmem:[%s12517 + $0x50] sm:$0xff]
                  %12540 = vst [vmem:[%s12518 + $0x50] sm:$0xff] %v12539
                  %v12541 = vld [vmem:[%s12517 + $0x58] sm:$0xff]
                  %12542 = vst [vmem:[%s12518 + $0x58] sm:$0xff] %v12541
                  %v12543 = vld [vmem:[%s12517 + $0x60] sm:$0xff]
                  %12544 = vst [vmem:[%s12518 + $0x60] sm:$0xff] %v12543
                  %v12545 = vld [vmem:[%s12517 + $0x68] sm:$0xff]
                  %12546 = vst [vmem:[%s12518 + $0x68] sm:$0xff] %v12545
                  %v12547 = vld [vmem:[%s12517 + $0x70] sm:$0xff]
                  %12548 = vst [vmem:[%s12518 + $0x70] sm:$0xff] %v12547
                  %v12549 = vld [vmem:[%s12517 + $0x78] sm:$0xff]
                  %12550 = vst [vmem:[%s12518 + $0x78] sm:$0xff] %v12549
                  %v12551 = vld [vmem:[%s12517 + $0x80] sm:$0xff]
                  %12552 = vst [vmem:[%s12518 + $0x80] sm:$0xff] %v12551
                  %v12553 = vld [vmem:[%s12517 + $0x88] sm:$0xff]
                  %12554 = vst [vmem:[%s12518 + $0x88] sm:$0xff] %v12553
                  %v12555 = vld [vmem:[%s12517 + $0x90] sm:$0xff]
                  %12556 = vst [vmem:[%s12518 + $0x90] sm:$0xff] %v12555
                  %v12557 = vld [vmem:[%s12517 + $0x98] sm:$0xff]
                  %12558 = vst [vmem:[%s12518 + $0x98] sm:$0xff] %v12557
                  %v12559 = vld [vmem:[%s12517 + $0xa0] sm:$0xff]
                  %12560 = vst [vmem:[%s12518 + $0xa0] sm:$0xff] %v12559
                  %v12561 = vld [vmem:[%s12517 + $0xa8] sm:$0xff]
                  %12562 = vst [vmem:[%s12518 + $0xa8] sm:$0xff] %v12561
                  %v12563 = vld [vmem:[%s12517 + $0xb0] sm:$0xff]
                  %12564 = vst [vmem:[%s12518 + $0xb0] sm:$0xff] %v12563
                  %v12565 = vld [vmem:[%s12517 + $0xb8] sm:$0xff]
                  %12566 = vst [vmem:[%s12518 + $0xb8] sm:$0xff] %v12565
                  %v12567 = vld [vmem:[%s12517 + $0xc0] sm:$0xff]
                  %12568 = vst [vmem:[%s12518 + $0xc0] sm:$0xff] %v12567
                  %v12569 = vld [vmem:[%s12517 + $0xc8] sm:$0xff]
                  %12570 = vst [vmem:[%s12518 + $0xc8] sm:$0xff] %v12569
                  %v12571 = vld [vmem:[%s12517 + $0xd0] sm:$0xff]
                  %12572 = vst [vmem:[%s12518 + $0xd0] sm:$0xff] %v12571
                  %v12573 = vld [vmem:[%s12517 + $0xd8] sm:$0xff]
                  %12574 = vst [vmem:[%s12518 + $0xd8] sm:$0xff] %v12573
                  %v12575 = vld [vmem:[%s12517 + $0xe0] sm:$0xff]
                  %12576 = vst [vmem:[%s12518 + $0xe0] sm:$0xff] %v12575
                  %v12577 = vld [vmem:[%s12517 + $0xe8] sm:$0xff]
                  %12578 = vst [vmem:[%s12518 + $0xe8] sm:$0xff] %v12577
                  %v12579 = vld [vmem:[%s12517 + $0xf0] sm:$0xff]
                  %12580 = vst [vmem:[%s12518 + $0xf0] sm:$0xff] %v12579
                  %v12581 = vld [vmem:[%s12517 + $0xf8] sm:$0xff]
                  %12582 = vst [vmem:[%s12518 + $0xf8] sm:$0xff] %v12581
                  %v12583 = vld [vmem:[%s12517 + $0x100] sm:$0xff]
                  %12584 = vst [vmem:[%s12518 + $0x100] sm:$0xff] %v12583
                  %v12585 = vld [vmem:[%s12517 + $0x108] sm:$0xff]
                  %12586 = vst [vmem:[%s12518 + $0x108] sm:$0xff] %v12585
                  %v12587 = vld [vmem:[%s12517 + $0x110] sm:$0xff]
                  %12588 = vst [vmem:[%s12518 + $0x110] sm:$0xff] %v12587
                  %v12589 = vld [vmem:[%s12517 + $0x118] sm:$0xff]
                  %12590 = vst [vmem:[%s12518 + $0x118] sm:$0xff] %v12589
                  %v12591 = vld [vmem:[%s12517 + $0x120] sm:$0xff]
                  %12592 = vst [vmem:[%s12518 + $0x120] sm:$0xff] %v12591
                  %v12593 = vld [vmem:[%s12517 + $0x128] sm:$0xff]
                  %12594 = vst [vmem:[%s12518 + $0x128] sm:$0xff] %v12593
                  %v12595 = vld [vmem:[%s12517 + $0x130] sm:$0xff]
                  %12596 = vst [vmem:[%s12518 + $0x130] sm:$0xff] %v12595
                  %v12597 = vld [vmem:[%s12517 + $0x138] sm:$0xff]
                  %12598 = vst [vmem:[%s12518 + $0x138] sm:$0xff] %v12597
                  %v12599 = vld [vmem:[%s12517 + $0x140] sm:$0xff]
                  %12600 = vst [vmem:[%s12518 + $0x140] sm:$0xff] %v12599
                  %v12601 = vld [vmem:[%s12517 + $0x148] sm:$0xff]
                  %12602 = vst [vmem:[%s12518 + $0x148] sm:$0xff] %v12601
                  %v12603 = vld [vmem:[%s12517 + $0x150] sm:$0xff]
                  %12604 = vst [vmem:[%s12518 + $0x150] sm:$0xff] %v12603
                  %v12605 = vld [vmem:[%s12517 + $0x158] sm:$0xff]
                  %12606 = vst [vmem:[%s12518 + $0x158] sm:$0xff] %v12605
                  %v12607 = vld [vmem:[%s12517 + $0x160] sm:$0xff]
                  %12608 = vst [vmem:[%s12518 + $0x160] sm:$0xff] %v12607
                  %v12609 = vld [vmem:[%s12517 + $0x168] sm:$0xff]
                  %12610 = vst [vmem:[%s12518 + $0x168] sm:$0xff] %v12609
                  %v12611 = vld [vmem:[%s12517 + $0x170] sm:$0xff]
                  %12612 = vst [vmem:[%s12518 + $0x170] sm:$0xff] %v12611
                  %v12613 = vld [vmem:[%s12517 + $0x178] sm:$0xff]
                  %12614 = vst [vmem:[%s12518 + $0x178] sm:$0xff] %v12613
                  %v12615 = vld [vmem:[%s12517 + $0x180] sm:$0xff]
                  %12616 = vst [vmem:[%s12518 + $0x180] sm:$0xff] %v12615
                  %v12617 = vld [vmem:[%s12517 + $0x188] sm:$0xff]
                  %12618 = vst [vmem:[%s12518 + $0x188] sm:$0xff] %v12617
                  %v12619 = vld [vmem:[%s12517 + $0x190] sm:$0xff]
                  %12620 = vst [vmem:[%s12518 + $0x190] sm:$0xff] %v12619
                  %v12621 = vld [vmem:[%s12517 + $0x198] sm:$0xff]
                  %12622 = vst [vmem:[%s12518 + $0x198] sm:$0xff] %v12621
                  %v12623 = vld [vmem:[%s12517 + $0x1a0] sm:$0xff]
                  %12624 = vst [vmem:[%s12518 + $0x1a0] sm:$0xff] %v12623
                  %v12625 = vld [vmem:[%s12517 + $0x1a8] sm:$0xff]
                  %12626 = vst [vmem:[%s12518 + $0x1a8] sm:$0xff] %v12625
                  %v12627 = vld [vmem:[%s12517 + $0x1b0] sm:$0xff]
                  %12628 = vst [vmem:[%s12518 + $0x1b0] sm:$0xff] %v12627
                  %v12629 = vld [vmem:[%s12517 + $0x1b8] sm:$0xff]
                  %12630 = vst [vmem:[%s12518 + $0x1b8] sm:$0xff] %v12629
                  %v12631 = vld [vmem:[%s12517 + $0x1c0] sm:$0xff]
                  %12632 = vst [vmem:[%s12518 + $0x1c0] sm:$0xff] %v12631
                  %v12633 = vld [vmem:[%s12517 + $0x1c8] sm:$0xff]
                  %12634 = vst [vmem:[%s12518 + $0x1c8] sm:$0xff] %v12633
                  %v12635 = vld [vmem:[%s12517 + $0x1d0] sm:$0xff]
                  %12636 = vst [vmem:[%s12518 + $0x1d0] sm:$0xff] %v12635
                  %v12637 = vld [vmem:[%s12517 + $0x1d8] sm:$0xff]
                  %12638 = vst [vmem:[%s12518 + $0x1d8] sm:$0xff] %v12637
                  %v12639 = vld [vmem:[%s12517 + $0x1e0] sm:$0xff]
                  %12640 = vst [vmem:[%s12518 + $0x1e0] sm:$0xff] %v12639
                  %v12641 = vld [vmem:[%s12517 + $0x1e8] sm:$0xff]
                  %12642 = vst [vmem:[%s12518 + $0x1e8] sm:$0xff] %v12641
                  %v12643 = vld [vmem:[%s12517 + $0x1f0] sm:$0xff]
                  %12644 = vst [vmem:[%s12518 + $0x1f0] sm:$0xff] %v12643
                  %v12645 = vld [vmem:[%s12517 + $0x1f8] sm:$0xff]
                  %12646 = vst [vmem:[%s12518 + $0x1f8] sm:$0xff] %v12645
                  %s12647 = sadd.s32 1, %s12516
                  %p12648 = scmp.ge.s32.totalorder %s12647, %s12509
                  %s12649 = scalar_select %p12648, 0, %s12647
                  %s12650 = smul.u32 %s12649, 512
                  %s12651 = smul.u32 %s12649, 512
                  %s12652 = scalar_lea.vmem %s12316, %s12650 [#allocation2]
                  %s12653 = scalar_lea.vmem %s12327, %s12651
                $region67: #{tpu_custom_call.1} parent=61 // loop_footer
                  %s12513 = sadd.s32 %s12511, 1
                $region68: #{tpu_custom_call.1} parent=61 // loop_footer_branch
                  %12510 = sbr.rel target = $region64
                $region69: #{tpu_custom_call.1} parent=61 // loop_exit
                  _
                %s12654 = sshrl.u32 %s12323, 6
                %s12655 = sand.u32 %s12323, 63
                %s12656 = smul.u32 %s12654, 64
                %s12657 = smul.u32 8, %s12656
                %s12658 = scalar_lea.vmem %s12316, %s12657 [#allocation2]
                %s12659 = smul.u32 8, %s12656
                %s12660 = scalar_lea.vmem %s12327, %s12659
                // While loop
                $region70: #{tpu_custom_call.1} parent=61 // loop_pre_header
                  _
                $region71: #{tpu_custom_call.1} parent=61 // loop_header
                  %s12662 = sphi 0, %s12664
                  %p12663 = scmp.ge.s32.totalorder %s12662, %s12655
                  %s12667 = sphi 0, %s12674
                  %s12668 = sphi %s12658, %s12677
                  %s12669 = sphi %s12660, %s12678
                $region72: #{tpu_custom_call.1} parent=61 // loop_header_branch
                  %12666 = sbr.rel (%p12663) target = $region76
                $region73: #{tpu_custom_call.1} parent=61 // loop_body
                  %v12670 = vld [vmem:[%s12668] sm:$0xff]
                  %12671 = vst [vmem:[%s12669] sm:$0xff] %v12670
                  %s12672 = sadd.s32 1, %s12667
                  %p12673 = scmp.ge.s32.totalorder %s12672, %s12655
                  %s12674 = scalar_select %p12673, 0, %s12672
                  %s12675 = smul.u32 %s12674, 8
                  %s12676 = smul.u32 %s12674, 8
                  %s12677 = scalar_lea.vmem %s12658, %s12675 [#allocation2]
                  %s12678 = scalar_lea.vmem %s12660, %s12676
                $region74: #{tpu_custom_call.1} parent=61 // loop_footer
                  %s12664 = sadd.s32 %s12662, 1
                $region75: #{tpu_custom_call.1} parent=61 // loop_footer_branch
                  %12661 = sbr.rel target = $region71
                $region76: #{tpu_custom_call.1} parent=61 // loop_exit
                  _
              $region62: #{tpu_custom_call.1} parent=39 // pred_fallthru
                _
              // Predicated region
              $region77: #{tpu_custom_call.1} parent=39 // pred_check
                _
              $region78: #{tpu_custom_call.1} parent=39 // pred_check_branch
                %12680 = sbr.rel target = $region80
              $region79: #{tpu_custom_call.1} parent=39 // pred_region
                _
              $region80: #{tpu_custom_call.1} parent=39 // pred_fallthru
                _
            $region40: #{tpu_custom_call.1} parent=35 // pred_fallthru
              _
            // Predicated region
            $region41: #{tpu_custom_call.1} parent=35 // pred_check
              _
            $region42: #{tpu_custom_call.1} parent=35 // pred_check_branch
              %12334 = sbr.rel target = $region44
            $region43: #{tpu_custom_call.1} parent=35 // pred_region
              %s12336 = ssub.s32 256, 1
              %s12337 = sshrl.u32 %s12323, 6
              // While loop
              $region45: #{tpu_custom_call.1} parent=43 // loop_pre_header
                _
              $region46: #{tpu_custom_call.1} parent=43 // loop_header
                %s12339 = sphi 0, %s12341
                %p12340 = scmp.ge.s32.totalorder %s12339, %s12337
                %s12344 = sphi 0, %s12477
                %s12345 = sphi %s12316, %s12480
                %s12346 = sphi %s12327, %s12481
              $region47: #{tpu_custom_call.1} parent=43 // loop_header_branch
                %12343 = sbr.rel (%p12340) target = $region51
              $region48: #{tpu_custom_call.1} parent=43 // loop_body
                %v12347 = vld [vmem:[%s12345] sm:%s12336]
                %12348 = vst [vmem:[%s12346] sm:%s12336] %v12347
                %v12349 = vld [vmem:[%s12345 + $0x8] sm:%s12336]
                %12350 = vst [vmem:[%s12346 + $0x8] sm:%s12336] %v12349
                %v12351 = vld [vmem:[%s12345 + $0x10] sm:%s12336]
                %12352 = vst [vmem:[%s12346 + $0x10] sm:%s12336] %v12351
                %v12353 = vld [vmem:[%s12345 + $0x18] sm:%s12336]
                %12354 = vst [vmem:[%s12346 + $0x18] sm:%s12336] %v12353
                %v12355 = vld [vmem:[%s12345 + $0x20] sm:%s12336]
                %12356 = vst [vmem:[%s12346 + $0x20] sm:%s12336] %v12355
                %v12357 = vld [vmem:[%s12345 + $0x28] sm:%s12336]
                %12358 = vst [vmem:[%s12346 + $0x28] sm:%s12336] %v12357
                %v12359 = vld [vmem:[%s12345 + $0x30] sm:%s12336]
                %12360 = vst [vmem:[%s12346 + $0x30] sm:%s12336] %v12359
                %v12361 = vld [vmem:[%s12345 + $0x38] sm:%s12336]
                %12362 = vst [vmem:[%s12346 + $0x38] sm:%s12336] %v12361
                %v12363 = vld [vmem:[%s12345 + $0x40] sm:%s12336]
                %12364 = vst [vmem:[%s12346 + $0x40] sm:%s12336] %v12363
                %v12365 = vld [vmem:[%s12345 + $0x48] sm:%s12336]
                %12366 = vst [vmem:[%s12346 + $0x48] sm:%s12336] %v12365
                %v12367 = vld [vmem:[%s12345 + $0x50] sm:%s12336]
                %12368 = vst [vmem:[%s12346 + $0x50] sm:%s12336] %v12367
                %v12369 = vld [vmem:[%s12345 + $0x58] sm:%s12336]
                %12370 = vst [vmem:[%s12346 + $0x58] sm:%s12336] %v12369
                %v12371 = vld [vmem:[%s12345 + $0x60] sm:%s12336]
                %12372 = vst [vmem:[%s12346 + $0x60] sm:%s12336] %v12371
                %v12373 = vld [vmem:[%s12345 + $0x68] sm:%s12336]
                %12374 = vst [vmem:[%s12346 + $0x68] sm:%s12336] %v12373
                %v12375 = vld [vmem:[%s12345 + $0x70] sm:%s12336]
                %12376 = vst [vmem:[%s12346 + $0x70] sm:%s12336] %v12375
                %v12377 = vld [vmem:[%s12345 + $0x78] sm:%s12336]
                %12378 = vst [vmem:[%s12346 + $0x78] sm:%s12336] %v12377
                %v12379 = vld [vmem:[%s12345 + $0x80] sm:%s12336]
                %12380 = vst [vmem:[%s12346 + $0x80] sm:%s12336] %v12379
                %v12381 = vld [vmem:[%s12345 + $0x88] sm:%s12336]
                %12382 = vst [vmem:[%s12346 + $0x88] sm:%s12336] %v12381
                %v12383 = vld [vmem:[%s12345 + $0x90] sm:%s12336]
                %12384 = vst [vmem:[%s12346 + $0x90] sm:%s12336] %v12383
                %v12385 = vld [vmem:[%s12345 + $0x98] sm:%s12336]
                %12386 = vst [vmem:[%s12346 + $0x98] sm:%s12336] %v12385
                %v12387 = vld [vmem:[%s12345 + $0xa0] sm:%s12336]
                %12388 = vst [vmem:[%s12346 + $0xa0] sm:%s12336] %v12387
                %v12389 = vld [vmem:[%s12345 + $0xa8] sm:%s12336]
                %12390 = vst [vmem:[%s12346 + $0xa8] sm:%s12336] %v12389
                %v12391 = vld [vmem:[%s12345 + $0xb0] sm:%s12336]
                %12392 = vst [vmem:[%s12346 + $0xb0] sm:%s12336] %v12391
                %v12393 = vld [vmem:[%s12345 + $0xb8] sm:%s12336]
                %12394 = vst [vmem:[%s12346 + $0xb8] sm:%s12336] %v12393
                %v12395 = vld [vmem:[%s12345 + $0xc0] sm:%s12336]
                %12396 = vst [vmem:[%s12346 + $0xc0] sm:%s12336] %v12395
                %v12397 = vld [vmem:[%s12345 + $0xc8] sm:%s12336]
                %12398 = vst [vmem:[%s12346 + $0xc8] sm:%s12336] %v12397
                %v12399 = vld [vmem:[%s12345 + $0xd0] sm:%s12336]
                %12400 = vst [vmem:[%s12346 + $0xd0] sm:%s12336] %v12399
                %v12401 = vld [vmem:[%s12345 + $0xd8] sm:%s12336]
                %12402 = vst [vmem:[%s12346 + $0xd8] sm:%s12336] %v12401
                %v12403 = vld [vmem:[%s12345 + $0xe0] sm:%s12336]
                %12404 = vst [vmem:[%s12346 + $0xe0] sm:%s12336] %v12403
                %v12405 = vld [vmem:[%s12345 + $0xe8] sm:%s12336]
                %12406 = vst [vmem:[%s12346 + $0xe8] sm:%s12336] %v12405
                %v12407 = vld [vmem:[%s12345 + $0xf0] sm:%s12336]
                %12408 = vst [vmem:[%s12346 + $0xf0] sm:%s12336] %v12407
                %v12409 = vld [vmem:[%s12345 + $0xf8] sm:%s12336]
                %12410 = vst [vmem:[%s12346 + $0xf8] sm:%s12336] %v12409
                %v12411 = vld [vmem:[%s12345 + $0x100] sm:%s12336]
                %12412 = vst [vmem:[%s12346 + $0x100] sm:%s12336] %v12411
                %v12413 = vld [vmem:[%s12345 + $0x108] sm:%s12336]
                %12414 = vst [vmem:[%s12346 + $0x108] sm:%s12336] %v12413
                %v12415 = vld [vmem:[%s12345 + $0x110] sm:%s12336]
                %12416 = vst [vmem:[%s12346 + $0x110] sm:%s12336] %v12415
                %v12417 = vld [vmem:[%s12345 + $0x118] sm:%s12336]
                %12418 = vst [vmem:[%s12346 + $0x118] sm:%s12336] %v12417
                %v12419 = vld [vmem:[%s12345 + $0x120] sm:%s12336]
                %12420 = vst [vmem:[%s12346 + $0x120] sm:%s12336] %v12419
                %v12421 = vld [vmem:[%s12345 + $0x128] sm:%s12336]
                %12422 = vst [vmem:[%s12346 + $0x128] sm:%s12336] %v12421
                %v12423 = vld [vmem:[%s12345 + $0x130] sm:%s12336]
                %12424 = vst [vmem:[%s12346 + $0x130] sm:%s12336] %v12423
                %v12425 = vld [vmem:[%s12345 + $0x138] sm:%s12336]
                %12426 = vst [vmem:[%s12346 + $0x138] sm:%s12336] %v12425
                %v12427 = vld [vmem:[%s12345 + $0x140] sm:%s12336]
                %12428 = vst [vmem:[%s12346 + $0x140] sm:%s12336] %v12427
                %v12429 = vld [vmem:[%s12345 + $0x148] sm:%s12336]
                %12430 = vst [vmem:[%s12346 + $0x148] sm:%s12336] %v12429
                %v12431 = vld [vmem:[%s12345 + $0x150] sm:%s12336]
                %12432 = vst [vmem:[%s12346 + $0x150] sm:%s12336] %v12431
                %v12433 = vld [vmem:[%s12345 + $0x158] sm:%s12336]
                %12434 = vst [vmem:[%s12346 + $0x158] sm:%s12336] %v12433
                %v12435 = vld [vmem:[%s12345 + $0x160] sm:%s12336]
                %12436 = vst [vmem:[%s12346 + $0x160] sm:%s12336] %v12435
                %v12437 = vld [vmem:[%s12345 + $0x168] sm:%s12336]
                %12438 = vst [vmem:[%s12346 + $0x168] sm:%s12336] %v12437
                %v12439 = vld [vmem:[%s12345 + $0x170] sm:%s12336]
                %12440 = vst [vmem:[%s12346 + $0x170] sm:%s12336] %v12439
                %v12441 = vld [vmem:[%s12345 + $0x178] sm:%s12336]
                %12442 = vst [vmem:[%s12346 + $0x178] sm:%s12336] %v12441
                %v12443 = vld [vmem:[%s12345 + $0x180] sm:%s12336]
                %12444 = vst [vmem:[%s12346 + $0x180] sm:%s12336] %v12443
                %v12445 = vld [vmem:[%s12345 + $0x188] sm:%s12336]
                %12446 = vst [vmem:[%s12346 + $0x188] sm:%s12336] %v12445
                %v12447 = vld [vmem:[%s12345 + $0x190] sm:%s12336]
                %12448 = vst [vmem:[%s12346 + $0x190] sm:%s12336] %v12447
                %v12449 = vld [vmem:[%s12345 + $0x198] sm:%s12336]
                %12450 = vst [vmem:[%s12346 + $0x198] sm:%s12336] %v12449
                %v12451 = vld [vmem:[%s12345 + $0x1a0] sm:%s12336]
                %12452 = vst [vmem:[%s12346 + $0x1a0] sm:%s12336] %v12451
                %v12453 = vld [vmem:[%s12345 + $0x1a8] sm:%s12336]
                %12454 = vst [vmem:[%s12346 + $0x1a8] sm:%s12336] %v12453
                %v12455 = vld [vmem:[%s12345 + $0x1b0] sm:%s12336]
                %12456 = vst [vmem:[%s12346 + $0x1b0] sm:%s12336] %v12455
                %v12457 = vld [vmem:[%s12345 + $0x1b8] sm:%s12336]
                %12458 = vst [vmem:[%s12346 + $0x1b8] sm:%s12336] %v12457
                %v12459 = vld [vmem:[%s12345 + $0x1c0] sm:%s12336]
                %12460 = vst [vmem:[%s12346 + $0x1c0] sm:%s12336] %v12459
                %v12461 = vld [vmem:[%s12345 + $0x1c8] sm:%s12336]
                %12462 = vst [vmem:[%s12346 + $0x1c8] sm:%s12336] %v12461
                %v12463 = vld [vmem:[%s12345 + $0x1d0] sm:%s12336]
                %12464 = vst [vmem:[%s12346 + $0x1d0] sm:%s12336] %v12463
                %v12465 = vld [vmem:[%s12345 + $0x1d8] sm:%s12336]
                %12466 = vst [vmem:[%s12346 + $0x1d8] sm:%s12336] %v12465
                %v12467 = vld [vmem:[%s12345 + $0x1e0] sm:%s12336]
                %12468 = vst [vmem:[%s12346 + $0x1e0] sm:%s12336] %v12467
                %v12469 = vld [vmem:[%s12345 + $0x1e8] sm:%s12336]
                %12470 = vst [vmem:[%s12346 + $0x1e8] sm:%s12336] %v12469
                %v12471 = vld [vmem:[%s12345 + $0x1f0] sm:%s12336]
                %12472 = vst [vmem:[%s12346 + $0x1f0] sm:%s12336] %v12471
                %v12473 = vld [vmem:[%s12345 + $0x1f8] sm:%s12336]
                %12474 = vst [vmem:[%s12346 + $0x1f8] sm:%s12336] %v12473
                %s12475 = sadd.s32 1, %s12344
                %p12476 = scmp.ge.s32.totalorder %s12475, %s12337
                %s12477 = scalar_select %p12476, 0, %s12475
                %s12478 = smul.u32 %s12477, 512
                %s12479 = smul.u32 %s12477, 512
                %s12480 = scalar_lea.vmem %s12316, %s12478 [#allocation2]
                %s12481 = scalar_lea.vmem %s12327, %s12479
              $region49: #{tpu_custom_call.1} parent=43 // loop_footer
                %s12341 = sadd.s32 %s12339, 1
              $region50: #{tpu_custom_call.1} parent=43 // loop_footer_branch
                %12338 = sbr.rel target = $region46
              $region51: #{tpu_custom_call.1} parent=43 // loop_exit
                _
              %s12482 = sshrl.u32 %s12323, 6
              %s12483 = sand.u32 %s12323, 63
              %s12484 = smul.u32 %s12482, 64
              %s12485 = smul.u32 8, %s12484
              %s12486 = scalar_lea.vmem %s12316, %s12485 [#allocation2]
              %s12487 = smul.u32 8, %s12484
              %s12488 = scalar_lea.vmem %s12327, %s12487
              // While loop
              $region52: #{tpu_custom_call.1} parent=43 // loop_pre_header
                _
              $region53: #{tpu_custom_call.1} parent=43 // loop_header
                %s12490 = sphi 0, %s12492
                %p12491 = scmp.ge.s32.totalorder %s12490, %s12483
                %s12495 = sphi 0, %s12502
                %s12496 = sphi %s12486, %s12505
                %s12497 = sphi %s12488, %s12506
              $region54: #{tpu_custom_call.1} parent=43 // loop_header_branch
                %12494 = sbr.rel (%p12491) target = $region58
              $region55: #{tpu_custom_call.1} parent=43 // loop_body
                %v12498 = vld [vmem:[%s12496] sm:%s12336]
                %12499 = vst [vmem:[%s12497] sm:%s12336] %v12498
                %s12500 = sadd.s32 1, %s12495
                %p12501 = scmp.ge.s32.totalorder %s12500, %s12483
                %s12502 = scalar_select %p12501, 0, %s12500
                %s12503 = smul.u32 %s12502, 8
                %s12504 = smul.u32 %s12502, 8
                %s12505 = scalar_lea.vmem %s12486, %s12503 [#allocation2]
                %s12506 = scalar_lea.vmem %s12488, %s12504
              $region56: #{tpu_custom_call.1} parent=43 // loop_footer
                %s12492 = sadd.s32 %s12490, 1
              $region57: #{tpu_custom_call.1} parent=43 // loop_footer_branch
                %12489 = sbr.rel target = $region53
              $region58: #{tpu_custom_call.1} parent=43 // loop_exit
                _
            $region44: #{tpu_custom_call.1} parent=35 // pred_fallthru
              _
          $region36: #{tpu_custom_call.1} parent=31 // pred_fallthru
            _
          %12681 = vnop
        $region32: #{tpu_custom_call.1} parent=27 // pred_fallthru
          _
      $region28: #{tpu_custom_call.1} parent=5 // pred_fallthru
        _
      %p12682 = scmp.le.s32.totalorder 2, %s8
      // Predicated region
      $region81: #{tpu_custom_call.1} parent=5 // pred_check
        %p12683 = pneg %p12682
      $region82: #{tpu_custom_call.1} parent=5 // pred_check_branch
        %12685 = sbr.rel (%p12683) target = $region84
      $region83: #{tpu_custom_call.1} parent=5 // pred_region
        %s12686 = ssub.s32 %s8, 2
        // Predicated region
        $region85: #{tpu_custom_call.1} parent=83 // pred_check
          %p12687 = pneg %p84
        $region86: #{tpu_custom_call.1} parent=83 // pred_check_branch
          %12689 = sbr.rel (%p12687) target = $region88
        $region87: #{tpu_custom_call.1} parent=83 // pred_region
          %s12690 = sand.u32 %s69, 1
          %s12691 = sand.u32 %s69, 1
          %s12692 = smul.addr %s12691, 1024
          %s12693 = scalar_lea.vmem [#allocation2], %s12692
        $region88: #{tpu_custom_call.1} parent=83 // pred_fallthru
          _
      $region84: #{tpu_custom_call.1} parent=5 // pred_fallthru
        _
    $region6: #{tpu_custom_call.1} parent=1 // loop_footer
      %s12 = sadd.s32 1, %s8
    $region7: #{tpu_custom_call.1} parent=1 // loop_footer_branch
      %7 = sbr.rel target = $region3
    $region8: #{tpu_custom_call.1} parent=1 // loop_exit
      _

</llo_original>
